<compile_context>
chip_gen: v5e
topology: v5e:2x2
jax: 0.10.0
libtpu: 0.0.40
codegen_flags: <defaults>
</compile_context>

<pallas_src>
import functools

import jax
import jax.numpy as jnp
from jax.experimental import pallas as pl
from jax.experimental.pallas import tpu as pltpu


def _round_up(x, m):
    return -(-x // m) * m


def _pick_rc(H, W):
    """Largest RC dividing H with RC*W <= 256, preferring RC*W % 128 == 0."""
    best = None
    for rc in range(H, 0, -1):
        if H % rc:
            continue
        m = rc * W
        if m > 256:
            continue
        if m % 128 == 0:
            return rc
        if best is None:
            best = rc
    return best if best is not None else 1


def _vmem_padded_bytes(shape, itemsize):
    dims = list(shape)
    dims[-1] = _round_up(dims[-1], 128)
    if len(dims) >= 2:
        dims[-2] = _round_up(dims[-2], 32 // itemsize)
    n = itemsize
    for d in dims:
        n *= d
    return n


# ---------------------------------------------------------------------------
# Fused kernel: first conv (im2col matmul) -> res blocks -> final conv.
# One grid step per batch element; z lives in VMEM between layers.
# ---------------------------------------------------------------------------
def _fused_forward_kernel(*refs, n_res, H, W, C, slope, RC):
    # ---- unpack refs -------------------------------------------------------
    p0_ref, w1_ref, b1_ref = refs[0], refs[1], refs[2]
    idx = 3
    res_refs = []
    for _ in range(n_res):
        res_refs.append((refs[idx], refs[idx + 1]))
        idx += 2
    wf_ref, bf_ref = refs[idx], refs[idx + 1]
    o_ref = refs[idx + 2]
    za_ref, zb_ref, patch_ref = refs[idx + 3], refs[idx + 4], refs[idx + 5]

    n_chunks = H // RC
    M = RC * W

    def leaky(v):
        return jnp.where(v >= 0.0, v, slope * v)

    # Re-zero ONLY the 1-pixel halo (perimeter) each grid step.  Interiors are
    # fully overwritten by every layer; the halo is read by every 3x3 conv and
    # must be zero ('same' padding).  Doing it per step (cheap) keeps the
    # kernel correct even when the "parallel" batch axis is split across
    # TensorCores (each core's scratch starts uninitialized).
    for buf in (za_ref, zb_ref):
        buf[0:1, :, :] = jnp.zeros((1, W + 2, C), buf.dtype)
        buf[H + 1:H + 2, :, :] = jnp.zeros((1, W + 2, C), buf.dtype)
        buf[:, 0:1, :] = jnp.zeros((H + 2, 1, C), buf.dtype)
        buf[:, W + 1:W + 2, :] = jnp.zeros((H + 2, 1, C), buf.dtype)

    # ---- first_part: single im2col matmul + bias + leaky_relu -> za --------
    for c in range(n_chunks):
        r0 = c * RC
        patch = p0_ref[0, r0 * W:(r0 + RC) * W, :]            # (M, K1) bf16
        acc = jnp.dot(patch, w1_ref[...],
                      preferred_element_type=jnp.float32) + b1_ref[...]
        acc = leaky(acc)
        za_ref[1 + r0:1 + r0 + RC, 1:1 + W, :] = (
            acc.reshape(RC, W, C).astype(za_ref.dtype))

    bufs = (za_ref, zb_ref)
    cur = 0

    def build_patch(src, r0):
        # 9-tap im2col of one RC-row band into lane-aligned VMEM scratch.
        for kh in range(3):
            for kw in range(3):
                t = kh * 3 + kw
                patch_ref[:, :, t * C:(t + 1) * C] = (
                    src[r0 + kh:r0 + kh + RC, kw:kw + W, :])

    # ---- middle_part: ResBlock(s): z + leaky(conv(z) + b), z in VMEM -------
    for wr_ref, br_ref in res_refs:
        src, dst = bufs[cur], bufs[1 - cur]
        for c in range(n_chunks):
            r0 = c * RC
            build_patch(src, r0)
            pre = jnp.dot(patch_ref[...].reshape(M, 9 * C), wr_ref[...],
                          preferred_element_type=jnp.float32) + br_ref[...]
            # residual: center tap (kh=1,kw=1) already sits in the im2col slab
            out = (leaky(pre).reshape(RC, W, C)
                   + patch_ref[:, :, 4 * C:5 * C].astype(jnp.float32))
            dst[1 + r0:1 + r0 + RC, 1:1 + W, :] = out.astype(dst.dtype)
        cur = 1 - cur

    # ---- final_part: conv + bias, lane-dense (C_out_pad, H*W) store --------
    src = bufs[cur]
    for c in range(n_chunks):
        r0 = c * RC
        build_patch(src, r0)
        pre = jnp.dot(patch_ref[...].reshape(M, 9 * C), wf_ref[...],
                      preferred_element_type=jnp.float32) + bf_ref[...]
        # Transposed store: last dim = RC*W lanes (multiple of 128).
        o_ref[0, :, r0 * W:(r0 + RC) * W] = pre.T.astype(o_ref.dtype)


# ---------------------------------------------------------------------------
# Wrapper: NCHW in/out, one pad + im2col for the first layer, one pallas_call.
# ---------------------------------------------------------------------------
def primal_proximal_equivariant_forward(params, x, g, s, *, in_channels):
    """Inputs x, g, s are NCHW (PyTorch convention). Returns (x_out, s_out) NCHW."""
    z = jnp.concatenate([x, g, s], axis=1).astype(jnp.float32)   # (B, C_in0, H, W)
    B, C_in0, H, W = z.shape

    w1 = params["w1"]
    C_mid = w1.shape[-1]
    wf = params["wf"]
    C_out = wf.shape[-1]
    n_res = len(params["res"])

    # Padded sizes: channel dim to a full lane tile, first-layer K to 16,
    # output channels to a full sublane tile.
    C_pad = _round_up(C_mid, 128)
    K1 = _round_up(9 * C_in0, 16)
    C_out_pad = _round_up(C_out, 8)

    # im2col of the (tiny) first-layer input, done once on the XLA side.
    z_nhwc = jnp.transpose(z, (0, 2, 3, 1))                      # (B, H, W, C_in0)
    zp = jnp.pad(z_nhwc, ((0, 0), (1, 1), (1, 1), (0, 0)))
    taps = [zp[:, kh:kh + H, kw:kw + W, :] for kh in range(3) for kw in range(3)]
    p0 = jnp.stack(taps, axis=3).reshape(B, H * W, 9 * C_in0)
    p0 = jnp.pad(p0, ((0, 0), (0, 0), (0, K1 - 9 * C_in0))).astype(jnp.bfloat16)

    # Kernel-friendly, zero-padded weight layouts; wide layers in bf16 (MXU).
    w1_m = jnp.pad(w1.reshape(9 * C_in0, C_mid),
                   ((0, K1 - 9 * C_in0), (0, C_pad - C_mid))).astype(jnp.bfloat16)
    b1_m = jnp.pad(params["b1"].reshape(1, C_mid),
                   ((0, 0), (0, C_pad - C_mid))).astype(jnp.float32)
    wf_m = jnp.pad(wf, ((0, 0), (0, 0), (0, C_pad - C_mid),
                        (0, C_out_pad - C_out)))
    wf_m = wf_m.reshape(9 * C_pad, C_out_pad).astype(jnp.bfloat16)
    bf_m = jnp.pad(params["bf"].reshape(1, C_out),
                   ((0, 0), (0, C_out_pad - C_out))).astype(jnp.float32)

    inputs = [p0, w1_m, b1_m]
    in_specs = [
        pl.BlockSpec((1, H * W, K1), lambda i: (i, 0, 0)),
        pl.BlockSpec((K1, C_pad), lambda i: (0, 0)),
        pl.BlockSpec((1, C_pad), lambda i: (0, 0)),
    ]
    for wr, br in params["res"]:
        wr_m = jnp.pad(wr, ((0, 0), (0, 0), (0, C_pad - C_mid),
                            (0, C_pad - C_mid)))
        wr_m = wr_m.reshape(9 * C_pad, C_pad).astype(jnp.bfloat16)
        br_m = jnp.pad(br.reshape(1, C_mid),
                       ((0, 0), (0, C_pad - C_mid))).astype(jnp.float32)
        inputs.append(wr_m)
        inputs.append(br_m)
        in_specs.append(pl.BlockSpec((9 * C_pad, C_pad), lambda i: (0, 0)))
        in_specs.append(pl.BlockSpec((1, C_pad), lambda i: (0, 0)))
    inputs += [wf_m, bf_m]
    in_specs += [
        pl.BlockSpec((9 * C_pad, C_out_pad), lambda i: (0, 0)),
        pl.BlockSpec((1, C_out_pad), lambda i: (0, 0)),
    ]

    # Row-chunk size: M = RC*W targets 256 (full MXU fill), multiple of 128.
    RC = _pick_rc(H, W)

    kernel = functools.partial(
        _fused_forward_kernel, n_res=n_res, H=H, W=W, C=C_pad,
        slope=0.01, RC=RC)

    # Explicit VMEM budget: scratch + double-buffered blocks + headroom.
    scratch_bytes = (2 * _vmem_padded_bytes((H + 2, W + 2, C_pad), 2)
                     + _vmem_padded_bytes((RC, W, 9 * C_pad), 2))
    io_block_bytes = (_vmem_padded_bytes((H * W, K1), 2)
                      + _vmem_padded_bytes((C_out_pad, H * W), 4))
    weight_bytes = sum(_vmem_padded_bytes(a.shape, a.dtype.itemsize)
                       for a in inputs[1:])
    vmem_limit = scratch_bytes + 2 * (io_block_bytes + weight_bytes) + (8 << 20)
    vmem_limit = int(min(max(vmem_limit, 32 << 20), 96 << 20))

    out = pl.pallas_call(
        kernel,
        out_shape=jax.ShapeDtypeStruct((B, C_out_pad, H * W), jnp.float32),
        grid=(B,),
        in_specs=in_specs,
        out_specs=pl.BlockSpec((1, C_out_pad, H * W), lambda i: (i, 0, 0)),
        scratch_shapes=[
            pltpu.VMEM((H + 2, W + 2, C_pad), jnp.bfloat16),     # z ping buffer
            pltpu.VMEM((H + 2, W + 2, C_pad), jnp.bfloat16),     # z pong buffer
            pltpu.VMEM((RC, W, 9 * C_pad), jnp.bfloat16),        # im2col slab
        ],
        compiler_params=pltpu.CompilerParams(
            dimension_semantics=("parallel",),
            vmem_limit_bytes=vmem_limit),
    )(*inputs)

    z_out = out[:, :C_out, :].reshape(B, C_out, H, W)   # drop padded channels
    x_out = z_out[:, :in_channels, :, :]
    s_out = z_out[:, in_channels:, :, :]
    return x_out, s_out


# ---------------------------------------------------------------------------
# Pure-JAX (f32, XLA conv) reference of the same forward for validation.
# ---------------------------------------------------------------------------
def _reference_forward(params, x, g, s, in_channels, slope=0.01):
    z = jnp.concatenate([x, g, s], axis=1).astype(jnp.float32)

    def conv(v, w, b):   # v: NCHW, w: (3,3,Cin,Cout) HWIO
        o = jax.lax.conv_general_dilated(
            v, w, window_strides=(1, 1), padding="SAME",
            dimension_numbers=("NCHW", "HWIO", "NCHW"))
        return o + b[None, :, None, None]

    def lrelu(v):
        return jnp.where(v >= 0.0, v, slope * v)

    z = lrelu(conv(z, params["w1"], params["b1"]))
    for wr, br in params["res"]:
        z = z + lrelu(conv(z, wr, br))
    z = conv(z, params["wf"], params["bf"])
    return z[:, :in_channels, :, :], z[:, in_channels:, :, :]


# ---------------------------------------------------------------------------
# Deterministic parameter construction (expanded 3x3 kernels).
# ---------------------------------------------------------------------------
def init_params(key, in_channels=1, n_memory=5, n_res_blocks=1,
                n_fields=16, order=6):
    """feat_type_intermed = 16 regular reps of C6 -> 16 * 6 = 96 channels."""
    c_in = 2 * in_channels + n_memory
    c_mid = n_fields * order
    c_out = in_channels + n_memory

    def conv_init(k, ci, co):
        kw, kb = jax.random.split(k)
        scale = 1.0 / jnp.sqrt(float(ci * 9))
        w = scale * jax.random.normal(kw, (3, 3, ci, co), jnp.float32)
        b = 0.01 * jax.random.normal(kb, (co,), jnp.float32)
        return w, b

    keys = jax.random.split(key, 2 + n_res_blocks)
    w1, b1 = conv_init(keys[0], c_in, c_mid)
    res = [conv_init(keys[1 + i], c_mid, c_mid) for i in range(n_res_blocks)]
    wf, bf = conv_init(keys[-1], c_mid, c_out)
    return {"w1": w1, "b1": b1, "res": res, "wf": wf, "bf": bf}


if __name__ == "__main__":
    key = jax.random.PRNGKey(0)
    kp, kx, kg, ks = jax.random.split(key, 4)

    in_channels, n_memory, n_res_blocks = 1, 5, 1
    B, H, W = 2, 16, 16

    params = init_params(kp, in_channels=in_channels, n_memory=n_memory,
                         n_res_blocks=n_res_blocks)

    x = jax.random.normal(kx, (B, in_channels, H, W), jnp.float32)
    g = jax.random.normal(kg, (B, in_channels, H, W), jnp.float32)
    s = jax.random.normal(ks, (B, n_memory, H, W), jnp.float32)

    fwd = jax.jit(functools.partial(primal_proximal_equivariant_forward,
                                    in_channels=in_channels))
    x_out, s_out = fwd(params, x, g, s)
    jax.block_until_ready((x_out, s_out))

    assert x_out.shape == (B, in_channels, H, W), x_out.shape
    assert s_out.shape == (B, n_memory, H, W), s_out.shape
    assert bool(jnp.all(jnp.isfinite(x_out))) and bool(jnp.all(jnp.isfinite(s_out)))

    # Loose numeric check vs the f32 XLA reference (kernel uses bf16 weights
    # and bf16 inter-layer activations, so tolerance is generous).
    x_ref, s_ref = _reference_forward(params, x, g, s, in_channels)
    err = float(jnp.maximum(jnp.max(jnp.abs(x_out - x_ref)),
                            jnp.max(jnp.abs(s_out - s_ref))))
    assert err < 0.35, f"max abs error vs reference: {err}"

    print("KERNEL_OK")
</pallas_src>

<mosaic_0001>
module attributes {stable_mosaic.version = 11 : i64} {
  func.func @_fused_forward_kernel(%arg0: i32, %arg1: memref<1x256x64xbf16, #tpu.memory_space<vmem>>, %arg2: memref<64x128xbf16, #tpu.memory_space<vmem>>, %arg3: memref<1x128xf32, #tpu.memory_space<vmem>>, %arg4: memref<1152x128xbf16, #tpu.memory_space<vmem>>, %arg5: memref<1x128xf32, #tpu.memory_space<vmem>>, %arg6: memref<1152x8xbf16, #tpu.memory_space<vmem>>, %arg7: memref<1x8xf32, #tpu.memory_space<vmem>>, %arg8: memref<1x8x256xf32, #tpu.memory_space<vmem>>, %arg9: memref<18x18x128xbf16, #tpu.memory_space<vmem>>, %arg10: memref<18x18x128xbf16, #tpu.memory_space<vmem>>, %arg11: memref<16x16x1152xbf16, #tpu.memory_space<vmem>>) attributes {dimension_semantics = [#tpu.dimension_semantics<parallel>], iteration_bounds = array<i64: 2>, scalar_prefetch = 0 : i64, scratch_operands = 3 : i64, tpu.core_type = #tpu.core_type<tc>, window_params = [{transform_indices = @transform_0, window_bounds = array<i64: 1, 256, 64>}, {pipeline_mode = #tpu.pipeline_mode<synchronous>, transform_indices = @transform_1, window_bounds = array<i64: 64, 128>}, {pipeline_mode = #tpu.pipeline_mode<synchronous>, transform_indices = @transform_2, window_bounds = array<i64: 1, 128>}, {pipeline_mode = #tpu.pipeline_mode<synchronous>, transform_indices = @transform_3, window_bounds = array<i64: 1152, 128>}, {pipeline_mode = #tpu.pipeline_mode<synchronous>, transform_indices = @transform_4, window_bounds = array<i64: 1, 128>}, {pipeline_mode = #tpu.pipeline_mode<synchronous>, transform_indices = @transform_5, window_bounds = array<i64: 1152, 8>}, {pipeline_mode = #tpu.pipeline_mode<synchronous>, transform_indices = @transform_6, window_bounds = array<i64: 1, 8>}, {transform_indices = @transform_7, window_bounds = array<i64: 1, 8, 256>}]} {
    %cst = arith.constant 0.000000e+00 : bf16
    %0 = vector.broadcast %cst : bf16 to vector<1x18x128xbf16>
    %c0 = arith.constant 0 : index
    %c0_0 = arith.constant 0 : index
    %c0_1 = arith.constant 0 : index
    %1 = vector.load %arg9[%c0, %c0_0, %c0_1] : memref<18x18x128xbf16, #tpu.memory_space<vmem>>, vector<1x18x128xbf16>
    tpu.vector_store %arg9[%c0, %c0_0, %c0_1], %0 {strides = array<i32>} : memref<18x18x128xbf16, #tpu.memory_space<vmem>>, vector<1x18x128xbf16>,
    %cst_2 = arith.constant 0.000000e+00 : bf16
    %2 = vector.broadcast %cst_2 : bf16 to vector<1x18x128xbf16>
    %c17 = arith.constant 17 : index
    %c0_3 = arith.constant 0 : index
    %c0_4 = arith.constant 0 : index
    %3 = vector.load %arg9[%c17, %c0_3, %c0_4] : memref<18x18x128xbf16, #tpu.memory_space<vmem>>, vector<1x18x128xbf16>
    tpu.vector_store %arg9[%c17, %c0_3, %c0_4], %2 {strides = array<i32>} : memref<18x18x128xbf16, #tpu.memory_space<vmem>>, vector<1x18x128xbf16>,
    %cst_5 = arith.constant 0.000000e+00 : bf16
    %4 = vector.broadcast %cst_5 : bf16 to vector<18x1x128xbf16>
    %c0_6 = arith.constant 0 : index
    %c0_7 = arith.constant 0 : index
    %c0_8 = arith.constant 0 : index
    %5 = vector.load %arg9[%c0_6, %c0_7, %c0_8] : memref<18x18x128xbf16, #tpu.memory_space<vmem>>, vector<18x1x128xbf16>
    tpu.vector_store %arg9[%c0_6, %c0_7, %c0_8], %4 {strides = array<i32>} : memref<18x18x128xbf16, #tpu.memory_space<vmem>>, vector<18x1x128xbf16>,
    %cst_9 = arith.constant 0.000000e+00 : bf16
    %6 = vector.broadcast %cst_9 : bf16 to vector<18x1x128xbf16>
    %c0_10 = arith.constant 0 : index
    %c17_11 = arith.constant 17 : index
    %c0_12 = arith.constant 0 : index
    %7 = vector.load %arg9[%c0_10, %c17_11, %c0_12] : memref<18x18x128xbf16, #tpu.memory_space<vmem>>, vector<18x1x128xbf16>
    tpu.vector_store %arg9[%c0_10, %c17_11, %c0_12], %6 {strides = array<i32>} : memref<18x18x128xbf16, #tpu.memory_space<vmem>>, vector<18x1x128xbf16>,
    %cst_13 = arith.constant 0.000000e+00 : bf16
    %8 = vector.broadcast %cst_13 : bf16 to vector<1x18x128xbf16>
    %c0_14 = arith.constant 0 : index
    %c0_15 = arith.constant 0 : index
    %c0_16 = arith.constant 0 : index
    %9 = vector.load %arg10[%c0_14, %c0_15, %c0_16] : memref<18x18x128xbf16, #tpu.memory_space<vmem>>, vector<1x18x128xbf16>
    tpu.vector_store %arg10[%c0_14, %c0_15, %c0_16], %8 {strides = array<i32>} : memref<18x18x128xbf16, #tpu.memory_space<vmem>>, vector<1x18x128xbf16>,
    %cst_17 = arith.constant 0.000000e+00 : bf16
    %10 = vector.broadcast %cst_17 : bf16 to vector<1x18x128xbf16>
    %c17_18 = arith.constant 17 : index
    %c0_19 = arith.constant 0 : index
    %c0_20 = arith.constant 0 : index
    %11 = vector.load %arg10[%c17_18, %c0_19, %c0_20] : memref<18x18x128xbf16, #tpu.memory_space<vmem>>, vector<1x18x128xbf16>
    tpu.vector_store %arg10[%c17_18, %c0_19, %c0_20], %10 {strides = array<i32>} : memref<18x18x128xbf16, #tpu.memory_space<vmem>>, vector<1x18x128xbf16>,
    %cst_21 = arith.constant 0.000000e+00 : bf16
    %12 = vector.broadcast %cst_21 : bf16 to vector<18x1x128xbf16>
    %c0_22 = arith.constant 0 : index
    %c0_23 = arith.constant 0 : index
    %c0_24 = arith.constant 0 : index
    %13 = vector.load %arg10[%c0_22, %c0_23, %c0_24] : memref<18x18x128xbf16, #tpu.memory_space<vmem>>, vector<18x1x128xbf16>
    tpu.vector_store %arg10[%c0_22, %c0_23, %c0_24], %12 {strides = array<i32>} : memref<18x18x128xbf16, #tpu.memory_space<vmem>>, vector<18x1x128xbf16>,
    %cst_25 = arith.constant 0.000000e+00 : bf16
    %14 = vector.broadcast %cst_25 : bf16 to vector<18x1x128xbf16>
    %c0_26 = arith.constant 0 : index
    %c17_27 = arith.constant 17 : index
    %c0_28 = arith.constant 0 : index
    %15 = vector.load %arg10[%c0_26, %c17_27, %c0_28] : memref<18x18x128xbf16, #tpu.memory_space<vmem>>, vector<18x1x128xbf16>
    tpu.vector_store %arg10[%c0_26, %c17_27, %c0_28], %14 {strides = array<i32>} : memref<18x18x128xbf16, #tpu.memory_space<vmem>>, vector<18x1x128xbf16>,
    %c0_29 = arith.constant 0 : index
    %c0_30 = arith.constant 0 : index
    %c0_31 = arith.constant 0 : index
    %16 = vector.load %arg1[%c0_29, %c0_30, %c0_31] : memref<1x256x64xbf16, #tpu.memory_space<vmem>>, vector<1x256x64xbf16>
    %17 = vector.shape_cast %16 : vector<1x256x64xbf16> to vector<256x64xbf16>
    %c0_32 = arith.constant 0 : index
    %c0_33 = arith.constant 0 : index
    %18 = vector.load %arg2[%c0_32, %c0_33] : memref<64x128xbf16, #tpu.memory_space<vmem>>, vector<64x128xbf16>
    %cst_34 = arith.constant dense<0.000000e+00> : vector<256x128xf32>
    %19 = tpu.matmul %17, %18, %cst_34 {dimension_numbers = #tpu.dot_dimension_numbers<[1], [0], [0], [1], [0, 0, 1, 1], [], []>} : vector<256x64xbf16>, vector<64x128xbf16>, vector<256x128xf32> -> vector<256x128xf32>
    %c0_35 = arith.constant 0 : index
    %c0_36 = arith.constant 0 : index
    %20 = vector.load %arg3[%c0_35, %c0_36] : memref<1x128xf32, #tpu.memory_space<vmem>>, vector<1x128xf32>
    %21 = vector.broadcast %20 : vector<1x128xf32> to vector<256x128xf32>
    %22 = arith.addf %19, %21 : vector<256x128xf32>
    %cst_37 = arith.constant 0.000000e+00 : f32
    %23 = vector.broadcast %cst_37 : f32 to vector<256x128xf32>
    %24 = arith.cmpf oge, %22, %23 : vector<256x128xf32>
    %cst_38 = arith.constant 0.00999999977 : f32
    %25 = vector.broadcast %cst_38 : f32 to vector<256x128xf32>
    %26 = arith.mulf %25, %22 : vector<256x128xf32>
    %27 = arith.select %24, %22, %26 : vector<256x128xi1>, vector<256x128xf32>
    %28 = vector.shape_cast %27 : vector<256x128xf32> to vector<16x16x128xf32>
    %29 = arith.truncf %28 : vector<16x16x128xf32> to vector<16x16x128xbf16>
    %c1 = arith.constant 1 : index
    %c1_39 = arith.constant 1 : index
    %c0_40 = arith.constant 0 : index
    %30 = vector.load %arg9[%c1, %c1_39, %c0_40] : memref<18x18x128xbf16, #tpu.memory_space<vmem>>, vector<16x16x128xbf16>
    tpu.vector_store %arg9[%c1, %c1_39, %c0_40], %29 {strides = array<i32>} : memref<18x18x128xbf16, #tpu.memory_space<vmem>>, vector<16x16x128xbf16>,
    %c0_41 = arith.constant 0 : index
    %c0_42 = arith.constant 0 : index
    %c0_43 = arith.constant 0 : index
    %31 = vector.load %arg9[%c0_41, %c0_42, %c0_43] : memref<18x18x128xbf16, #tpu.memory_space<vmem>>, vector<16x16x128xbf16>
    %c0_44 = arith.constant 0 : index
    %c0_45 = arith.constant 0 : index
    %c0_46 = arith.constant 0 : index
    %32 = vector.load %arg11[%c0_44, %c0_45, %c0_46] : memref<16x16x1152xbf16, #tpu.memory_space<vmem>>, vector<16x16x128xbf16>
    tpu.vector_store %arg11[%c0_44, %c0_45, %c0_46], %31 {strides = array<i32>} : memref<16x16x1152xbf16, #tpu.memory_space<vmem>>, vector<16x16x128xbf16>,
    %c0_47 = arith.constant 0 : index
    %c1_48 = arith.constant 1 : index
    %c0_49 = arith.constant 0 : index
    %33 = vector.load %arg9[%c0_47, %c1_48, %c0_49] : memref<18x18x128xbf16, #tpu.memory_space<vmem>>, vector<16x16x128xbf16>
    %c0_50 = arith.constant 0 : index
    %c0_51 = arith.constant 0 : index
    %c128 = arith.constant 128 : index
    %34 = vector.load %arg11[%c0_50, %c0_51, %c128] : memref<16x16x1152xbf16, #tpu.memory_space<vmem>>, vector<16x16x128xbf16>
    tpu.vector_store %arg11[%c0_50, %c0_51, %c128], %33 {strides = array<i32>} : memref<16x16x1152xbf16, #tpu.memory_space<vmem>>, vector<16x16x128xbf16>,
    %c0_52 = arith.constant 0 : index
    %c2 = arith.constant 2 : index
    %c0_53 = arith.constant 0 : index
    %35 = vector.load %arg9[%c0_52, %c2, %c0_53] : memref<18x18x128xbf16, #tpu.memory_space<vmem>>, vector<16x16x128xbf16>
    %c0_54 = arith.constant 0 : index
    %c0_55 = arith.constant 0 : index
    %c256 = arith.constant 256 : index
    %36 = vector.load %arg11[%c0_54, %c0_55, %c256] : memref<16x16x1152xbf16, #tpu.memory_space<vmem>>, vector<16x16x128xbf16>
    tpu.vector_store %arg11[%c0_54, %c0_55, %c256], %35 {strides = array<i32>} : memref<16x16x1152xbf16, #tpu.memory_space<vmem>>, vector<16x16x128xbf16>,
    %c1_56 = arith.constant 1 : index
    %c0_57 = arith.constant 0 : index
    %c0_58 = arith.constant 0 : index
    %37 = vector.load %arg9[%c1_56, %c0_57, %c0_58] : memref<18x18x128xbf16, #tpu.memory_space<vmem>>, vector<16x16x128xbf16>
    %c0_59 = arith.constant 0 : index
    %c0_60 = arith.constant 0 : index
    %c384 = arith.constant 384 : index
    %38 = vector.load %arg11[%c0_59, %c0_60, %c384] : memref<16x16x1152xbf16, #tpu.memory_space<vmem>>, vector<16x16x128xbf16>
    tpu.vector_store %arg11[%c0_59, %c0_60, %c384], %37 {strides = array<i32>} : memref<16x16x1152xbf16, #tpu.memory_space<vmem>>, vector<16x16x128xbf16>,
    %c1_61 = arith.constant 1 : index
    %c1_62 = arith.constant 1 : index
    %c0_63 = arith.constant 0 : index
    %39 = vector.load %arg9[%c1_61, %c1_62, %c0_63] : memref<18x18x128xbf16, #tpu.memory_space<vmem>>, vector<16x16x128xbf16>
    %c0_64 = arith.constant 0 : index
    %c0_65 = arith.constant 0 : index
    %c512 = arith.constant 512 : index
    %40 = vector.load %arg11[%c0_64, %c0_65, %c512] : memref<16x16x1152xbf16, #tpu.memory_space<vmem>>, vector<16x16x128xbf16>
    tpu.vector_store %arg11[%c0_64, %c0_65, %c512], %39 {strides = array<i32>} : memref<16x16x1152xbf16, #tpu.memory_space<vmem>>, vector<16x16x128xbf16>,
    %c1_66 = arith.constant 1 : index
    %c2_67 = arith.constant 2 : index
    %c0_68 = arith.constant 0 : index
    %41 = vector.load %arg9[%c1_66, %c2_67, %c0_68] : memref<18x18x128xbf16, #tpu.memory_space<vmem>>, vector<16x16x128xbf16>
    %c0_69 = arith.constant 0 : index
    %c0_70 = arith.constant 0 : index
    %c640 = arith.constant 640 : index
    %42 = vector.load %arg11[%c0_69, %c0_70, %c640] : memref<16x16x1152xbf16, #tpu.memory_space<vmem>>, vector<16x16x128xbf16>
    tpu.vector_store %arg11[%c0_69, %c0_70, %c640], %41 {strides = array<i32>} : memref<16x16x1152xbf16, #tpu.memory_space<vmem>>, vector<16x16x128xbf16>,
    %c2_71 = arith.constant 2 : index
    %c0_72 = arith.constant 0 : index
    %c0_73 = arith.constant 0 : index
    %43 = vector.load %arg9[%c2_71, %c0_72, %c0_73] : memref<18x18x128xbf16, #tpu.memory_space<vmem>>, vector<16x16x128xbf16>
    %c0_74 = arith.constant 0 : index
    %c0_75 = arith.constant 0 : index
    %c768 = arith.constant 768 : index
    %44 = vector.load %arg11[%c0_74, %c0_75, %c768] : memref<16x16x1152xbf16, #tpu.memory_space<vmem>>, vector<16x16x128xbf16>
    tpu.vector_store %arg11[%c0_74, %c0_75, %c768], %43 {strides = array<i32>} : memref<16x16x1152xbf16, #tpu.memory_space<vmem>>, vector<16x16x128xbf16>,
    %c2_76 = arith.constant 2 : index
    %c1_77 = arith.constant 1 : index
    %c0_78 = arith.constant 0 : index
    %45 = vector.load %arg9[%c2_76, %c1_77, %c0_78] : memref<18x18x128xbf16, #tpu.memory_space<vmem>>, vector<16x16x128xbf16>
    %c0_79 = arith.constant 0 : index
    %c0_80 = arith.constant 0 : index
    %c896 = arith.constant 896 : index
    %46 = vector.load %arg11[%c0_79, %c0_80, %c896] : memref<16x16x1152xbf16, #tpu.memory_space<vmem>>, vector<16x16x128xbf16>
    tpu.vector_store %arg11[%c0_79, %c0_80, %c896], %45 {strides = array<i32>} : memref<16x16x1152xbf16, #tpu.memory_space<vmem>>, vector<16x16x128xbf16>,
    %c2_81 = arith.constant 2 : index
    %c2_82 = arith.constant 2 : index
    %c0_83 = arith.constant 0 : index
    %47 = vector.load %arg9[%c2_81, %c2_82, %c0_83] : memref<18x18x128xbf16, #tpu.memory_space<vmem>>, vector<16x16x128xbf16>
    %c0_84 = arith.constant 0 : index
    %c0_85 = arith.constant 0 : index
    %c1024 = arith.constant 1024 : index
    %48 = vector.load %arg11[%c0_84, %c0_85, %c1024] : memref<16x16x1152xbf16, #tpu.memory_space<vmem>>, vector<16x16x128xbf16>
    tpu.vector_store %arg11[%c0_84, %c0_85, %c1024], %47 {strides = array<i32>} : memref<16x16x1152xbf16, #tpu.memory_space<vmem>>, vector<16x16x128xbf16>,
    %c0_86 = arith.constant 0 : index
    %c0_87 = arith.constant 0 : index
    %c0_88 = arith.constant 0 : index
    %49 = vector.load %arg11[%c0_86, %c0_87, %c0_88] : memref<16x16x1152xbf16, #tpu.memory_space<vmem>>, vector<16x16x1152xbf16>
    %50 = vector.shape_cast %49 : vector<16x16x1152xbf16> to vector<256x1152xbf16>
    %c0_89 = arith.constant 0 : index
    %c0_90 = arith.constant 0 : index
    %51 = vector.load %arg4[%c0_89, %c0_90] : memref<1152x128xbf16, #tpu.memory_space<vmem>>, vector<1152x128xbf16>
    %cst_91 = arith.constant dense<0.000000e+00> : vector<256x128xf32>
    %52 = tpu.matmul %50, %51, %cst_91 {dimension_numbers = #tpu.dot_dimension_numbers<[1], [0], [0], [1], [0, 0, 1, 1], [], []>} : vector<256x1152xbf16>, vector<1152x128xbf16>, vector<256x128xf32> -> vector<256x128xf32>
    %c0_92 = arith.constant 0 : index
    %c0_93 = arith.constant 0 : index
    %53 = vector.load %arg5[%c0_92, %c0_93] : memref<1x128xf32, #tpu.memory_space<vmem>>, vector<1x128xf32>
    %54 = vector.broadcast %53 : vector<1x128xf32> to vector<256x128xf32>
    %55 = arith.addf %52, %54 : vector<256x128xf32>
    %cst_94 = arith.constant 0.000000e+00 : f32
    %56 = vector.broadcast %cst_94 : f32 to vector<256x128xf32>
    %57 = arith.cmpf oge, %55, %56 : vector<256x128xf32>
    %cst_95 = arith.constant 0.00999999977 : f32
    %58 = vector.broadcast %cst_95 : f32 to vector<256x128xf32>
    %59 = arith.mulf %58, %55 : vector<256x128xf32>
    %60 = arith.select %57, %55, %59 : vector<256x128xi1>, vector<256x128xf32>
    %61 = vector.shape_cast %60 : vector<256x128xf32> to vector<16x16x128xf32>
    %c0_96 = arith.constant 0 : index
    %c0_97 = arith.constant 0 : index
    %c512_98 = arith.constant 512 : index
    %62 = vector.load %arg11[%c0_96, %c0_97, %c512_98] : memref<16x16x1152xbf16, #tpu.memory_space<vmem>>, vector<16x16x128xbf16>
    %63 = arith.extf %62 : vector<16x16x128xbf16> to vector<16x16x128xf32>
    %64 = arith.addf %61, %63 : vector<16x16x128xf32>
    %65 = arith.truncf %64 : vector<16x16x128xf32> to vector<16x16x128xbf16>
    %c1_99 = arith.constant 1 : index
    %c1_100 = arith.constant 1 : index
    %c0_101 = arith.constant 0 : index
    %66 = vector.load %arg10[%c1_99, %c1_100, %c0_101] : memref<18x18x128xbf16, #tpu.memory_space<vmem>>, vector<16x16x128xbf16>
    tpu.vector_store %arg10[%c1_99, %c1_100, %c0_101], %65 {strides = array<i32>} : memref<18x18x128xbf16, #tpu.memory_space<vmem>>, vector<16x16x128xbf16>,
    %c0_102 = arith.constant 0 : index
    %c0_103 = arith.constant 0 : index
    %c0_104 = arith.constant 0 : index
    %67 = vector.load %arg10[%c0_102, %c0_103, %c0_104] : memref<18x18x128xbf16, #tpu.memory_space<vmem>>, vector<16x16x128xbf16>
    %c0_105 = arith.constant 0 : index
    %c0_106 = arith.constant 0 : index
    %c0_107 = arith.constant 0 : index
    %68 = vector.load %arg11[%c0_105, %c0_106, %c0_107] : memref<16x16x1152xbf16, #tpu.memory_space<vmem>>, vector<16x16x128xbf16>
    tpu.vector_store %arg11[%c0_105, %c0_106, %c0_107], %67 {strides = array<i32>} : memref<16x16x1152xbf16, #tpu.memory_space<vmem>>, vector<16x16x128xbf16>,
    %c0_108 = arith.constant 0 : index
    %c1_109 = arith.constant 1 : index
    %c0_110 = arith.constant 0 : index
    %69 = vector.load %arg10[%c0_108, %c1_109, %c0_110] : memref<18x18x128xbf16, #tpu.memory_space<vmem>>, vector<16x16x128xbf16>
    %c0_111 = arith.constant 0 : index
    %c0_112 = arith.constant 0 : index
    %c128_113 = arith.constant 128 : index
    %70 = vector.load %arg11[%c0_111, %c0_112, %c128_113] : memref<16x16x1152xbf16, #tpu.memory_space<vmem>>, vector<16x16x128xbf16>
    tpu.vector_store %arg11[%c0_111, %c0_112, %c128_113], %69 {strides = array<i32>} : memref<16x16x1152xbf16, #tpu.memory_space<vmem>>, vector<16x16x128xbf16>,
    %c0_114 = arith.constant 0 : index
    %c2_115 = arith.constant 2 : index
    %c0_116 = arith.constant 0 : index
    %71 = vector.load %arg10[%c0_114, %c2_115, %c0_116] : memref<18x18x128xbf16, #tpu.memory_space<vmem>>, vector<16x16x128xbf16>
    %c0_117 = arith.constant 0 : index
    %c0_118 = arith.constant 0 : index
    %c256_119 = arith.constant 256 : index
    %72 = vector.load %arg11[%c0_117, %c0_118, %c256_119] : memref<16x16x1152xbf16, #tpu.memory_space<vmem>>, vector<16x16x128xbf16>
    tpu.vector_store %arg11[%c0_117, %c0_118, %c256_119], %71 {strides = array<i32>} : memref<16x16x1152xbf16, #tpu.memory_space<vmem>>, vector<16x16x128xbf16>,
    %c1_120 = arith.constant 1 : index
    %c0_121 = arith.constant 0 : index
    %c0_122 = arith.constant 0 : index
    %73 = vector.load %arg10[%c1_120, %c0_121, %c0_122] : memref<18x18x128xbf16, #tpu.memory_space<vmem>>, vector<16x16x128xbf16>
    %c0_123 = arith.constant 0 : index
    %c0_124 = arith.constant 0 : index
    %c384_125 = arith.constant 384 : index
    %74 = vector.load %arg11[%c0_123, %c0_124, %c384_125] : memref<16x16x1152xbf16, #tpu.memory_space<vmem>>, vector<16x16x128xbf16>
    tpu.vector_store %arg11[%c0_123, %c0_124, %c384_125], %73 {strides = array<i32>} : memref<16x16x1152xbf16, #tpu.memory_space<vmem>>, vector<16x16x128xbf16>,
    %c1_126 = arith.constant 1 : index
    %c1_127 = arith.constant 1 : index
    %c0_128 = arith.constant 0 : index
    %75 = vector.load %arg10[%c1_126, %c1_127, %c0_128] : memref<18x18x128xbf16, #tpu.memory_space<vmem>>, vector<16x16x128xbf16>
    %c0_129 = arith.constant 0 : index
    %c0_130 = arith.constant 0 : index
    %c512_131 = arith.constant 512 : index
    %76 = vector.load %arg11[%c0_129, %c0_130, %c512_131] : memref<16x16x1152xbf16, #tpu.memory_space<vmem>>, vector<16x16x128xbf16>
    tpu.vector_store %arg11[%c0_129, %c0_130, %c512_131], %75 {strides = array<i32>} : memref<16x16x1152xbf16, #tpu.memory_space<vmem>>, vector<16x16x128xbf16>,
    %c1_132 = arith.constant 1 : index
    %c2_133 = arith.constant 2 : index
    %c0_134 = arith.constant 0 : index
    %77 = vector.load %arg10[%c1_132, %c2_133, %c0_134] : memref<18x18x128xbf16, #tpu.memory_space<vmem>>, vector<16x16x128xbf16>
    %c0_135 = arith.constant 0 : index
    %c0_136 = arith.constant 0 : index
    %c640_137 = arith.constant 640 : index
    %78 = vector.load %arg11[%c0_135, %c0_136, %c640_137] : memref<16x16x1152xbf16, #tpu.memory_space<vmem>>, vector<16x16x128xbf16>
    tpu.vector_store %arg11[%c0_135, %c0_136, %c640_137], %77 {strides = array<i32>} : memref<16x16x1152xbf16, #tpu.memory_space<vmem>>, vector<16x16x128xbf16>,
    %c2_138 = arith.constant 2 : index
    %c0_139 = arith.constant 0 : index
    %c0_140 = arith.constant 0 : index
    %79 = vector.load %arg10[%c2_138, %c0_139, %c0_140] : memref<18x18x128xbf16, #tpu.memory_space<vmem>>, vector<16x16x128xbf16>
    %c0_141 = arith.constant 0 : index
    %c0_142 = arith.constant 0 : index
    %c768_143 = arith.constant 768 : index
    %80 = vector.load %arg11[%c0_141, %c0_142, %c768_143] : memref<16x16x1152xbf16, #tpu.memory_space<vmem>>, vector<16x16x128xbf16>
    tpu.vector_store %arg11[%c0_141, %c0_142, %c768_143], %79 {strides = array<i32>} : memref<16x16x1152xbf16, #tpu.memory_space<vmem>>, vector<16x16x128xbf16>,
    %c2_144 = arith.constant 2 : index
    %c1_145 = arith.constant 1 : index
    %c0_146 = arith.constant 0 : index
    %81 = vector.load %arg10[%c2_144, %c1_145, %c0_146] : memref<18x18x128xbf16, #tpu.memory_space<vmem>>, vector<16x16x128xbf16>
    %c0_147 = arith.constant 0 : index
    %c0_148 = arith.constant 0 : index
    %c896_149 = arith.constant 896 : index
    %82 = vector.load %arg11[%c0_147, %c0_148, %c896_149] : memref<16x16x1152xbf16, #tpu.memory_space<vmem>>, vector<16x16x128xbf16>
    tpu.vector_store %arg11[%c0_147, %c0_148, %c896_149], %81 {strides = array<i32>} : memref<16x16x1152xbf16, #tpu.memory_space<vmem>>, vector<16x16x128xbf16>,
    %c2_150 = arith.constant 2 : index
    %c2_151 = arith.constant 2 : index
    %c0_152 = arith.constant 0 : index
    %83 = vector.load %arg10[%c2_150, %c2_151, %c0_152] : memref<18x18x128xbf16, #tpu.memory_space<vmem>>, vector<16x16x128xbf16>
    %c0_153 = arith.constant 0 : index
    %c0_154 = arith.constant 0 : index
    %c1024_155 = arith.constant 1024 : index
    %84 = vector.load %arg11[%c0_153, %c0_154, %c1024_155] : memref<16x16x1152xbf16, #tpu.memory_space<vmem>>, vector<16x16x128xbf16>
    tpu.vector_store %arg11[%c0_153, %c0_154, %c1024_155], %83 {strides = array<i32>} : memref<16x16x1152xbf16, #tpu.memory_space<vmem>>, vector<16x16x128xbf16>,
    %c0_156 = arith.constant 0 : index
    %c0_157 = arith.constant 0 : index
    %c0_158 = arith.constant 0 : index
    %85 = vector.load %arg11[%c0_156, %c0_157, %c0_158] : memref<16x16x1152xbf16, #tpu.memory_space<vmem>>, vector<16x16x1152xbf16>
    %86 = vector.shape_cast %85 : vector<16x16x1152xbf16> to vector<256x1152xbf16>
    %c0_159 = arith.constant 0 : index
    %c0_160 = arith.constant 0 : index
    %87 = vector.load %arg6[%c0_159, %c0_160] : memref<1152x8xbf16, #tpu.memory_space<vmem>>, vector<1152x8xbf16>
    %cst_161 = arith.constant dense<0.000000e+00> : vector<256x8xf32>
    %88 = tpu.matmul %86, %87, %cst_161 {dimension_numbers = #tpu.dot_dimension_numbers<[1], [0], [0], [1], [0, 0, 1, 1], [], []>} : vector<256x1152xbf16>, vector<1152x8xbf16>, vector<256x8xf32> -> vector<256x8xf32>
    %c0_162 = arith.constant 0 : index
    %c0_163 = arith.constant 0 : index
    %89 = vector.load %arg7[%c0_162, %c0_163] : memref<1x8xf32, #tpu.memory_space<vmem>>, vector<1x8xf32>
    %90 = vector.broadcast %89 : vector<1x8xf32> to vector<256x8xf32>
    %91 = arith.addf %88, %90 : vector<256x8xf32>
    %92 = tpu.transpose %91, [1, 0] : vector<256x8xf32> -> vector<8x256xf32>
    %c0_164 = arith.constant 0 : index
    %c0_165 = arith.constant 0 : index
    %c0_166 = arith.constant 0 : index
    %93 = vector.load %arg8[%c0_164, %c0_165, %c0_166] : memref<1x8x256xf32, #tpu.memory_space<vmem>>, vector<1x8x256xf32>
    %94 = vector.shape_cast %93 : vector<1x8x256xf32> to vector<8x256xf32>
    %95 = vector.shape_cast %92 : vector<8x256xf32> to vector<1x8x256xf32>
    tpu.vector_store %arg8[%c0_164, %c0_165, %c0_166], %95 {strides = array<i32>} : memref<1x8x256xf32, #tpu.memory_space<vmem>>, vector<1x8x256xf32>,
    return
  }
  func.func @transform_0(%arg0: i32) -> (i32, i32, i32) {
    %c0_i32 = arith.constant 0 : i32
    %c0_i32_0 = arith.constant 0 : i32
    %c0_i32_1 = arith.constant 0 : i32
    return %arg0, %c0_i32, %c0_i32_0 : i32, i32, i32
  }
  func.func @transform_1(%arg0: i32) -> (i32, i32) {
    %c0_i32 = arith.constant 0 : i32
    %c0_i32_0 = arith.constant 0 : i32
    %c0_i32_1 = arith.constant 0 : i32
    return %c0_i32, %c0_i32_0 : i32, i32
  }
  func.func @transform_2(%arg0: i32) -> (i32, i32) {
    %c0_i32 = arith.constant 0 : i32
    %c0_i32_0 = arith.constant 0 : i32
    %c0_i32_1 = arith.constant 0 : i32
    return %c0_i32, %c0_i32_0 : i32, i32
  }
  func.func @transform_3(%arg0: i32) -> (i32, i32) {
    %c0_i32 = arith.constant 0 : i32
    %c0_i32_0 = arith.constant 0 : i32
    %c0_i32_1 = arith.constant 0 : i32
    return %c0_i32, %c0_i32_0 : i32, i32
  }
  func.func @transform_4(%arg0: i32) -> (i32, i32) {
    %c0_i32 = arith.constant 0 : i32
    %c0_i32_0 = arith.constant 0 : i32
    %c0_i32_1 = arith.constant 0 : i32
    return %c0_i32, %c0_i32_0 : i32, i32
  }
  func.func @transform_5(%arg0: i32) -> (i32, i32) {
    %c0_i32 = arith.constant 0 : i32
    %c0_i32_0 = arith.constant 0 : i32
    %c0_i32_1 = arith.constant 0 : i32
    return %c0_i32, %c0_i32_0 : i32, i32
  }
  func.func @transform_6(%arg0: i32) -> (i32, i32) {
    %c0_i32 = arith.constant 0 : i32
    %c0_i32_0 = arith.constant 0 : i32
    %c0_i32_1 = arith.constant 0 : i32
    return %c0_i32, %c0_i32_0 : i32, i32
  }
  func.func @transform_7(%arg0: i32) -> (i32, i32, i32) {
    %c0_i32 = arith.constant 0 : i32
    %c0_i32_0 = arith.constant 0 : i32
    %c0_i32_1 = arith.constant 0 : i32
    return %arg0, %c0_i32, %c0_i32_0 : i32, i32, i32
  }
}

</mosaic_0001>

<llo_original>
// kernel: primal_proximal_equivariant_forward.1
$region0: #{primal_proximal_equivariant_forward.1}
  #allocation0 [shape = 'u32[]', space=smem, size = 0x4, offset = 0x4, fixed_abs, tag = 'smem constant byte address 0x4 - core index']
  #allocation1 [shape = 'u32[72,128]{1,0:T(1,128)}', space=vmem, size = 0x9000, scoped, tag = 'internal scratch']
  #allocation2 [shape = 'bf16[18,18,128]{2,1,0:T(8,128)(2,1)}', space=vmem, size = 0x1b000, scoped, tag = 'scratch operand']
  #allocation3 [shape = 'bf16[18,18,128]{2,1,0:T(8,128)(2,1)}', space=vmem, size = 0x1b000, scoped, tag = 'scratch operand']
  #allocation4 [shape = 'bf16[16,16,1152]{2,1,0:T(8,128)(2,1)}', space=vmem, size = 0x90000, scoped, tag = 'scratch operand']
  %s0 = inlined_call_operand.vmem [shape: bf16[2,256,64], index: 0, kind: input, shape index: {}]
  %s1 = inlined_call_operand.vmem [shape: bf16[64,128], index: 1, kind: input, shape index: {}]
  %s2 = inlined_call_operand.vmem [shape: f32[1,128], index: 2, kind: input, shape index: {}]
  %s3 = inlined_call_operand.vmem [shape: bf16[1152,128], index: 3, kind: input, shape index: {}]
  %s4 = inlined_call_operand.vmem [shape: f32[1,128], index: 4, kind: input, shape index: {}]
  %s5 = inlined_call_operand.vmem [shape: bf16[1152,8], index: 5, kind: input, shape index: {}]
  %s6 = inlined_call_operand.vmem [shape: f32[1,8], index: 6, kind: input, shape index: {}]
  %s7 = inlined_call_operand.vmem [shape: f32[2,8,256], index: 7, kind: output, shape index: {}]
  %s8 = sld [smem:[#allocation0]]
  $region61: #{primal_proximal_equivariant_forward.1} parent=0
    _
  %s10 = ssub.s32 1, %s8
  %s11 = scalar_select 0, %s10, %s8
  loop: start=0, step=1, limit=4
  $region2: #{primal_proximal_equivariant_forward.1} parent=0 // loop_pre_header
    _
  $region3: #{primal_proximal_equivariant_forward.1} parent=0 // loop_header
    %s13 = sphi 0, %s17
    %p14 = scmp.ge.s32.totalorder %s13, 4
    %s23 = sphi 0, %s25
    %s26 = sphi 0, %s23
    %s27 = sphi 0, %s26
    %s43 = sphi 0, %s27
    %s47 = sphi 0, %s47
    %s49 = sphi 0, %s47
    %s50 = sphi 0, %s49
    %s64 = sphi 0, %s50
    %s68 = sphi 0, %s68
    %s70 = sphi 0, %s68
    %s71 = sphi 0, %s70
    %s85 = sphi 0, %s71
    %s89 = sphi 0, %s89
    %s91 = sphi 0, %s89
    %s92 = sphi 0, %s91
    %s106 = sphi 0, %s92
    %s110 = sphi 0, %s110
    %s112 = sphi 0, %s110
    %s113 = sphi 0, %s112
    %s127 = sphi 0, %s113
    %s131 = sphi 0, %s131
    %s133 = sphi 0, %s131
    %s134 = sphi 0, %s133
    %s148 = sphi 0, %s134
    %s152 = sphi 0, %s152
    %s154 = sphi 0, %s152
    %s155 = sphi 0, %s154
    %s169 = sphi 0, %s155
    %s175 = sphi 0, %s177
    %s178 = sphi 0, %s175
    %s179 = sphi 0, %s178
    %s195 = sphi 0, %s179
  $region4: #{primal_proximal_equivariant_forward.1} parent=0 // loop_header_branch
    %16 = sbr.rel (%p14) target = $region8
  $region5: #{primal_proximal_equivariant_forward.1} parent=0 // loop_body
    %s18 = ssub.s32 %s13, 1
    %s19 = ssub.s32 %s13, 2
    %s20 = sadd.s32 %s13, 1
    %s21 = ssub.s32 %s13, %s20
    %p22 = scmp.eq.s32.totalorder %s21, 0
    %s24 = sadd.s32 %s23, 1
    %s25 = scalar_select %p22, %s23, %s24
    %p28 = pneg %p22
    %p29 = scmp.eq.s32.totalorder %s13, 1
    %p30 = por %p28, %p29
    %p31 = scmp.ne.s32.totalorder %s23, %s26
    %p32 = scmp.eq.s32.totalorder %s13, 0
    %p33 = por %p31, %p32
    %p34 = scmp.ne.s32.totalorder %s23, %s26
    %p35 = scmp.eq.s32.totalorder %s18, 1
    %p36 = por %p34, %p35
    %p37 = scmp.ne.s32.totalorder %s26, %s27
    %p38 = scmp.eq.s32.totalorder %s18, 0
    %p39 = por %p37, %p38
    %p40 = scmp.ne.s32.totalorder %s26, %s27
    %p41 = scmp.eq.s32.totalorder %s19, 1
    %p42 = por %p40, %p41
    %p44 = scmp.ne.s32.totalorder %s27, %s43
    %p45 = scmp.eq.s32.totalorder %s19, 0
    %p46 = por %p44, %p45
    %s48 = sadd.s32 %s47, 1
    %p51 = scmp.eq.s32.totalorder %s13, 1
    %p52 = scmp.ne.s32.totalorder %s47, %s49
    %p53 = scmp.eq.s32.totalorder %s13, 0
    %p54 = por %p52, %p53
    %p55 = scmp.ne.s32.totalorder %s47, %s49
    %p56 = scmp.eq.s32.totalorder %s18, 1
    %p57 = por %p55, %p56
    %p58 = scmp.ne.s32.totalorder %s49, %s50
    %p59 = scmp.eq.s32.totalorder %s18, 0
    %p60 = por %p58, %p59
    %p61 = scmp.ne.s32.totalorder %s49, %s50
    %p62 = scmp.eq.s32.totalorder %s19, 1
    %p63 = por %p61, %p62
    %p65 = scmp.ne.s32.totalorder %s50, %s64
    %p66 = scmp.eq.s32.totalorder %s19, 0
    %p67 = por %p65, %p66
    %s69 = sadd.s32 %s68, 1
    %p72 = scmp.eq.s32.totalorder %s13, 1
    %p73 = scmp.ne.s32.totalorder %s68, %s70
    %p74 = scmp.eq.s32.totalorder %s13, 0
    %p75 = por %p73, %p74
    %p76 = scmp.ne.s32.totalorder %s68, %s70
    %p77 = scmp.eq.s32.totalorder %s18, 1
    %p78 = por %p76, %p77
    %p79 = scmp.ne.s32.totalorder %s70, %s71
    %p80 = scmp.eq.s32.totalorder %s18, 0
    %p81 = por %p79, %p80
    %p82 = scmp.ne.s32.totalorder %s70, %s71
    %p83 = scmp.eq.s32.totalorder %s19, 1
    %p84 = por %p82, %p83
    %p86 = scmp.ne.s32.totalorder %s71, %s85
    %p87 = scmp.eq.s32.totalorder %s19, 0
    %p88 = por %p86, %p87
    %s90 = sadd.s32 %s89, 1
    %p93 = scmp.eq.s32.totalorder %s13, 1
    %p94 = scmp.ne.s32.totalorder %s89, %s91
    %p95 = scmp.eq.s32.totalorder %s13, 0
    %p96 = por %p94, %p95
    %p97 = scmp.ne.s32.totalorder %s89, %s91
    %p98 = scmp.eq.s32.totalorder %s18, 1
    %p99 = por %p97, %p98
    %p100 = scmp.ne.s32.totalorder %s91, %s92
    %p101 = scmp.eq.s32.totalorder %s18, 0
    %p102 = por %p100, %p101
    %p103 = scmp.ne.s32.totalorder %s91, %s92
    %p104 = scmp.eq.s32.totalorder %s19, 1
    %p105 = por %p103, %p104
    %p107 = scmp.ne.s32.totalorder %s92, %s106
    %p108 = scmp.eq.s32.totalorder %s19, 0
    %p109 = por %p107, %p108
    %s111 = sadd.s32 %s110, 1
    %p114 = scmp.eq.s32.totalorder %s13, 1
    %p115 = scmp.ne.s32.totalorder %s110, %s112
    %p116 = scmp.eq.s32.totalorder %s13, 0
    %p117 = por %p115, %p116
    %p118 = scmp.ne.s32.totalorder %s110, %s112
    %p119 = scmp.eq.s32.totalorder %s18, 1
    %p120 = por %p118, %p119
    %p121 = scmp.ne.s32.totalorder %s112, %s113
    %p122 = scmp.eq.s32.totalorder %s18, 0
    %p123 = por %p121, %p122
    %p124 = scmp.ne.s32.totalorder %s112, %s113
    %p125 = scmp.eq.s32.totalorder %s19, 1
    %p126 = por %p124, %p125
    %p128 = scmp.ne.s32.totalorder %s113, %s127
    %p129 = scmp.eq.s32.totalorder %s19, 0
    %p130 = por %p128, %p129
    %s132 = sadd.s32 %s131, 1
    %p135 = scmp.eq.s32.totalorder %s13, 1
    %p136 = scmp.ne.s32.totalorder %s131, %s133
    %p137 = scmp.eq.s32.totalorder %s13, 0
    %p138 = por %p136, %p137
    %p139 = scmp.ne.s32.totalorder %s131, %s133
    %p140 = scmp.eq.s32.totalorder %s18, 1
    %p141 = por %p139, %p140
    %p142 = scmp.ne.s32.totalorder %s133, %s134
    %p143 = scmp.eq.s32.totalorder %s18, 0
    %p144 = por %p142, %p143
    %p145 = scmp.ne.s32.totalorder %s133, %s134
    %p146 = scmp.eq.s32.totalorder %s19, 1
    %p147 = por %p145, %p146
    %p149 = scmp.ne.s32.totalorder %s134, %s148
    %p150 = scmp.eq.s32.totalorder %s19, 0
    %p151 = por %p149, %p150
    %s153 = sadd.s32 %s152, 1
    %p156 = scmp.eq.s32.totalorder %s13, 1
    %p157 = scmp.ne.s32.totalorder %s152, %s154
    %p158 = scmp.eq.s32.totalorder %s13, 0
    %p159 = por %p157, %p158
    %p160 = scmp.ne.s32.totalorder %s152, %s154
    %p161 = scmp.eq.s32.totalorder %s18, 1
    %p162 = por %p160, %p161
    %p163 = scmp.ne.s32.totalorder %s154, %s155
    %p164 = scmp.eq.s32.totalorder %s18, 0
    %p165 = por %p163, %p164
    %p166 = scmp.ne.s32.totalorder %s154, %s155
    %p167 = scmp.eq.s32.totalorder %s19, 1
    %p168 = por %p166, %p167
    %p170 = scmp.ne.s32.totalorder %s155, %s169
    %p171 = scmp.eq.s32.totalorder %s19, 0
    %p172 = por %p170, %p171
    %s173 = ssub.s32 %s13, %s20
    %p174 = scmp.eq.s32.totalorder %s173, 0
    %s176 = sadd.s32 %s175, 1
    %s177 = scalar_select %p174, %s175, %s176
    %p180 = pneg %p174
    %p181 = scmp.eq.s32.totalorder %s13, 1
    %p182 = por %p180, %p181
    %p183 = scmp.ne.s32.totalorder %s175, %s178
    %p184 = scmp.eq.s32.totalorder %s13, 0
    %p185 = por %p183, %p184
    %p186 = scmp.ne.s32.totalorder %s175, %s178
    %p187 = scmp.eq.s32.totalorder %s18, 1
    %p188 = por %p186, %p187
    %p189 = scmp.ne.s32.totalorder %s178, %s179
    %p190 = scmp.eq.s32.totalorder %s18, 0
    %p191 = por %p189, %p190
    %p192 = scmp.ne.s32.totalorder %s178, %s179
    %p193 = scmp.eq.s32.totalorder %s19, 1
    %p194 = por %p192, %p193
    %p196 = scmp.ne.s32.totalorder %s179, %s195
    %p197 = scmp.eq.s32.totalorder %s19, 0
    %p198 = por %p196, %p197
    %p199 = scmp.le.s32.totalorder 1, %s13
    %p200 = scmp.lt.s32.totalorder %s13, 3
    %p201 = pnand %p199, %p200
    %p202 = pneg %p201
    // Predicated region
    $region9: #{primal_proximal_equivariant_forward.1} parent=5 // pred_check
      _
    $region10: #{primal_proximal_equivariant_forward.1} parent=5 // pred_check_branch
      %204 = sbr.rel (%p201) target = $region12
    $region11: #{primal_proximal_equivariant_forward.1} parent=5 // pred_region
      %s205 = ssub.s32 %s13, 1
      // Predicated region
      $region13: #{primal_proximal_equivariant_forward.1} parent=11 // pred_check
        %p206 = pneg %p60
      $region14: #{primal_proximal_equivariant_forward.1} parent=11 // pred_check_branch
        %208 = sbr.rel (%p206) target = $region16
      $region15: #{primal_proximal_equivariant_forward.1} parent=11 // pred_region
        _
      $region16: #{primal_proximal_equivariant_forward.1} parent=11 // pred_fallthru
        _
      // Predicated region
      $region17: #{primal_proximal_equivariant_forward.1} parent=11 // pred_check
        %p209 = pneg %p81
      $region18: #{primal_proximal_equivariant_forward.1} parent=11 // pred_check_branch
        %211 = sbr.rel (%p209) target = $region20
      $region19: #{primal_proximal_equivariant_forward.1} parent=11 // pred_region
        _
      $region20: #{primal_proximal_equivariant_forward.1} parent=11 // pred_fallthru
        _
      // Predicated region
      $region21: #{primal_proximal_equivariant_forward.1} parent=11 // pred_check
        %p212 = pneg %p102
      $region22: #{primal_proximal_equivariant_forward.1} parent=11 // pred_check_branch
        %214 = sbr.rel (%p212) target = $region24
      $region23: #{primal_proximal_equivariant_forward.1} parent=11 // pred_region
        _
      $region24: #{primal_proximal_equivariant_forward.1} parent=11 // pred_fallthru
        _
      // Predicated region
      $region25: #{primal_proximal_equivariant_forward.1} parent=11 // pred_check
        %p215 = pneg %p123
      $region26: #{primal_proximal_equivariant_forward.1} parent=11 // pred_check_branch
        %217 = sbr.rel (%p215) target = $region28
      $region27: #{primal_proximal_equivariant_forward.1} parent=11 // pred_region
        _
      $region28: #{primal_proximal_equivariant_forward.1} parent=11 // pred_fallthru
        _
      // Predicated region
      $region29: #{primal_proximal_equivariant_forward.1} parent=11 // pred_check
        %p218 = pneg %p144
      $region30: #{primal_proximal_equivariant_forward.1} parent=11 // pred_check_branch
        %220 = sbr.rel (%p218) target = $region32
      $region31: #{primal_proximal_equivariant_forward.1} parent=11 // pred_region
        _
      $region32: #{primal_proximal_equivariant_forward.1} parent=11 // pred_fallthru
        _
      // Predicated region
      $region33: #{primal_proximal_equivariant_forward.1} parent=11 // pred_check
        %p221 = pneg %p165
      $region34: #{primal_proximal_equivariant_forward.1} parent=11 // pred_check_branch
        %223 = sbr.rel (%p221) target = $region36
      $region35: #{primal_proximal_equivariant_forward.1} parent=11 // pred_region
        _
      $region36: #{primal_proximal_equivariant_forward.1} parent=11 // pred_fallthru
        _
    $region12: #{primal_proximal_equivariant_forward.1} parent=5 // pred_fallthru
      _
    %p224 = scmp.lt.s32.totalorder %s13, 2
    // Predicated region
    $region37: #{primal_proximal_equivariant_forward.1} parent=5 // pred_check
      %p225 = pneg %p224
    $region38: #{primal_proximal_equivariant_forward.1} parent=5 // pred_check_branch
      %227 = sbr.rel (%p225) target = $region40
    $region39: #{primal_proximal_equivariant_forward.1} parent=5 // pred_region
      // Predicated region
      $region41: #{primal_proximal_equivariant_forward.1} parent=39 // pred_check
        %p228 = pneg %p33
      $region42: #{primal_proximal_equivariant_forward.1} parent=39 // pred_check_branch
        %230 = sbr.rel (%p228) target = $region44
      $region43: #{primal_proximal_equivariant_forward.1} parent=39 // pred_region
        %p231 = scmp.lt.s32.totalorder %s13, 1
        %s232 = scalar_select %p231, %s13, 1
        %s233 = smul.addr %s232, 32
        %s234 = smul.addr %s233, 4
        %s235 = scalar_lea.vmem %s0, %s234
      $region44: #{primal_proximal_equivariant_forward.1} parent=39 // pred_fallthru
        _
    $region40: #{primal_proximal_equivariant_forward.1} parent=5 // pred_fallthru
      _
    %p236 = scmp.le.s32.totalorder 1, %s13
    %p237 = scmp.lt.s32.totalorder %s13, 3
    %p238 = pnand %p236, %p237
    %p239 = pneg %p238
    // Predicated region
    $region45: #{primal_proximal_equivariant_forward.1} parent=5 // pred_check
      _
    $region46: #{primal_proximal_equivariant_forward.1} parent=5 // pred_check_branch
      %241 = sbr.rel (%p238) target = $region48
    $region47: #{primal_proximal_equivariant_forward.1} parent=5 // pred_region
      %s242 = ssub.s32 %s13, 1
      %p243 = scmp.lt.s32.totalorder %s18, 1
      %s244 = scalar_select %p243, %s18, 1
      %s245 = smul.addr %s244, 32
      %s246 = smul.addr %s245, 4
      %s247 = scalar_lea.vmem %s0, %s246
      %p248 = pneg %p39
      %p249 = pneg %p36
      %p250 = pneg %p60
      %p251 = pneg %p57
      %p252 = pneg %p81
      %p253 = pneg %p78
      %p254 = pneg %p102
      %p255 = pneg %p99
      %p256 = pneg %p123
      %p257 = pneg %p120
      %p258 = pneg %p144
      %p259 = pneg %p141
      %p260 = pneg %p165
      %p261 = pneg %p162
      %p262 = pneg %p191
      %p263 = pneg %p188
      %p264 = scmp.lt.s32.totalorder %s18, 1
      %s265 = scalar_select %p264, %s18, 1
      %s266 = smul.addr %s265, 2
      %s267 = smul.addr %s266, 8
      %s268 = scalar_lea.vmem %s7, %s267
      %p269 = scmp.lt.s32.totalorder %s18, 1
      %s270 = scalar_select %p269, %s18, 1
      %s271 = smul.addr %s270, 32
      %s272 = smul.addr %s271, 4
      %s273 = scalar_lea.vmem %s0, %s272
      %p274 = scmp.lt.s32.totalorder %s18, 1
      %s275 = scalar_select %p274, %s18, 1
      %s276 = smul.addr %s275, 2
      %s277 = smul.addr %s276, 8
      %s278 = scalar_lea.vmem %s7, %s277
      %280 = vst [vmem:[#allocation2] sm:$0xf] 0
      %281 = vst [vmem:[#allocation2 + $0x4] sm:$0xf] 0
      %282 = vst [vmem:[#allocation2 + $0x8] sm:$0x1] 0
      %s283 = scalar_lea.vmem [#allocation2], 204
      %284 = vst [vmem:[%s283] sm:$0xf] 0
      %285 = vst [vmem:[%s283 + $0x4] sm:$0xf] 0
      %286 = vst [vmem:[%s283 + $0x8] sm:$0x1] 0
      %vm287 = vcmask 1040384
      %vm288 = vsmask.f32 256
      %vm289 = vmand %vm287, %vm288
      %v290 = vld [vmem:[#allocation2] sm:$0x1]
      %v291 = vsel %vm289, 0, %v290
      %292 = vst [vmem:[#allocation2] sm:$0x1] %v291
      %v293 = vld [vmem:[#allocation2 + $0xc] sm:$0x1]
      %v294 = vsel %vm289, 0, %v293
      %295 = vst [vmem:[#allocation2 + $0xc] sm:$0x1] %v294
      %v296 = vld [vmem:[#allocation2 + $0x18] sm:$0x1]
      %v297 = vsel %vm289, 0, %v296
      %298 = vst [vmem:[#allocation2 + $0x18] sm:$0x1] %v297
      %v299 = vld [vmem:[#allocation2 + $0x24] sm:$0x1]
      %v300 = vsel %vm289, 0, %v299
      %301 = vst [vmem:[#allocation2 + $0x24] sm:$0x1] %v300
      %v302 = vld [vmem:[#allocation2 + $0x30] sm:$0x1]
      %v303 = vsel %vm289, 0, %v302
      %304 = vst [vmem:[#allocation2 + $0x30] sm:$0x1] %v303
      %v305 = vld [vmem:[#allocation2 + $0x3c] sm:$0x1]
      %v306 = vsel %vm289, 0, %v305
      %307 = vst [vmem:[#allocation2 + $0x3c] sm:$0x1] %v306
      %v308 = vld [vmem:[#allocation2 + $0x48] sm:$0x1]
      %v309 = vsel %vm289, 0, %v308
      %310 = vst [vmem:[#allocation2 + $0x48] sm:$0x1] %v309
      %v311 = vld [vmem:[#allocation2 + $0x54] sm:$0x1]
      %v312 = vsel %vm289, 0, %v311
      %313 = vst [vmem:[#allocation2 + $0x54] sm:$0x1] %v312
      %v314 = vld [vmem:[#allocation2 + $0x60] sm:$0x1]
      %v315 = vsel %vm289, 0, %v314
      %316 = vst [vmem:[#allocation2 + $0x60] sm:$0x1] %v315
      %v317 = vld [vmem:[#allocation2 + $0x6c] sm:$0x1]
      %v318 = vsel %vm289, 0, %v317
      %319 = vst [vmem:[#allocation2 + $0x6c] sm:$0x1] %v318
      %v320 = vld [vmem:[#allocation2 + $0x78] sm:$0x1]
      %v321 = vsel %vm289, 0, %v320
      %322 = vst [vmem:[#allocation2 + $0x78] sm:$0x1] %v321
      %v323 = vld [vmem:[#allocation2 + $0x84] sm:$0x1]
      %v324 = vsel %vm289, 0, %v323
      %325 = vst [vmem:[#allocation2 + $0x84] sm:$0x1] %v324
      %v326 = vld [vmem:[#allocation2 + $0x90] sm:$0x1]
      %v327 = vsel %vm289, 0, %v326
      %328 = vst [vmem:[#allocation2 + $0x90] sm:$0x1] %v327
      %v329 = vld [vmem:[#allocation2 + $0x9c] sm:$0x1]
      %v330 = vsel %vm289, 0, %v329
      %331 = vst [vmem:[#allocation2 + $0x9c] sm:$0x1] %v330
      %v332 = vld [vmem:[#allocation2 + $0xa8] sm:$0x1]
      %v333 = vsel %vm289, 0, %v332
      %334 = vst [vmem:[#allocation2 + $0xa8] sm:$0x1] %v333
      %v335 = vld [vmem:[#allocation2 + $0xb4] sm:$0x1]
      %v336 = vsel %vm289, 0, %v335
      %337 = vst [vmem:[#allocation2 + $0xb4] sm:$0x1] %v336
      %v338 = vld [vmem:[#allocation2 + $0xc0] sm:$0x1]
      %v339 = vsel %vm289, 0, %v338
      %340 = vst [vmem:[#allocation2 + $0xc0] sm:$0x1] %v339
      %v341 = vld [vmem:[#allocation2 + $0xcc] sm:$0x1]
      %v342 = vsel %vm289, 0, %v341
      %343 = vst [vmem:[#allocation2 + $0xcc] sm:$0x1] %v342
      %vm344 = vsmask.f32 7938
      %vm345 = vmand %vm287, %vm344
      %v346 = vld [vmem:[#allocation2 + $0x8] sm:$0x1]
      %v347 = vsel %vm345, 0, %v346
      %348 = vst [vmem:[#allocation2 + $0x8] sm:$0x1] %v347
      %v349 = vld [vmem:[#allocation2 + $0x14] sm:$0x1]
      %v350 = vsel %vm345, 0, %v349
      %351 = vst [vmem:[#allocation2 + $0x14] sm:$0x1] %v350
      %v352 = vld [vmem:[#allocation2 + $0x20] sm:$0x1]
      %v353 = vsel %vm345, 0, %v352
      %354 = vst [vmem:[#allocation2 + $0x20] sm:$0x1] %v353
      %v355 = vld [vmem:[#allocation2 + $0x2c] sm:$0x1]
      %v356 = vsel %vm345, 0, %v355
      %357 = vst [vmem:[#allocation2 + $0x2c] sm:$0x1] %v356
      %v358 = vld [vmem:[#allocation2 + $0x38] sm:$0x1]
      %v359 = vsel %vm345, 0, %v358
      %360 = vst [vmem:[#allocation2 + $0x38] sm:$0x1] %v359
      %v361 = vld [vmem:[#allocation2 + $0x44] sm:$0x1]
      %v362 = vsel %vm345, 0, %v361
      %363 = vst [vmem:[#allocation2 + $0x44] sm:$0x1] %v362
      %v364 = vld [vmem:[#allocation2 + $0x50] sm:$0x1]
      %v365 = vsel %vm345, 0, %v364
      %366 = vst [vmem:[#allocation2 + $0x50] sm:$0x1] %v365
      %v367 = vld [vmem:[#allocation2 + $0x5c] sm:$0x1]
      %v368 = vsel %vm345, 0, %v367
      %369 = vst [vmem:[#allocation2 + $0x5c] sm:$0x1] %v368
      %v370 = vld [vmem:[#allocation2 + $0x68] sm:$0x1]
      %v371 = vsel %vm345, 0, %v370
      %372 = vst [vmem:[#allocation2 + $0x68] sm:$0x1] %v371
      %v373 = vld [vmem:[#allocation2 + $0x74] sm:$0x1]
      %v374 = vsel %vm345, 0, %v373
      %375 = vst [vmem:[#allocation2 + $0x74] sm:$0x1] %v374
      %v376 = vld [vmem:[#allocation2 + $0x80] sm:$0x1]
      %v377 = vsel %vm345, 0, %v376
      %378 = vst [vmem:[#allocation2 + $0x80] sm:$0x1] %v377
      %v379 = vld [vmem:[#allocation2 + $0x8c] sm:$0x1]
      %v380 = vsel %vm345, 0, %v379
      %381 = vst [vmem:[#allocation2 + $0x8c] sm:$0x1] %v380
      %v382 = vld [vmem:[#allocation2 + $0x98] sm:$0x1]
      %v383 = vsel %vm345, 0, %v382
      %384 = vst [vmem:[#allocation2 + $0x98] sm:$0x1] %v383
      %v385 = vld [vmem:[#allocation2 + $0xa4] sm:$0x1]
      %v386 = vsel %vm345, 0, %v385
      %387 = vst [vmem:[#allocation2 + $0xa4] sm:$0x1] %v386
      %v388 = vld [vmem:[#allocation2 + $0xb0] sm:$0x1]
      %v389 = vsel %vm345, 0, %v388
      %390 = vst [vmem:[#allocation2 + $0xb0] sm:$0x1] %v389
      %v391 = vld [vmem:[#allocation2 + $0xbc] sm:$0x1]
      %v392 = vsel %vm345, 0, %v391
      %393 = vst [vmem:[#allocation2 + $0xbc] sm:$0x1] %v392
      %v394 = vld [vmem:[#allocation2 + $0xc8] sm:$0x1]
      %v395 = vsel %vm345, 0, %v394
      %396 = vst [vmem:[#allocation2 + $0xc8] sm:$0x1] %v395
      %v397 = vld [vmem:[#allocation2 + $0xd4] sm:$0x1]
      %v398 = vsel %vm345, 0, %v397
      %399 = vst [vmem:[#allocation2 + $0xd4] sm:$0x1] %v398
      %400 = vst [vmem:[#allocation3] sm:$0xf] 0
      %401 = vst [vmem:[#allocation3 + $0x4] sm:$0xf] 0
      %402 = vst [vmem:[#allocation3 + $0x8] sm:$0x1] 0
      %s403 = scalar_lea.vmem [#allocation3], 204
      %404 = vst [vmem:[%s403] sm:$0xf] 0
      %405 = vst [vmem:[%s403 + $0x4] sm:$0xf] 0
      %406 = vst [vmem:[%s403 + $0x8] sm:$0x1] 0
      %v407 = vld [vmem:[#allocation3] sm:$0x1]
      %v408 = vsel %vm289, 0, %v407
      %409 = vst [vmem:[#allocation3] sm:$0x1] %v408
      %v410 = vld [vmem:[#allocation3 + $0xc] sm:$0x1]
      %v411 = vsel %vm289, 0, %v410
      %412 = vst [vmem:[#allocation3 + $0xc] sm:$0x1] %v411
      %v413 = vld [vmem:[#allocation3 + $0x18] sm:$0x1]
      %v414 = vsel %vm289, 0, %v413
      %415 = vst [vmem:[#allocation3 + $0x18] sm:$0x1] %v414
      %v416 = vld [vmem:[#allocation3 + $0x24] sm:$0x1]
      %v417 = vsel %vm289, 0, %v416
      %418 = vst [vmem:[#allocation3 + $0x24] sm:$0x1] %v417
      %v419 = vld [vmem:[#allocation3 + $0x30] sm:$0x1]
      %v420 = vsel %vm289, 0, %v419
      %421 = vst [vmem:[#allocation3 + $0x30] sm:$0x1] %v420
      %v422 = vld [vmem:[#allocation3 + $0x3c] sm:$0x1]
      %v423 = vsel %vm289, 0, %v422
      %424 = vst [vmem:[#allocation3 + $0x3c] sm:$0x1] %v423
      %v425 = vld [vmem:[#allocation3 + $0x48] sm:$0x1]
      %v426 = vsel %vm289, 0, %v425
      %427 = vst [vmem:[#allocation3 + $0x48] sm:$0x1] %v426
      %v428 = vld [vmem:[#allocation3 + $0x54] sm:$0x1]
      %v429 = vsel %vm289, 0, %v428
      %430 = vst [vmem:[#allocation3 + $0x54] sm:$0x1] %v429
      %v431 = vld [vmem:[#allocation3 + $0x60] sm:$0x1]
      %v432 = vsel %vm289, 0, %v431
      %433 = vst [vmem:[#allocation3 + $0x60] sm:$0x1] %v432
      %v434 = vld [vmem:[#allocation3 + $0x6c] sm:$0x1]
      %v435 = vsel %vm289, 0, %v434
      %436 = vst [vmem:[#allocation3 + $0x6c] sm:$0x1] %v435
      %v437 = vld [vmem:[#allocation3 + $0x78] sm:$0x1]
      %v438 = vsel %vm289, 0, %v437
      %439 = vst [vmem:[#allocation3 + $0x78] sm:$0x1] %v438
      %v440 = vld [vmem:[#allocation3 + $0x84] sm:$0x1]
      %v441 = vsel %vm289, 0, %v440
      %442 = vst [vmem:[#allocation3 + $0x84] sm:$0x1] %v441
      %v443 = vld [vmem:[#allocation3 + $0x90] sm:$0x1]
      %v444 = vsel %vm289, 0, %v443
      %445 = vst [vmem:[#allocation3 + $0x90] sm:$0x1] %v444
      %v446 = vld [vmem:[#allocation3 + $0x9c] sm:$0x1]
      %v447 = vsel %vm289, 0, %v446
      %448 = vst [vmem:[#allocation3 + $0x9c] sm:$0x1] %v447
      %v449 = vld [vmem:[#allocation3 + $0xa8] sm:$0x1]
      %v450 = vsel %vm289, 0, %v449
      %451 = vst [vmem:[#allocation3 + $0xa8] sm:$0x1] %v450
      %v452 = vld [vmem:[#allocation3 + $0xb4] sm:$0x1]
      %v453 = vsel %vm289, 0, %v452
      %454 = vst [vmem:[#allocation3 + $0xb4] sm:$0x1] %v453
      %v455 = vld [vmem:[#allocation3 + $0xc0] sm:$0x1]
      %v456 = vsel %vm289, 0, %v455
      %457 = vst [vmem:[#allocation3 + $0xc0] sm:$0x1] %v456
      %v458 = vld [vmem:[#allocation3 + $0xcc] sm:$0x1]
      %v459 = vsel %vm289, 0, %v458
      %460 = vst [vmem:[#allocation3 + $0xcc] sm:$0x1] %v459
      %v461 = vld [vmem:[#allocation3 + $0x8] sm:$0x1]
      %v462 = vsel %vm345, 0, %v461
      %463 = vst [vmem:[#allocation3 + $0x8] sm:$0x1] %v462
      %v464 = vld [vmem:[#allocation3 + $0x14] sm:$0x1]
      %v465 = vsel %vm345, 0, %v464
      %466 = vst [vmem:[#allocation3 + $0x14] sm:$0x1] %v465
      %v467 = vld [vmem:[#allocation3 + $0x20] sm:$0x1]
      %v468 = vsel %vm345, 0, %v467
      %469 = vst [vmem:[#allocation3 + $0x20] sm:$0x1] %v468
      %v470 = vld [vmem:[#allocation3 + $0x2c] sm:$0x1]
      %v471 = vsel %vm345, 0, %v470
      %472 = vst [vmem:[#allocation3 + $0x2c] sm:$0x1] %v471
      %v473 = vld [vmem:[#allocation3 + $0x38] sm:$0x1]
      %v474 = vsel %vm345, 0, %v473
      %475 = vst [vmem:[#allocation3 + $0x38] sm:$0x1] %v474
      %v476 = vld [vmem:[#allocation3 + $0x44] sm:$0x1]
      %v477 = vsel %vm345, 0, %v476
      %478 = vst [vmem:[#allocation3 + $0x44] sm:$0x1] %v477
      %v479 = vld [vmem:[#allocation3 + $0x50] sm:$0x1]
      %v480 = vsel %vm345, 0, %v479
      %481 = vst [vmem:[#allocation3 + $0x50] sm:$0x1] %v480
      %v482 = vld [vmem:[#allocation3 + $0x5c] sm:$0x1]
      %v483 = vsel %vm345, 0, %v482
      %484 = vst [vmem:[#allocation3 + $0x5c] sm:$0x1] %v483
      %v485 = vld [vmem:[#allocation3 + $0x68] sm:$0x1]
      %v486 = vsel %vm345, 0, %v485
      %487 = vst [vmem:[#allocation3 + $0x68] sm:$0x1] %v486
      %v488 = vld [vmem:[#allocation3 + $0x74] sm:$0x1]
      %v489 = vsel %vm345, 0, %v488
      %490 = vst [vmem:[#allocation3 + $0x74] sm:$0x1] %v489
      %v491 = vld [vmem:[#allocation3 + $0x80] sm:$0x1]
      %v492 = vsel %vm345, 0, %v491
      %493 = vst [vmem:[#allocation3 + $0x80] sm:$0x1] %v492
      %v494 = vld [vmem:[#allocation3 + $0x8c] sm:$0x1]
      %v495 = vsel %vm345, 0, %v494
      %496 = vst [vmem:[#allocation3 + $0x8c] sm:$0x1] %v495
      %v497 = vld [vmem:[#allocation3 + $0x98] sm:$0x1]
      %v498 = vsel %vm345, 0, %v497
      %499 = vst [vmem:[#allocation3 + $0x98] sm:$0x1] %v498
      %v500 = vld [vmem:[#allocation3 + $0xa4] sm:$0x1]
      %v501 = vsel %vm345, 0, %v500
      %502 = vst [vmem:[#allocation3 + $0xa4] sm:$0x1] %v501
      %v503 = vld [vmem:[#allocation3 + $0xb0] sm:$0x1]
      %v504 = vsel %vm345, 0, %v503
      %505 = vst [vmem:[#allocation3 + $0xb0] sm:$0x1] %v504
      %v506 = vld [vmem:[#allocation3 + $0xbc] sm:$0x1]
      %v507 = vsel %vm345, 0, %v506
      %508 = vst [vmem:[#allocation3 + $0xbc] sm:$0x1] %v507
      %v509 = vld [vmem:[#allocation3 + $0xc8] sm:$0x1]
      %v510 = vsel %vm345, 0, %v509
      %511 = vst [vmem:[#allocation3 + $0xc8] sm:$0x1] %v510
      %v512 = vld [vmem:[#allocation3 + $0xd4] sm:$0x1]
      %v513 = vsel %vm345, 0, %v512
      %514 = vst [vmem:[#allocation3 + $0xd4] sm:$0x1] %v513
      %v515 = vld [vmem:[%s273] sm:$0xf]
      %v516 = vld [vmem:[%s273 + $0x4] sm:$0xf]
      %v517 = vld [vmem:[%s273 + $0x8] sm:$0xf]
      %v518 = vld [vmem:[%s273 + $0xc] sm:$0xf]
      %v519 = vld [vmem:[%s273 + $0x10] sm:$0xf]
      %v520 = vld [vmem:[%s273 + $0x14] sm:$0xf]
      %v521 = vld [vmem:[%s273 + $0x18] sm:$0xf]
      %v522 = vld [vmem:[%s273 + $0x1c] sm:$0xf]
      %v523 = vld [vmem:[%s273 + $0x20] sm:$0xf]
      %v524 = vld [vmem:[%s273 + $0x24] sm:$0xf]
      %v525 = vld [vmem:[%s273 + $0x28] sm:$0xf]
      %v526 = vld [vmem:[%s273 + $0x2c] sm:$0xf]
      %v527 = vld [vmem:[%s273 + $0x30] sm:$0xf]
      %v528 = vld [vmem:[%s273 + $0x34] sm:$0xf]
      %v529 = vld [vmem:[%s273 + $0x38] sm:$0xf]
      %v530 = vld [vmem:[%s273 + $0x3c] sm:$0xf]
      %v531 = vld [vmem:[%s273 + $0x40] sm:$0xf]
      %v532 = vld [vmem:[%s273 + $0x44] sm:$0xf]
      %v533 = vld [vmem:[%s273 + $0x48] sm:$0xf]
      %v534 = vld [vmem:[%s273 + $0x4c] sm:$0xf]
      %v535 = vld [vmem:[%s273 + $0x50] sm:$0xf]
      %v536 = vld [vmem:[%s273 + $0x54] sm:$0xf]
      %v537 = vld [vmem:[%s273 + $0x58] sm:$0xf]
      %v538 = vld [vmem:[%s273 + $0x5c] sm:$0xf]
      %v539 = vld [vmem:[%s273 + $0x60] sm:$0xf]
      %v540 = vld [vmem:[%s273 + $0x64] sm:$0xf]
      %v541 = vld [vmem:[%s273 + $0x68] sm:$0xf]
      %v542 = vld [vmem:[%s273 + $0x6c] sm:$0xf]
      %v543 = vld [vmem:[%s273 + $0x70] sm:$0xf]
      %v544 = vld [vmem:[%s273 + $0x74] sm:$0xf]
      %v545 = vld [vmem:[%s273 + $0x78] sm:$0xf]
      %v546 = vld [vmem:[%s273 + $0x7c] sm:$0xf]
      %v547 = vld [vmem:[%s1] sm:$0xf]
      %v548 = vld [vmem:[%s1 + $0x4] sm:$0xf]
      %v549 = vld [vmem:[%s1 + $0x8] sm:$0xf]
      %v550 = vld [vmem:[%s1 + $0xc] sm:$0xf]
      %v551 = vld [vmem:[%s1 + $0x10] sm:$0xf]
      %v552 = vld [vmem:[%s1 + $0x14] sm:$0xf]
      %v553 = vld [vmem:[%s1 + $0x18] sm:$0xf]
      %v554 = vld [vmem:[%s1 + $0x1c] sm:$0xf]
      %v555 = vld [vmem:[%s2] sm:$0x1]
      %v557 = vperm.slane %v555, 0
      %v591 = vunpack.c.l.b16 %v515
      %v592 = vunpack.c.l.b16 %v516
      %v593 = vunpack.c.l.b16 %v517
      %v594 = vunpack.c.l.b16 %v518
      %v595 = vunpack.c.l.b16 %v519
      %v596 = vunpack.c.l.b16 %v520
      %v597 = vunpack.c.l.b16 %v521
      %v598 = vunpack.c.l.b16 %v522
      %v599 = vunpack.c.l.b16 %v523
      %v600 = vunpack.c.l.b16 %v524
      %v601 = vunpack.c.l.b16 %v525
      %v602 = vunpack.c.l.b16 %v526
      %v603 = vunpack.c.l.b16 %v527
      %v604 = vunpack.c.l.b16 %v528
      %v605 = vunpack.c.l.b16 %v529
      %v606 = vunpack.c.l.b16 %v530
      %v607 = vunpack.c.l.b16 %v531
      %v608 = vunpack.c.l.b16 %v532
      %v609 = vunpack.c.l.b16 %v533
      %v610 = vunpack.c.l.b16 %v534
      %v611 = vunpack.c.l.b16 %v535
      %v612 = vunpack.c.l.b16 %v536
      %v613 = vunpack.c.l.b16 %v537
      %v614 = vunpack.c.l.b16 %v538
      %v615 = vunpack.c.l.b16 %v539
      %v616 = vunpack.c.l.b16 %v540
      %v617 = vunpack.c.l.b16 %v541
      %v618 = vunpack.c.l.b16 %v542
      %v619 = vunpack.c.l.b16 %v543
      %v620 = vunpack.c.l.b16 %v544
      %v621 = vunpack.c.l.b16 %v545
      %v622 = vunpack.c.l.b16 %v546
      %v623 = vpack.c.b16 %v592, %v591
      %v624 = vpack.c.b16 %v594, %v593
      %v625 = vpack.c.b16 %v596, %v595
      %v626 = vpack.c.b16 %v598, %v597
      %v627 = vpack.c.b16 %v600, %v599
      %v628 = vpack.c.b16 %v602, %v601
      %v629 = vpack.c.b16 %v604, %v603
      %v630 = vpack.c.b16 %v606, %v605
      %v631 = vpack.c.b16 %v608, %v607
      %v632 = vpack.c.b16 %v610, %v609
      %v633 = vpack.c.b16 %v612, %v611
      %v634 = vpack.c.b16 %v614, %v613
      %v635 = vpack.c.b16 %v616, %v615
      %v636 = vpack.c.b16 %v618, %v617
      %v637 = vpack.c.b16 %v620, %v619
      %v638 = vpack.c.b16 %v622, %v621
      %v647 = vunpack.c.l.b16 %v547
      %v648 = vunpack.c.l.b16 %v548
      %v649 = vunpack.c.l.b16 %v549
      %v650 = vunpack.c.l.b16 %v550
      %v651 = vunpack.c.l.b16 %v551
      %v652 = vunpack.c.l.b16 %v552
      %v653 = vunpack.c.l.b16 %v553
      %v654 = vunpack.c.l.b16 %v554
      %v655 = vpack.c.b16 %v648, %v647
      %v656 = vpack.c.b16 %v650, %v649
      %v657 = vpack.c.b16 %v652, %v651
      %v658 = vpack.c.b16 %v654, %v653
      %vm663 = vcmask 523264
      %v665 = vsel %vm663, %v623, 0
      %v668 = vsel %vm663, %v624, 0
      %v671 = vsel %vm663, %v625, 0
      %v674 = vsel %vm663, %v626, 0
      %v677 = vsel %vm663, %v627, 0
      %v680 = vsel %vm663, %v628, 0
      %v683 = vsel %vm663, %v629, 0
      %v686 = vsel %vm663, %v630, 0
      %v689 = vsel %vm663, %v631, 0
      %v692 = vsel %vm663, %v632, 0
      %v695 = vsel %vm663, %v633, 0
      %v698 = vsel %vm663, %v634, 0
      %v701 = vsel %vm663, %v635, 0
      %v704 = vsel %vm663, %v636, 0
      %v707 = vsel %vm663, %v637, 0
      %v710 = vsel %vm663, %v638, 0
      %712 = vmatpush.bf16.msra.mxu0 0
      %713 = vmatpush.bf16.msra.mxu0 0
      %714 = vmatpush.bf16.msra.mxu0 0
      %715 = vmatpush.bf16.msra.mxu0 0
      %716 = vmatpush.bf16.msra.mxu0 %v658
      %717 = vmatpush.bf16.msra.mxu0 %v657
      %718 = vmatpush.bf16.msra.mxu0 %v656
      %719 = vmatpush.bf16.msra.mxu0 %v655
      %720 = vmatmul.bf16.gmra.mxu0 %v665
      %v721 = vpop.f32.mrf.mxu0
      %v722 = vadd.f32 %v557, %v721
      %v723 = vpop.f32.mrf.mxu0
      %v724 = vadd.f32 %v557, %v723
      %725 = vmatmul.bf16.gmra.mxu0 %v668
      %v726 = vpop.f32.mrf.mxu0
      %v727 = vadd.f32 %v557, %v726
      %v728 = vpop.f32.mrf.mxu0
      %v729 = vadd.f32 %v557, %v728
      %730 = vmatmul.bf16.gmra.mxu0 %v671
      %v731 = vpop.f32.mrf.mxu0
      %v732 = vadd.f32 %v557, %v731
      %v733 = vpop.f32.mrf.mxu0
      %v734 = vadd.f32 %v557, %v733
      %735 = vmatmul.bf16.gmra.mxu0 %v674
      %v736 = vpop.f32.mrf.mxu0
      %v737 = vadd.f32 %v557, %v736
      %v738 = vpop.f32.mrf.mxu0
      %v739 = vadd.f32 %v557, %v738
      %740 = vmatmul.bf16.gmra.mxu0 %v677
      %v741 = vpop.f32.mrf.mxu0
      %v742 = vadd.f32 %v557, %v741
      %v743 = vpop.f32.mrf.mxu0
      %v744 = vadd.f32 %v557, %v743
      %745 = vmatmul.bf16.gmra.mxu0 %v680
      %v746 = vpop.f32.mrf.mxu0
      %v747 = vadd.f32 %v557, %v746
      %v748 = vpop.f32.mrf.mxu0
      %v749 = vadd.f32 %v557, %v748
      %750 = vmatmul.bf16.gmra.mxu0 %v683
      %v751 = vpop.f32.mrf.mxu0
      %v752 = vadd.f32 %v557, %v751
      %v753 = vpop.f32.mrf.mxu0
      %v754 = vadd.f32 %v557, %v753
      %755 = vmatmul.bf16.gmra.mxu0 %v686
      %v756 = vpop.f32.mrf.mxu0
      %v757 = vadd.f32 %v557, %v756
      %v758 = vpop.f32.mrf.mxu0
      %v759 = vadd.f32 %v557, %v758
      %760 = vmatmul.bf16.gmra.mxu0 %v689
      %v761 = vpop.f32.mrf.mxu0
      %v762 = vadd.f32 %v557, %v761
      %v763 = vpop.f32.mrf.mxu0
      %v764 = vadd.f32 %v557, %v763
      %765 = vmatmul.bf16.gmra.mxu0 %v692
      %v766 = vpop.f32.mrf.mxu0
      %v767 = vadd.f32 %v557, %v766
      %v768 = vpop.f32.mrf.mxu0
      %v769 = vadd.f32 %v557, %v768
      %770 = vmatmul.bf16.gmra.mxu0 %v695
      %v771 = vpop.f32.mrf.mxu0
      %v772 = vadd.f32 %v557, %v771
      %v773 = vpop.f32.mrf.mxu0
      %v774 = vadd.f32 %v557, %v773
      %775 = vmatmul.bf16.gmra.mxu0 %v698
      %v776 = vpop.f32.mrf.mxu0
      %v777 = vadd.f32 %v557, %v776
      %v778 = vpop.f32.mrf.mxu0
      %v779 = vadd.f32 %v557, %v778
      %780 = vmatmul.bf16.gmra.mxu0 %v701
      %v781 = vpop.f32.mrf.mxu0
      %v782 = vadd.f32 %v557, %v781
      %v783 = vpop.f32.mrf.mxu0
      %v784 = vadd.f32 %v557, %v783
      %785 = vmatmul.bf16.gmra.mxu0 %v704
      %v786 = vpop.f32.mrf.mxu0
      %v787 = vadd.f32 %v557, %v786
      %v788 = vpop.f32.mrf.mxu0
      %v789 = vadd.f32 %v557, %v788
      %790 = vmatmul.bf16.gmra.mxu0 %v707
      %v791 = vpop.f32.mrf.mxu0
      %v792 = vadd.f32 %v557, %v791
      %v793 = vpop.f32.mrf.mxu0
      %v794 = vadd.f32 %v557, %v793
      %795 = vmatmul.bf16.gmra.mxu0 %v710
      %v796 = vpop.f32.mrf.mxu0
      %v797 = vadd.f32 %v557, %v796
      %v798 = vpop.f32.mrf.mxu0
      %v799 = vadd.f32 %v557, %v798
      %800 = vdwg.mxu0
      %vm801 = vcmp.ge.f32.partialorder %v722, 0.0
      %vm802 = vcmp.ge.f32.partialorder %v724, 0.0
      %vm803 = vcmp.ge.f32.partialorder %v727, 0.0
      %vm804 = vcmp.ge.f32.partialorder %v729, 0.0
      %vm805 = vcmp.ge.f32.partialorder %v732, 0.0
      %vm806 = vcmp.ge.f32.partialorder %v734, 0.0
      %vm807 = vcmp.ge.f32.partialorder %v737, 0.0
      %vm808 = vcmp.ge.f32.partialorder %v739, 0.0
      %vm809 = vcmp.ge.f32.partialorder %v742, 0.0
      %vm810 = vcmp.ge.f32.partialorder %v744, 0.0
      %vm811 = vcmp.ge.f32.partialorder %v747, 0.0
      %vm812 = vcmp.ge.f32.partialorder %v749, 0.0
      %vm813 = vcmp.ge.f32.partialorder %v752, 0.0
      %vm814 = vcmp.ge.f32.partialorder %v754, 0.0
      %vm815 = vcmp.ge.f32.partialorder %v757, 0.0
      %vm816 = vcmp.ge.f32.partialorder %v759, 0.0
      %vm817 = vcmp.ge.f32.partialorder %v762, 0.0
      %vm818 = vcmp.ge.f32.partialorder %v764, 0.0
      %vm819 = vcmp.ge.f32.partialorder %v767, 0.0
      %vm820 = vcmp.ge.f32.partialorder %v769, 0.0
      %vm821 = vcmp.ge.f32.partialorder %v772, 0.0
      %vm822 = vcmp.ge.f32.partialorder %v774, 0.0
      %vm823 = vcmp.ge.f32.partialorder %v777, 0.0
      %vm824 = vcmp.ge.f32.partialorder %v779, 0.0
      %vm825 = vcmp.ge.f32.partialorder %v782, 0.0
      %vm826 = vcmp.ge.f32.partialorder %v784, 0.0
      %vm827 = vcmp.ge.f32.partialorder %v787, 0.0
      %vm828 = vcmp.ge.f32.partialorder %v789, 0.0
      %vm829 = vcmp.ge.f32.partialorder %v792, 0.0
      %vm830 = vcmp.ge.f32.partialorder %v794, 0.0
      %vm831 = vcmp.ge.f32.partialorder %v797, 0.0
      %vm832 = vcmp.ge.f32.partialorder %v799, 0.0
      %v833 = vmul.f32 %v722, 0.01
      %v834 = vmul.f32 %v724, 0.01
      %v835 = vmul.f32 %v727, 0.01
      %v836 = vmul.f32 %v729, 0.01
      %v837 = vmul.f32 %v732, 0.01
      %v838 = vmul.f32 %v734, 0.01
      %v839 = vmul.f32 %v737, 0.01
      %v840 = vmul.f32 %v739, 0.01
      %v841 = vmul.f32 %v742, 0.01
      %v842 = vmul.f32 %v744, 0.01
      %v843 = vmul.f32 %v747, 0.01
      %v844 = vmul.f32 %v749, 0.01
      %v845 = vmul.f32 %v752, 0.01
      %v846 = vmul.f32 %v754, 0.01
      %v847 = vmul.f32 %v757, 0.01
      %v848 = vmul.f32 %v759, 0.01
      %v849 = vmul.f32 %v762, 0.01
      %v850 = vmul.f32 %v764, 0.01
      %v851 = vmul.f32 %v767, 0.01
      %v852 = vmul.f32 %v769, 0.01
      %v853 = vmul.f32 %v772, 0.01
      %v854 = vmul.f32 %v774, 0.01
      %v855 = vmul.f32 %v777, 0.01
      %v856 = vmul.f32 %v779, 0.01
      %v857 = vmul.f32 %v782, 0.01
      %v858 = vmul.f32 %v784, 0.01
      %v859 = vmul.f32 %v787, 0.01
      %v860 = vmul.f32 %v789, 0.01
      %v861 = vmul.f32 %v792, 0.01
      %v862 = vmul.f32 %v794, 0.01
      %v863 = vmul.f32 %v797, 0.01
      %v864 = vmul.f32 %v799, 0.01
      %v865 = vsel %vm801, %v722, %v833
      %v866 = vsel %vm802, %v724, %v834
      %v867 = vsel %vm803, %v727, %v835
      %v868 = vsel %vm804, %v729, %v836
      %v869 = vsel %vm805, %v732, %v837
      %v870 = vsel %vm806, %v734, %v838
      %v871 = vsel %vm807, %v737, %v839
      %v872 = vsel %vm808, %v739, %v840
      %v873 = vsel %vm809, %v742, %v841
      %v874 = vsel %vm810, %v744, %v842
      %v875 = vsel %vm811, %v747, %v843
      %v876 = vsel %vm812, %v749, %v844
      %v877 = vsel %vm813, %v752, %v845
      %v878 = vsel %vm814, %v754, %v846
      %v879 = vsel %vm815, %v757, %v847
      %v880 = vsel %vm816, %v759, %v848
      %v881 = vsel %vm817, %v762, %v849
      %v882 = vsel %vm818, %v764, %v850
      %v883 = vsel %vm819, %v767, %v851
      %v884 = vsel %vm820, %v769, %v852
      %v885 = vsel %vm821, %v772, %v853
      %v886 = vsel %vm822, %v774, %v854
      %v887 = vsel %vm823, %v777, %v855
      %v888 = vsel %vm824, %v779, %v856
      %v889 = vsel %vm825, %v782, %v857
      %v890 = vsel %vm826, %v784, %v858
      %v891 = vsel %vm827, %v787, %v859
      %v892 = vsel %vm828, %v789, %v860
      %v893 = vsel %vm829, %v792, %v861
      %v894 = vsel %vm830, %v794, %v862
      %v895 = vsel %vm831, %v797, %v863
      %v896 = vsel %vm832, %v799, %v864
      %v897 = vpack.c.bf16 %v865, %v865
      %v898 = vpack.c.bf16 %v866, %v866
      %v899 = vpack.c.bf16 %v867, %v867
      %v900 = vpack.c.bf16 %v868, %v868
      %v901 = vpack.c.bf16 %v869, %v869
      %v902 = vpack.c.bf16 %v870, %v870
      %v903 = vpack.c.bf16 %v871, %v871
      %v904 = vpack.c.bf16 %v872, %v872
      %v905 = vpack.c.bf16 %v873, %v873
      %v906 = vpack.c.bf16 %v874, %v874
      %v907 = vpack.c.bf16 %v875, %v875
      %v908 = vpack.c.bf16 %v876, %v876
      %v909 = vpack.c.bf16 %v877, %v877
      %v910 = vpack.c.bf16 %v878, %v878
      %v911 = vpack.c.bf16 %v879, %v879
      %v912 = vpack.c.bf16 %v880, %v880
      %v913 = vpack.c.bf16 %v881, %v881
      %v914 = vpack.c.bf16 %v882, %v882
      %v915 = vpack.c.bf16 %v883, %v883
      %v916 = vpack.c.bf16 %v884, %v884
      %v917 = vpack.c.bf16 %v885, %v885
      %v918 = vpack.c.bf16 %v886, %v886
      %v919 = vpack.c.bf16 %v887, %v887
      %v920 = vpack.c.bf16 %v888, %v888
      %v921 = vpack.c.bf16 %v889, %v889
      %v922 = vpack.c.bf16 %v890, %v890
      %v923 = vpack.c.bf16 %v891, %v891
      %v924 = vpack.c.bf16 %v892, %v892
      %v925 = vpack.c.bf16 %v893, %v893
      %v926 = vpack.c.bf16 %v894, %v894
      %v927 = vpack.c.bf16 %v895, %v895
      %v928 = vpack.c.bf16 %v896, %v896
      %vm929 = vsmask.f32 4368
      %vm930 = vmor %vm288, %vm929
      %v932 = vshrl.u32 %v897, 16
      %v934 = vrot.slane %v932, 7
      %v935 = vshll.u32 %v897, 16
      %v937 = vor.u32 %v934, %v935
      %v938 = vrot.slane %v934, 4
      %v940 = vshrl.u32 %v898, 16
      %v942 = vrot.slane %v940, 7
      %v943 = vshll.u32 %v898, 16
      %v945 = vor.u32 %v942, %v943
      %v946 = vsel %vm930, %v938, %v945
      %v947 = vrot.slane %v942, 4
      %v949 = vshrl.u32 %v899, 16
      %v951 = vrot.slane %v949, 7
      %v952 = vshll.u32 %v899, 16
      %v954 = vor.u32 %v951, %v952
      %v955 = vrot.slane %v951, 4
      %v957 = vshrl.u32 %v900, 16
      %v959 = vrot.slane %v957, 7
      %v960 = vshll.u32 %v900, 16
      %v962 = vor.u32 %v959, %v960
      %v963 = vsel %vm930, %v955, %v962
      %v964 = vrot.slane %v959, 4
      %v966 = vshrl.u32 %v901, 16
      %v968 = vrot.slane %v966, 7
      %v969 = vshll.u32 %v901, 16
      %v971 = vor.u32 %v968, %v969
      %v972 = vrot.slane %v968, 4
      %v974 = vshrl.u32 %v902, 16
      %v976 = vrot.slane %v974, 7
      %v977 = vshll.u32 %v902, 16
      %v979 = vor.u32 %v976, %v977
      %v980 = vsel %vm930, %v972, %v979
      %v981 = vrot.slane %v976, 4
      %v983 = vshrl.u32 %v903, 16
      %v985 = vrot.slane %v983, 7
      %v986 = vshll.u32 %v903, 16
      %v988 = vor.u32 %v985, %v986
      %v989 = vrot.slane %v985, 4
      %v991 = vshrl.u32 %v904, 16
      %v993 = vrot.slane %v991, 7
      %v994 = vshll.u32 %v904, 16
      %v996 = vor.u32 %v993, %v994
      %v997 = vsel %vm930, %v989, %v996
      %v998 = vrot.slane %v993, 4
      %v1000 = vshrl.u32 %v905, 16
      %v1002 = vrot.slane %v1000, 7
      %v1003 = vshll.u32 %v905, 16
      %v1005 = vor.u32 %v1002, %v1003
      %v1006 = vrot.slane %v1002, 4
      %v1008 = vshrl.u32 %v906, 16
      %v1010 = vrot.slane %v1008, 7
      %v1011 = vshll.u32 %v906, 16
      %v1013 = vor.u32 %v1010, %v1011
      %v1014 = vsel %vm930, %v1006, %v1013
      %v1015 = vrot.slane %v1010, 4
      %v1017 = vshrl.u32 %v907, 16
      %v1019 = vrot.slane %v1017, 7
      %v1020 = vshll.u32 %v907, 16
      %v1022 = vor.u32 %v1019, %v1020
      %v1023 = vrot.slane %v1019, 4
      %v1025 = vshrl.u32 %v908, 16
      %v1027 = vrot.slane %v1025, 7
      %v1028 = vshll.u32 %v908, 16
      %v1030 = vor.u32 %v1027, %v1028
      %v1031 = vsel %vm930, %v1023, %v1030
      %v1032 = vrot.slane %v1027, 4
      %v1034 = vshrl.u32 %v909, 16
      %v1036 = vrot.slane %v1034, 7
      %v1037 = vshll.u32 %v909, 16
      %v1039 = vor.u32 %v1036, %v1037
      %v1040 = vrot.slane %v1036, 4
      %v1042 = vshrl.u32 %v910, 16
      %v1044 = vrot.slane %v1042, 7
      %v1045 = vshll.u32 %v910, 16
      %v1047 = vor.u32 %v1044, %v1045
      %v1048 = vsel %vm930, %v1040, %v1047
      %v1049 = vrot.slane %v1044, 4
      %v1051 = vshrl.u32 %v911, 16
      %v1053 = vrot.slane %v1051, 7
      %v1054 = vshll.u32 %v911, 16
      %v1056 = vor.u32 %v1053, %v1054
      %v1057 = vrot.slane %v1053, 4
      %v1059 = vshrl.u32 %v912, 16
      %v1061 = vrot.slane %v1059, 7
      %v1062 = vshll.u32 %v912, 16
      %v1064 = vor.u32 %v1061, %v1062
      %v1065 = vsel %vm930, %v1057, %v1064
      %v1066 = vrot.slane %v1061, 4
      %v1068 = vshrl.u32 %v913, 16
      %v1070 = vrot.slane %v1068, 7
      %v1071 = vshll.u32 %v913, 16
      %v1073 = vor.u32 %v1070, %v1071
      %v1074 = vrot.slane %v1070, 4
      %v1076 = vshrl.u32 %v914, 16
      %v1078 = vrot.slane %v1076, 7
      %v1079 = vshll.u32 %v914, 16
      %v1081 = vor.u32 %v1078, %v1079
      %v1082 = vsel %vm930, %v1074, %v1081
      %v1083 = vrot.slane %v1078, 4
      %v1085 = vshrl.u32 %v915, 16
      %v1087 = vrot.slane %v1085, 7
      %v1088 = vshll.u32 %v915, 16
      %v1090 = vor.u32 %v1087, %v1088
      %v1091 = vrot.slane %v1087, 4
      %v1093 = vshrl.u32 %v916, 16
      %v1095 = vrot.slane %v1093, 7
      %v1096 = vshll.u32 %v916, 16
      %v1098 = vor.u32 %v1095, %v1096
      %v1099 = vsel %vm930, %v1091, %v1098
      %v1100 = vrot.slane %v1095, 4
      %v1102 = vshrl.u32 %v917, 16
      %v1104 = vrot.slane %v1102, 7
      %v1105 = vshll.u32 %v917, 16
      %v1107 = vor.u32 %v1104, %v1105
      %v1108 = vrot.slane %v1104, 4
      %v1110 = vshrl.u32 %v918, 16
      %v1112 = vrot.slane %v1110, 7
      %v1113 = vshll.u32 %v918, 16
      %v1115 = vor.u32 %v1112, %v1113
      %v1116 = vsel %vm930, %v1108, %v1115
      %v1117 = vrot.slane %v1112, 4
      %v1119 = vshrl.u32 %v919, 16
      %v1121 = vrot.slane %v1119, 7
      %v1122 = vshll.u32 %v919, 16
      %v1124 = vor.u32 %v1121, %v1122
      %v1125 = vrot.slane %v1121, 4
      %v1127 = vshrl.u32 %v920, 16
      %v1129 = vrot.slane %v1127, 7
      %v1130 = vshll.u32 %v920, 16
      %v1132 = vor.u32 %v1129, %v1130
      %v1133 = vsel %vm930, %v1125, %v1132
      %v1134 = vrot.slane %v1129, 4
      %v1136 = vshrl.u32 %v921, 16
      %v1138 = vrot.slane %v1136, 7
      %v1139 = vshll.u32 %v921, 16
      %v1141 = vor.u32 %v1138, %v1139
      %v1142 = vrot.slane %v1138, 4
      %v1144 = vshrl.u32 %v922, 16
      %v1146 = vrot.slane %v1144, 7
      %v1147 = vshll.u32 %v922, 16
      %v1149 = vor.u32 %v1146, %v1147
      %v1150 = vsel %vm930, %v1142, %v1149
      %v1151 = vrot.slane %v1146, 4
      %v1153 = vshrl.u32 %v923, 16
      %v1155 = vrot.slane %v1153, 7
      %v1156 = vshll.u32 %v923, 16
      %v1158 = vor.u32 %v1155, %v1156
      %v1159 = vrot.slane %v1155, 4
      %v1161 = vshrl.u32 %v924, 16
      %v1163 = vrot.slane %v1161, 7
      %v1164 = vshll.u32 %v924, 16
      %v1166 = vor.u32 %v1163, %v1164
      %v1167 = vsel %vm930, %v1159, %v1166
      %v1168 = vrot.slane %v1163, 4
      %v1170 = vshrl.u32 %v925, 16
      %v1172 = vrot.slane %v1170, 7
      %v1173 = vshll.u32 %v925, 16
      %v1175 = vor.u32 %v1172, %v1173
      %v1176 = vrot.slane %v1172, 4
      %v1178 = vshrl.u32 %v926, 16
      %v1180 = vrot.slane %v1178, 7
      %v1181 = vshll.u32 %v926, 16
      %v1183 = vor.u32 %v1180, %v1181
      %v1184 = vsel %vm930, %v1176, %v1183
      %v1185 = vrot.slane %v1180, 4
      %v1187 = vshrl.u32 %v927, 16
      %v1189 = vrot.slane %v1187, 7
      %v1190 = vshll.u32 %v927, 16
      %v1192 = vor.u32 %v1189, %v1190
      %v1193 = vrot.slane %v1189, 4
      %v1195 = vshrl.u32 %v928, 16
      %v1197 = vrot.slane %v1195, 7
      %v1198 = vshll.u32 %v928, 16
      %v1200 = vor.u32 %v1197, %v1198
      %v1201 = vsel %vm930, %v1193, %v1200
      %v1202 = vrot.slane %v1197, 4
      %s1251 = scalar_lea.vmem [#allocation2], 12
      %vm1252 = vcmask 1043456
      %vm1253 = vmand %vm1252, %vm344
      %v1254 = vld [vmem:[%s1251] sm:$0xf]
      %v1255 = vsel %vm1253, %v937, %v1254
      %1256 = vst [vmem:[%s1251] sm:$0xf] %v1255
      %1257 = vst [vmem:[%s1251 + $0x4] sm:$0xf] %v946
      %v1258 = vld [vmem:[%s1251 + $0x8] sm:$0x1]
      %v1259 = vsel %vm289, %v947, %v1258
      %1260 = vst [vmem:[%s1251 + $0x8] sm:$0x1] %v1259
      %v1261 = vld [vmem:[%s1251 + $0xc] sm:$0xf]
      %v1262 = vsel %vm1253, %v954, %v1261
      %1263 = vst [vmem:[%s1251 + $0xc] sm:$0xf] %v1262
      %1264 = vst [vmem:[%s1251 + $0x10] sm:$0xf] %v963
      %v1265 = vld [vmem:[%s1251 + $0x14] sm:$0x1]
      %v1266 = vsel %vm289, %v964, %v1265
      %1267 = vst [vmem:[%s1251 + $0x14] sm:$0x1] %v1266
      %v1268 = vld [vmem:[%s1251 + $0x18] sm:$0xf]
      %v1269 = vsel %vm1253, %v971, %v1268
      %1270 = vst [vmem:[%s1251 + $0x18] sm:$0xf] %v1269
      %1271 = vst [vmem:[%s1251 + $0x1c] sm:$0xf] %v980
      %v1272 = vld [vmem:[%s1251 + $0x20] sm:$0x1]
      %v1273 = vsel %vm289, %v981, %v1272
      %1274 = vst [vmem:[%s1251 + $0x20] sm:$0x1] %v1273
      %v1275 = vld [vmem:[%s1251 + $0x24] sm:$0xf]
      %v1276 = vsel %vm1253, %v988, %v1275
      %1277 = vst [vmem:[%s1251 + $0x24] sm:$0xf] %v1276
      %1278 = vst [vmem:[%s1251 + $0x28] sm:$0xf] %v997
      %v1279 = vld [vmem:[%s1251 + $0x2c] sm:$0x1]
      %v1280 = vsel %vm289, %v998, %v1279
      %1281 = vst [vmem:[%s1251 + $0x2c] sm:$0x1] %v1280
      %v1282 = vld [vmem:[%s1251 + $0x30] sm:$0xf]
      %v1283 = vsel %vm1253, %v1005, %v1282
      %1284 = vst [vmem:[%s1251 + $0x30] sm:$0xf] %v1283
      %1285 = vst [vmem:[%s1251 + $0x34] sm:$0xf] %v1014
      %v1286 = vld [vmem:[%s1251 + $0x38] sm:$0x1]
      %v1287 = vsel %vm289, %v1015, %v1286
      %1288 = vst [vmem:[%s1251 + $0x38] sm:$0x1] %v1287
      %v1289 = vld [vmem:[%s1251 + $0x3c] sm:$0xf]
      %v1290 = vsel %vm1253, %v1022, %v1289
      %1291 = vst [vmem:[%s1251 + $0x3c] sm:$0xf] %v1290
      %1292 = vst [vmem:[%s1251 + $0x40] sm:$0xf] %v1031
      %v1293 = vld [vmem:[%s1251 + $0x44] sm:$0x1]
      %v1294 = vsel %vm289, %v1032, %v1293
      %1295 = vst [vmem:[%s1251 + $0x44] sm:$0x1] %v1294
      %v1296 = vld [vmem:[%s1251 + $0x48] sm:$0xf]
      %v1297 = vsel %vm1253, %v1039, %v1296
      %1298 = vst [vmem:[%s1251 + $0x48] sm:$0xf] %v1297
      %1299 = vst [vmem:[%s1251 + $0x4c] sm:$0xf] %v1048
      %v1300 = vld [vmem:[%s1251 + $0x50] sm:$0x1]
      %v1301 = vsel %vm289, %v1049, %v1300
      %1302 = vst [vmem:[%s1251 + $0x50] sm:$0x1] %v1301
      %v1303 = vld [vmem:[%s1251 + $0x54] sm:$0xf]
      %v1304 = vsel %vm1253, %v1056, %v1303
      %1305 = vst [vmem:[%s1251 + $0x54] sm:$0xf] %v1304
      %1306 = vst [vmem:[%s1251 + $0x58] sm:$0xf] %v1065
      %v1307 = vld [vmem:[%s1251 + $0x5c] sm:$0x1]
      %v1308 = vsel %vm289, %v1066, %v1307
      %1309 = vst [vmem:[%s1251 + $0x5c] sm:$0x1] %v1308
      %v1310 = vld [vmem:[%s1251 + $0x60] sm:$0xf]
      %v1311 = vsel %vm1253, %v1073, %v1310
      %1312 = vst [vmem:[%s1251 + $0x60] sm:$0xf] %v1311
      %1313 = vst [vmem:[%s1251 + $0x64] sm:$0xf] %v1082
      %v1314 = vld [vmem:[%s1251 + $0x68] sm:$0x1]
      %v1315 = vsel %vm289, %v1083, %v1314
      %1316 = vst [vmem:[%s1251 + $0x68] sm:$0x1] %v1315
      %v1317 = vld [vmem:[%s1251 + $0x6c] sm:$0xf]
      %v1318 = vsel %vm1253, %v1090, %v1317
      %1319 = vst [vmem:[%s1251 + $0x6c] sm:$0xf] %v1318
      %1320 = vst [vmem:[%s1251 + $0x70] sm:$0xf] %v1099
      %v1321 = vld [vmem:[%s1251 + $0x74] sm:$0x1]
      %v1322 = vsel %vm289, %v1100, %v1321
      %1323 = vst [vmem:[%s1251 + $0x74] sm:$0x1] %v1322
      %v1324 = vld [vmem:[%s1251 + $0x78] sm:$0xf]
      %v1325 = vsel %vm1253, %v1107, %v1324
      %1326 = vst [vmem:[%s1251 + $0x78] sm:$0xf] %v1325
      %1327 = vst [vmem:[%s1251 + $0x7c] sm:$0xf] %v1116
      %v1328 = vld [vmem:[%s1251 + $0x80] sm:$0x1]
      %v1329 = vsel %vm289, %v1117, %v1328
      %1330 = vst [vmem:[%s1251 + $0x80] sm:$0x1] %v1329
      %v1331 = vld [vmem:[%s1251 + $0x84] sm:$0xf]
      %v1332 = vsel %vm1253, %v1124, %v1331
      %1333 = vst [vmem:[%s1251 + $0x84] sm:$0xf] %v1332
      %1334 = vst [vmem:[%s1251 + $0x88] sm:$0xf] %v1133
      %v1335 = vld [vmem:[%s1251 + $0x8c] sm:$0x1]
      %v1336 = vsel %vm289, %v1134, %v1335
      %1337 = vst [vmem:[%s1251 + $0x8c] sm:$0x1] %v1336
      %v1338 = vld [vmem:[%s1251 + $0x90] sm:$0xf]
      %v1339 = vsel %vm1253, %v1141, %v1338
      %1340 = vst [vmem:[%s1251 + $0x90] sm:$0xf] %v1339
      %1341 = vst [vmem:[%s1251 + $0x94] sm:$0xf] %v1150
      %v1342 = vld [vmem:[%s1251 + $0x98] sm:$0x1]
      %v1343 = vsel %vm289, %v1151, %v1342
      %1344 = vst [vmem:[%s1251 + $0x98] sm:$0x1] %v1343
      %v1345 = vld [vmem:[%s1251 + $0x9c] sm:$0xf]
      %v1346 = vsel %vm1253, %v1158, %v1345
      %1347 = vst [vmem:[%s1251 + $0x9c] sm:$0xf] %v1346
      %1348 = vst [vmem:[%s1251 + $0xa0] sm:$0xf] %v1167
      %v1349 = vld [vmem:[%s1251 + $0xa4] sm:$0x1]
      %v1350 = vsel %vm289, %v1168, %v1349
      %1351 = vst [vmem:[%s1251 + $0xa4] sm:$0x1] %v1350
      %v1352 = vld [vmem:[%s1251 + $0xa8] sm:$0xf]
      %v1353 = vsel %vm1253, %v1175, %v1352
      %1354 = vst [vmem:[%s1251 + $0xa8] sm:$0xf] %v1353
      %1355 = vst [vmem:[%s1251 + $0xac] sm:$0xf] %v1184
      %v1356 = vld [vmem:[%s1251 + $0xb0] sm:$0x1]
      %v1357 = vsel %vm289, %v1185, %v1356
      %1358 = vst [vmem:[%s1251 + $0xb0] sm:$0x1] %v1357
      %v1359 = vld [vmem:[%s1251 + $0xb4] sm:$0xf]
      %v1360 = vsel %vm1253, %v1192, %v1359
      %1361 = vst [vmem:[%s1251 + $0xb4] sm:$0xf] %v1360
      %1362 = vst [vmem:[%s1251 + $0xb8] sm:$0xf] %v1201
      %v1363 = vld [vmem:[%s1251 + $0xbc] sm:$0x1]
      %v1364 = vsel %vm289, %v1202, %v1363
      %1365 = vst [vmem:[%s1251 + $0xbc] sm:$0x1] %v1364
      %v1366 = vld [vmem:[#allocation2] sm:$0xf]
      %v1367 = vld [vmem:[#allocation2 + $0x4] sm:$0xf]
      %v1368 = vld [vmem:[#allocation2 + $0xc] sm:$0xf]
      %v1369 = vld [vmem:[#allocation2 + $0x10] sm:$0xf]
      %v1370 = vld [vmem:[#allocation2 + $0x18] sm:$0xf]
      %v1371 = vld [vmem:[#allocation2 + $0x1c] sm:$0xf]
      %v1372 = vld [vmem:[#allocation2 + $0x24] sm:$0xf]
      %v1373 = vld [vmem:[#allocation2 + $0x28] sm:$0xf]
      %v1374 = vld [vmem:[#allocation2 + $0x30] sm:$0xf]
      %v1375 = vld [vmem:[#allocation2 + $0x34] sm:$0xf]
      %v1376 = vld [vmem:[#allocation2 + $0x3c] sm:$0xf]
      %v1377 = vld [vmem:[#allocation2 + $0x40] sm:$0xf]
      %v1378 = vld [vmem:[#allocation2 + $0x48] sm:$0xf]
      %v1379 = vld [vmem:[#allocation2 + $0x4c] sm:$0xf]
      %v1380 = vld [vmem:[#allocation2 + $0x54] sm:$0xf]
      %v1381 = vld [vmem:[#allocation2 + $0x58] sm:$0xf]
      %v1382 = vld [vmem:[#allocation2 + $0x60] sm:$0xf]
      %v1383 = vld [vmem:[#allocation2 + $0x64] sm:$0xf]
      %v1384 = vld [vmem:[#allocation2 + $0x6c] sm:$0xf]
      %v1385 = vld [vmem:[#allocation2 + $0x70] sm:$0xf]
      %v1386 = vld [vmem:[#allocation2 + $0x78] sm:$0xf]
      %v1387 = vld [vmem:[#allocation2 + $0x7c] sm:$0xf]
      %v1388 = vld [vmem:[#allocation2 + $0x84] sm:$0xf]
      %v1389 = vld [vmem:[#allocation2 + $0x88] sm:$0xf]
      %v1390 = vld [vmem:[#allocation2 + $0x90] sm:$0xf]
      %v1391 = vld [vmem:[#allocation2 + $0x94] sm:$0xf]
      %v1392 = vld [vmem:[#allocation2 + $0x9c] sm:$0xf]
      %v1393 = vld [vmem:[#allocation2 + $0xa0] sm:$0xf]
      %v1394 = vld [vmem:[#allocation2 + $0xa8] sm:$0xf]
      %v1395 = vld [vmem:[#allocation2 + $0xac] sm:$0xf]
      %v1396 = vld [vmem:[#allocation2 + $0xb4] sm:$0xf]
      %v1397 = vld [vmem:[#allocation2 + $0xb8] sm:$0xf]
      %1398 = vst [vmem:[#allocation4] sm:$0xf] %v1366
      %1399 = vst [vmem:[#allocation4 + $0x24] sm:$0xf] %v1367
      %1400 = vst [vmem:[#allocation4 + $0x48] sm:$0xf] %v1368
      %1401 = vst [vmem:[#allocation4 + $0x6c] sm:$0xf] %v1369
      %1402 = vst [vmem:[#allocation4 + $0x90] sm:$0xf] %v1370
      %1403 = vst [vmem:[#allocation4 + $0xb4] sm:$0xf] %v1371
      %1404 = vst [vmem:[#allocation4 + $0xd8] sm:$0xf] %v1372
      %1405 = vst [vmem:[#allocation4 + $0xfc] sm:$0xf] %v1373
      %1406 = vst [vmem:[#allocation4 + $0x120] sm:$0xf] %v1374
      %1407 = vst [vmem:[#allocation4 + $0x144] sm:$0xf] %v1375
      %1408 = vst [vmem:[#allocation4 + $0x168] sm:$0xf] %v1376
      %1409 = vst [vmem:[#allocation4 + $0x18c] sm:$0xf] %v1377
      %1410 = vst [vmem:[#allocation4 + $0x1b0] sm:$0xf] %v1378
      %1411 = vst [vmem:[#allocation4 + $0x1d4] sm:$0xf] %v1379
      %1412 = vst [vmem:[#allocation4 + $0x1f8] sm:$0xf] %v1380
      %1413 = vst [vmem:[#allocation4 + $0x21c] sm:$0xf] %v1381
      %1414 = vst [vmem:[#allocation4 + $0x240] sm:$0xf] %v1382
      %1415 = vst [vmem:[#allocation4 + $0x264] sm:$0xf] %v1383
      %1416 = vst [vmem:[#allocation4 + $0x288] sm:$0xf] %v1384
      %1417 = vst [vmem:[#allocation4 + $0x2ac] sm:$0xf] %v1385
      %1418 = vst [vmem:[#allocation4 + $0x2d0] sm:$0xf] %v1386
      %1419 = vst [vmem:[#allocation4 + $0x2f4] sm:$0xf] %v1387
      %1420 = vst [vmem:[#allocation4 + $0x318] sm:$0xf] %v1388
      %1421 = vst [vmem:[#allocation4 + $0x33c] sm:$0xf] %v1389
      %1422 = vst [vmem:[#allocation4 + $0x360] sm:$0xf] %v1390
      %1423 = vst [vmem:[#allocation4 + $0x384] sm:$0xf] %v1391
      %1424 = vst [vmem:[#allocation4 + $0x3a8] sm:$0xf] %v1392
      %1425 = vst [vmem:[#allocation4 + $0x3cc] sm:$0xf] %v1393
      %1426 = vst [vmem:[#allocation4 + $0x3f0] sm:$0xf] %v1394
      %1427 = vst [vmem:[#allocation4 + $0x414] sm:$0xf] %v1395
      %1428 = vst [vmem:[#allocation4 + $0x438] sm:$0xf] %v1396
      %1429 = vst [vmem:[#allocation4 + $0x45c] sm:$0xf] %v1397
      %v1430 = vld [vmem:[#allocation2] sm:$0xf]
      %v1431 = vld [vmem:[#allocation2 + $0x4] sm:$0xf]
      %v1432 = vld [vmem:[#allocation2 + $0x8] sm:$0x1]
      %v1433 = vld [vmem:[#allocation2 + $0xc] sm:$0xf]
      %v1434 = vld [vmem:[#allocation2 + $0x10] sm:$0xf]
      %v1435 = vld [vmem:[#allocation2 + $0x14] sm:$0x1]
      %v1436 = vld [vmem:[#allocation2 + $0x18] sm:$0xf]
      %v1437 = vld [vmem:[#allocation2 + $0x1c] sm:$0xf]
      %v1438 = vld [vmem:[#allocation2 + $0x20] sm:$0x1]
      %v1439 = vld [vmem:[#allocation2 + $0x24] sm:$0xf]
      %v1440 = vld [vmem:[#allocation2 + $0x28] sm:$0xf]
      %v1441 = vld [vmem:[#allocation2 + $0x2c] sm:$0x1]
      %v1442 = vld [vmem:[#allocation2 + $0x30] sm:$0xf]
      %v1443 = vld [vmem:[#allocation2 + $0x34] sm:$0xf]
      %v1444 = vld [vmem:[#allocation2 + $0x38] sm:$0x1]
      %v1445 = vld [vmem:[#allocation2 + $0x3c] sm:$0xf]
      %v1446 = vld [vmem:[#allocation2 + $0x40] sm:$0xf]
      %v1447 = vld [vmem:[#allocation2 + $0x44] sm:$0x1]
      %v1448 = vld [vmem:[#allocation2 + $0x48] sm:$0xf]
      %v1449 = vld [vmem:[#allocation2 + $0x4c] sm:$0xf]
      %v1450 = vld [vmem:[#allocation2 + $0x50] sm:$0x1]
      %v1451 = vld [vmem:[#allocation2 + $0x54] sm:$0xf]
      %v1452 = vld [vmem:[#allocation2 + $0x58] sm:$0xf]
      %v1453 = vld [vmem:[#allocation2 + $0x5c] sm:$0x1]
      %v1454 = vld [vmem:[#allocation2 + $0x60] sm:$0xf]
      %v1455 = vld [vmem:[#allocation2 + $0x64] sm:$0xf]
      %v1456 = vld [vmem:[#allocation2 + $0x68] sm:$0x1]
      %v1457 = vld [vmem:[#allocation2 + $0x6c] sm:$0xf]
      %v1458 = vld [vmem:[#allocation2 + $0x70] sm:$0xf]
      %v1459 = vld [vmem:[#allocation2 + $0x74] sm:$0x1]
      %v1460 = vld [vmem:[#allocation2 + $0x78] sm:$0xf]
      %v1461 = vld [vmem:[#allocation2 + $0x7c] sm:$0xf]
      %v1462 = vld [vmem:[#allocation2 + $0x80] sm:$0x1]
      %v1463 = vld [vmem:[#allocation2 + $0x84] sm:$0xf]
      %v1464 = vld [vmem:[#allocation2 + $0x88] sm:$0xf]
      %v1465 = vld [vmem:[#allocation2 + $0x8c] sm:$0x1]
      %v1466 = vld [vmem:[#allocation2 + $0x90] sm:$0xf]
      %v1467 = vld [vmem:[#allocation2 + $0x94] sm:$0xf]
      %v1468 = vld [vmem:[#allocation2 + $0x98] sm:$0x1]
      %v1469 = vld [vmem:[#allocation2 + $0x9c] sm:$0xf]
      %v1470 = vld [vmem:[#allocation2 + $0xa0] sm:$0xf]
      %v1471 = vld [vmem:[#allocation2 + $0xa4] sm:$0x1]
      %v1472 = vld [vmem:[#allocation2 + $0xa8] sm:$0xf]
      %v1473 = vld [vmem:[#allocation2 + $0xac] sm:$0xf]
      %v1474 = vld [vmem:[#allocation2 + $0xb0] sm:$0x1]
      %v1475 = vld [vmem:[#allocation2 + $0xb4] sm:$0xf]
      %v1476 = vld [vmem:[#allocation2 + $0xb8] sm:$0xf]
      %v1477 = vld [vmem:[#allocation2 + $0xbc] sm:$0x1]
      %vm1478 = vsmask.f32 3328
      %vm1479 = vsmask.f32 7440
      %vm1480 = vmor %vm1478, %vm1479
      %v1482 = vshrl.u32 %v1430, 16
      %v1484 = vrot.slane %v1482, 4
      %v1485 = vshll.u32 %v1430, 16
      %v1487 = vrot.slane %v1485, 5
      %v1488 = vor.u32 %v1484, %v1487
      %v1489 = vrot.slane %v1488, 4
      %v1491 = vshll.u32 %v1431, 16
      %v1493 = vrot.slane %v1491, 5
      %v1494 = vsel %vm1480, %v1489, %v1493
      %v1495 = vshrl.u32 %v1431, 16
      %v1497 = vrot.slane %v1495, 4
      %v1498 = vor.u32 %v1497, %v1493
      %v1499 = vrot.slane %v1498, 4
      %v1501 = vshll.u32 %v1432, 16
      %v1503 = vrot.slane %v1501, 5
      %v1504 = vsel %vm1480, %v1499, %v1503
      %v1506 = vshrl.u32 %v1433, 16
      %v1508 = vrot.slane %v1506, 4
      %v1509 = vshll.u32 %v1433, 16
      %v1511 = vrot.slane %v1509, 5
      %v1512 = vor.u32 %v1508, %v1511
      %v1513 = vrot.slane %v1512, 4
      %v1515 = vshll.u32 %v1434, 16
      %v1517 = vrot.slane %v1515, 5
      %v1518 = vsel %vm1480, %v1513, %v1517
      %v1519 = vshrl.u32 %v1434, 16
      %v1521 = vrot.slane %v1519, 4
      %v1522 = vor.u32 %v1521, %v1517
      %v1523 = vrot.slane %v1522, 4
      %v1525 = vshll.u32 %v1435, 16
      %v1527 = vrot.slane %v1525, 5
      %v1528 = vsel %vm1480, %v1523, %v1527
      %v1530 = vshrl.u32 %v1436, 16
      %v1532 = vrot.slane %v1530, 4
      %v1533 = vshll.u32 %v1436, 16
      %v1535 = vrot.slane %v1533, 5
      %v1536 = vor.u32 %v1532, %v1535
      %v1537 = vrot.slane %v1536, 4
      %v1539 = vshll.u32 %v1437, 16
      %v1541 = vrot.slane %v1539, 5
      %v1542 = vsel %vm1480, %v1537, %v1541
      %v1543 = vshrl.u32 %v1437, 16
      %v1545 = vrot.slane %v1543, 4
      %v1546 = vor.u32 %v1545, %v1541
      %v1547 = vrot.slane %v1546, 4
      %v1549 = vshll.u32 %v1438, 16
      %v1551 = vrot.slane %v1549, 5
      %v1552 = vsel %vm1480, %v1547, %v1551
      %v1554 = vshrl.u32 %v1439, 16
      %v1556 = vrot.slane %v1554, 4
      %v1557 = vshll.u32 %v1439, 16
      %v1559 = vrot.slane %v1557, 5
      %v1560 = vor.u32 %v1556, %v1559
      %v1561 = vrot.slane %v1560, 4
      %v1563 = vshll.u32 %v1440, 16
      %v1565 = vrot.slane %v1563, 5
      %v1566 = vsel %vm1480, %v1561, %v1565
      %v1567 = vshrl.u32 %v1440, 16
      %v1569 = vrot.slane %v1567, 4
      %v1570 = vor.u32 %v1569, %v1565
      %v1571 = vrot.slane %v1570, 4
      %v1573 = vshll.u32 %v1441, 16
      %v1575 = vrot.slane %v1573, 5
      %v1576 = vsel %vm1480, %v1571, %v1575
      %v1578 = vshrl.u32 %v1442, 16
      %v1580 = vrot.slane %v1578, 4
      %v1581 = vshll.u32 %v1442, 16
      %v1583 = vrot.slane %v1581, 5
      %v1584 = vor.u32 %v1580, %v1583
      %v1585 = vrot.slane %v1584, 4
      %v1587 = vshll.u32 %v1443, 16
      %v1589 = vrot.slane %v1587, 5
      %v1590 = vsel %vm1480, %v1585, %v1589
      %v1591 = vshrl.u32 %v1443, 16
      %v1593 = vrot.slane %v1591, 4
      %v1594 = vor.u32 %v1593, %v1589
      %v1595 = vrot.slane %v1594, 4
      %v1597 = vshll.u32 %v1444, 16
      %v1599 = vrot.slane %v1597, 5
      %v1600 = vsel %vm1480, %v1595, %v1599
      %v1602 = vshrl.u32 %v1445, 16
      %v1604 = vrot.slane %v1602, 4
      %v1605 = vshll.u32 %v1445, 16
      %v1607 = vrot.slane %v1605, 5
      %v1608 = vor.u32 %v1604, %v1607
      %v1609 = vrot.slane %v1608, 4
      %v1611 = vshll.u32 %v1446, 16
      %v1613 = vrot.slane %v1611, 5
      %v1614 = vsel %vm1480, %v1609, %v1613
      %v1615 = vshrl.u32 %v1446, 16
      %v1617 = vrot.slane %v1615, 4
      %v1618 = vor.u32 %v1617, %v1613
      %v1619 = vrot.slane %v1618, 4
      %v1621 = vshll.u32 %v1447, 16
      %v1623 = vrot.slane %v1621, 5
      %v1624 = vsel %vm1480, %v1619, %v1623
      %v1626 = vshrl.u32 %v1448, 16
      %v1628 = vrot.slane %v1626, 4
      %v1629 = vshll.u32 %v1448, 16
      %v1631 = vrot.slane %v1629, 5
      %v1632 = vor.u32 %v1628, %v1631
      %v1633 = vrot.slane %v1632, 4
      %v1635 = vshll.u32 %v1449, 16
      %v1637 = vrot.slane %v1635, 5
      %v1638 = vsel %vm1480, %v1633, %v1637
      %v1639 = vshrl.u32 %v1449, 16
      %v1641 = vrot.slane %v1639, 4
      %v1642 = vor.u32 %v1641, %v1637
      %v1643 = vrot.slane %v1642, 4
      %v1645 = vshll.u32 %v1450, 16
      %v1647 = vrot.slane %v1645, 5
      %v1648 = vsel %vm1480, %v1643, %v1647
      %v1650 = vshrl.u32 %v1451, 16
      %v1652 = vrot.slane %v1650, 4
      %v1653 = vshll.u32 %v1451, 16
      %v1655 = vrot.slane %v1653, 5
      %v1656 = vor.u32 %v1652, %v1655
      %v1657 = vrot.slane %v1656, 4
      %v1659 = vshll.u32 %v1452, 16
      %v1661 = vrot.slane %v1659, 5
      %v1662 = vsel %vm1480, %v1657, %v1661
      %v1663 = vshrl.u32 %v1452, 16
      %v1665 = vrot.slane %v1663, 4
      %v1666 = vor.u32 %v1665, %v1661
      %v1667 = vrot.slane %v1666, 4
      %v1669 = vshll.u32 %v1453, 16
      %v1671 = vrot.slane %v1669, 5
      %v1672 = vsel %vm1480, %v1667, %v1671
      %v1674 = vshrl.u32 %v1454, 16
      %v1676 = vrot.slane %v1674, 4
      %v1677 = vshll.u32 %v1454, 16
      %v1679 = vrot.slane %v1677, 5
      %v1680 = vor.u32 %v1676, %v1679
      %v1681 = vrot.slane %v1680, 4
      %v1683 = vshll.u32 %v1455, 16
      %v1685 = vrot.slane %v1683, 5
      %v1686 = vsel %vm1480, %v1681, %v1685
      %v1687 = vshrl.u32 %v1455, 16
      %v1689 = vrot.slane %v1687, 4
      %v1690 = vor.u32 %v1689, %v1685
      %v1691 = vrot.slane %v1690, 4
      %v1693 = vshll.u32 %v1456, 16
      %v1695 = vrot.slane %v1693, 5
      %v1696 = vsel %vm1480, %v1691, %v1695
      %v1698 = vshrl.u32 %v1457, 16
      %v1700 = vrot.slane %v1698, 4
      %v1701 = vshll.u32 %v1457, 16
      %v1703 = vrot.slane %v1701, 5
      %v1704 = vor.u32 %v1700, %v1703
      %v1705 = vrot.slane %v1704, 4
      %v1707 = vshll.u32 %v1458, 16
      %v1709 = vrot.slane %v1707, 5
      %v1710 = vsel %vm1480, %v1705, %v1709
      %v1711 = vshrl.u32 %v1458, 16
      %v1713 = vrot.slane %v1711, 4
      %v1714 = vor.u32 %v1713, %v1709
      %v1715 = vrot.slane %v1714, 4
      %v1717 = vshll.u32 %v1459, 16
      %v1719 = vrot.slane %v1717, 5
      %v1720 = vsel %vm1480, %v1715, %v1719
      %v1722 = vshrl.u32 %v1460, 16
      %v1724 = vrot.slane %v1722, 4
      %v1725 = vshll.u32 %v1460, 16
      %v1727 = vrot.slane %v1725, 5
      %v1728 = vor.u32 %v1724, %v1727
      %v1729 = vrot.slane %v1728, 4
      %v1731 = vshll.u32 %v1461, 16
      %v1733 = vrot.slane %v1731, 5
      %v1734 = vsel %vm1480, %v1729, %v1733
      %v1735 = vshrl.u32 %v1461, 16
      %v1737 = vrot.slane %v1735, 4
      %v1738 = vor.u32 %v1737, %v1733
      %v1739 = vrot.slane %v1738, 4
      %v1741 = vshll.u32 %v1462, 16
      %v1743 = vrot.slane %v1741, 5
      %v1744 = vsel %vm1480, %v1739, %v1743
      %v1746 = vshrl.u32 %v1463, 16
      %v1748 = vrot.slane %v1746, 4
      %v1749 = vshll.u32 %v1463, 16
      %v1751 = vrot.slane %v1749, 5
      %v1752 = vor.u32 %v1748, %v1751
      %v1753 = vrot.slane %v1752, 4
      %v1755 = vshll.u32 %v1464, 16
      %v1757 = vrot.slane %v1755, 5
      %v1758 = vsel %vm1480, %v1753, %v1757
      %v1759 = vshrl.u32 %v1464, 16
      %v1761 = vrot.slane %v1759, 4
      %v1762 = vor.u32 %v1761, %v1757
      %v1763 = vrot.slane %v1762, 4
      %v1765 = vshll.u32 %v1465, 16
      %v1767 = vrot.slane %v1765, 5
      %v1768 = vsel %vm1480, %v1763, %v1767
      %v1770 = vshrl.u32 %v1466, 16
      %v1772 = vrot.slane %v1770, 4
      %v1773 = vshll.u32 %v1466, 16
      %v1775 = vrot.slane %v1773, 5
      %v1776 = vor.u32 %v1772, %v1775
      %v1777 = vrot.slane %v1776, 4
      %v1779 = vshll.u32 %v1467, 16
      %v1781 = vrot.slane %v1779, 5
      %v1782 = vsel %vm1480, %v1777, %v1781
      %v1783 = vshrl.u32 %v1467, 16
      %v1785 = vrot.slane %v1783, 4
      %v1786 = vor.u32 %v1785, %v1781
      %v1787 = vrot.slane %v1786, 4
      %v1789 = vshll.u32 %v1468, 16
      %v1791 = vrot.slane %v1789, 5
      %v1792 = vsel %vm1480, %v1787, %v1791
      %v1794 = vshrl.u32 %v1469, 16
      %v1796 = vrot.slane %v1794, 4
      %v1797 = vshll.u32 %v1469, 16
      %v1799 = vrot.slane %v1797, 5
      %v1800 = vor.u32 %v1796, %v1799
      %v1801 = vrot.slane %v1800, 4
      %v1803 = vshll.u32 %v1470, 16
      %v1805 = vrot.slane %v1803, 5
      %v1806 = vsel %vm1480, %v1801, %v1805
      %v1807 = vshrl.u32 %v1470, 16
      %v1809 = vrot.slane %v1807, 4
      %v1810 = vor.u32 %v1809, %v1805
      %v1811 = vrot.slane %v1810, 4
      %v1813 = vshll.u32 %v1471, 16
      %v1815 = vrot.slane %v1813, 5
      %v1816 = vsel %vm1480, %v1811, %v1815
      %v1818 = vshrl.u32 %v1472, 16
      %v1820 = vrot.slane %v1818, 4
      %v1821 = vshll.u32 %v1472, 16
      %v1823 = vrot.slane %v1821, 5
      %v1824 = vor.u32 %v1820, %v1823
      %v1825 = vrot.slane %v1824, 4
      %v1827 = vshll.u32 %v1473, 16
      %v1829 = vrot.slane %v1827, 5
      %v1830 = vsel %vm1480, %v1825, %v1829
      %v1831 = vshrl.u32 %v1473, 16
      %v1833 = vrot.slane %v1831, 4
      %v1834 = vor.u32 %v1833, %v1829
      %v1835 = vrot.slane %v1834, 4
      %v1837 = vshll.u32 %v1474, 16
      %v1839 = vrot.slane %v1837, 5
      %v1840 = vsel %vm1480, %v1835, %v1839
      %v1842 = vshrl.u32 %v1475, 16
      %v1844 = vrot.slane %v1842, 4
      %v1845 = vshll.u32 %v1475, 16
      %v1847 = vrot.slane %v1845, 5
      %v1848 = vor.u32 %v1844, %v1847
      %v1849 = vrot.slane %v1848, 4
      %v1851 = vshll.u32 %v1476, 16
      %v1853 = vrot.slane %v1851, 5
      %v1854 = vsel %vm1480, %v1849, %v1853
      %v1855 = vshrl.u32 %v1476, 16
      %v1857 = vrot.slane %v1855, 4
      %v1858 = vor.u32 %v1857, %v1853
      %v1859 = vrot.slane %v1858, 4
      %v1861 = vshll.u32 %v1477, 16
      %v1863 = vrot.slane %v1861, 5
      %v1864 = vsel %vm1480, %v1859, %v1863
      %1897 = vst [vmem:[#allocation4 + $0x4] sm:$0xf] %v1494
      %1898 = vst [vmem:[#allocation4 + $0x28] sm:$0xf] %v1504
      %1899 = vst [vmem:[#allocation4 + $0x4c] sm:$0xf] %v1518
      %1900 = vst [vmem:[#allocation4 + $0x70] sm:$0xf] %v1528
      %1901 = vst [vmem:[#allocation4 + $0x94] sm:$0xf] %v1542
      %1902 = vst [vmem:[#allocation4 + $0xb8] sm:$0xf] %v1552
      %1903 = vst [vmem:[#allocation4 + $0xdc] sm:$0xf] %v1566
      %1904 = vst [vmem:[#allocation4 + $0x100] sm:$0xf] %v1576
      %1905 = vst [vmem:[#allocation4 + $0x124] sm:$0xf] %v1590
      %1906 = vst [vmem:[#allocation4 + $0x148] sm:$0xf] %v1600
      %1907 = vst [vmem:[#allocation4 + $0x16c] sm:$0xf] %v1614
      %1908 = vst [vmem:[#allocation4 + $0x190] sm:$0xf] %v1624
      %1909 = vst [vmem:[#allocation4 + $0x1b4] sm:$0xf] %v1638
      %1910 = vst [vmem:[#allocation4 + $0x1d8] sm:$0xf] %v1648
      %1911 = vst [vmem:[#allocation4 + $0x1fc] sm:$0xf] %v1662
      %1912 = vst [vmem:[#allocation4 + $0x220] sm:$0xf] %v1672
      %1913 = vst [vmem:[#allocation4 + $0x244] sm:$0xf] %v1686
      %1914 = vst [vmem:[#allocation4 + $0x268] sm:$0xf] %v1696
      %1915 = vst [vmem:[#allocation4 + $0x28c] sm:$0xf] %v1710
      %1916 = vst [vmem:[#allocation4 + $0x2b0] sm:$0xf] %v1720
      %1917 = vst [vmem:[#allocation4 + $0x2d4] sm:$0xf] %v1734
      %1918 = vst [vmem:[#allocation4 + $0x2f8] sm:$0xf] %v1744
      %1919 = vst [vmem:[#allocation4 + $0x31c] sm:$0xf] %v1758
      %1920 = vst [vmem:[#allocation4 + $0x340] sm:$0xf] %v1768
      %1921 = vst [vmem:[#allocation4 + $0x364] sm:$0xf] %v1782
      %1922 = vst [vmem:[#allocation4 + $0x388] sm:$0xf] %v1792
      %1923 = vst [vmem:[#allocation4 + $0x3ac] sm:$0xf] %v1806
      %1924 = vst [vmem:[#allocation4 + $0x3d0] sm:$0xf] %v1816
      %1925 = vst [vmem:[#allocation4 + $0x3f4] sm:$0xf] %v1830
      %1926 = vst [vmem:[#allocation4 + $0x418] sm:$0xf] %v1840
      %1927 = vst [vmem:[#allocation4 + $0x43c] sm:$0xf] %v1854
      %1928 = vst [vmem:[#allocation4 + $0x460] sm:$0xf] %v1864
      %v1929 = vld [vmem:[#allocation2] sm:$0xe]
      %v1930 = vld [vmem:[#allocation2 + $0x4] sm:$0xf]
      %v1931 = vld [vmem:[#allocation2 + $0x8] sm:$0x1]
      %v1932 = vld [vmem:[#allocation2 + $0xc] sm:$0xe]
      %v1933 = vld [vmem:[#allocation2 + $0x10] sm:$0xf]
      %v1934 = vld [vmem:[#allocation2 + $0x14] sm:$0x1]
      %v1935 = vld [vmem:[#allocation2 + $0x18] sm:$0xe]
      %v1936 = vld [vmem:[#allocation2 + $0x1c] sm:$0xf]
      %v1937 = vld [vmem:[#allocation2 + $0x20] sm:$0x1]
      %v1938 = vld [vmem:[#allocation2 + $0x24] sm:$0xe]
      %v1939 = vld [vmem:[#allocation2 + $0x28] sm:$0xf]
      %v1940 = vld [vmem:[#allocation2 + $0x2c] sm:$0x1]
      %v1941 = vld [vmem:[#allocation2 + $0x30] sm:$0xe]
      %v1942 = vld [vmem:[#allocation2 + $0x34] sm:$0xf]
      %v1943 = vld [vmem:[#allocation2 + $0x38] sm:$0x1]
      %v1944 = vld [vmem:[#allocation2 + $0x3c] sm:$0xe]
      %v1945 = vld [vmem:[#allocation2 + $0x40] sm:$0xf]
      %v1946 = vld [vmem:[#allocation2 + $0x44] sm:$0x1]
      %v1947 = vld [vmem:[#allocation2 + $0x48] sm:$0xe]
      %v1948 = vld [vmem:[#allocation2 + $0x4c] sm:$0xf]
      %v1949 = vld [vmem:[#allocation2 + $0x50] sm:$0x1]
      %v1950 = vld [vmem:[#allocation2 + $0x54] sm:$0xe]
      %v1951 = vld [vmem:[#allocation2 + $0x58] sm:$0xf]
      %v1952 = vld [vmem:[#allocation2 + $0x5c] sm:$0x1]
      %v1953 = vld [vmem:[#allocation2 + $0x60] sm:$0xe]
      %v1954 = vld [vmem:[#allocation2 + $0x64] sm:$0xf]
      %v1955 = vld [vmem:[#allocation2 + $0x68] sm:$0x1]
      %v1956 = vld [vmem:[#allocation2 + $0x6c] sm:$0xe]
      %v1957 = vld [vmem:[#allocation2 + $0x70] sm:$0xf]
      %v1958 = vld [vmem:[#allocation2 + $0x74] sm:$0x1]
      %v1959 = vld [vmem:[#allocation2 + $0x78] sm:$0xe]
      %v1960 = vld [vmem:[#allocation2 + $0x7c] sm:$0xf]
      %v1961 = vld [vmem:[#allocation2 + $0x80] sm:$0x1]
      %v1962 = vld [vmem:[#allocation2 + $0x84] sm:$0xe]
      %v1963 = vld [vmem:[#allocation2 + $0x88] sm:$0xf]
      %v1964 = vld [vmem:[#allocation2 + $0x8c] sm:$0x1]
      %v1965 = vld [vmem:[#allocation2 + $0x90] sm:$0xe]
      %v1966 = vld [vmem:[#allocation2 + $0x94] sm:$0xf]
      %v1967 = vld [vmem:[#allocation2 + $0x98] sm:$0x1]
      %v1968 = vld [vmem:[#allocation2 + $0x9c] sm:$0xe]
      %v1969 = vld [vmem:[#allocation2 + $0xa0] sm:$0xf]
      %v1970 = vld [vmem:[#allocation2 + $0xa4] sm:$0x1]
      %v1971 = vld [vmem:[#allocation2 + $0xa8] sm:$0xe]
      %v1972 = vld [vmem:[#allocation2 + $0xac] sm:$0xf]
      %v1973 = vld [vmem:[#allocation2 + $0xb0] sm:$0x1]
      %v1974 = vld [vmem:[#allocation2 + $0xb4] sm:$0xe]
      %v1975 = vld [vmem:[#allocation2 + $0xb8] sm:$0xf]
      %v1976 = vld [vmem:[#allocation2 + $0xbc] sm:$0x1]
      %vm2025 = vcmask 1042432
      %vm2026 = vcmask 1046532
      %vm2027 = vmor %vm2025, %vm2026
      %v2028 = vrot.slane %v1929, 5
      %v2029 = vrot.slane %v2028, 4
      %v2030 = vrot.slane %v1930, 5
      %v2031 = vsel %vm2027, %v2029, %v2030
      %v2032 = vrot.slane %v2030, 4
      %v2033 = vrot.slane %v1931, 5
      %v2034 = vsel %vm2027, %v2032, %v2033
      %v2035 = vrot.slane %v1932, 5
      %v2036 = vrot.slane %v2035, 4
      %v2037 = vrot.slane %v1933, 5
      %v2038 = vsel %vm2027, %v2036, %v2037
      %v2039 = vrot.slane %v2037, 4
      %v2040 = vrot.slane %v1934, 5
      %v2041 = vsel %vm2027, %v2039, %v2040
      %v2042 = vrot.slane %v1935, 5
      %v2043 = vrot.slane %v2042, 4
      %v2044 = vrot.slane %v1936, 5
      %v2045 = vsel %vm2027, %v2043, %v2044
      %v2046 = vrot.slane %v2044, 4
      %v2047 = vrot.slane %v1937, 5
      %v2048 = vsel %vm2027, %v2046, %v2047
      %v2049 = vrot.slane %v1938, 5
      %v2050 = vrot.slane %v2049, 4
      %v2051 = vrot.slane %v1939, 5
      %v2052 = vsel %vm2027, %v2050, %v2051
      %v2053 = vrot.slane %v2051, 4
      %v2054 = vrot.slane %v1940, 5
      %v2055 = vsel %vm2027, %v2053, %v2054
      %v2056 = vrot.slane %v1941, 5
      %v2057 = vrot.slane %v2056, 4
      %v2058 = vrot.slane %v1942, 5
      %v2059 = vsel %vm2027, %v2057, %v2058
      %v2060 = vrot.slane %v2058, 4
      %v2061 = vrot.slane %v1943, 5
      %v2062 = vsel %vm2027, %v2060, %v2061
      %v2063 = vrot.slane %v1944, 5
      %v2064 = vrot.slane %v2063, 4
      %v2065 = vrot.slane %v1945, 5
      %v2066 = vsel %vm2027, %v2064, %v2065
      %v2067 = vrot.slane %v2065, 4
      %v2068 = vrot.slane %v1946, 5
      %v2069 = vsel %vm2027, %v2067, %v2068
      %v2070 = vrot.slane %v1947, 5
      %v2071 = vrot.slane %v2070, 4
      %v2072 = vrot.slane %v1948, 5
      %v2073 = vsel %vm2027, %v2071, %v2072
      %v2074 = vrot.slane %v2072, 4
      %v2075 = vrot.slane %v1949, 5
      %v2076 = vsel %vm2027, %v2074, %v2075
      %v2077 = vrot.slane %v1950, 5
      %v2078 = vrot.slane %v2077, 4
      %v2079 = vrot.slane %v1951, 5
      %v2080 = vsel %vm2027, %v2078, %v2079
      %v2081 = vrot.slane %v2079, 4
      %v2082 = vrot.slane %v1952, 5
      %v2083 = vsel %vm2027, %v2081, %v2082
      %v2084 = vrot.slane %v1953, 5
      %v2085 = vrot.slane %v2084, 4
      %v2086 = vrot.slane %v1954, 5
      %v2087 = vsel %vm2027, %v2085, %v2086
      %v2088 = vrot.slane %v2086, 4
      %v2089 = vrot.slane %v1955, 5
      %v2090 = vsel %vm2027, %v2088, %v2089
      %v2091 = vrot.slane %v1956, 5
      %v2092 = vrot.slane %v2091, 4
      %v2093 = vrot.slane %v1957, 5
      %v2094 = vsel %vm2027, %v2092, %v2093
      %v2095 = vrot.slane %v2093, 4
      %v2096 = vrot.slane %v1958, 5
      %v2097 = vsel %vm2027, %v2095, %v2096
      %v2098 = vrot.slane %v1959, 5
      %v2099 = vrot.slane %v2098, 4
      %v2100 = vrot.slane %v1960, 5
      %v2101 = vsel %vm2027, %v2099, %v2100
      %v2102 = vrot.slane %v2100, 4
      %v2103 = vrot.slane %v1961, 5
      %v2104 = vsel %vm2027, %v2102, %v2103
      %v2105 = vrot.slane %v1962, 5
      %v2106 = vrot.slane %v2105, 4
      %v2107 = vrot.slane %v1963, 5
      %v2108 = vsel %vm2027, %v2106, %v2107
      %v2109 = vrot.slane %v2107, 4
      %v2110 = vrot.slane %v1964, 5
      %v2111 = vsel %vm2027, %v2109, %v2110
      %v2112 = vrot.slane %v1965, 5
      %v2113 = vrot.slane %v2112, 4
      %v2114 = vrot.slane %v1966, 5
      %v2115 = vsel %vm2027, %v2113, %v2114
      %v2116 = vrot.slane %v2114, 4
      %v2117 = vrot.slane %v1967, 5
      %v2118 = vsel %vm2027, %v2116, %v2117
      %v2119 = vrot.slane %v1968, 5
      %v2120 = vrot.slane %v2119, 4
      %v2121 = vrot.slane %v1969, 5
      %v2122 = vsel %vm2027, %v2120, %v2121
      %v2123 = vrot.slane %v2121, 4
      %v2124 = vrot.slane %v1970, 5
      %v2125 = vsel %vm2027, %v2123, %v2124
      %v2126 = vrot.slane %v1971, 5
      %v2127 = vrot.slane %v2126, 4
      %v2128 = vrot.slane %v1972, 5
      %v2129 = vsel %vm2027, %v2127, %v2128
      %v2130 = vrot.slane %v2128, 4
      %v2131 = vrot.slane %v1973, 5
      %v2132 = vsel %vm2027, %v2130, %v2131
      %v2133 = vrot.slane %v1974, 5
      %v2134 = vrot.slane %v2133, 4
      %v2135 = vrot.slane %v1975, 5
      %v2136 = vsel %vm2027, %v2134, %v2135
      %v2137 = vrot.slane %v2135, 4
      %v2138 = vrot.slane %v1976, 5
      %v2139 = vsel %vm2027, %v2137, %v2138
      %2172 = vst [vmem:[#allocation4 + $0x8] sm:$0xf] %v2031
      %2173 = vst [vmem:[#allocation4 + $0x2c] sm:$0xf] %v2034
      %2174 = vst [vmem:[#allocation4 + $0x50] sm:$0xf] %v2038
      %2175 = vst [vmem:[#allocation4 + $0x74] sm:$0xf] %v2041
      %2176 = vst [vmem:[#allocation4 + $0x98] sm:$0xf] %v2045
      %2177 = vst [vmem:[#allocation4 + $0xbc] sm:$0xf] %v2048
      %2178 = vst [vmem:[#allocation4 + $0xe0] sm:$0xf] %v2052
      %2179 = vst [vmem:[#allocation4 + $0x104] sm:$0xf] %v2055
      %2180 = vst [vmem:[#allocation4 + $0x128] sm:$0xf] %v2059
      %2181 = vst [vmem:[#allocation4 + $0x14c] sm:$0xf] %v2062
      %2182 = vst [vmem:[#allocation4 + $0x170] sm:$0xf] %v2066
      %2183 = vst [vmem:[#allocation4 + $0x194] sm:$0xf] %v2069
      %2184 = vst [vmem:[#allocation4 + $0x1b8] sm:$0xf] %v2073
      %2185 = vst [vmem:[#allocation4 + $0x1dc] sm:$0xf] %v2076
      %2186 = vst [vmem:[#allocation4 + $0x200] sm:$0xf] %v2080
      %2187 = vst [vmem:[#allocation4 + $0x224] sm:$0xf] %v2083
      %2188 = vst [vmem:[#allocation4 + $0x248] sm:$0xf] %v2087
      %2189 = vst [vmem:[#allocation4 + $0x26c] sm:$0xf] %v2090
      %2190 = vst [vmem:[#allocation4 + $0x290] sm:$0xf] %v2094
      %2191 = vst [vmem:[#allocation4 + $0x2b4] sm:$0xf] %v2097
      %2192 = vst [vmem:[#allocation4 + $0x2d8] sm:$0xf] %v2101
      %2193 = vst [vmem:[#allocation4 + $0x2fc] sm:$0xf] %v2104
      %2194 = vst [vmem:[#allocation4 + $0x320] sm:$0xf] %v2108
      %2195 = vst [vmem:[#allocation4 + $0x344] sm:$0xf] %v2111
      %2196 = vst [vmem:[#allocation4 + $0x368] sm:$0xf] %v2115
      %2197 = vst [vmem:[#allocation4 + $0x38c] sm:$0xf] %v2118
      %2198 = vst [vmem:[#allocation4 + $0x3b0] sm:$0xf] %v2122
      %2199 = vst [vmem:[#allocation4 + $0x3d4] sm:$0xf] %v2125
      %2200 = vst [vmem:[#allocation4 + $0x3f8] sm:$0xf] %v2129
      %2201 = vst [vmem:[#allocation4 + $0x41c] sm:$0xf] %v2132
      %2202 = vst [vmem:[#allocation4 + $0x440] sm:$0xf] %v2136
      %2203 = vst [vmem:[#allocation4 + $0x464] sm:$0xf] %v2139
      %v2204 = vld [vmem:[%s1251] sm:$0xf]
      %v2205 = vld [vmem:[%s1251 + $0x4] sm:$0xf]
      %v2206 = vld [vmem:[%s1251 + $0xc] sm:$0xf]
      %v2207 = vld [vmem:[%s1251 + $0x10] sm:$0xf]
      %v2208 = vld [vmem:[%s1251 + $0x18] sm:$0xf]
      %v2209 = vld [vmem:[%s1251 + $0x1c] sm:$0xf]
      %v2210 = vld [vmem:[%s1251 + $0x24] sm:$0xf]
      %v2211 = vld [vmem:[%s1251 + $0x28] sm:$0xf]
      %v2212 = vld [vmem:[%s1251 + $0x30] sm:$0xf]
      %v2213 = vld [vmem:[%s1251 + $0x34] sm:$0xf]
      %v2214 = vld [vmem:[%s1251 + $0x3c] sm:$0xf]
      %v2215 = vld [vmem:[%s1251 + $0x40] sm:$0xf]
      %v2216 = vld [vmem:[%s1251 + $0x48] sm:$0xf]
      %v2217 = vld [vmem:[%s1251 + $0x4c] sm:$0xf]
      %v2218 = vld [vmem:[%s1251 + $0x54] sm:$0xf]
      %v2219 = vld [vmem:[%s1251 + $0x58] sm:$0xf]
      %v2220 = vld [vmem:[%s1251 + $0x60] sm:$0xf]
      %v2221 = vld [vmem:[%s1251 + $0x64] sm:$0xf]
      %v2222 = vld [vmem:[%s1251 + $0x6c] sm:$0xf]
      %v2223 = vld [vmem:[%s1251 + $0x70] sm:$0xf]
      %v2224 = vld [vmem:[%s1251 + $0x78] sm:$0xf]
      %v2225 = vld [vmem:[%s1251 + $0x7c] sm:$0xf]
      %v2226 = vld [vmem:[%s1251 + $0x84] sm:$0xf]
      %v2227 = vld [vmem:[%s1251 + $0x88] sm:$0xf]
      %v2228 = vld [vmem:[%s1251 + $0x90] sm:$0xf]
      %v2229 = vld [vmem:[%s1251 + $0x94] sm:$0xf]
      %v2230 = vld [vmem:[%s1251 + $0x9c] sm:$0xf]
      %v2231 = vld [vmem:[%s1251 + $0xa0] sm:$0xf]
      %v2232 = vld [vmem:[%s1251 + $0xa8] sm:$0xf]
      %v2233 = vld [vmem:[%s1251 + $0xac] sm:$0xf]
      %v2234 = vld [vmem:[%s1251 + $0xb4] sm:$0xf]
      %v2235 = vld [vmem:[%s1251 + $0xb8] sm:$0xf]
      %2236 = vst [vmem:[#allocation4 + $0xc] sm:$0xf] %v2204
      %2237 = vst [vmem:[#allocation4 + $0x30] sm:$0xf] %v2205
      %2238 = vst [vmem:[#allocation4 + $0x54] sm:$0xf] %v2206
      %2239 = vst [vmem:[#allocation4 + $0x78] sm:$0xf] %v2207
      %2240 = vst [vmem:[#allocation4 + $0x9c] sm:$0xf] %v2208
      %2241 = vst [vmem:[#allocation4 + $0xc0] sm:$0xf] %v2209
      %2242 = vst [vmem:[#allocation4 + $0xe4] sm:$0xf] %v2210
      %2243 = vst [vmem:[#allocation4 + $0x108] sm:$0xf] %v2211
      %2244 = vst [vmem:[#allocation4 + $0x12c] sm:$0xf] %v2212
      %2245 = vst [vmem:[#allocation4 + $0x150] sm:$0xf] %v2213
      %2246 = vst [vmem:[#allocation4 + $0x174] sm:$0xf] %v2214
      %2247 = vst [vmem:[#allocation4 + $0x198] sm:$0xf] %v2215
      %2248 = vst [vmem:[#allocation4 + $0x1bc] sm:$0xf] %v2216
      %2249 = vst [vmem:[#allocation4 + $0x1e0] sm:$0xf] %v2217
      %2250 = vst [vmem:[#allocation4 + $0x204] sm:$0xf] %v2218
      %2251 = vst [vmem:[#allocation4 + $0x228] sm:$0xf] %v2219
      %2252 = vst [vmem:[#allocation4 + $0x24c] sm:$0xf] %v2220
      %2253 = vst [vmem:[#allocation4 + $0x270] sm:$0xf] %v2221
      %2254 = vst [vmem:[#allocation4 + $0x294] sm:$0xf] %v2222
      %2255 = vst [vmem:[#allocation4 + $0x2b8] sm:$0xf] %v2223
      %2256 = vst [vmem:[#allocation4 + $0x2dc] sm:$0xf] %v2224
      %2257 = vst [vmem:[#allocation4 + $0x300] sm:$0xf] %v2225
      %2258 = vst [vmem:[#allocation4 + $0x324] sm:$0xf] %v2226
      %2259 = vst [vmem:[#allocation4 + $0x348] sm:$0xf] %v2227
      %2260 = vst [vmem:[#allocation4 + $0x36c] sm:$0xf] %v2228
      %2261 = vst [vmem:[#allocation4 + $0x390] sm:$0xf] %v2229
      %2262 = vst [vmem:[#allocation4 + $0x3b4] sm:$0xf] %v2230
      %2263 = vst [vmem:[#allocation4 + $0x3d8] sm:$0xf] %v2231
      %2264 = vst [vmem:[#allocation4 + $0x3fc] sm:$0xf] %v2232
      %2265 = vst [vmem:[#allocation4 + $0x420] sm:$0xf] %v2233
      %2266 = vst [vmem:[#allocation4 + $0x444] sm:$0xf] %v2234
      %2267 = vst [vmem:[#allocation4 + $0x468] sm:$0xf] %v2235
      %v2268 = vld [vmem:[%s1251] sm:$0xf]
      %v2269 = vld [vmem:[%s1251 + $0x4] sm:$0xf]
      %v2270 = vld [vmem:[%s1251 + $0x8] sm:$0x1]
      %v2271 = vld [vmem:[%s1251 + $0xc] sm:$0xf]
      %v2272 = vld [vmem:[%s1251 + $0x10] sm:$0xf]
      %v2273 = vld [vmem:[%s1251 + $0x14] sm:$0x1]
      %v2274 = vld [vmem:[%s1251 + $0x18] sm:$0xf]
      %v2275 = vld [vmem:[%s1251 + $0x1c] sm:$0xf]
      %v2276 = vld [vmem:[%s1251 + $0x20] sm:$0x1]
      %v2277 = vld [vmem:[%s1251 + $0x24] sm:$0xf]
      %v2278 = vld [vmem:[%s1251 + $0x28] sm:$0xf]
      %v2279 = vld [vmem:[%s1251 + $0x2c] sm:$0x1]
      %v2280 = vld [vmem:[%s1251 + $0x30] sm:$0xf]
      %v2281 = vld [vmem:[%s1251 + $0x34] sm:$0xf]
      %v2282 = vld [vmem:[%s1251 + $0x38] sm:$0x1]
      %v2283 = vld [vmem:[%s1251 + $0x3c] sm:$0xf]
      %v2284 = vld [vmem:[%s1251 + $0x40] sm:$0xf]
      %v2285 = vld [vmem:[%s1251 + $0x44] sm:$0x1]
      %v2286 = vld [vmem:[%s1251 + $0x48] sm:$0xf]
      %v2287 = vld [vmem:[%s1251 + $0x4c] sm:$0xf]
      %v2288 = vld [vmem:[%s1251 + $0x50] sm:$0x1]
      %v2289 = vld [vmem:[%s1251 + $0x54] sm:$0xf]
      %v2290 = vld [vmem:[%s1251 + $0x58] sm:$0xf]
      %v2291 = vld [vmem:[%s1251 + $0x5c] sm:$0x1]
      %v2292 = vld [vmem:[%s1251 + $0x60] sm:$0xf]
      %v2293 = vld [vmem:[%s1251 + $0x64] sm:$0xf]
      %v2294 = vld [vmem:[%s1251 + $0x68] sm:$0x1]
      %v2295 = vld [vmem:[%s1251 + $0x6c] sm:$0xf]
      %v2296 = vld [vmem:[%s1251 + $0x70] sm:$0xf]
      %v2297 = vld [vmem:[%s1251 + $0x74] sm:$0x1]
      %v2298 = vld [vmem:[%s1251 + $0x78] sm:$0xf]
      %v2299 = vld [vmem:[%s1251 + $0x7c] sm:$0xf]
      %v2300 = vld [vmem:[%s1251 + $0x80] sm:$0x1]
      %v2301 = vld [vmem:[%s1251 + $0x84] sm:$0xf]
      %v2302 = vld [vmem:[%s1251 + $0x88] sm:$0xf]
      %v2303 = vld [vmem:[%s1251 + $0x8c] sm:$0x1]
      %v2304 = vld [vmem:[%s1251 + $0x90] sm:$0xf]
      %v2305 = vld [vmem:[%s1251 + $0x94] sm:$0xf]
      %v2306 = vld [vmem:[%s1251 + $0x98] sm:$0x1]
      %v2307 = vld [vmem:[%s1251 + $0x9c] sm:$0xf]
      %v2308 = vld [vmem:[%s1251 + $0xa0] sm:$0xf]
      %v2309 = vld [vmem:[%s1251 + $0xa4] sm:$0x1]
      %v2310 = vld [vmem:[%s1251 + $0xa8] sm:$0xf]
      %v2311 = vld [vmem:[%s1251 + $0xac] sm:$0xf]
      %v2312 = vld [vmem:[%s1251 + $0xb0] sm:$0x1]
      %v2313 = vld [vmem:[%s1251 + $0xb4] sm:$0xf]
      %v2314 = vld [vmem:[%s1251 + $0xb8] sm:$0xf]
      %v2315 = vld [vmem:[%s1251 + $0xbc] sm:$0x1]
      %v2317 = vshrl.u32 %v2268, 16
      %v2319 = vrot.slane %v2317, 4
      %v2320 = vshll.u32 %v2268, 16
      %v2322 = vrot.slane %v2320, 5
      %v2323 = vor.u32 %v2319, %v2322
      %v2324 = vrot.slane %v2323, 4
      %v2326 = vshll.u32 %v2269, 16
      %v2328 = vrot.slane %v2326, 5
      %v2329 = vsel %vm1480, %v2324, %v2328
      %v2330 = vshrl.u32 %v2269, 16
      %v2332 = vrot.slane %v2330, 4
      %v2333 = vor.u32 %v2332, %v2328
      %v2334 = vrot.slane %v2333, 4
      %v2336 = vshll.u32 %v2270, 16
      %v2338 = vrot.slane %v2336, 5
      %v2339 = vsel %vm1480, %v2334, %v2338
      %v2341 = vshrl.u32 %v2271, 16
      %v2343 = vrot.slane %v2341, 4
      %v2344 = vshll.u32 %v2271, 16
      %v2346 = vrot.slane %v2344, 5
      %v2347 = vor.u32 %v2343, %v2346
      %v2348 = vrot.slane %v2347, 4
      %v2350 = vshll.u32 %v2272, 16
      %v2352 = vrot.slane %v2350, 5
      %v2353 = vsel %vm1480, %v2348, %v2352
      %v2354 = vshrl.u32 %v2272, 16
      %v2356 = vrot.slane %v2354, 4
      %v2357 = vor.u32 %v2356, %v2352
      %v2358 = vrot.slane %v2357, 4
      %v2360 = vshll.u32 %v2273, 16
      %v2362 = vrot.slane %v2360, 5
      %v2363 = vsel %vm1480, %v2358, %v2362
      %v2365 = vshrl.u32 %v2274, 16
      %v2367 = vrot.slane %v2365, 4
      %v2368 = vshll.u32 %v2274, 16
      %v2370 = vrot.slane %v2368, 5
      %v2371 = vor.u32 %v2367, %v2370
      %v2372 = vrot.slane %v2371, 4
      %v2374 = vshll.u32 %v2275, 16
      %v2376 = vrot.slane %v2374, 5
      %v2377 = vsel %vm1480, %v2372, %v2376
      %v2378 = vshrl.u32 %v2275, 16
      %v2380 = vrot.slane %v2378, 4
      %v2381 = vor.u32 %v2380, %v2376
      %v2382 = vrot.slane %v2381, 4
      %v2384 = vshll.u32 %v2276, 16
      %v2386 = vrot.slane %v2384, 5
      %v2387 = vsel %vm1480, %v2382, %v2386
      %v2389 = vshrl.u32 %v2277, 16
      %v2391 = vrot.slane %v2389, 4
      %v2392 = vshll.u32 %v2277, 16
      %v2394 = vrot.slane %v2392, 5
      %v2395 = vor.u32 %v2391, %v2394
      %v2396 = vrot.slane %v2395, 4
      %v2398 = vshll.u32 %v2278, 16
      %v2400 = vrot.slane %v2398, 5
      %v2401 = vsel %vm1480, %v2396, %v2400
      %v2402 = vshrl.u32 %v2278, 16
      %v2404 = vrot.slane %v2402, 4
      %v2405 = vor.u32 %v2404, %v2400
      %v2406 = vrot.slane %v2405, 4
      %v2408 = vshll.u32 %v2279, 16
      %v2410 = vrot.slane %v2408, 5
      %v2411 = vsel %vm1480, %v2406, %v2410
      %v2413 = vshrl.u32 %v2280, 16
      %v2415 = vrot.slane %v2413, 4
      %v2416 = vshll.u32 %v2280, 16
      %v2418 = vrot.slane %v2416, 5
      %v2419 = vor.u32 %v2415, %v2418
      %v2420 = vrot.slane %v2419, 4
      %v2422 = vshll.u32 %v2281, 16
      %v2424 = vrot.slane %v2422, 5
      %v2425 = vsel %vm1480, %v2420, %v2424
      %v2426 = vshrl.u32 %v2281, 16
      %v2428 = vrot.slane %v2426, 4
      %v2429 = vor.u32 %v2428, %v2424
      %v2430 = vrot.slane %v2429, 4
      %v2432 = vshll.u32 %v2282, 16
      %v2434 = vrot.slane %v2432, 5
      %v2435 = vsel %vm1480, %v2430, %v2434
      %v2437 = vshrl.u32 %v2283, 16
      %v2439 = vrot.slane %v2437, 4
      %v2440 = vshll.u32 %v2283, 16
      %v2442 = vrot.slane %v2440, 5
      %v2443 = vor.u32 %v2439, %v2442
      %v2444 = vrot.slane %v2443, 4
      %v2446 = vshll.u32 %v2284, 16
      %v2448 = vrot.slane %v2446, 5
      %v2449 = vsel %vm1480, %v2444, %v2448
      %v2450 = vshrl.u32 %v2284, 16
      %v2452 = vrot.slane %v2450, 4
      %v2453 = vor.u32 %v2452, %v2448
      %v2454 = vrot.slane %v2453, 4
      %v2456 = vshll.u32 %v2285, 16
      %v2458 = vrot.slane %v2456, 5
      %v2459 = vsel %vm1480, %v2454, %v2458
      %v2461 = vshrl.u32 %v2286, 16
      %v2463 = vrot.slane %v2461, 4
      %v2464 = vshll.u32 %v2286, 16
      %v2466 = vrot.slane %v2464, 5
      %v2467 = vor.u32 %v2463, %v2466
      %v2468 = vrot.slane %v2467, 4
      %v2470 = vshll.u32 %v2287, 16
      %v2472 = vrot.slane %v2470, 5
      %v2473 = vsel %vm1480, %v2468, %v2472
      %v2474 = vshrl.u32 %v2287, 16
      %v2476 = vrot.slane %v2474, 4
      %v2477 = vor.u32 %v2476, %v2472
      %v2478 = vrot.slane %v2477, 4
      %v2480 = vshll.u32 %v2288, 16
      %v2482 = vrot.slane %v2480, 5
      %v2483 = vsel %vm1480, %v2478, %v2482
      %v2485 = vshrl.u32 %v2289, 16
      %v2487 = vrot.slane %v2485, 4
      %v2488 = vshll.u32 %v2289, 16
      %v2490 = vrot.slane %v2488, 5
      %v2491 = vor.u32 %v2487, %v2490
      %v2492 = vrot.slane %v2491, 4
      %v2494 = vshll.u32 %v2290, 16
      %v2496 = vrot.slane %v2494, 5
      %v2497 = vsel %vm1480, %v2492, %v2496
      %v2498 = vshrl.u32 %v2290, 16
      %v2500 = vrot.slane %v2498, 4
      %v2501 = vor.u32 %v2500, %v2496
      %v2502 = vrot.slane %v2501, 4
      %v2504 = vshll.u32 %v2291, 16
      %v2506 = vrot.slane %v2504, 5
      %v2507 = vsel %vm1480, %v2502, %v2506
      %v2509 = vshrl.u32 %v2292, 16
      %v2511 = vrot.slane %v2509, 4
      %v2512 = vshll.u32 %v2292, 16
      %v2514 = vrot.slane %v2512, 5
      %v2515 = vor.u32 %v2511, %v2514
      %v2516 = vrot.slane %v2515, 4
      %v2518 = vshll.u32 %v2293, 16
      %v2520 = vrot.slane %v2518, 5
      %v2521 = vsel %vm1480, %v2516, %v2520
      %v2522 = vshrl.u32 %v2293, 16
      %v2524 = vrot.slane %v2522, 4
      %v2525 = vor.u32 %v2524, %v2520
      %v2526 = vrot.slane %v2525, 4
      %v2528 = vshll.u32 %v2294, 16
      %v2530 = vrot.slane %v2528, 5
      %v2531 = vsel %vm1480, %v2526, %v2530
      %v2533 = vshrl.u32 %v2295, 16
      %v2535 = vrot.slane %v2533, 4
      %v2536 = vshll.u32 %v2295, 16
      %v2538 = vrot.slane %v2536, 5
      %v2539 = vor.u32 %v2535, %v2538
      %v2540 = vrot.slane %v2539, 4
      %v2542 = vshll.u32 %v2296, 16
      %v2544 = vrot.slane %v2542, 5
      %v2545 = vsel %vm1480, %v2540, %v2544
      %v2546 = vshrl.u32 %v2296, 16
      %v2548 = vrot.slane %v2546, 4
      %v2549 = vor.u32 %v2548, %v2544
      %v2550 = vrot.slane %v2549, 4
      %v2552 = vshll.u32 %v2297, 16
      %v2554 = vrot.slane %v2552, 5
      %v2555 = vsel %vm1480, %v2550, %v2554
      %v2557 = vshrl.u32 %v2298, 16
      %v2559 = vrot.slane %v2557, 4
      %v2560 = vshll.u32 %v2298, 16
      %v2562 = vrot.slane %v2560, 5
      %v2563 = vor.u32 %v2559, %v2562
      %v2564 = vrot.slane %v2563, 4
      %v2566 = vshll.u32 %v2299, 16
      %v2568 = vrot.slane %v2566, 5
      %v2569 = vsel %vm1480, %v2564, %v2568
      %v2570 = vshrl.u32 %v2299, 16
      %v2572 = vrot.slane %v2570, 4
      %v2573 = vor.u32 %v2572, %v2568
      %v2574 = vrot.slane %v2573, 4
      %v2576 = vshll.u32 %v2300, 16
      %v2578 = vrot.slane %v2576, 5
      %v2579 = vsel %vm1480, %v2574, %v2578
      %v2581 = vshrl.u32 %v2301, 16
      %v2583 = vrot.slane %v2581, 4
      %v2584 = vshll.u32 %v2301, 16
      %v2586 = vrot.slane %v2584, 5
      %v2587 = vor.u32 %v2583, %v2586
      %v2588 = vrot.slane %v2587, 4
      %v2590 = vshll.u32 %v2302, 16
      %v2592 = vrot.slane %v2590, 5
      %v2593 = vsel %vm1480, %v2588, %v2592
      %v2594 = vshrl.u32 %v2302, 16
      %v2596 = vrot.slane %v2594, 4
      %v2597 = vor.u32 %v2596, %v2592
      %v2598 = vrot.slane %v2597, 4
      %v2600 = vshll.u32 %v2303, 16
      %v2602 = vrot.slane %v2600, 5
      %v2603 = vsel %vm1480, %v2598, %v2602
      %v2605 = vshrl.u32 %v2304, 16
      %v2607 = vrot.slane %v2605, 4
      %v2608 = vshll.u32 %v2304, 16
      %v2610 = vrot.slane %v2608, 5
      %v2611 = vor.u32 %v2607, %v2610
      %v2612 = vrot.slane %v2611, 4
      %v2614 = vshll.u32 %v2305, 16
      %v2616 = vrot.slane %v2614, 5
      %v2617 = vsel %vm1480, %v2612, %v2616
      %v2618 = vshrl.u32 %v2305, 16
      %v2620 = vrot.slane %v2618, 4
      %v2621 = vor.u32 %v2620, %v2616
      %v2622 = vrot.slane %v2621, 4
      %v2624 = vshll.u32 %v2306, 16
      %v2626 = vrot.slane %v2624, 5
      %v2627 = vsel %vm1480, %v2622, %v2626
      %v2629 = vshrl.u32 %v2307, 16
      %v2631 = vrot.slane %v2629, 4
      %v2632 = vshll.u32 %v2307, 16
      %v2634 = vrot.slane %v2632, 5
      %v2635 = vor.u32 %v2631, %v2634
      %v2636 = vrot.slane %v2635, 4
      %v2638 = vshll.u32 %v2308, 16
      %v2640 = vrot.slane %v2638, 5
      %v2641 = vsel %vm1480, %v2636, %v2640
      %v2642 = vshrl.u32 %v2308, 16
      %v2644 = vrot.slane %v2642, 4
      %v2645 = vor.u32 %v2644, %v2640
      %v2646 = vrot.slane %v2645, 4
      %v2648 = vshll.u32 %v2309, 16
      %v2650 = vrot.slane %v2648, 5
      %v2651 = vsel %vm1480, %v2646, %v2650
      %v2653 = vshrl.u32 %v2310, 16
      %v2655 = vrot.slane %v2653, 4
      %v2656 = vshll.u32 %v2310, 16
      %v2658 = vrot.slane %v2656, 5
      %v2659 = vor.u32 %v2655, %v2658
      %v2660 = vrot.slane %v2659, 4
      %v2662 = vshll.u32 %v2311, 16
      %v2664 = vrot.slane %v2662, 5
      %v2665 = vsel %vm1480, %v2660, %v2664
      %v2666 = vshrl.u32 %v2311, 16
      %v2668 = vrot.slane %v2666, 4
      %v2669 = vor.u32 %v2668, %v2664
      %v2670 = vrot.slane %v2669, 4
      %v2672 = vshll.u32 %v2312, 16
      %v2674 = vrot.slane %v2672, 5
      %v2675 = vsel %vm1480, %v2670, %v2674
      %v2677 = vshrl.u32 %v2313, 16
      %v2679 = vrot.slane %v2677, 4
      %v2680 = vshll.u32 %v2313, 16
      %v2682 = vrot.slane %v2680, 5
      %v2683 = vor.u32 %v2679, %v2682
      %v2684 = vrot.slane %v2683, 4
      %v2686 = vshll.u32 %v2314, 16
      %v2688 = vrot.slane %v2686, 5
      %v2689 = vsel %vm1480, %v2684, %v2688
      %v2690 = vshrl.u32 %v2314, 16
      %v2692 = vrot.slane %v2690, 4
      %v2693 = vor.u32 %v2692, %v2688
      %v2694 = vrot.slane %v2693, 4
      %v2696 = vshll.u32 %v2315, 16
      %v2698 = vrot.slane %v2696, 5
      %v2699 = vsel %vm1480, %v2694, %v2698
      %2732 = vst [vmem:[#allocation4 + $0x10] sm:$0xf] %v2329
      %2733 = vst [vmem:[#allocation4 + $0x34] sm:$0xf] %v2339
      %2734 = vst [vmem:[#allocation4 + $0x58] sm:$0xf] %v2353
      %2735 = vst [vmem:[#allocation4 + $0x7c] sm:$0xf] %v2363
      %2736 = vst [vmem:[#allocation4 + $0xa0] sm:$0xf] %v2377
      %2737 = vst [vmem:[#allocation4 + $0xc4] sm:$0xf] %v2387
      %2738 = vst [vmem:[#allocation4 + $0xe8] sm:$0xf] %v2401
      %2739 = vst [vmem:[#allocation4 + $0x10c] sm:$0xf] %v2411
      %2740 = vst [vmem:[#allocation4 + $0x130] sm:$0xf] %v2425
      %2741 = vst [vmem:[#allocation4 + $0x154] sm:$0xf] %v2435
      %2742 = vst [vmem:[#allocation4 + $0x178] sm:$0xf] %v2449
      %2743 = vst [vmem:[#allocation4 + $0x19c] sm:$0xf] %v2459
      %2744 = vst [vmem:[#allocation4 + $0x1c0] sm:$0xf] %v2473
      %2745 = vst [vmem:[#allocation4 + $0x1e4] sm:$0xf] %v2483
      %2746 = vst [vmem:[#allocation4 + $0x208] sm:$0xf] %v2497
      %2747 = vst [vmem:[#allocation4 + $0x22c] sm:$0xf] %v2507
      %2748 = vst [vmem:[#allocation4 + $0x250] sm:$0xf] %v2521
      %2749 = vst [vmem:[#allocation4 + $0x274] sm:$0xf] %v2531
      %2750 = vst [vmem:[#allocation4 + $0x298] sm:$0xf] %v2545
      %2751 = vst [vmem:[#allocation4 + $0x2bc] sm:$0xf] %v2555
      %2752 = vst [vmem:[#allocation4 + $0x2e0] sm:$0xf] %v2569
      %2753 = vst [vmem:[#allocation4 + $0x304] sm:$0xf] %v2579
      %2754 = vst [vmem:[#allocation4 + $0x328] sm:$0xf] %v2593
      %2755 = vst [vmem:[#allocation4 + $0x34c] sm:$0xf] %v2603
      %2756 = vst [vmem:[#allocation4 + $0x370] sm:$0xf] %v2617
      %2757 = vst [vmem:[#allocation4 + $0x394] sm:$0xf] %v2627
      %2758 = vst [vmem:[#allocation4 + $0x3b8] sm:$0xf] %v2641
      %2759 = vst [vmem:[#allocation4 + $0x3dc] sm:$0xf] %v2651
      %2760 = vst [vmem:[#allocation4 + $0x400] sm:$0xf] %v2665
      %2761 = vst [vmem:[#allocation4 + $0x424] sm:$0xf] %v2675
      %2762 = vst [vmem:[#allocation4 + $0x448] sm:$0xf] %v2689
      %2763 = vst [vmem:[#allocation4 + $0x46c] sm:$0xf] %v2699
      %v2764 = vld [vmem:[%s1251] sm:$0xe]
      %v2765 = vld [vmem:[%s1251 + $0x4] sm:$0xf]
      %v2766 = vld [vmem:[%s1251 + $0x8] sm:$0x1]
      %v2767 = vld [vmem:[%s1251 + $0xc] sm:$0xe]
      %v2768 = vld [vmem:[%s1251 + $0x10] sm:$0xf]
      %v2769 = vld [vmem:[%s1251 + $0x14] sm:$0x1]
      %v2770 = vld [vmem:[%s1251 + $0x18] sm:$0xe]
      %v2771 = vld [vmem:[%s1251 + $0x1c] sm:$0xf]
      %v2772 = vld [vmem:[%s1251 + $0x20] sm:$0x1]
      %v2773 = vld [vmem:[%s1251 + $0x24] sm:$0xe]
      %v2774 = vld [vmem:[%s1251 + $0x28] sm:$0xf]
      %v2775 = vld [vmem:[%s1251 + $0x2c] sm:$0x1]
      %v2776 = vld [vmem:[%s1251 + $0x30] sm:$0xe]
      %v2777 = vld [vmem:[%s1251 + $0x34] sm:$0xf]
      %v2778 = vld [vmem:[%s1251 + $0x38] sm:$0x1]
      %v2779 = vld [vmem:[%s1251 + $0x3c] sm:$0xe]
      %v2780 = vld [vmem:[%s1251 + $0x40] sm:$0xf]
      %v2781 = vld [vmem:[%s1251 + $0x44] sm:$0x1]
      %v2782 = vld [vmem:[%s1251 + $0x48] sm:$0xe]
      %v2783 = vld [vmem:[%s1251 + $0x4c] sm:$0xf]
      %v2784 = vld [vmem:[%s1251 + $0x50] sm:$0x1]
      %v2785 = vld [vmem:[%s1251 + $0x54] sm:$0xe]
      %v2786 = vld [vmem:[%s1251 + $0x58] sm:$0xf]
      %v2787 = vld [vmem:[%s1251 + $0x5c] sm:$0x1]
      %v2788 = vld [vmem:[%s1251 + $0x60] sm:$0xe]
      %v2789 = vld [vmem:[%s1251 + $0x64] sm:$0xf]
      %v2790 = vld [vmem:[%s1251 + $0x68] sm:$0x1]
      %v2791 = vld [vmem:[%s1251 + $0x6c] sm:$0xe]
      %v2792 = vld [vmem:[%s1251 + $0x70] sm:$0xf]
      %v2793 = vld [vmem:[%s1251 + $0x74] sm:$0x1]
      %v2794 = vld [vmem:[%s1251 + $0x78] sm:$0xe]
      %v2795 = vld [vmem:[%s1251 + $0x7c] sm:$0xf]
      %v2796 = vld [vmem:[%s1251 + $0x80] sm:$0x1]
      %v2797 = vld [vmem:[%s1251 + $0x84] sm:$0xe]
      %v2798 = vld [vmem:[%s1251 + $0x88] sm:$0xf]
      %v2799 = vld [vmem:[%s1251 + $0x8c] sm:$0x1]
      %v2800 = vld [vmem:[%s1251 + $0x90] sm:$0xe]
      %v2801 = vld [vmem:[%s1251 + $0x94] sm:$0xf]
      %v2802 = vld [vmem:[%s1251 + $0x98] sm:$0x1]
      %v2803 = vld [vmem:[%s1251 + $0x9c] sm:$0xe]
      %v2804 = vld [vmem:[%s1251 + $0xa0] sm:$0xf]
      %v2805 = vld [vmem:[%s1251 + $0xa4] sm:$0x1]
      %v2806 = vld [vmem:[%s1251 + $0xa8] sm:$0xe]
      %v2807 = vld [vmem:[%s1251 + $0xac] sm:$0xf]
      %v2808 = vld [vmem:[%s1251 + $0xb0] sm:$0x1]
      %v2809 = vld [vmem:[%s1251 + $0xb4] sm:$0xe]
      %v2810 = vld [vmem:[%s1251 + $0xb8] sm:$0xf]
      %v2811 = vld [vmem:[%s1251 + $0xbc] sm:$0x1]
      %v2860 = vrot.slane %v2764, 5
      %v2861 = vrot.slane %v2860, 4
      %v2862 = vrot.slane %v2765, 5
      %v2863 = vsel %vm2027, %v2861, %v2862
      %v2864 = vrot.slane %v2862, 4
      %v2865 = vrot.slane %v2766, 5
      %v2866 = vsel %vm2027, %v2864, %v2865
      %v2867 = vrot.slane %v2767, 5
      %v2868 = vrot.slane %v2867, 4
      %v2869 = vrot.slane %v2768, 5
      %v2870 = vsel %vm2027, %v2868, %v2869
      %v2871 = vrot.slane %v2869, 4
      %v2872 = vrot.slane %v2769, 5
      %v2873 = vsel %vm2027, %v2871, %v2872
      %v2874 = vrot.slane %v2770, 5
      %v2875 = vrot.slane %v2874, 4
      %v2876 = vrot.slane %v2771, 5
      %v2877 = vsel %vm2027, %v2875, %v2876
      %v2878 = vrot.slane %v2876, 4
      %v2879 = vrot.slane %v2772, 5
      %v2880 = vsel %vm2027, %v2878, %v2879
      %v2881 = vrot.slane %v2773, 5
      %v2882 = vrot.slane %v2881, 4
      %v2883 = vrot.slane %v2774, 5
      %v2884 = vsel %vm2027, %v2882, %v2883
      %v2885 = vrot.slane %v2883, 4
      %v2886 = vrot.slane %v2775, 5
      %v2887 = vsel %vm2027, %v2885, %v2886
      %v2888 = vrot.slane %v2776, 5
      %v2889 = vrot.slane %v2888, 4
      %v2890 = vrot.slane %v2777, 5
      %v2891 = vsel %vm2027, %v2889, %v2890
      %v2892 = vrot.slane %v2890, 4
      %v2893 = vrot.slane %v2778, 5
      %v2894 = vsel %vm2027, %v2892, %v2893
      %v2895 = vrot.slane %v2779, 5
      %v2896 = vrot.slane %v2895, 4
      %v2897 = vrot.slane %v2780, 5
      %v2898 = vsel %vm2027, %v2896, %v2897
      %v2899 = vrot.slane %v2897, 4
      %v2900 = vrot.slane %v2781, 5
      %v2901 = vsel %vm2027, %v2899, %v2900
      %v2902 = vrot.slane %v2782, 5
      %v2903 = vrot.slane %v2902, 4
      %v2904 = vrot.slane %v2783, 5
      %v2905 = vsel %vm2027, %v2903, %v2904
      %v2906 = vrot.slane %v2904, 4
      %v2907 = vrot.slane %v2784, 5
      %v2908 = vsel %vm2027, %v2906, %v2907
      %v2909 = vrot.slane %v2785, 5
      %v2910 = vrot.slane %v2909, 4
      %v2911 = vrot.slane %v2786, 5
      %v2912 = vsel %vm2027, %v2910, %v2911
      %v2913 = vrot.slane %v2911, 4
      %v2914 = vrot.slane %v2787, 5
      %v2915 = vsel %vm2027, %v2913, %v2914
      %v2916 = vrot.slane %v2788, 5
      %v2917 = vrot.slane %v2916, 4
      %v2918 = vrot.slane %v2789, 5
      %v2919 = vsel %vm2027, %v2917, %v2918
      %v2920 = vrot.slane %v2918, 4
      %v2921 = vrot.slane %v2790, 5
      %v2922 = vsel %vm2027, %v2920, %v2921
      %v2923 = vrot.slane %v2791, 5
      %v2924 = vrot.slane %v2923, 4
      %v2925 = vrot.slane %v2792, 5
      %v2926 = vsel %vm2027, %v2924, %v2925
      %v2927 = vrot.slane %v2925, 4
      %v2928 = vrot.slane %v2793, 5
      %v2929 = vsel %vm2027, %v2927, %v2928
      %v2930 = vrot.slane %v2794, 5
      %v2931 = vrot.slane %v2930, 4
      %v2932 = vrot.slane %v2795, 5
      %v2933 = vsel %vm2027, %v2931, %v2932
      %v2934 = vrot.slane %v2932, 4
      %v2935 = vrot.slane %v2796, 5
      %v2936 = vsel %vm2027, %v2934, %v2935
      %v2937 = vrot.slane %v2797, 5
      %v2938 = vrot.slane %v2937, 4
      %v2939 = vrot.slane %v2798, 5
      %v2940 = vsel %vm2027, %v2938, %v2939
      %v2941 = vrot.slane %v2939, 4
      %v2942 = vrot.slane %v2799, 5
      %v2943 = vsel %vm2027, %v2941, %v2942
      %v2944 = vrot.slane %v2800, 5
      %v2945 = vrot.slane %v2944, 4
      %v2946 = vrot.slane %v2801, 5
      %v2947 = vsel %vm2027, %v2945, %v2946
      %v2948 = vrot.slane %v2946, 4
      %v2949 = vrot.slane %v2802, 5
      %v2950 = vsel %vm2027, %v2948, %v2949
      %v2951 = vrot.slane %v2803, 5
      %v2952 = vrot.slane %v2951, 4
      %v2953 = vrot.slane %v2804, 5
      %v2954 = vsel %vm2027, %v2952, %v2953
      %v2955 = vrot.slane %v2953, 4
      %v2956 = vrot.slane %v2805, 5
      %v2957 = vsel %vm2027, %v2955, %v2956
      %v2958 = vrot.slane %v2806, 5
      %v2959 = vrot.slane %v2958, 4
      %v2960 = vrot.slane %v2807, 5
      %v2961 = vsel %vm2027, %v2959, %v2960
      %v2962 = vrot.slane %v2960, 4
      %v2963 = vrot.slane %v2808, 5
      %v2964 = vsel %vm2027, %v2962, %v2963
      %v2965 = vrot.slane %v2809, 5
      %v2966 = vrot.slane %v2965, 4
      %v2967 = vrot.slane %v2810, 5
      %v2968 = vsel %vm2027, %v2966, %v2967
      %v2969 = vrot.slane %v2967, 4
      %v2970 = vrot.slane %v2811, 5
      %v2971 = vsel %vm2027, %v2969, %v2970
      %3004 = vst [vmem:[#allocation4 + $0x14] sm:$0xf] %v2863
      %3005 = vst [vmem:[#allocation4 + $0x38] sm:$0xf] %v2866
      %3006 = vst [vmem:[#allocation4 + $0x5c] sm:$0xf] %v2870
      %3007 = vst [vmem:[#allocation4 + $0x80] sm:$0xf] %v2873
      %3008 = vst [vmem:[#allocation4 + $0xa4] sm:$0xf] %v2877
      %3009 = vst [vmem:[#allocation4 + $0xc8] sm:$0xf] %v2880
      %3010 = vst [vmem:[#allocation4 + $0xec] sm:$0xf] %v2884
      %3011 = vst [vmem:[#allocation4 + $0x110] sm:$0xf] %v2887
      %3012 = vst [vmem:[#allocation4 + $0x134] sm:$0xf] %v2891
      %3013 = vst [vmem:[#allocation4 + $0x158] sm:$0xf] %v2894
      %3014 = vst [vmem:[#allocation4 + $0x17c] sm:$0xf] %v2898
      %3015 = vst [vmem:[#allocation4 + $0x1a0] sm:$0xf] %v2901
      %3016 = vst [vmem:[#allocation4 + $0x1c4] sm:$0xf] %v2905
      %3017 = vst [vmem:[#allocation4 + $0x1e8] sm:$0xf] %v2908
      %3018 = vst [vmem:[#allocation4 + $0x20c] sm:$0xf] %v2912
      %3019 = vst [vmem:[#allocation4 + $0x230] sm:$0xf] %v2915
      %3020 = vst [vmem:[#allocation4 + $0x254] sm:$0xf] %v2919
      %3021 = vst [vmem:[#allocation4 + $0x278] sm:$0xf] %v2922
      %3022 = vst [vmem:[#allocation4 + $0x29c] sm:$0xf] %v2926
      %3023 = vst [vmem:[#allocation4 + $0x2c0] sm:$0xf] %v2929
      %3024 = vst [vmem:[#allocation4 + $0x2e4] sm:$0xf] %v2933
      %3025 = vst [vmem:[#allocation4 + $0x308] sm:$0xf] %v2936
      %3026 = vst [vmem:[#allocation4 + $0x32c] sm:$0xf] %v2940
      %3027 = vst [vmem:[#allocation4 + $0x350] sm:$0xf] %v2943
      %3028 = vst [vmem:[#allocation4 + $0x374] sm:$0xf] %v2947
      %3029 = vst [vmem:[#allocation4 + $0x398] sm:$0xf] %v2950
      %3030 = vst [vmem:[#allocation4 + $0x3bc] sm:$0xf] %v2954
      %3031 = vst [vmem:[#allocation4 + $0x3e0] sm:$0xf] %v2957
      %3032 = vst [vmem:[#allocation4 + $0x404] sm:$0xf] %v2961
      %3033 = vst [vmem:[#allocation4 + $0x428] sm:$0xf] %v2964
      %3034 = vst [vmem:[#allocation4 + $0x44c] sm:$0xf] %v2968
      %3035 = vst [vmem:[#allocation4 + $0x470] sm:$0xf] %v2971
      %s3036 = scalar_lea.vmem [#allocation2], 24
      %v3037 = vld [vmem:[%s3036] sm:$0xf]
      %v3038 = vld [vmem:[%s3036 + $0x4] sm:$0xf]
      %v3039 = vld [vmem:[%s3036 + $0xc] sm:$0xf]
      %v3040 = vld [vmem:[%s3036 + $0x10] sm:$0xf]
      %v3041 = vld [vmem:[%s3036 + $0x18] sm:$0xf]
      %v3042 = vld [vmem:[%s3036 + $0x1c] sm:$0xf]
      %v3043 = vld [vmem:[%s3036 + $0x24] sm:$0xf]
      %v3044 = vld [vmem:[%s3036 + $0x28] sm:$0xf]
      %v3045 = vld [vmem:[%s3036 + $0x30] sm:$0xf]
      %v3046 = vld [vmem:[%s3036 + $0x34] sm:$0xf]
      %v3047 = vld [vmem:[%s3036 + $0x3c] sm:$0xf]
      %v3048 = vld [vmem:[%s3036 + $0x40] sm:$0xf]
      %v3049 = vld [vmem:[%s3036 + $0x48] sm:$0xf]
      %v3050 = vld [vmem:[%s3036 + $0x4c] sm:$0xf]
      %v3051 = vld [vmem:[%s3036 + $0x54] sm:$0xf]
      %v3052 = vld [vmem:[%s3036 + $0x58] sm:$0xf]
      %v3053 = vld [vmem:[%s3036 + $0x60] sm:$0xf]
      %v3054 = vld [vmem:[%s3036 + $0x64] sm:$0xf]
      %v3055 = vld [vmem:[%s3036 + $0x6c] sm:$0xf]
      %v3056 = vld [vmem:[%s3036 + $0x70] sm:$0xf]
      %v3057 = vld [vmem:[%s3036 + $0x78] sm:$0xf]
      %v3058 = vld [vmem:[%s3036 + $0x7c] sm:$0xf]
      %v3059 = vld [vmem:[%s3036 + $0x84] sm:$0xf]
      %v3060 = vld [vmem:[%s3036 + $0x88] sm:$0xf]
      %v3061 = vld [vmem:[%s3036 + $0x90] sm:$0xf]
      %v3062 = vld [vmem:[%s3036 + $0x94] sm:$0xf]
      %v3063 = vld [vmem:[%s3036 + $0x9c] sm:$0xf]
      %v3064 = vld [vmem:[%s3036 + $0xa0] sm:$0xf]
      %v3065 = vld [vmem:[%s3036 + $0xa8] sm:$0xf]
      %v3066 = vld [vmem:[%s3036 + $0xac] sm:$0xf]
      %v3067 = vld [vmem:[%s3036 + $0xb4] sm:$0xf]
      %v3068 = vld [vmem:[%s3036 + $0xb8] sm:$0xf]
      %3069 = vst [vmem:[#allocation4 + $0x18] sm:$0xf] %v3037
      %3070 = vst [vmem:[#allocation4 + $0x3c] sm:$0xf] %v3038
      %3071 = vst [vmem:[#allocation4 + $0x60] sm:$0xf] %v3039
      %3072 = vst [vmem:[#allocation4 + $0x84] sm:$0xf] %v3040
      %3073 = vst [vmem:[#allocation4 + $0xa8] sm:$0xf] %v3041
      %3074 = vst [vmem:[#allocation4 + $0xcc] sm:$0xf] %v3042
      %3075 = vst [vmem:[#allocation4 + $0xf0] sm:$0xf] %v3043
      %3076 = vst [vmem:[#allocation4 + $0x114] sm:$0xf] %v3044
      %3077 = vst [vmem:[#allocation4 + $0x138] sm:$0xf] %v3045
      %3078 = vst [vmem:[#allocation4 + $0x15c] sm:$0xf] %v3046
      %3079 = vst [vmem:[#allocation4 + $0x180] sm:$0xf] %v3047
      %3080 = vst [vmem:[#allocation4 + $0x1a4] sm:$0xf] %v3048
      %3081 = vst [vmem:[#allocation4 + $0x1c8] sm:$0xf] %v3049
      %3082 = vst [vmem:[#allocation4 + $0x1ec] sm:$0xf] %v3050
      %3083 = vst [vmem:[#allocation4 + $0x210] sm:$0xf] %v3051
      %3084 = vst [vmem:[#allocation4 + $0x234] sm:$0xf] %v3052
      %3085 = vst [vmem:[#allocation4 + $0x258] sm:$0xf] %v3053
      %3086 = vst [vmem:[#allocation4 + $0x27c] sm:$0xf] %v3054
      %3087 = vst [vmem:[#allocation4 + $0x2a0] sm:$0xf] %v3055
      %3088 = vst [vmem:[#allocation4 + $0x2c4] sm:$0xf] %v3056
      %3089 = vst [vmem:[#allocation4 + $0x2e8] sm:$0xf] %v3057
      %3090 = vst [vmem:[#allocation4 + $0x30c] sm:$0xf] %v3058
      %3091 = vst [vmem:[#allocation4 + $0x330] sm:$0xf] %v3059
      %3092 = vst [vmem:[#allocation4 + $0x354] sm:$0xf] %v3060
      %3093 = vst [vmem:[#allocation4 + $0x378] sm:$0xf] %v3061
      %3094 = vst [vmem:[#allocation4 + $0x39c] sm:$0xf] %v3062
      %3095 = vst [vmem:[#allocation4 + $0x3c0] sm:$0xf] %v3063
      %3096 = vst [vmem:[#allocation4 + $0x3e4] sm:$0xf] %v3064
      %3097 = vst [vmem:[#allocation4 + $0x408] sm:$0xf] %v3065
      %3098 = vst [vmem:[#allocation4 + $0x42c] sm:$0xf] %v3066
      %3099 = vst [vmem:[#allocation4 + $0x450] sm:$0xf] %v3067
      %3100 = vst [vmem:[#allocation4 + $0x474] sm:$0xf] %v3068
      %v3101 = vld [vmem:[%s3036] sm:$0xf]
      %v3102 = vld [vmem:[%s3036 + $0x4] sm:$0xf]
      %v3103 = vld [vmem:[%s3036 + $0x8] sm:$0x1]
      %v3104 = vld [vmem:[%s3036 + $0xc] sm:$0xf]
      %v3105 = vld [vmem:[%s3036 + $0x10] sm:$0xf]
      %v3106 = vld [vmem:[%s3036 + $0x14] sm:$0x1]
      %v3107 = vld [vmem:[%s3036 + $0x18] sm:$0xf]
      %v3108 = vld [vmem:[%s3036 + $0x1c] sm:$0xf]
      %v3109 = vld [vmem:[%s3036 + $0x20] sm:$0x1]
      %v3110 = vld [vmem:[%s3036 + $0x24] sm:$0xf]
      %v3111 = vld [vmem:[%s3036 + $0x28] sm:$0xf]
      %v3112 = vld [vmem:[%s3036 + $0x2c] sm:$0x1]
      %v3113 = vld [vmem:[%s3036 + $0x30] sm:$0xf]
      %v3114 = vld [vmem:[%s3036 + $0x34] sm:$0xf]
      %v3115 = vld [vmem:[%s3036 + $0x38] sm:$0x1]
      %v3116 = vld [vmem:[%s3036 + $0x3c] sm:$0xf]
      %v3117 = vld [vmem:[%s3036 + $0x40] sm:$0xf]
      %v3118 = vld [vmem:[%s3036 + $0x44] sm:$0x1]
      %v3119 = vld [vmem:[%s3036 + $0x48] sm:$0xf]
      %v3120 = vld [vmem:[%s3036 + $0x4c] sm:$0xf]
      %v3121 = vld [vmem:[%s3036 + $0x50] sm:$0x1]
      %v3122 = vld [vmem:[%s3036 + $0x54] sm:$0xf]
      %v3123 = vld [vmem:[%s3036 + $0x58] sm:$0xf]
      %v3124 = vld [vmem:[%s3036 + $0x5c] sm:$0x1]
      %v3125 = vld [vmem:[%s3036 + $0x60] sm:$0xf]
      %v3126 = vld [vmem:[%s3036 + $0x64] sm:$0xf]
      %v3127 = vld [vmem:[%s3036 + $0x68] sm:$0x1]
      %v3128 = vld [vmem:[%s3036 + $0x6c] sm:$0xf]
      %v3129 = vld [vmem:[%s3036 + $0x70] sm:$0xf]
      %v3130 = vld [vmem:[%s3036 + $0x74] sm:$0x1]
      %v3131 = vld [vmem:[%s3036 + $0x78] sm:$0xf]
      %v3132 = vld [vmem:[%s3036 + $0x7c] sm:$0xf]
      %v3133 = vld [vmem:[%s3036 + $0x80] sm:$0x1]
      %v3134 = vld [vmem:[%s3036 + $0x84] sm:$0xf]
      %v3135 = vld [vmem:[%s3036 + $0x88] sm:$0xf]
      %v3136 = vld [vmem:[%s3036 + $0x8c] sm:$0x1]
      %v3137 = vld [vmem:[%s3036 + $0x90] sm:$0xf]
      %v3138 = vld [vmem:[%s3036 + $0x94] sm:$0xf]
      %v3139 = vld [vmem:[%s3036 + $0x98] sm:$0x1]
      %v3140 = vld [vmem:[%s3036 + $0x9c] sm:$0xf]
      %v3141 = vld [vmem:[%s3036 + $0xa0] sm:$0xf]
      %v3142 = vld [vmem:[%s3036 + $0xa4] sm:$0x1]
      %v3143 = vld [vmem:[%s3036 + $0xa8] sm:$0xf]
      %v3144 = vld [vmem:[%s3036 + $0xac] sm:$0xf]
      %v3145 = vld [vmem:[%s3036 + $0xb0] sm:$0x1]
      %v3146 = vld [vmem:[%s3036 + $0xb4] sm:$0xf]
      %v3147 = vld [vmem:[%s3036 + $0xb8] sm:$0xf]
      %v3148 = vld [vmem:[%s3036 + $0xbc] sm:$0x1]
      %v3150 = vshrl.u32 %v3101, 16
      %v3152 = vrot.slane %v3150, 4
      %v3153 = vshll.u32 %v3101, 16
      %v3155 = vrot.slane %v3153, 5
      %v3156 = vor.u32 %v3152, %v3155
      %v3157 = vrot.slane %v3156, 4
      %v3159 = vshll.u32 %v3102, 16
      %v3161 = vrot.slane %v3159, 5
      %v3162 = vsel %vm1480, %v3157, %v3161
      %v3163 = vshrl.u32 %v3102, 16
      %v3165 = vrot.slane %v3163, 4
      %v3166 = vor.u32 %v3165, %v3161
      %v3167 = vrot.slane %v3166, 4
      %v3169 = vshll.u32 %v3103, 16
      %v3171 = vrot.slane %v3169, 5
      %v3172 = vsel %vm1480, %v3167, %v3171
      %v3174 = vshrl.u32 %v3104, 16
      %v3176 = vrot.slane %v3174, 4
      %v3177 = vshll.u32 %v3104, 16
      %v3179 = vrot.slane %v3177, 5
      %v3180 = vor.u32 %v3176, %v3179
      %v3181 = vrot.slane %v3180, 4
      %v3183 = vshll.u32 %v3105, 16
      %v3185 = vrot.slane %v3183, 5
      %v3186 = vsel %vm1480, %v3181, %v3185
      %v3187 = vshrl.u32 %v3105, 16
      %v3189 = vrot.slane %v3187, 4
      %v3190 = vor.u32 %v3189, %v3185
      %v3191 = vrot.slane %v3190, 4
      %v3193 = vshll.u32 %v3106, 16
      %v3195 = vrot.slane %v3193, 5
      %v3196 = vsel %vm1480, %v3191, %v3195
      %v3198 = vshrl.u32 %v3107, 16
      %v3200 = vrot.slane %v3198, 4
      %v3201 = vshll.u32 %v3107, 16
      %v3203 = vrot.slane %v3201, 5
      %v3204 = vor.u32 %v3200, %v3203
      %v3205 = vrot.slane %v3204, 4
      %v3207 = vshll.u32 %v3108, 16
      %v3209 = vrot.slane %v3207, 5
      %v3210 = vsel %vm1480, %v3205, %v3209
      %v3211 = vshrl.u32 %v3108, 16
      %v3213 = vrot.slane %v3211, 4
      %v3214 = vor.u32 %v3213, %v3209
      %v3215 = vrot.slane %v3214, 4
      %v3217 = vshll.u32 %v3109, 16
      %v3219 = vrot.slane %v3217, 5
      %v3220 = vsel %vm1480, %v3215, %v3219
      %v3222 = vshrl.u32 %v3110, 16
      %v3224 = vrot.slane %v3222, 4
      %v3225 = vshll.u32 %v3110, 16
      %v3227 = vrot.slane %v3225, 5
      %v3228 = vor.u32 %v3224, %v3227
      %v3229 = vrot.slane %v3228, 4
      %v3231 = vshll.u32 %v3111, 16
      %v3233 = vrot.slane %v3231, 5
      %v3234 = vsel %vm1480, %v3229, %v3233
      %v3235 = vshrl.u32 %v3111, 16
      %v3237 = vrot.slane %v3235, 4
      %v3238 = vor.u32 %v3237, %v3233
      %v3239 = vrot.slane %v3238, 4
      %v3241 = vshll.u32 %v3112, 16
      %v3243 = vrot.slane %v3241, 5
      %v3244 = vsel %vm1480, %v3239, %v3243
      %v3246 = vshrl.u32 %v3113, 16
      %v3248 = vrot.slane %v3246, 4
      %v3249 = vshll.u32 %v3113, 16
      %v3251 = vrot.slane %v3249, 5
      %v3252 = vor.u32 %v3248, %v3251
      %v3253 = vrot.slane %v3252, 4
      %v3255 = vshll.u32 %v3114, 16
      %v3257 = vrot.slane %v3255, 5
      %v3258 = vsel %vm1480, %v3253, %v3257
      %v3259 = vshrl.u32 %v3114, 16
      %v3261 = vrot.slane %v3259, 4
      %v3262 = vor.u32 %v3261, %v3257
      %v3263 = vrot.slane %v3262, 4
      %v3265 = vshll.u32 %v3115, 16
      %v3267 = vrot.slane %v3265, 5
      %v3268 = vsel %vm1480, %v3263, %v3267
      %v3270 = vshrl.u32 %v3116, 16
      %v3272 = vrot.slane %v3270, 4
      %v3273 = vshll.u32 %v3116, 16
      %v3275 = vrot.slane %v3273, 5
      %v3276 = vor.u32 %v3272, %v3275
      %v3277 = vrot.slane %v3276, 4
      %v3279 = vshll.u32 %v3117, 16
      %v3281 = vrot.slane %v3279, 5
      %v3282 = vsel %vm1480, %v3277, %v3281
      %v3283 = vshrl.u32 %v3117, 16
      %v3285 = vrot.slane %v3283, 4
      %v3286 = vor.u32 %v3285, %v3281
      %v3287 = vrot.slane %v3286, 4
      %v3289 = vshll.u32 %v3118, 16
      %v3291 = vrot.slane %v3289, 5
      %v3292 = vsel %vm1480, %v3287, %v3291
      %v3294 = vshrl.u32 %v3119, 16
      %v3296 = vrot.slane %v3294, 4
      %v3297 = vshll.u32 %v3119, 16
      %v3299 = vrot.slane %v3297, 5
      %v3300 = vor.u32 %v3296, %v3299
      %v3301 = vrot.slane %v3300, 4
      %v3303 = vshll.u32 %v3120, 16
      %v3305 = vrot.slane %v3303, 5
      %v3306 = vsel %vm1480, %v3301, %v3305
      %v3307 = vshrl.u32 %v3120, 16
      %v3309 = vrot.slane %v3307, 4
      %v3310 = vor.u32 %v3309, %v3305
      %v3311 = vrot.slane %v3310, 4
      %v3313 = vshll.u32 %v3121, 16
      %v3315 = vrot.slane %v3313, 5
      %v3316 = vsel %vm1480, %v3311, %v3315
      %v3318 = vshrl.u32 %v3122, 16
      %v3320 = vrot.slane %v3318, 4
      %v3321 = vshll.u32 %v3122, 16
      %v3323 = vrot.slane %v3321, 5
      %v3324 = vor.u32 %v3320, %v3323
      %v3325 = vrot.slane %v3324, 4
      %v3327 = vshll.u32 %v3123, 16
      %v3329 = vrot.slane %v3327, 5
      %v3330 = vsel %vm1480, %v3325, %v3329
      %v3331 = vshrl.u32 %v3123, 16
      %v3333 = vrot.slane %v3331, 4
      %v3334 = vor.u32 %v3333, %v3329
      %v3335 = vrot.slane %v3334, 4
      %v3337 = vshll.u32 %v3124, 16
      %v3339 = vrot.slane %v3337, 5
      %v3340 = vsel %vm1480, %v3335, %v3339
      %v3342 = vshrl.u32 %v3125, 16
      %v3344 = vrot.slane %v3342, 4
      %v3345 = vshll.u32 %v3125, 16
      %v3347 = vrot.slane %v3345, 5
      %v3348 = vor.u32 %v3344, %v3347
      %v3349 = vrot.slane %v3348, 4
      %v3351 = vshll.u32 %v3126, 16
      %v3353 = vrot.slane %v3351, 5
      %v3354 = vsel %vm1480, %v3349, %v3353
      %v3355 = vshrl.u32 %v3126, 16
      %v3357 = vrot.slane %v3355, 4
      %v3358 = vor.u32 %v3357, %v3353
      %v3359 = vrot.slane %v3358, 4
      %v3361 = vshll.u32 %v3127, 16
      %v3363 = vrot.slane %v3361, 5
      %v3364 = vsel %vm1480, %v3359, %v3363
      %v3366 = vshrl.u32 %v3128, 16
      %v3368 = vrot.slane %v3366, 4
      %v3369 = vshll.u32 %v3128, 16
      %v3371 = vrot.slane %v3369, 5
      %v3372 = vor.u32 %v3368, %v3371
      %v3373 = vrot.slane %v3372, 4
      %v3375 = vshll.u32 %v3129, 16
      %v3377 = vrot.slane %v3375, 5
      %v3378 = vsel %vm1480, %v3373, %v3377
      %v3379 = vshrl.u32 %v3129, 16
      %v3381 = vrot.slane %v3379, 4
      %v3382 = vor.u32 %v3381, %v3377
      %v3383 = vrot.slane %v3382, 4
      %v3385 = vshll.u32 %v3130, 16
      %v3387 = vrot.slane %v3385, 5
      %v3388 = vsel %vm1480, %v3383, %v3387
      %v3390 = vshrl.u32 %v3131, 16
      %v3392 = vrot.slane %v3390, 4
      %v3393 = vshll.u32 %v3131, 16
      %v3395 = vrot.slane %v3393, 5
      %v3396 = vor.u32 %v3392, %v3395
      %v3397 = vrot.slane %v3396, 4
      %v3399 = vshll.u32 %v3132, 16
      %v3401 = vrot.slane %v3399, 5
      %v3402 = vsel %vm1480, %v3397, %v3401
      %v3403 = vshrl.u32 %v3132, 16
      %v3405 = vrot.slane %v3403, 4
      %v3406 = vor.u32 %v3405, %v3401
      %v3407 = vrot.slane %v3406, 4
      %v3409 = vshll.u32 %v3133, 16
      %v3411 = vrot.slane %v3409, 5
      %v3412 = vsel %vm1480, %v3407, %v3411
      %v3414 = vshrl.u32 %v3134, 16
      %v3416 = vrot.slane %v3414, 4
      %v3417 = vshll.u32 %v3134, 16
      %v3419 = vrot.slane %v3417, 5
      %v3420 = vor.u32 %v3416, %v3419
      %v3421 = vrot.slane %v3420, 4
      %v3423 = vshll.u32 %v3135, 16
      %v3425 = vrot.slane %v3423, 5
      %v3426 = vsel %vm1480, %v3421, %v3425
      %v3427 = vshrl.u32 %v3135, 16
      %v3429 = vrot.slane %v3427, 4
      %v3430 = vor.u32 %v3429, %v3425
      %v3431 = vrot.slane %v3430, 4
      %v3433 = vshll.u32 %v3136, 16
      %v3435 = vrot.slane %v3433, 5
      %v3436 = vsel %vm1480, %v3431, %v3435
      %v3438 = vshrl.u32 %v3137, 16
      %v3440 = vrot.slane %v3438, 4
      %v3441 = vshll.u32 %v3137, 16
      %v3443 = vrot.slane %v3441, 5
      %v3444 = vor.u32 %v3440, %v3443
      %v3445 = vrot.slane %v3444, 4
      %v3447 = vshll.u32 %v3138, 16
      %v3449 = vrot.slane %v3447, 5
      %v3450 = vsel %vm1480, %v3445, %v3449
      %v3451 = vshrl.u32 %v3138, 16
      %v3453 = vrot.slane %v3451, 4
      %v3454 = vor.u32 %v3453, %v3449
      %v3455 = vrot.slane %v3454, 4
      %v3457 = vshll.u32 %v3139, 16
      %v3459 = vrot.slane %v3457, 5
      %v3460 = vsel %vm1480, %v3455, %v3459
      %v3462 = vshrl.u32 %v3140, 16
      %v3464 = vrot.slane %v3462, 4
      %v3465 = vshll.u32 %v3140, 16
      %v3467 = vrot.slane %v3465, 5
      %v3468 = vor.u32 %v3464, %v3467
      %v3469 = vrot.slane %v3468, 4
      %v3471 = vshll.u32 %v3141, 16
      %v3473 = vrot.slane %v3471, 5
      %v3474 = vsel %vm1480, %v3469, %v3473
      %v3475 = vshrl.u32 %v3141, 16
      %v3477 = vrot.slane %v3475, 4
      %v3478 = vor.u32 %v3477, %v3473
      %v3479 = vrot.slane %v3478, 4
      %v3481 = vshll.u32 %v3142, 16
      %v3483 = vrot.slane %v3481, 5
      %v3484 = vsel %vm1480, %v3479, %v3483
      %v3486 = vshrl.u32 %v3143, 16
      %v3488 = vrot.slane %v3486, 4
      %v3489 = vshll.u32 %v3143, 16
      %v3491 = vrot.slane %v3489, 5
      %v3492 = vor.u32 %v3488, %v3491
      %v3493 = vrot.slane %v3492, 4
      %v3495 = vshll.u32 %v3144, 16
      %v3497 = vrot.slane %v3495, 5
      %v3498 = vsel %vm1480, %v3493, %v3497
      %v3499 = vshrl.u32 %v3144, 16
      %v3501 = vrot.slane %v3499, 4
      %v3502 = vor.u32 %v3501, %v3497
      %v3503 = vrot.slane %v3502, 4
      %v3505 = vshll.u32 %v3145, 16
      %v3507 = vrot.slane %v3505, 5
      %v3508 = vsel %vm1480, %v3503, %v3507
      %v3510 = vshrl.u32 %v3146, 16
      %v3512 = vrot.slane %v3510, 4
      %v3513 = vshll.u32 %v3146, 16
      %v3515 = vrot.slane %v3513, 5
      %v3516 = vor.u32 %v3512, %v3515
      %v3517 = vrot.slane %v3516, 4
      %v3519 = vshll.u32 %v3147, 16
      %v3521 = vrot.slane %v3519, 5
      %v3522 = vsel %vm1480, %v3517, %v3521
      %v3523 = vshrl.u32 %v3147, 16
      %v3525 = vrot.slane %v3523, 4
      %v3526 = vor.u32 %v3525, %v3521
      %v3527 = vrot.slane %v3526, 4
      %v3529 = vshll.u32 %v3148, 16
      %v3531 = vrot.slane %v3529, 5
      %v3532 = vsel %vm1480, %v3527, %v3531
      %3565 = vst [vmem:[#allocation4 + $0x1c] sm:$0xf] %v3162
      %3566 = vst [vmem:[#allocation4 + $0x40] sm:$0xf] %v3172
      %3567 = vst [vmem:[#allocation4 + $0x64] sm:$0xf] %v3186
      %3568 = vst [vmem:[#allocation4 + $0x88] sm:$0xf] %v3196
      %3569 = vst [vmem:[#allocation4 + $0xac] sm:$0xf] %v3210
      %3570 = vst [vmem:[#allocation4 + $0xd0] sm:$0xf] %v3220
      %3571 = vst [vmem:[#allocation4 + $0xf4] sm:$0xf] %v3234
      %3572 = vst [vmem:[#allocation4 + $0x118] sm:$0xf] %v3244
      %3573 = vst [vmem:[#allocation4 + $0x13c] sm:$0xf] %v3258
      %3574 = vst [vmem:[#allocation4 + $0x160] sm:$0xf] %v3268
      %3575 = vst [vmem:[#allocation4 + $0x184] sm:$0xf] %v3282
      %3576 = vst [vmem:[#allocation4 + $0x1a8] sm:$0xf] %v3292
      %3577 = vst [vmem:[#allocation4 + $0x1cc] sm:$0xf] %v3306
      %3578 = vst [vmem:[#allocation4 + $0x1f0] sm:$0xf] %v3316
      %3579 = vst [vmem:[#allocation4 + $0x214] sm:$0xf] %v3330
      %3580 = vst [vmem:[#allocation4 + $0x238] sm:$0xf] %v3340
      %3581 = vst [vmem:[#allocation4 + $0x25c] sm:$0xf] %v3354
      %3582 = vst [vmem:[#allocation4 + $0x280] sm:$0xf] %v3364
      %3583 = vst [vmem:[#allocation4 + $0x2a4] sm:$0xf] %v3378
      %3584 = vst [vmem:[#allocation4 + $0x2c8] sm:$0xf] %v3388
      %3585 = vst [vmem:[#allocation4 + $0x2ec] sm:$0xf] %v3402
      %3586 = vst [vmem:[#allocation4 + $0x310] sm:$0xf] %v3412
      %3587 = vst [vmem:[#allocation4 + $0x334] sm:$0xf] %v3426
      %3588 = vst [vmem:[#allocation4 + $0x358] sm:$0xf] %v3436
      %3589 = vst [vmem:[#allocation4 + $0x37c] sm:$0xf] %v3450
      %3590 = vst [vmem:[#allocation4 + $0x3a0] sm:$0xf] %v3460
      %3591 = vst [vmem:[#allocation4 + $0x3c4] sm:$0xf] %v3474
      %3592 = vst [vmem:[#allocation4 + $0x3e8] sm:$0xf] %v3484
      %3593 = vst [vmem:[#allocation4 + $0x40c] sm:$0xf] %v3498
      %3594 = vst [vmem:[#allocation4 + $0x430] sm:$0xf] %v3508
      %3595 = vst [vmem:[#allocation4 + $0x454] sm:$0xf] %v3522
      %3596 = vst [vmem:[#allocation4 + $0x478] sm:$0xf] %v3532
      %v3597 = vld [vmem:[%s3036] sm:$0xe]
      %v3598 = vld [vmem:[%s3036 + $0x4] sm:$0xf]
      %v3599 = vld [vmem:[%s3036 + $0x8] sm:$0x1]
      %v3600 = vld [vmem:[%s3036 + $0xc] sm:$0xe]
      %v3601 = vld [vmem:[%s3036 + $0x10] sm:$0xf]
      %v3602 = vld [vmem:[%s3036 + $0x14] sm:$0x1]
      %v3603 = vld [vmem:[%s3036 + $0x18] sm:$0xe]
      %v3604 = vld [vmem:[%s3036 + $0x1c] sm:$0xf]
      %v3605 = vld [vmem:[%s3036 + $0x20] sm:$0x1]
      %v3606 = vld [vmem:[%s3036 + $0x24] sm:$0xe]
      %v3607 = vld [vmem:[%s3036 + $0x28] sm:$0xf]
      %v3608 = vld [vmem:[%s3036 + $0x2c] sm:$0x1]
      %v3609 = vld [vmem:[%s3036 + $0x30] sm:$0xe]
      %v3610 = vld [vmem:[%s3036 + $0x34] sm:$0xf]
      %v3611 = vld [vmem:[%s3036 + $0x38] sm:$0x1]
      %v3612 = vld [vmem:[%s3036 + $0x3c] sm:$0xe]
      %v3613 = vld [vmem:[%s3036 + $0x40] sm:$0xf]
      %v3614 = vld [vmem:[%s3036 + $0x44] sm:$0x1]
      %v3615 = vld [vmem:[%s3036 + $0x48] sm:$0xe]
      %v3616 = vld [vmem:[%s3036 + $0x4c] sm:$0xf]
      %v3617 = vld [vmem:[%s3036 + $0x50] sm:$0x1]
      %v3618 = vld [vmem:[%s3036 + $0x54] sm:$0xe]
      %v3619 = vld [vmem:[%s3036 + $0x58] sm:$0xf]
      %v3620 = vld [vmem:[%s3036 + $0x5c] sm:$0x1]
      %v3621 = vld [vmem:[%s3036 + $0x60] sm:$0xe]
      %v3622 = vld [vmem:[%s3036 + $0x64] sm:$0xf]
      %v3623 = vld [vmem:[%s3036 + $0x68] sm:$0x1]
      %v3624 = vld [vmem:[%s3036 + $0x6c] sm:$0xe]
      %v3625 = vld [vmem:[%s3036 + $0x70] sm:$0xf]
      %v3626 = vld [vmem:[%s3036 + $0x74] sm:$0x1]
      %v3627 = vld [vmem:[%s3036 + $0x78] sm:$0xe]
      %v3628 = vld [vmem:[%s3036 + $0x7c] sm:$0xf]
      %v3629 = vld [vmem:[%s3036 + $0x80] sm:$0x1]
      %v3630 = vld [vmem:[%s3036 + $0x84] sm:$0xe]
      %v3631 = vld [vmem:[%s3036 + $0x88] sm:$0xf]
      %v3632 = vld [vmem:[%s3036 + $0x8c] sm:$0x1]
      %v3633 = vld [vmem:[%s3036 + $0x90] sm:$0xe]
      %v3634 = vld [vmem:[%s3036 + $0x94] sm:$0xf]
      %v3635 = vld [vmem:[%s3036 + $0x98] sm:$0x1]
      %v3636 = vld [vmem:[%s3036 + $0x9c] sm:$0xe]
      %v3637 = vld [vmem:[%s3036 + $0xa0] sm:$0xf]
      %v3638 = vld [vmem:[%s3036 + $0xa4] sm:$0x1]
      %v3639 = vld [vmem:[%s3036 + $0xa8] sm:$0xe]
      %v3640 = vld [vmem:[%s3036 + $0xac] sm:$0xf]
      %v3641 = vld [vmem:[%s3036 + $0xb0] sm:$0x1]
      %v3642 = vld [vmem:[%s3036 + $0xb4] sm:$0xe]
      %v3643 = vld [vmem:[%s3036 + $0xb8] sm:$0xf]
      %v3644 = vld [vmem:[%s3036 + $0xbc] sm:$0x1]
      %v3693 = vrot.slane %v3597, 5
      %v3694 = vrot.slane %v3693, 4
      %v3695 = vrot.slane %v3598, 5
      %v3696 = vsel %vm2027, %v3694, %v3695
      %v3697 = vrot.slane %v3695, 4
      %v3698 = vrot.slane %v3599, 5
      %v3699 = vsel %vm2027, %v3697, %v3698
      %v3700 = vrot.slane %v3600, 5
      %v3701 = vrot.slane %v3700, 4
      %v3702 = vrot.slane %v3601, 5
      %v3703 = vsel %vm2027, %v3701, %v3702
      %v3704 = vrot.slane %v3702, 4
      %v3705 = vrot.slane %v3602, 5
      %v3706 = vsel %vm2027, %v3704, %v3705
      %v3707 = vrot.slane %v3603, 5
      %v3708 = vrot.slane %v3707, 4
      %v3709 = vrot.slane %v3604, 5
      %v3710 = vsel %vm2027, %v3708, %v3709
      %v3711 = vrot.slane %v3709, 4
      %v3712 = vrot.slane %v3605, 5
      %v3713 = vsel %vm2027, %v3711, %v3712
      %v3714 = vrot.slane %v3606, 5
      %v3715 = vrot.slane %v3714, 4
      %v3716 = vrot.slane %v3607, 5
      %v3717 = vsel %vm2027, %v3715, %v3716
      %v3718 = vrot.slane %v3716, 4
      %v3719 = vrot.slane %v3608, 5
      %v3720 = vsel %vm2027, %v3718, %v3719
      %v3721 = vrot.slane %v3609, 5
      %v3722 = vrot.slane %v3721, 4
      %v3723 = vrot.slane %v3610, 5
      %v3724 = vsel %vm2027, %v3722, %v3723
      %v3725 = vrot.slane %v3723, 4
      %v3726 = vrot.slane %v3611, 5
      %v3727 = vsel %vm2027, %v3725, %v3726
      %v3728 = vrot.slane %v3612, 5
      %v3729 = vrot.slane %v3728, 4
      %v3730 = vrot.slane %v3613, 5
      %v3731 = vsel %vm2027, %v3729, %v3730
      %v3732 = vrot.slane %v3730, 4
      %v3733 = vrot.slane %v3614, 5
      %v3734 = vsel %vm2027, %v3732, %v3733
      %v3735 = vrot.slane %v3615, 5
      %v3736 = vrot.slane %v3735, 4
      %v3737 = vrot.slane %v3616, 5
      %v3738 = vsel %vm2027, %v3736, %v3737
      %v3739 = vrot.slane %v3737, 4
      %v3740 = vrot.slane %v3617, 5
      %v3741 = vsel %vm2027, %v3739, %v3740
      %v3742 = vrot.slane %v3618, 5
      %v3743 = vrot.slane %v3742, 4
      %v3744 = vrot.slane %v3619, 5
      %v3745 = vsel %vm2027, %v3743, %v3744
      %v3746 = vrot.slane %v3744, 4
      %v3747 = vrot.slane %v3620, 5
      %v3748 = vsel %vm2027, %v3746, %v3747
      %v3749 = vrot.slane %v3621, 5
      %v3750 = vrot.slane %v3749, 4
      %v3751 = vrot.slane %v3622, 5
      %v3752 = vsel %vm2027, %v3750, %v3751
      %v3753 = vrot.slane %v3751, 4
      %v3754 = vrot.slane %v3623, 5
      %v3755 = vsel %vm2027, %v3753, %v3754
      %v3756 = vrot.slane %v3624, 5
      %v3757 = vrot.slane %v3756, 4
      %v3758 = vrot.slane %v3625, 5
      %v3759 = vsel %vm2027, %v3757, %v3758
      %v3760 = vrot.slane %v3758, 4
      %v3761 = vrot.slane %v3626, 5
      %v3762 = vsel %vm2027, %v3760, %v3761
      %v3763 = vrot.slane %v3627, 5
      %v3764 = vrot.slane %v3763, 4
      %v3765 = vrot.slane %v3628, 5
      %v3766 = vsel %vm2027, %v3764, %v3765
      %v3767 = vrot.slane %v3765, 4
      %v3768 = vrot.slane %v3629, 5
      %v3769 = vsel %vm2027, %v3767, %v3768
      %v3770 = vrot.slane %v3630, 5
      %v3771 = vrot.slane %v3770, 4
      %v3772 = vrot.slane %v3631, 5
      %v3773 = vsel %vm2027, %v3771, %v3772
      %v3774 = vrot.slane %v3772, 4
      %v3775 = vrot.slane %v3632, 5
      %v3776 = vsel %vm2027, %v3774, %v3775
      %v3777 = vrot.slane %v3633, 5
      %v3778 = vrot.slane %v3777, 4
      %v3779 = vrot.slane %v3634, 5
      %v3780 = vsel %vm2027, %v3778, %v3779
      %v3781 = vrot.slane %v3779, 4
      %v3782 = vrot.slane %v3635, 5
      %v3783 = vsel %vm2027, %v3781, %v3782
      %v3784 = vrot.slane %v3636, 5
      %v3785 = vrot.slane %v3784, 4
      %v3786 = vrot.slane %v3637, 5
      %v3787 = vsel %vm2027, %v3785, %v3786
      %v3788 = vrot.slane %v3786, 4
      %v3789 = vrot.slane %v3638, 5
      %v3790 = vsel %vm2027, %v3788, %v3789
      %v3791 = vrot.slane %v3639, 5
      %v3792 = vrot.slane %v3791, 4
      %v3793 = vrot.slane %v3640, 5
      %v3794 = vsel %vm2027, %v3792, %v3793
      %v3795 = vrot.slane %v3793, 4
      %v3796 = vrot.slane %v3641, 5
      %v3797 = vsel %vm2027, %v3795, %v3796
      %v3798 = vrot.slane %v3642, 5
      %v3799 = vrot.slane %v3798, 4
      %v3800 = vrot.slane %v3643, 5
      %v3801 = vsel %vm2027, %v3799, %v3800
      %v3802 = vrot.slane %v3800, 4
      %v3803 = vrot.slane %v3644, 5
      %v3804 = vsel %vm2027, %v3802, %v3803
      %3837 = vst [vmem:[#allocation4 + $0x20] sm:$0xf] %v3696
      %3838 = vst [vmem:[#allocation4 + $0x44] sm:$0xf] %v3699
      %3839 = vst [vmem:[#allocation4 + $0x68] sm:$0xf] %v3703
      %3840 = vst [vmem:[#allocation4 + $0x8c] sm:$0xf] %v3706
      %3841 = vst [vmem:[#allocation4 + $0xb0] sm:$0xf] %v3710
      %3842 = vst [vmem:[#allocation4 + $0xd4] sm:$0xf] %v3713
      %3843 = vst [vmem:[#allocation4 + $0xf8] sm:$0xf] %v3717
      %3844 = vst [vmem:[#allocation4 + $0x11c] sm:$0xf] %v3720
      %3845 = vst [vmem:[#allocation4 + $0x140] sm:$0xf] %v3724
      %3846 = vst [vmem:[#allocation4 + $0x164] sm:$0xf] %v3727
      %3847 = vst [vmem:[#allocation4 + $0x188] sm:$0xf] %v3731
      %3848 = vst [vmem:[#allocation4 + $0x1ac] sm:$0xf] %v3734
      %3849 = vst [vmem:[#allocation4 + $0x1d0] sm:$0xf] %v3738
      %3850 = vst [vmem:[#allocation4 + $0x1f4] sm:$0xf] %v3741
      %3851 = vst [vmem:[#allocation4 + $0x218] sm:$0xf] %v3745
      %3852 = vst [vmem:[#allocation4 + $0x23c] sm:$0xf] %v3748
      %3853 = vst [vmem:[#allocation4 + $0x260] sm:$0xf] %v3752
      %3854 = vst [vmem:[#allocation4 + $0x284] sm:$0xf] %v3755
      %3855 = vst [vmem:[#allocation4 + $0x2a8] sm:$0xf] %v3759
      %3856 = vst [vmem:[#allocation4 + $0x2cc] sm:$0xf] %v3762
      %3857 = vst [vmem:[#allocation4 + $0x2f0] sm:$0xf] %v3766
      %3858 = vst [vmem:[#allocation4 + $0x314] sm:$0xf] %v3769
      %3859 = vst [vmem:[#allocation4 + $0x338] sm:$0xf] %v3773
      %3860 = vst [vmem:[#allocation4 + $0x35c] sm:$0xf] %v3776
      %3861 = vst [vmem:[#allocation4 + $0x380] sm:$0xf] %v3780
      %3862 = vst [vmem:[#allocation4 + $0x3a4] sm:$0xf] %v3783
      %3863 = vst [vmem:[#allocation4 + $0x3c8] sm:$0xf] %v3787
      %3864 = vst [vmem:[#allocation4 + $0x3ec] sm:$0xf] %v3790
      %3865 = vst [vmem:[#allocation4 + $0x410] sm:$0xf] %v3794
      %3866 = vst [vmem:[#allocation4 + $0x434] sm:$0xf] %v3797
      %3867 = vst [vmem:[#allocation4 + $0x458] sm:$0xf] %v3801
      %3868 = vst [vmem:[#allocation4 + $0x47c] sm:$0xf] %v3804
      %v3869 = vld [vmem:[#allocation4] sm:$0xff]
      %v3870 = vld [vmem:[#allocation4 + $0x8] sm:$0xff]
      %v3871 = vld [vmem:[#allocation4 + $0x10] sm:$0xff]
      %v3872 = vld [vmem:[#allocation4 + $0x18] sm:$0xff]
      %v3873 = vld [vmem:[#allocation4 + $0x20] sm:$0xf]
      %v3874 = vld [vmem:[#allocation4 + $0x24] sm:$0xff]
      %v3875 = vld [vmem:[#allocation4 + $0x2c] sm:$0xff]
      %v3876 = vld [vmem:[#allocation4 + $0x34] sm:$0xff]
      %v3877 = vld [vmem:[#allocation4 + $0x3c] sm:$0xff]
      %v3878 = vld [vmem:[#allocation4 + $0x44] sm:$0xf]
      %v3879 = vld [vmem:[#allocation4 + $0x48] sm:$0xff]
      %v3880 = vld [vmem:[#allocation4 + $0x50] sm:$0xff]
      %v3881 = vld [vmem:[#allocation4 + $0x58] sm:$0xff]
      %v3882 = vld [vmem:[#allocation4 + $0x60] sm:$0xff]
      %v3883 = vld [vmem:[#allocation4 + $0x68] sm:$0xf]
      %v3884 = vld [vmem:[#allocation4 + $0x6c] sm:$0xff]
      %v3885 = vld [vmem:[#allocation4 + $0x74] sm:$0xff]
      %v3886 = vld [vmem:[#allocation4 + $0x7c] sm:$0xff]
      %v3887 = vld [vmem:[#allocation4 + $0x84] sm:$0xff]
      %v3888 = vld [vmem:[#allocation4 + $0x8c] sm:$0xf]
      %v3889 = vld [vmem:[#allocation4 + $0x90] sm:$0xff]
      %v3890 = vld [vmem:[#allocation4 + $0x98] sm:$0xff]
      %v3891 = vld [vmem:[#allocation4 + $0xa0] sm:$0xff]
      %v3892 = vld [vmem:[#allocation4 + $0xa8] sm:$0xff]
      %v3893 = vld [vmem:[#allocation4 + $0xb0] sm:$0xf]
      %v3894 = vld [vmem:[#allocation4 + $0xb4] sm:$0xff]
      %v3895 = vld [vmem:[#allocation4 + $0xbc] sm:$0xff]
      %v3896 = vld [vmem:[#allocation4 + $0xc4] sm:$0xff]
      %v3897 = vld [vmem:[#allocation4 + $0xcc] sm:$0xff]
      %v3898 = vld [vmem:[#allocation4 + $0xd4] sm:$0xf]
      %v3899 = vld [vmem:[#allocation4 + $0xd8] sm:$0xff]
      %v3900 = vld [vmem:[#allocation4 + $0xe0] sm:$0xff]
      %v3901 = vld [vmem:[#allocation4 + $0xe8] sm:$0xff]
      %v3902 = vld [vmem:[#allocation4 + $0xf0] sm:$0xff]
      %v3903 = vld [vmem:[#allocation4 + $0xf8] sm:$0xf]
      %v3904 = vld [vmem:[#allocation4 + $0xfc] sm:$0xff]
      %v3905 = vld [vmem:[#allocation4 + $0x104] sm:$0xff]
      %v3906 = vld [vmem:[#allocation4 + $0x10c] sm:$0xff]
      %v3907 = vld [vmem:[#allocation4 + $0x114] sm:$0xff]
      %v3908 = vld [vmem:[#allocation4 + $0x11c] sm:$0xf]
      %v3909 = vld [vmem:[#allocation4 + $0x120] sm:$0xff]
      %v3910 = vld [vmem:[#allocation4 + $0x128] sm:$0xff]
      %v3911 = vld [vmem:[#allocation4 + $0x130] sm:$0xff]
      %v3912 = vld [vmem:[#allocation4 + $0x138] sm:$0xff]
      %v3913 = vld [vmem:[#allocation4 + $0x140] sm:$0xf]
      %v3914 = vld [vmem:[#allocation4 + $0x144] sm:$0xff]
      %v3915 = vld [vmem:[#allocation4 + $0x14c] sm:$0xff]
      %v3916 = vld [vmem:[#allocation4 + $0x154] sm:$0xff]
      %v3917 = vld [vmem:[#allocation4 + $0x15c] sm:$0xff]
      %v3918 = vld [vmem:[#allocation4 + $0x164] sm:$0xf]
      %v3919 = vld [vmem:[#allocation4 + $0x168] sm:$0xff]
      %v3920 = vld [vmem:[#allocation4 + $0x170] sm:$0xff]
      %v3921 = vld [vmem:[#allocation4 + $0x178] sm:$0xff]
      %v3922 = vld [vmem:[#allocation4 + $0x180] sm:$0xff]
      %v3923 = vld [vmem:[#allocation4 + $0x188] sm:$0xf]
      %v3924 = vld [vmem:[#allocation4 + $0x18c] sm:$0xff]
      %v3925 = vld [vmem:[#allocation4 + $0x194] sm:$0xff]
      %v3926 = vld [vmem:[#allocation4 + $0x19c] sm:$0xff]
      %v3927 = vld [vmem:[#allocation4 + $0x1a4] sm:$0xff]
      %v3928 = vld [vmem:[#allocation4 + $0x1ac] sm:$0xf]
      %v3929 = vld [vmem:[#allocation4 + $0x1b0] sm:$0xff]
      %v3930 = vld [vmem:[#allocation4 + $0x1b8] sm:$0xff]
      %v3931 = vld [vmem:[#allocation4 + $0x1c0] sm:$0xff]
      %v3932 = vld [vmem:[#allocation4 + $0x1c8] sm:$0xff]
      %v3933 = vld [vmem:[#allocation4 + $0x1d0] sm:$0xf]
      %v3934 = vld [vmem:[#allocation4 + $0x1d4] sm:$0xff]
      %v3935 = vld [vmem:[#allocation4 + $0x1dc] sm:$0xff]
      %v3936 = vld [vmem:[#allocation4 + $0x1e4] sm:$0xff]
      %v3937 = vld [vmem:[#allocation4 + $0x1ec] sm:$0xff]
      %v3938 = vld [vmem:[#allocation4 + $0x1f4] sm:$0xf]
      %v3939 = vld [vmem:[#allocation4 + $0x1f8] sm:$0xff]
      %v3940 = vld [vmem:[#allocation4 + $0x200] sm:$0xff]
      %v3941 = vld [vmem:[#allocation4 + $0x208] sm:$0xff]
      %v3942 = vld [vmem:[#allocation4 + $0x210] sm:$0xff]
      %v3943 = vld [vmem:[#allocation4 + $0x218] sm:$0xf]
      %v3944 = vld [vmem:[#allocation4 + $0x21c] sm:$0xff]
      %v3945 = vld [vmem:[#allocation4 + $0x224] sm:$0xff]
      %v3946 = vld [vmem:[#allocation4 + $0x22c] sm:$0xff]
      %v3947 = vld [vmem:[#allocation4 + $0x234] sm:$0xff]
      %v3948 = vld [vmem:[#allocation4 + $0x23c] sm:$0xf]
      %v3949 = vld [vmem:[#allocation4 + $0x240] sm:$0xff]
      %v3950 = vld [vmem:[#allocation4 + $0x248] sm:$0xff]
      %v3951 = vld [vmem:[#allocation4 + $0x250] sm:$0xff]
      %v3952 = vld [vmem:[#allocation4 + $0x258] sm:$0xff]
      %v3953 = vld [vmem:[#allocation4 + $0x260] sm:$0xf]
      %v3954 = vld [vmem:[#allocation4 + $0x264] sm:$0xff]
      %v3955 = vld [vmem:[#allocation4 + $0x26c] sm:$0xff]
      %v3956 = vld [vmem:[#allocation4 + $0x274] sm:$0xff]
      %v3957 = vld [vmem:[#allocation4 + $0x27c] sm:$0xff]
      %v3958 = vld [vmem:[#allocation4 + $0x284] sm:$0xf]
      %v3959 = vld [vmem:[#allocation4 + $0x288] sm:$0xff]
      %v3960 = vld [vmem:[#allocation4 + $0x290] sm:$0xff]
      %v3961 = vld [vmem:[#allocation4 + $0x298] sm:$0xff]
      %v3962 = vld [vmem:[#allocation4 + $0x2a0] sm:$0xff]
      %v3963 = vld [vmem:[#allocation4 + $0x2a8] sm:$0xf]
      %v3964 = vld [vmem:[#allocation4 + $0x2ac] sm:$0xff]
      %v3965 = vld [vmem:[#allocation4 + $0x2b4] sm:$0xff]
      %v3966 = vld [vmem:[#allocation4 + $0x2bc] sm:$0xff]
      %v3967 = vld [vmem:[#allocation4 + $0x2c4] sm:$0xff]
      %v3968 = vld [vmem:[#allocation4 + $0x2cc] sm:$0xf]
      %v3969 = vld [vmem:[#allocation4 + $0x2d0] sm:$0xff]
      %v3970 = vld [vmem:[#allocation4 + $0x2d8] sm:$0xff]
      %v3971 = vld [vmem:[#allocation4 + $0x2e0] sm:$0xff]
      %v3972 = vld [vmem:[#allocation4 + $0x2e8] sm:$0xff]
      %v3973 = vld [vmem:[#allocation4 + $0x2f0] sm:$0xf]
      %v3974 = vld [vmem:[#allocation4 + $0x2f4] sm:$0xff]
      %v3975 = vld [vmem:[#allocation4 + $0x2fc] sm:$0xff]
      %v3976 = vld [vmem:[#allocation4 + $0x304] sm:$0xff]
      %v3977 = vld [vmem:[#allocation4 + $0x30c] sm:$0xff]
      %v3978 = vld [vmem:[#allocation4 + $0x314] sm:$0xf]
      %v3979 = vld [vmem:[#allocation4 + $0x318] sm:$0xff]
      %v3980 = vld [vmem:[#allocation4 + $0x320] sm:$0xff]
      %v3981 = vld [vmem:[#allocation4 + $0x328] sm:$0xff]
      %v3982 = vld [vmem:[#allocation4 + $0x330] sm:$0xff]
      %v3983 = vld [vmem:[#allocation4 + $0x338] sm:$0xf]
      %v3984 = vld [vmem:[#allocation4 + $0x33c] sm:$0xff]
      %v3985 = vld [vmem:[#allocation4 + $0x344] sm:$0xff]
      %v3986 = vld [vmem:[#allocation4 + $0x34c] sm:$0xff]
      %v3987 = vld [vmem:[#allocation4 + $0x354] sm:$0xff]
      %v3988 = vld [vmem:[#allocation4 + $0x35c] sm:$0xf]
      %v3989 = vld [vmem:[#allocation4 + $0x360] sm:$0xff]
      %v3990 = vld [vmem:[#allocation4 + $0x368] sm:$0xff]
      %v3991 = vld [vmem:[#allocation4 + $0x370] sm:$0xff]
      %v3992 = vld [vmem:[#allocation4 + $0x378] sm:$0xff]
      %v3993 = vld [vmem:[#allocation4 + $0x380] sm:$0xf]
      %v3994 = vld [vmem:[#allocation4 + $0x384] sm:$0xff]
      %v3995 = vld [vmem:[#allocation4 + $0x38c] sm:$0xff]
      %v3996 = vld [vmem:[#allocation4 + $0x394] sm:$0xff]
      %v3997 = vld [vmem:[#allocation4 + $0x39c] sm:$0xff]
      %v3998 = vld [vmem:[#allocation4 + $0x3a4] sm:$0xf]
      %v3999 = vld [vmem:[#allocation4 + $0x3a8] sm:$0xff]
      %v4000 = vld [vmem:[#allocation4 + $0x3b0] sm:$0xff]
      %v4001 = vld [vmem:[#allocation4 + $0x3b8] sm:$0xff]
      %v4002 = vld [vmem:[#allocation4 + $0x3c0] sm:$0xff]
      %v4003 = vld [vmem:[#allocation4 + $0x3c8] sm:$0xf]
      %v4004 = vld [vmem:[#allocation4 + $0x3cc] sm:$0xff]
      %v4005 = vld [vmem:[#allocation4 + $0x3d4] sm:$0xff]
      %v4006 = vld [vmem:[#allocation4 + $0x3dc] sm:$0xff]
      %v4007 = vld [vmem:[#allocation4 + $0x3e4] sm:$0xff]
      %v4008 = vld [vmem:[#allocation4 + $0x3ec] sm:$0xf]
      %v4009 = vld [vmem:[#allocation4 + $0x3f0] sm:$0xff]
      %v4010 = vld [vmem:[#allocation4 + $0x3f8] sm:$0xff]
      %v4011 = vld [vmem:[#allocation4 + $0x400] sm:$0xff]
      %v4012 = vld [vmem:[#allocation4 + $0x408] sm:$0xff]
      %v4013 = vld [vmem:[#allocation4 + $0x410] sm:$0xf]
      %v4014 = vld [vmem:[#allocation4 + $0x414] sm:$0xff]
      %v4015 = vld [vmem:[#allocation4 + $0x41c] sm:$0xff]
      %v4016 = vld [vmem:[#allocation4 + $0x424] sm:$0xff]
      %v4017 = vld [vmem:[#allocation4 + $0x42c] sm:$0xff]
      %v4018 = vld [vmem:[#allocation4 + $0x434] sm:$0xf]
      %v4019 = vld [vmem:[#allocation4 + $0x438] sm:$0xff]
      %v4020 = vld [vmem:[#allocation4 + $0x440] sm:$0xff]
      %v4021 = vld [vmem:[#allocation4 + $0x448] sm:$0xff]
      %v4022 = vld [vmem:[#allocation4 + $0x450] sm:$0xff]
      %v4023 = vld [vmem:[#allocation4 + $0x458] sm:$0xf]
      %v4024 = vld [vmem:[#allocation4 + $0x45c] sm:$0xff]
      %v4025 = vld [vmem:[#allocation4 + $0x464] sm:$0xff]
      %v4026 = vld [vmem:[#allocation4 + $0x46c] sm:$0xff]
      %v4027 = vld [vmem:[#allocation4 + $0x474] sm:$0xff]
      %v4028 = vld [vmem:[#allocation4 + $0x47c] sm:$0xf]
      %v4029 = vld [vmem:[%s3] sm:$0xf]
      %v4030 = vld [vmem:[%s3 + $0x4] sm:$0xf]
      %v4031 = vld [vmem:[%s3 + $0x8] sm:$0xf]
      %v4032 = vld [vmem:[%s3 + $0xc] sm:$0xf]
      %v4033 = vld [vmem:[%s3 + $0x10] sm:$0xf]
      %v4034 = vld [vmem:[%s3 + $0x14] sm:$0xf]
      %v4035 = vld [vmem:[%s3 + $0x18] sm:$0xf]
      %v4036 = vld [vmem:[%s3 + $0x1c] sm:$0xf]
      %v4037 = vld [vmem:[%s3 + $0x20] sm:$0xf]
      %v4038 = vld [vmem:[%s3 + $0x24] sm:$0xf]
      %v4039 = vld [vmem:[%s3 + $0x28] sm:$0xf]
      %v4040 = vld [vmem:[%s3 + $0x2c] sm:$0xf]
      %v4041 = vld [vmem:[%s3 + $0x30] sm:$0xf]
      %v4042 = vld [vmem:[%s3 + $0x34] sm:$0xf]
      %v4043 = vld [vmem:[%s3 + $0x38] sm:$0xf]
      %v4044 = vld [vmem:[%s3 + $0x3c] sm:$0xf]
      %v4045 = vld [vmem:[%s3 + $0x40] sm:$0xf]
      %v4046 = vld [vmem:[%s3 + $0x44] sm:$0xf]
      %v4047 = vld [vmem:[%s3 + $0x48] sm:$0xf]
      %v4048 = vld [vmem:[%s3 + $0x4c] sm:$0xf]
      %v4049 = vld [vmem:[%s3 + $0x50] sm:$0xf]
      %v4050 = vld [vmem:[%s3 + $0x54] sm:$0xf]
      %v4051 = vld [vmem:[%s3 + $0x58] sm:$0xf]
      %v4052 = vld [vmem:[%s3 + $0x5c] sm:$0xf]
      %v4053 = vld [vmem:[%s3 + $0x60] sm:$0xf]
      %v4054 = vld [vmem:[%s3 + $0x64] sm:$0xf]
      %v4055 = vld [vmem:[%s3 + $0x68] sm:$0xf]
      %v4056 = vld [vmem:[%s3 + $0x6c] sm:$0xf]
      %v4057 = vld [vmem:[%s3 + $0x70] sm:$0xf]
      %v4058 = vld [vmem:[%s3 + $0x74] sm:$0xf]
      %v4059 = vld [vmem:[%s3 + $0x78] sm:$0xf]
      %v4060 = vld [vmem:[%s3 + $0x7c] sm:$0xf]
      %v4061 = vld [vmem:[%s3 + $0x80] sm:$0xf]
      %v4062 = vld [vmem:[%s3 + $0x84] sm:$0xf]
      %v4063 = vld [vmem:[%s3 + $0x88] sm:$0xf]
      %v4064 = vld [vmem:[%s3 + $0x8c] sm:$0xf]
      %v4065 = vld [vmem:[%s3 + $0x90] sm:$0xf]
      %v4066 = vld [vmem:[%s3 + $0x94] sm:$0xf]
      %v4067 = vld [vmem:[%s3 + $0x98] sm:$0xf]
      %v4068 = vld [vmem:[%s3 + $0x9c] sm:$0xf]
      %v4069 = vld [vmem:[%s3 + $0xa0] sm:$0xf]
      %v4070 = vld [vmem:[%s3 + $0xa4] sm:$0xf]
      %v4071 = vld [vmem:[%s3 + $0xa8] sm:$0xf]
      %v4072 = vld [vmem:[%s3 + $0xac] sm:$0xf]
      %v4073 = vld [vmem:[%s3 + $0xb0] sm:$0xf]
      %v4074 = vld [vmem:[%s3 + $0xb4] sm:$0xf]
      %v4075 = vld [vmem:[%s3 + $0xb8] sm:$0xf]
      %v4076 = vld [vmem:[%s3 + $0xbc] sm:$0xf]
      %v4077 = vld [vmem:[%s3 + $0xc0] sm:$0xf]
      %v4078 = vld [vmem:[%s3 + $0xc4] sm:$0xf]
      %v4079 = vld [vmem:[%s3 + $0xc8] sm:$0xf]
      %v4080 = vld [vmem:[%s3 + $0xcc] sm:$0xf]
      %v4081 = vld [vmem:[%s3 + $0xd0] sm:$0xf]
      %v4082 = vld [vmem:[%s3 + $0xd4] sm:$0xf]
      %v4083 = vld [vmem:[%s3 + $0xd8] sm:$0xf]
      %v4084 = vld [vmem:[%s3 + $0xdc] sm:$0xf]
      %v4085 = vld [vmem:[%s3 + $0xe0] sm:$0xf]
      %v4086 = vld [vmem:[%s3 + $0xe4] sm:$0xf]
      %v4087 = vld [vmem:[%s3 + $0xe8] sm:$0xf]
      %v4088 = vld [vmem:[%s3 + $0xec] sm:$0xf]
      %v4089 = vld [vmem:[%s3 + $0xf0] sm:$0xf]
      %v4090 = vld [vmem:[%s3 + $0xf4] sm:$0xf]
      %v4091 = vld [vmem:[%s3 + $0xf8] sm:$0xf]
      %v4092 = vld [vmem:[%s3 + $0xfc] sm:$0xf]
      %v4093 = vld [vmem:[%s3 + $0x100] sm:$0xf]
      %v4094 = vld [vmem:[%s3 + $0x104] sm:$0xf]
      %v4095 = vld [vmem:[%s3 + $0x108] sm:$0xf]
      %v4096 = vld [vmem:[%s3 + $0x10c] sm:$0xf]
      %v4097 = vld [vmem:[%s3 + $0x110] sm:$0xf]
      %v4098 = vld [vmem:[%s3 + $0x114] sm:$0xf]
      %v4099 = vld [vmem:[%s3 + $0x118] sm:$0xf]
      %v4100 = vld [vmem:[%s3 + $0x11c] sm:$0xf]
      %v4101 = vld [vmem:[%s3 + $0x120] sm:$0xf]
      %v4102 = vld [vmem:[%s3 + $0x124] sm:$0xf]
      %v4103 = vld [vmem:[%s3 + $0x128] sm:$0xf]
      %v4104 = vld [vmem:[%s3 + $0x12c] sm:$0xf]
      %v4105 = vld [vmem:[%s3 + $0x130] sm:$0xf]
      %v4106 = vld [vmem:[%s3 + $0x134] sm:$0xf]
      %v4107 = vld [vmem:[%s3 + $0x138] sm:$0xf]
      %v4108 = vld [vmem:[%s3 + $0x13c] sm:$0xf]
      %v4109 = vld [vmem:[%s3 + $0x140] sm:$0xf]
      %v4110 = vld [vmem:[%s3 + $0x144] sm:$0xf]
      %v4111 = vld [vmem:[%s3 + $0x148] sm:$0xf]
      %v4112 = vld [vmem:[%s3 + $0x14c] sm:$0xf]
      %v4113 = vld [vmem:[%s3 + $0x150] sm:$0xf]
      %v4114 = vld [vmem:[%s3 + $0x154] sm:$0xf]
      %v4115 = vld [vmem:[%s3 + $0x158] sm:$0xf]
      %v4116 = vld [vmem:[%s3 + $0x15c] sm:$0xf]
      %v4117 = vld [vmem:[%s3 + $0x160] sm:$0xf]
      %v4118 = vld [vmem:[%s3 + $0x164] sm:$0xf]
      %v4119 = vld [vmem:[%s3 + $0x168] sm:$0xf]
      %v4120 = vld [vmem:[%s3 + $0x16c] sm:$0xf]
      %v4121 = vld [vmem:[%s3 + $0x170] sm:$0xf]
      %v4122 = vld [vmem:[%s3 + $0x174] sm:$0xf]
      %v4123 = vld [vmem:[%s3 + $0x178] sm:$0xf]
      %v4124 = vld [vmem:[%s3 + $0x17c] sm:$0xf]
      %v4125 = vld [vmem:[%s3 + $0x180] sm:$0xf]
      %v4126 = vld [vmem:[%s3 + $0x184] sm:$0xf]
      %v4127 = vld [vmem:[%s3 + $0x188] sm:$0xf]
      %v4128 = vld [vmem:[%s3 + $0x18c] sm:$0xf]
      %v4129 = vld [vmem:[%s3 + $0x190] sm:$0xf]
      %v4130 = vld [vmem:[%s3 + $0x194] sm:$0xf]
      %v4131 = vld [vmem:[%s3 + $0x198] sm:$0xf]
      %v4132 = vld [vmem:[%s3 + $0x19c] sm:$0xf]
      %v4133 = vld [vmem:[%s3 + $0x1a0] sm:$0xf]
      %v4134 = vld [vmem:[%s3 + $0x1a4] sm:$0xf]
      %v4135 = vld [vmem:[%s3 + $0x1a8] sm:$0xf]
      %v4136 = vld [vmem:[%s3 + $0x1ac] sm:$0xf]
      %v4137 = vld [vmem:[%s3 + $0x1b0] sm:$0xf]
      %v4138 = vld [vmem:[%s3 + $0x1b4] sm:$0xf]
      %v4139 = vld [vmem:[%s3 + $0x1b8] sm:$0xf]
      %v4140 = vld [vmem:[%s3 + $0x1bc] sm:$0xf]
      %v4141 = vld [vmem:[%s3 + $0x1c0] sm:$0xf]
      %v4142 = vld [vmem:[%s3 + $0x1c4] sm:$0xf]
      %v4143 = vld [vmem:[%s3 + $0x1c8] sm:$0xf]
      %v4144 = vld [vmem:[%s3 + $0x1cc] sm:$0xf]
      %v4145 = vld [vmem:[%s3 + $0x1d0] sm:$0xf]
      %v4146 = vld [vmem:[%s3 + $0x1d4] sm:$0xf]
      %v4147 = vld [vmem:[%s3 + $0x1d8] sm:$0xf]
      %v4148 = vld [vmem:[%s3 + $0x1dc] sm:$0xf]
      %v4149 = vld [vmem:[%s3 + $0x1e0] sm:$0xf]
      %v4150 = vld [vmem:[%s3 + $0x1e4] sm:$0xf]
      %v4151 = vld [vmem:[%s3 + $0x1e8] sm:$0xf]
      %v4152 = vld [vmem:[%s3 + $0x1ec] sm:$0xf]
      %v4153 = vld [vmem:[%s3 + $0x1f0] sm:$0xf]
      %v4154 = vld [vmem:[%s3 + $0x1f4] sm:$0xf]
      %v4155 = vld [vmem:[%s3 + $0x1f8] sm:$0xf]
      %v4156 = vld [vmem:[%s3 + $0x1fc] sm:$0xf]
      %v4157 = vld [vmem:[%s3 + $0x200] sm:$0xf]
      %v4158 = vld [vmem:[%s3 + $0x204] sm:$0xf]
      %v4159 = vld [vmem:[%s3 + $0x208] sm:$0xf]
      %v4160 = vld [vmem:[%s3 + $0x20c] sm:$0xf]
      %v4161 = vld [vmem:[%s3 + $0x210] sm:$0xf]
      %v4162 = vld [vmem:[%s3 + $0x214] sm:$0xf]
      %v4163 = vld [vmem:[%s3 + $0x218] sm:$0xf]
      %v4164 = vld [vmem:[%s3 + $0x21c] sm:$0xf]
      %v4165 = vld [vmem:[%s3 + $0x220] sm:$0xf]
      %v4166 = vld [vmem:[%s3 + $0x224] sm:$0xf]
      %v4167 = vld [vmem:[%s3 + $0x228] sm:$0xf]
      %v4168 = vld [vmem:[%s3 + $0x22c] sm:$0xf]
      %v4169 = vld [vmem:[%s3 + $0x230] sm:$0xf]
      %v4170 = vld [vmem:[%s3 + $0x234] sm:$0xf]
      %v4171 = vld [vmem:[%s3 + $0x238] sm:$0xf]
      %v4172 = vld [vmem:[%s3 + $0x23c] sm:$0xf]
      %v4173 = vld [vmem:[%s4] sm:$0x1]
      %v4175 = vperm.slane %v4173, 0
      %v4337 = vunpack.c.l.b16 %v3869
      %v4338 = vunpack.c.h.b16 %v3869
      %v4339 = vunpack.c.l.b16 %v3870
      %v4340 = vunpack.c.h.b16 %v3870
      %v4341 = vunpack.c.l.b16 %v3871
      %v4342 = vunpack.c.h.b16 %v3871
      %v4343 = vunpack.c.l.b16 %v3872
      %v4344 = vunpack.c.h.b16 %v3872
      %v4345 = vunpack.c.l.b16 %v3873
      %v4346 = vunpack.c.l.b16 %v3874
      %v4347 = vunpack.c.h.b16 %v3874
      %v4348 = vunpack.c.l.b16 %v3875
      %v4349 = vunpack.c.h.b16 %v3875
      %v4350 = vunpack.c.l.b16 %v3876
      %v4351 = vunpack.c.h.b16 %v3876
      %v4352 = vunpack.c.l.b16 %v3877
      %v4353 = vunpack.c.h.b16 %v3877
      %v4354 = vunpack.c.l.b16 %v3878
      %v4355 = vunpack.c.l.b16 %v3879
      %v4356 = vunpack.c.h.b16 %v3879
      %v4357 = vunpack.c.l.b16 %v3880
      %v4358 = vunpack.c.h.b16 %v3880
      %v4359 = vunpack.c.l.b16 %v3881
      %v4360 = vunpack.c.h.b16 %v3881
      %v4361 = vunpack.c.l.b16 %v3882
      %v4362 = vunpack.c.h.b16 %v3882
      %v4363 = vunpack.c.l.b16 %v3883
      %v4364 = vunpack.c.l.b16 %v3884
      %v4365 = vunpack.c.h.b16 %v3884
      %v4366 = vunpack.c.l.b16 %v3885
      %v4367 = vunpack.c.h.b16 %v3885
      %v4368 = vunpack.c.l.b16 %v3886
      %v4369 = vunpack.c.h.b16 %v3886
      %v4370 = vunpack.c.l.b16 %v3887
      %v4371 = vunpack.c.h.b16 %v3887
      %v4372 = vunpack.c.l.b16 %v3888
      %v4373 = vunpack.c.l.b16 %v3889
      %v4374 = vunpack.c.h.b16 %v3889
      %v4375 = vunpack.c.l.b16 %v3890
      %v4376 = vunpack.c.h.b16 %v3890
      %v4377 = vunpack.c.l.b16 %v3891
      %v4378 = vunpack.c.h.b16 %v3891
      %v4379 = vunpack.c.l.b16 %v3892
      %v4380 = vunpack.c.h.b16 %v3892
      %v4381 = vunpack.c.l.b16 %v3893
      %v4382 = vunpack.c.l.b16 %v3894
      %v4383 = vunpack.c.h.b16 %v3894
      %v4384 = vunpack.c.l.b16 %v3895
      %v4385 = vunpack.c.h.b16 %v3895
      %v4386 = vunpack.c.l.b16 %v3896
      %v4387 = vunpack.c.h.b16 %v3896
      %v4388 = vunpack.c.l.b16 %v3897
      %v4389 = vunpack.c.h.b16 %v3897
      %v4390 = vunpack.c.l.b16 %v3898
      %v4391 = vunpack.c.l.b16 %v3899
      %v4392 = vunpack.c.h.b16 %v3899
      %v4393 = vunpack.c.l.b16 %v3900
      %v4394 = vunpack.c.h.b16 %v3900
      %v4395 = vunpack.c.l.b16 %v3901
      %v4396 = vunpack.c.h.b16 %v3901
      %v4397 = vunpack.c.l.b16 %v3902
      %v4398 = vunpack.c.h.b16 %v3902
      %v4399 = vunpack.c.l.b16 %v3903
      %v4400 = vunpack.c.l.b16 %v3904
      %v4401 = vunpack.c.h.b16 %v3904
      %v4402 = vunpack.c.l.b16 %v3905
      %v4403 = vunpack.c.h.b16 %v3905
      %v4404 = vunpack.c.l.b16 %v3906
      %v4405 = vunpack.c.h.b16 %v3906
      %v4406 = vunpack.c.l.b16 %v3907
      %v4407 = vunpack.c.h.b16 %v3907
      %v4408 = vunpack.c.l.b16 %v3908
      %v4409 = vunpack.c.l.b16 %v3909
      %v4410 = vunpack.c.h.b16 %v3909
      %v4411 = vunpack.c.l.b16 %v3910
      %v4412 = vunpack.c.h.b16 %v3910
      %v4413 = vunpack.c.l.b16 %v3911
      %v4414 = vunpack.c.h.b16 %v3911
      %v4415 = vunpack.c.l.b16 %v3912
      %v4416 = vunpack.c.h.b16 %v3912
      %v4417 = vunpack.c.l.b16 %v3913
      %v4418 = vunpack.c.l.b16 %v3914
      %v4419 = vunpack.c.h.b16 %v3914
      %v4420 = vunpack.c.l.b16 %v3915
      %v4421 = vunpack.c.h.b16 %v3915
      %v4422 = vunpack.c.l.b16 %v3916
      %v4423 = vunpack.c.h.b16 %v3916
      %v4424 = vunpack.c.l.b16 %v3917
      %v4425 = vunpack.c.h.b16 %v3917
      %v4426 = vunpack.c.l.b16 %v3918
      %v4427 = vunpack.c.l.b16 %v3919
      %v4428 = vunpack.c.h.b16 %v3919
      %v4429 = vunpack.c.l.b16 %v3920
      %v4430 = vunpack.c.h.b16 %v3920
      %v4431 = vunpack.c.l.b16 %v3921
      %v4432 = vunpack.c.h.b16 %v3921
      %v4433 = vunpack.c.l.b16 %v3922
      %v4434 = vunpack.c.h.b16 %v3922
      %v4435 = vunpack.c.l.b16 %v3923
      %v4436 = vunpack.c.l.b16 %v3924
      %v4437 = vunpack.c.h.b16 %v3924
      %v4438 = vunpack.c.l.b16 %v3925
      %v4439 = vunpack.c.h.b16 %v3925
      %v4440 = vunpack.c.l.b16 %v3926
      %v4441 = vunpack.c.h.b16 %v3926
      %v4442 = vunpack.c.l.b16 %v3927
      %v4443 = vunpack.c.h.b16 %v3927
      %v4444 = vunpack.c.l.b16 %v3928
      %v4445 = vunpack.c.l.b16 %v3929
      %v4446 = vunpack.c.h.b16 %v3929
      %v4447 = vunpack.c.l.b16 %v3930
      %v4448 = vunpack.c.h.b16 %v3930
      %v4449 = vunpack.c.l.b16 %v3931
      %v4450 = vunpack.c.h.b16 %v3931
      %v4451 = vunpack.c.l.b16 %v3932
      %v4452 = vunpack.c.h.b16 %v3932
      %v4453 = vunpack.c.l.b16 %v3933
      %v4454 = vunpack.c.l.b16 %v3934
      %v4455 = vunpack.c.h.b16 %v3934
      %v4456 = vunpack.c.l.b16 %v3935
      %v4457 = vunpack.c.h.b16 %v3935
      %v4458 = vunpack.c.l.b16 %v3936
      %v4459 = vunpack.c.h.b16 %v3936
      %v4460 = vunpack.c.l.b16 %v3937
      %v4461 = vunpack.c.h.b16 %v3937
      %v4462 = vunpack.c.l.b16 %v3938
      %v4463 = vunpack.c.l.b16 %v3939
      %v4464 = vunpack.c.h.b16 %v3939
      %v4465 = vunpack.c.l.b16 %v3940
      %v4466 = vunpack.c.h.b16 %v3940
      %v4467 = vunpack.c.l.b16 %v3941
      %v4468 = vunpack.c.h.b16 %v3941
      %v4469 = vunpack.c.l.b16 %v3942
      %v4470 = vunpack.c.h.b16 %v3942
      %v4471 = vunpack.c.l.b16 %v3943
      %v4472 = vunpack.c.l.b16 %v3944
      %v4473 = vunpack.c.h.b16 %v3944
      %v4474 = vunpack.c.l.b16 %v3945
      %v4475 = vunpack.c.h.b16 %v3945
      %v4476 = vunpack.c.l.b16 %v3946
      %v4477 = vunpack.c.h.b16 %v3946
      %v4478 = vunpack.c.l.b16 %v3947
      %v4479 = vunpack.c.h.b16 %v3947
      %v4480 = vunpack.c.l.b16 %v3948
      %v4481 = vunpack.c.l.b16 %v3949
      %v4482 = vunpack.c.h.b16 %v3949
      %v4483 = vunpack.c.l.b16 %v3950
      %v4484 = vunpack.c.h.b16 %v3950
      %v4485 = vunpack.c.l.b16 %v3951
      %v4486 = vunpack.c.h.b16 %v3951
      %v4487 = vunpack.c.l.b16 %v3952
      %v4488 = vunpack.c.h.b16 %v3952
      %v4489 = vunpack.c.l.b16 %v3953
      %v4490 = vunpack.c.l.b16 %v3954
      %v4491 = vunpack.c.h.b16 %v3954
      %v4492 = vunpack.c.l.b16 %v3955
      %v4493 = vunpack.c.h.b16 %v3955
      %v4494 = vunpack.c.l.b16 %v3956
      %v4495 = vunpack.c.h.b16 %v3956
      %v4496 = vunpack.c.l.b16 %v3957
      %v4497 = vunpack.c.h.b16 %v3957
      %v4498 = vunpack.c.l.b16 %v3958
      %v4499 = vunpack.c.l.b16 %v3959
      %v4500 = vunpack.c.h.b16 %v3959
      %v4501 = vunpack.c.l.b16 %v3960
      %v4502 = vunpack.c.h.b16 %v3960
      %v4503 = vunpack.c.l.b16 %v3961
      %v4504 = vunpack.c.h.b16 %v3961
      %v4505 = vunpack.c.l.b16 %v3962
      %v4506 = vunpack.c.h.b16 %v3962
      %v4507 = vunpack.c.l.b16 %v3963
      %v4508 = vunpack.c.l.b16 %v3964
      %v4509 = vunpack.c.h.b16 %v3964
      %v4510 = vunpack.c.l.b16 %v3965
      %v4511 = vunpack.c.h.b16 %v3965
      %v4512 = vunpack.c.l.b16 %v3966
      %v4513 = vunpack.c.h.b16 %v3966
      %v4514 = vunpack.c.l.b16 %v3967
      %v4515 = vunpack.c.h.b16 %v3967
      %v4516 = vunpack.c.l.b16 %v3968
      %v4517 = vunpack.c.l.b16 %v3969
      %v4518 = vunpack.c.h.b16 %v3969
      %v4519 = vunpack.c.l.b16 %v3970
      %v4520 = vunpack.c.h.b16 %v3970
      %v4521 = vunpack.c.l.b16 %v3971
      %v4522 = vunpack.c.h.b16 %v3971
      %v4523 = vunpack.c.l.b16 %v3972
      %v4524 = vunpack.c.h.b16 %v3972
      %v4525 = vunpack.c.l.b16 %v3973
      %v4526 = vunpack.c.l.b16 %v3974
      %v4527 = vunpack.c.h.b16 %v3974
      %v4528 = vunpack.c.l.b16 %v3975
      %v4529 = vunpack.c.h.b16 %v3975
      %v4530 = vunpack.c.l.b16 %v3976
      %v4531 = vunpack.c.h.b16 %v3976
      %v4532 = vunpack.c.l.b16 %v3977
      %v4533 = vunpack.c.h.b16 %v3977
      %v4534 = vunpack.c.l.b16 %v3978
      %v4535 = vunpack.c.l.b16 %v3979
      %v4536 = vunpack.c.h.b16 %v3979
      %v4537 = vunpack.c.l.b16 %v3980
      %v4538 = vunpack.c.h.b16 %v3980
      %v4539 = vunpack.c.l.b16 %v3981
      %v4540 = vunpack.c.h.b16 %v3981
      %v4541 = vunpack.c.l.b16 %v3982
      %v4542 = vunpack.c.h.b16 %v3982
      %v4543 = vunpack.c.l.b16 %v3983
      %v4544 = vunpack.c.l.b16 %v3984
      %v4545 = vunpack.c.h.b16 %v3984
      %v4546 = vunpack.c.l.b16 %v3985
      %v4547 = vunpack.c.h.b16 %v3985
      %v4548 = vunpack.c.l.b16 %v3986
      %v4549 = vunpack.c.h.b16 %v3986
      %v4550 = vunpack.c.l.b16 %v3987
      %v4551 = vunpack.c.h.b16 %v3987
      %v4552 = vunpack.c.l.b16 %v3988
      %v4553 = vunpack.c.l.b16 %v3989
      %v4554 = vunpack.c.h.b16 %v3989
      %v4555 = vunpack.c.l.b16 %v3990
      %v4556 = vunpack.c.h.b16 %v3990
      %v4557 = vunpack.c.l.b16 %v3991
      %v4558 = vunpack.c.h.b16 %v3991
      %v4559 = vunpack.c.l.b16 %v3992
      %v4560 = vunpack.c.h.b16 %v3992
      %v4561 = vunpack.c.l.b16 %v3993
      %v4562 = vunpack.c.l.b16 %v3994
      %v4563 = vunpack.c.h.b16 %v3994
      %v4564 = vunpack.c.l.b16 %v3995
      %v4565 = vunpack.c.h.b16 %v3995
      %v4566 = vunpack.c.l.b16 %v3996
      %v4567 = vunpack.c.h.b16 %v3996
      %v4568 = vunpack.c.l.b16 %v3997
      %v4569 = vunpack.c.h.b16 %v3997
      %v4570 = vunpack.c.l.b16 %v3998
      %v4571 = vunpack.c.l.b16 %v3999
      %v4572 = vunpack.c.h.b16 %v3999
      %v4573 = vunpack.c.l.b16 %v4000
      %v4574 = vunpack.c.h.b16 %v4000
      %v4575 = vunpack.c.l.b16 %v4001
      %v4576 = vunpack.c.h.b16 %v4001
      %v4577 = vunpack.c.l.b16 %v4002
      %v4578 = vunpack.c.h.b16 %v4002
      %v4579 = vunpack.c.l.b16 %v4003
      %v4580 = vunpack.c.l.b16 %v4004
      %v4581 = vunpack.c.h.b16 %v4004
      %v4582 = vunpack.c.l.b16 %v4005
      %v4583 = vunpack.c.h.b16 %v4005
      %v4584 = vunpack.c.l.b16 %v4006
      %v4585 = vunpack.c.h.b16 %v4006
      %v4586 = vunpack.c.l.b16 %v4007
      %v4587 = vunpack.c.h.b16 %v4007
      %v4588 = vunpack.c.l.b16 %v4008
      %v4589 = vunpack.c.l.b16 %v4009
      %v4590 = vunpack.c.h.b16 %v4009
      %v4591 = vunpack.c.l.b16 %v4010
      %v4592 = vunpack.c.h.b16 %v4010
      %v4593 = vunpack.c.l.b16 %v4011
      %v4594 = vunpack.c.h.b16 %v4011
      %v4595 = vunpack.c.l.b16 %v4012
      %v4596 = vunpack.c.h.b16 %v4012
      %v4597 = vunpack.c.l.b16 %v4013
      %v4598 = vunpack.c.l.b16 %v4014
      %v4599 = vunpack.c.h.b16 %v4014
      %v4600 = vunpack.c.l.b16 %v4015
      %v4601 = vunpack.c.h.b16 %v4015
      %v4602 = vunpack.c.l.b16 %v4016
      %v4603 = vunpack.c.h.b16 %v4016
      %v4604 = vunpack.c.l.b16 %v4017
      %v4605 = vunpack.c.h.b16 %v4017
      %v4606 = vunpack.c.l.b16 %v4018
      %v4607 = vunpack.c.l.b16 %v4019
      %v4608 = vunpack.c.h.b16 %v4019
      %v4609 = vunpack.c.l.b16 %v4020
      %v4610 = vunpack.c.h.b16 %v4020
      %v4611 = vunpack.c.l.b16 %v4021
      %v4612 = vunpack.c.h.b16 %v4021
      %v4613 = vunpack.c.l.b16 %v4022
      %v4614 = vunpack.c.h.b16 %v4022
      %v4615 = vunpack.c.l.b16 %v4023
      %v4616 = vunpack.c.l.b16 %v4024
      %v4617 = vunpack.c.h.b16 %v4024
      %v4618 = vunpack.c.l.b16 %v4025
      %v4619 = vunpack.c.h.b16 %v4025
      %v4620 = vunpack.c.l.b16 %v4026
      %v4621 = vunpack.c.h.b16 %v4026
      %v4622 = vunpack.c.l.b16 %v4027
      %v4623 = vunpack.c.h.b16 %v4027
      %v4624 = vunpack.c.l.b16 %v4028
      %v4625 = vpack.c.b16 %v4346, %v4337
      %v4626 = vpack.c.b16 %v4347, %v4338
      %v4627 = vpack.c.b16 %v4348, %v4339
      %v4628 = vpack.c.b16 %v4349, %v4340
      %v4629 = vpack.c.b16 %v4350, %v4341
      %v4630 = vpack.c.b16 %v4351, %v4342
      %v4631 = vpack.c.b16 %v4352, %v4343
      %v4632 = vpack.c.b16 %v4353, %v4344
      %v4633 = vpack.c.b16 %v4354, %v4345
      %v4634 = vpack.c.b16 %v4364, %v4355
      %v4635 = vpack.c.b16 %v4365, %v4356
      %v4636 = vpack.c.b16 %v4366, %v4357
      %v4637 = vpack.c.b16 %v4367, %v4358
      %v4638 = vpack.c.b16 %v4368, %v4359
      %v4639 = vpack.c.b16 %v4369, %v4360
      %v4640 = vpack.c.b16 %v4370, %v4361
      %v4641 = vpack.c.b16 %v4371, %v4362
      %v4642 = vpack.c.b16 %v4372, %v4363
      %v4643 = vpack.c.b16 %v4382, %v4373
      %v4644 = vpack.c.b16 %v4383, %v4374
      %v4645 = vpack.c.b16 %v4384, %v4375
      %v4646 = vpack.c.b16 %v4385, %v4376
      %v4647 = vpack.c.b16 %v4386, %v4377
      %v4648 = vpack.c.b16 %v4387, %v4378
      %v4649 = vpack.c.b16 %v4388, %v4379
      %v4650 = vpack.c.b16 %v4389, %v4380
      %v4651 = vpack.c.b16 %v4390, %v4381
      %v4652 = vpack.c.b16 %v4400, %v4391
      %v4653 = vpack.c.b16 %v4401, %v4392
      %v4654 = vpack.c.b16 %v4402, %v4393
      %v4655 = vpack.c.b16 %v4403, %v4394
      %v4656 = vpack.c.b16 %v4404, %v4395
      %v4657 = vpack.c.b16 %v4405, %v4396
      %v4658 = vpack.c.b16 %v4406, %v4397
      %v4659 = vpack.c.b16 %v4407, %v4398
      %v4660 = vpack.c.b16 %v4408, %v4399
      %v4661 = vpack.c.b16 %v4418, %v4409
      %v4662 = vpack.c.b16 %v4419, %v4410
      %v4663 = vpack.c.b16 %v4420, %v4411
      %v4664 = vpack.c.b16 %v4421, %v4412
      %v4665 = vpack.c.b16 %v4422, %v4413
      %v4666 = vpack.c.b16 %v4423, %v4414
      %v4667 = vpack.c.b16 %v4424, %v4415
      %v4668 = vpack.c.b16 %v4425, %v4416
      %v4669 = vpack.c.b16 %v4426, %v4417
      %v4670 = vpack.c.b16 %v4436, %v4427
      %v4671 = vpack.c.b16 %v4437, %v4428
      %v4672 = vpack.c.b16 %v4438, %v4429
      %v4673 = vpack.c.b16 %v4439, %v4430
      %v4674 = vpack.c.b16 %v4440, %v4431
      %v4675 = vpack.c.b16 %v4441, %v4432
      %v4676 = vpack.c.b16 %v4442, %v4433
      %v4677 = vpack.c.b16 %v4443, %v4434
      %v4678 = vpack.c.b16 %v4444, %v4435
      %v4679 = vpack.c.b16 %v4454, %v4445
      %v4680 = vpack.c.b16 %v4455, %v4446
      %v4681 = vpack.c.b16 %v4456, %v4447
      %v4682 = vpack.c.b16 %v4457, %v4448
      %v4683 = vpack.c.b16 %v4458, %v4449
      %v4684 = vpack.c.b16 %v4459, %v4450
      %v4685 = vpack.c.b16 %v4460, %v4451
      %v4686 = vpack.c.b16 %v4461, %v4452
      %v4687 = vpack.c.b16 %v4462, %v4453
      %v4688 = vpack.c.b16 %v4472, %v4463
      %v4689 = vpack.c.b16 %v4473, %v4464
      %v4690 = vpack.c.b16 %v4474, %v4465
      %v4691 = vpack.c.b16 %v4475, %v4466
      %v4692 = vpack.c.b16 %v4476, %v4467
      %v4693 = vpack.c.b16 %v4477, %v4468
      %v4694 = vpack.c.b16 %v4478, %v4469
      %v4695 = vpack.c.b16 %v4479, %v4470
      %v4696 = vpack.c.b16 %v4480, %v4471
      %v4697 = vpack.c.b16 %v4490, %v4481
      %v4698 = vpack.c.b16 %v4491, %v4482
      %v4699 = vpack.c.b16 %v4492, %v4483
      %v4700 = vpack.c.b16 %v4493, %v4484
      %v4701 = vpack.c.b16 %v4494, %v4485
      %v4702 = vpack.c.b16 %v4495, %v4486
      %v4703 = vpack.c.b16 %v4496, %v4487
      %v4704 = vpack.c.b16 %v4497, %v4488
      %v4705 = vpack.c.b16 %v4498, %v4489
      %v4706 = vpack.c.b16 %v4508, %v4499
      %v4707 = vpack.c.b16 %v4509, %v4500
      %v4708 = vpack.c.b16 %v4510, %v4501
      %v4709 = vpack.c.b16 %v4511, %v4502
      %v4710 = vpack.c.b16 %v4512, %v4503
      %v4711 = vpack.c.b16 %v4513, %v4504
      %v4712 = vpack.c.b16 %v4514, %v4505
      %v4713 = vpack.c.b16 %v4515, %v4506
      %v4714 = vpack.c.b16 %v4516, %v4507
      %v4715 = vpack.c.b16 %v4526, %v4517
      %v4716 = vpack.c.b16 %v4527, %v4518
      %v4717 = vpack.c.b16 %v4528, %v4519
      %v4718 = vpack.c.b16 %v4529, %v4520
      %v4719 = vpack.c.b16 %v4530, %v4521
      %v4720 = vpack.c.b16 %v4531, %v4522
      %v4721 = vpack.c.b16 %v4532, %v4523
      %v4722 = vpack.c.b16 %v4533, %v4524
      %v4723 = vpack.c.b16 %v4534, %v4525
      %v4724 = vpack.c.b16 %v4544, %v4535
      %v4725 = vpack.c.b16 %v4545, %v4536
      %v4726 = vpack.c.b16 %v4546, %v4537
      %v4727 = vpack.c.b16 %v4547, %v4538
      %v4728 = vpack.c.b16 %v4548, %v4539
      %v4729 = vpack.c.b16 %v4549, %v4540
      %v4730 = vpack.c.b16 %v4550, %v4541
      %v4731 = vpack.c.b16 %v4551, %v4542
      %v4732 = vpack.c.b16 %v4552, %v4543
      %v4733 = vpack.c.b16 %v4562, %v4553
      %v4734 = vpack.c.b16 %v4563, %v4554
      %v4735 = vpack.c.b16 %v4564, %v4555
      %v4736 = vpack.c.b16 %v4565, %v4556
      %v4737 = vpack.c.b16 %v4566, %v4557
      %v4738 = vpack.c.b16 %v4567, %v4558
      %v4739 = vpack.c.b16 %v4568, %v4559
      %v4740 = vpack.c.b16 %v4569, %v4560
      %v4741 = vpack.c.b16 %v4570, %v4561
      %v4742 = vpack.c.b16 %v4580, %v4571
      %v4743 = vpack.c.b16 %v4581, %v4572
      %v4744 = vpack.c.b16 %v4582, %v4573
      %v4745 = vpack.c.b16 %v4583, %v4574
      %v4746 = vpack.c.b16 %v4584, %v4575
      %v4747 = vpack.c.b16 %v4585, %v4576
      %v4748 = vpack.c.b16 %v4586, %v4577
      %v4749 = vpack.c.b16 %v4587, %v4578
      %v4750 = vpack.c.b16 %v4588, %v4579
      %v4751 = vpack.c.b16 %v4598, %v4589
      %v4752 = vpack.c.b16 %v4599, %v4590
      %v4753 = vpack.c.b16 %v4600, %v4591
      %v4754 = vpack.c.b16 %v4601, %v4592
      %v4755 = vpack.c.b16 %v4602, %v4593
      %v4756 = vpack.c.b16 %v4603, %v4594
      %v4757 = vpack.c.b16 %v4604, %v4595
      %v4758 = vpack.c.b16 %v4605, %v4596
      %v4759 = vpack.c.b16 %v4606, %v4597
      %v4760 = vpack.c.b16 %v4616, %v4607
      %v4761 = vpack.c.b16 %v4617, %v4608
      %v4762 = vpack.c.b16 %v4618, %v4609
      %v4763 = vpack.c.b16 %v4619, %v4610
      %v4764 = vpack.c.b16 %v4620, %v4611
      %v4765 = vpack.c.b16 %v4621, %v4612
      %v4766 = vpack.c.b16 %v4622, %v4613
      %v4767 = vpack.c.b16 %v4623, %v4614
      %v4768 = vpack.c.b16 %v4624, %v4615
      %v5057 = vunpack.c.l.b16 %v4029
      %v5058 = vunpack.c.l.b16 %v4030
      %v5059 = vunpack.c.l.b16 %v4031
      %v5060 = vunpack.c.l.b16 %v4032
      %v5061 = vunpack.c.l.b16 %v4033
      %v5062 = vunpack.c.l.b16 %v4034
      %v5063 = vunpack.c.l.b16 %v4035
      %v5064 = vunpack.c.l.b16 %v4036
      %v5065 = vunpack.c.l.b16 %v4037
      %v5066 = vunpack.c.l.b16 %v4038
      %v5067 = vunpack.c.l.b16 %v4039
      %v5068 = vunpack.c.l.b16 %v4040
      %v5069 = vunpack.c.l.b16 %v4041
      %v5070 = vunpack.c.l.b16 %v4042
      %v5071 = vunpack.c.l.b16 %v4043
      %v5072 = vunpack.c.l.b16 %v4044
      %v5073 = vunpack.c.l.b16 %v4045
      %v5074 = vunpack.c.l.b16 %v4046
      %v5075 = vunpack.c.l.b16 %v4047
      %v5076 = vunpack.c.l.b16 %v4048
      %v5077 = vunpack.c.l.b16 %v4049
      %v5078 = vunpack.c.l.b16 %v4050
      %v5079 = vunpack.c.l.b16 %v4051
      %v5080 = vunpack.c.l.b16 %v4052
      %v5081 = vunpack.c.l.b16 %v4053
      %v5082 = vunpack.c.l.b16 %v4054
      %v5083 = vunpack.c.l.b16 %v4055
      %v5084 = vunpack.c.l.b16 %v4056
      %v5085 = vunpack.c.l.b16 %v4057
      %v5086 = vunpack.c.l.b16 %v4058
      %v5087 = vunpack.c.l.b16 %v4059
      %v5088 = vunpack.c.l.b16 %v4060
      %v5089 = vunpack.c.l.b16 %v4061
      %v5090 = vunpack.c.l.b16 %v4062
      %v5091 = vunpack.c.l.b16 %v4063
      %v5092 = vunpack.c.l.b16 %v4064
      %v5093 = vunpack.c.l.b16 %v4065
      %v5094 = vunpack.c.l.b16 %v4066
      %v5095 = vunpack.c.l.b16 %v4067
      %v5096 = vunpack.c.l.b16 %v4068
      %v5097 = vunpack.c.l.b16 %v4069
      %v5098 = vunpack.c.l.b16 %v4070
      %v5099 = vunpack.c.l.b16 %v4071
      %v5100 = vunpack.c.l.b16 %v4072
      %v5101 = vunpack.c.l.b16 %v4073
      %v5102 = vunpack.c.l.b16 %v4074
      %v5103 = vunpack.c.l.b16 %v4075
      %v5104 = vunpack.c.l.b16 %v4076
      %v5105 = vunpack.c.l.b16 %v4077
      %v5106 = vunpack.c.l.b16 %v4078
      %v5107 = vunpack.c.l.b16 %v4079
      %v5108 = vunpack.c.l.b16 %v4080
      %v5109 = vunpack.c.l.b16 %v4081
      %v5110 = vunpack.c.l.b16 %v4082
      %v5111 = vunpack.c.l.b16 %v4083
      %v5112 = vunpack.c.l.b16 %v4084
      %v5113 = vunpack.c.l.b16 %v4085
      %v5114 = vunpack.c.l.b16 %v4086
      %v5115 = vunpack.c.l.b16 %v4087
      %v5116 = vunpack.c.l.b16 %v4088
      %v5117 = vunpack.c.l.b16 %v4089
      %v5118 = vunpack.c.l.b16 %v4090
      %v5119 = vunpack.c.l.b16 %v4091
      %v5120 = vunpack.c.l.b16 %v4092
      %v5121 = vunpack.c.l.b16 %v4093
      %v5122 = vunpack.c.l.b16 %v4094
      %v5123 = vunpack.c.l.b16 %v4095
      %v5124 = vunpack.c.l.b16 %v4096
      %v5125 = vunpack.c.l.b16 %v4097
      %v5126 = vunpack.c.l.b16 %v4098
      %v5127 = vunpack.c.l.b16 %v4099
      %v5128 = vunpack.c.l.b16 %v4100
      %v5129 = vunpack.c.l.b16 %v4101
      %v5130 = vunpack.c.l.b16 %v4102
      %v5131 = vunpack.c.l.b16 %v4103
      %v5132 = vunpack.c.l.b16 %v4104
      %v5133 = vunpack.c.l.b16 %v4105
      %v5134 = vunpack.c.l.b16 %v4106
      %v5135 = vunpack.c.l.b16 %v4107
      %v5136 = vunpack.c.l.b16 %v4108
      %v5137 = vunpack.c.l.b16 %v4109
      %v5138 = vunpack.c.l.b16 %v4110
      %v5139 = vunpack.c.l.b16 %v4111
      %v5140 = vunpack.c.l.b16 %v4112
      %v5141 = vunpack.c.l.b16 %v4113
      %v5142 = vunpack.c.l.b16 %v4114
      %v5143 = vunpack.c.l.b16 %v4115
      %v5144 = vunpack.c.l.b16 %v4116
      %v5145 = vunpack.c.l.b16 %v4117
      %v5146 = vunpack.c.l.b16 %v4118
      %v5147 = vunpack.c.l.b16 %v4119
      %v5148 = vunpack.c.l.b16 %v4120
      %v5149 = vunpack.c.l.b16 %v4121
      %v5150 = vunpack.c.l.b16 %v4122
      %v5151 = vunpack.c.l.b16 %v4123
      %v5152 = vunpack.c.l.b16 %v4124
      %v5153 = vunpack.c.l.b16 %v4125
      %v5154 = vunpack.c.l.b16 %v4126
      %v5155 = vunpack.c.l.b16 %v4127
      %v5156 = vunpack.c.l.b16 %v4128
      %v5157 = vunpack.c.l.b16 %v4129
      %v5158 = vunpack.c.l.b16 %v4130
      %v5159 = vunpack.c.l.b16 %v4131
      %v5160 = vunpack.c.l.b16 %v4132
      %v5161 = vunpack.c.l.b16 %v4133
      %v5162 = vunpack.c.l.b16 %v4134
      %v5163 = vunpack.c.l.b16 %v4135
      %v5164 = vunpack.c.l.b16 %v4136
      %v5165 = vunpack.c.l.b16 %v4137
      %v5166 = vunpack.c.l.b16 %v4138
      %v5167 = vunpack.c.l.b16 %v4139
      %v5168 = vunpack.c.l.b16 %v4140
      %v5169 = vunpack.c.l.b16 %v4141
      %v5170 = vunpack.c.l.b16 %v4142
      %v5171 = vunpack.c.l.b16 %v4143
      %v5172 = vunpack.c.l.b16 %v4144
      %v5173 = vunpack.c.l.b16 %v4145
      %v5174 = vunpack.c.l.b16 %v4146
      %v5175 = vunpack.c.l.b16 %v4147
      %v5176 = vunpack.c.l.b16 %v4148
      %v5177 = vunpack.c.l.b16 %v4149
      %v5178 = vunpack.c.l.b16 %v4150
      %v5179 = vunpack.c.l.b16 %v4151
      %v5180 = vunpack.c.l.b16 %v4152
      %v5181 = vunpack.c.l.b16 %v4153
      %v5182 = vunpack.c.l.b16 %v4154
      %v5183 = vunpack.c.l.b16 %v4155
      %v5184 = vunpack.c.l.b16 %v4156
      %v5185 = vunpack.c.l.b16 %v4157
      %v5186 = vunpack.c.l.b16 %v4158
      %v5187 = vunpack.c.l.b16 %v4159
      %v5188 = vunpack.c.l.b16 %v4160
      %v5189 = vunpack.c.l.b16 %v4161
      %v5190 = vunpack.c.l.b16 %v4162
      %v5191 = vunpack.c.l.b16 %v4163
      %v5192 = vunpack.c.l.b16 %v4164
      %v5193 = vunpack.c.l.b16 %v4165
      %v5194 = vunpack.c.l.b16 %v4166
      %v5195 = vunpack.c.l.b16 %v4167
      %v5196 = vunpack.c.l.b16 %v4168
      %v5197 = vunpack.c.l.b16 %v4169
      %v5198 = vunpack.c.l.b16 %v4170
      %v5199 = vunpack.c.l.b16 %v4171
      %v5200 = vunpack.c.l.b16 %v4172
      %v5201 = vpack.c.b16 %v5058, %v5057
      %v5202 = vpack.c.b16 %v5060, %v5059
      %v5203 = vpack.c.b16 %v5062, %v5061
      %v5204 = vpack.c.b16 %v5064, %v5063
      %v5205 = vpack.c.b16 %v5066, %v5065
      %v5206 = vpack.c.b16 %v5068, %v5067
      %v5207 = vpack.c.b16 %v5070, %v5069
      %v5208 = vpack.c.b16 %v5072, %v5071
      %v5209 = vpack.c.b16 %v5074, %v5073
      %v5210 = vpack.c.b16 %v5076, %v5075
      %v5211 = vpack.c.b16 %v5078, %v5077
      %v5212 = vpack.c.b16 %v5080, %v5079
      %v5213 = vpack.c.b16 %v5082, %v5081
      %v5214 = vpack.c.b16 %v5084, %v5083
      %v5215 = vpack.c.b16 %v5086, %v5085
      %v5216 = vpack.c.b16 %v5088, %v5087
      %v5217 = vpack.c.b16 %v5090, %v5089
      %v5218 = vpack.c.b16 %v5092, %v5091
      %v5219 = vpack.c.b16 %v5094, %v5093
      %v5220 = vpack.c.b16 %v5096, %v5095
      %v5221 = vpack.c.b16 %v5098, %v5097
      %v5222 = vpack.c.b16 %v5100, %v5099
      %v5223 = vpack.c.b16 %v5102, %v5101
      %v5224 = vpack.c.b16 %v5104, %v5103
      %v5225 = vpack.c.b16 %v5106, %v5105
      %v5226 = vpack.c.b16 %v5108, %v5107
      %v5227 = vpack.c.b16 %v5110, %v5109
      %v5228 = vpack.c.b16 %v5112, %v5111
      %v5229 = vpack.c.b16 %v5114, %v5113
      %v5230 = vpack.c.b16 %v5116, %v5115
      %v5231 = vpack.c.b16 %v5118, %v5117
      %v5232 = vpack.c.b16 %v5120, %v5119
      %v5233 = vpack.c.b16 %v5122, %v5121
      %v5234 = vpack.c.b16 %v5124, %v5123
      %v5235 = vpack.c.b16 %v5126, %v5125
      %v5236 = vpack.c.b16 %v5128, %v5127
      %v5237 = vpack.c.b16 %v5130, %v5129
      %v5238 = vpack.c.b16 %v5132, %v5131
      %v5239 = vpack.c.b16 %v5134, %v5133
      %v5240 = vpack.c.b16 %v5136, %v5135
      %v5241 = vpack.c.b16 %v5138, %v5137
      %v5242 = vpack.c.b16 %v5140, %v5139
      %v5243 = vpack.c.b16 %v5142, %v5141
      %v5244 = vpack.c.b16 %v5144, %v5143
      %v5245 = vpack.c.b16 %v5146, %v5145
      %v5246 = vpack.c.b16 %v5148, %v5147
      %v5247 = vpack.c.b16 %v5150, %v5149
      %v5248 = vpack.c.b16 %v5152, %v5151
      %v5249 = vpack.c.b16 %v5154, %v5153
      %v5250 = vpack.c.b16 %v5156, %v5155
      %v5251 = vpack.c.b16 %v5158, %v5157
      %v5252 = vpack.c.b16 %v5160, %v5159
      %v5253 = vpack.c.b16 %v5162, %v5161
      %v5254 = vpack.c.b16 %v5164, %v5163
      %v5255 = vpack.c.b16 %v5166, %v5165
      %v5256 = vpack.c.b16 %v5168, %v5167
      %v5257 = vpack.c.b16 %v5170, %v5169
      %v5258 = vpack.c.b16 %v5172, %v5171
      %v5259 = vpack.c.b16 %v5174, %v5173
      %v5260 = vpack.c.b16 %v5176, %v5175
      %v5261 = vpack.c.b16 %v5178, %v5177
      %v5262 = vpack.c.b16 %v5180, %v5179
      %v5263 = vpack.c.b16 %v5182, %v5181
      %v5264 = vpack.c.b16 %v5184, %v5183
      %v5265 = vpack.c.b16 %v5186, %v5185
      %v5266 = vpack.c.b16 %v5188, %v5187
      %v5267 = vpack.c.b16 %v5190, %v5189
      %v5268 = vpack.c.b16 %v5192, %v5191
      %v5269 = vpack.c.b16 %v5194, %v5193
      %v5270 = vpack.c.b16 %v5196, %v5195
      %v5271 = vpack.c.b16 %v5198, %v5197
      %v5272 = vpack.c.b16 %v5200, %v5199
      %5345 = vmatpush.bf16.msra.mxu0 %v5208
      %5346 = vmatpush.bf16.msra.mxu0 %v5207
      %5347 = vmatpush.bf16.msra.mxu0 %v5206
      %5348 = vmatpush.bf16.msra.mxu0 %v5205
      %5349 = vmatpush.bf16.msra.mxu0 %v5204
      %5350 = vmatpush.bf16.msra.mxu0 %v5203
      %5351 = vmatpush.bf16.msra.mxu0 %v5202
      %5352 = vmatpush.bf16.msra.mxu0 %v5201
      %5353 = vmatmul.bf16.gmra.mxu0 %v4625
      %v5354 = vpop.f32.mrf.mxu0
      %v5355 = vadd.f32 %v4175, %v5354
      %v5356 = vpop.f32.mrf.mxu0
      %v5357 = vadd.f32 %v4175, %v5356
      %5358 = vmatmul.bf16.gmra.mxu0 %v4634
      %v5359 = vpop.f32.mrf.mxu0
      %v5360 = vadd.f32 %v4175, %v5359
      %v5361 = vpop.f32.mrf.mxu0
      %v5362 = vadd.f32 %v4175, %v5361
      %5363 = vmatmul.bf16.gmra.mxu0 %v4643
      %v5364 = vpop.f32.mrf.mxu0
      %v5365 = vadd.f32 %v4175, %v5364
      %v5366 = vpop.f32.mrf.mxu0
      %v5367 = vadd.f32 %v4175, %v5366
      %5368 = vmatmul.bf16.gmra.mxu0 %v4652
      %v5369 = vpop.f32.mrf.mxu0
      %v5370 = vadd.f32 %v4175, %v5369
      %v5371 = vpop.f32.mrf.mxu0
      %v5372 = vadd.f32 %v4175, %v5371
      %5373 = vmatmul.bf16.gmra.mxu0 %v4661
      %v5374 = vpop.f32.mrf.mxu0
      %v5375 = vadd.f32 %v4175, %v5374
      %v5376 = vpop.f32.mrf.mxu0
      %v5377 = vadd.f32 %v4175, %v5376
      %5378 = vmatmul.bf16.gmra.mxu0 %v4670
      %v5379 = vpop.f32.mrf.mxu0
      %v5380 = vadd.f32 %v4175, %v5379
      %v5381 = vpop.f32.mrf.mxu0
      %v5382 = vadd.f32 %v4175, %v5381
      %5383 = vmatmul.bf16.gmra.mxu0 %v4679
      %v5384 = vpop.f32.mrf.mxu0
      %v5385 = vadd.f32 %v4175, %v5384
      %v5386 = vpop.f32.mrf.mxu0
      %v5387 = vadd.f32 %v4175, %v5386
      %5388 = vmatmul.bf16.gmra.mxu0 %v4688
      %v5389 = vpop.f32.mrf.mxu0
      %v5390 = vadd.f32 %v4175, %v5389
      %v5391 = vpop.f32.mrf.mxu0
      %v5392 = vadd.f32 %v4175, %v5391
      %5393 = vmatmul.bf16.gmra.mxu0 %v4697
      %v5394 = vpop.f32.mrf.mxu0
      %v5395 = vadd.f32 %v4175, %v5394
      %v5396 = vpop.f32.mrf.mxu0
      %v5397 = vadd.f32 %v4175, %v5396
      %5398 = vmatmul.bf16.gmra.mxu0 %v4706
      %v5399 = vpop.f32.mrf.mxu0
      %v5400 = vadd.f32 %v4175, %v5399
      %v5401 = vpop.f32.mrf.mxu0
      %v5402 = vadd.f32 %v4175, %v5401
      %5403 = vmatmul.bf16.gmra.mxu0 %v4715
      %v5404 = vpop.f32.mrf.mxu0
      %v5405 = vadd.f32 %v4175, %v5404
      %v5406 = vpop.f32.mrf.mxu0
      %v5407 = vadd.f32 %v4175, %v5406
      %5408 = vmatmul.bf16.gmra.mxu0 %v4724
      %v5409 = vpop.f32.mrf.mxu0
      %v5410 = vadd.f32 %v4175, %v5409
      %v5411 = vpop.f32.mrf.mxu0
      %v5412 = vadd.f32 %v4175, %v5411
      %5413 = vmatmul.bf16.gmra.mxu0 %v4733
      %v5414 = vpop.f32.mrf.mxu0
      %v5415 = vadd.f32 %v4175, %v5414
      %v5416 = vpop.f32.mrf.mxu0
      %v5417 = vadd.f32 %v4175, %v5416
      %5418 = vmatmul.bf16.gmra.mxu0 %v4742
      %v5419 = vpop.f32.mrf.mxu0
      %v5420 = vadd.f32 %v4175, %v5419
      %v5421 = vpop.f32.mrf.mxu0
      %v5422 = vadd.f32 %v4175, %v5421
      %5423 = vmatmul.bf16.gmra.mxu0 %v4751
      %v5424 = vpop.f32.mrf.mxu0
      %v5425 = vadd.f32 %v4175, %v5424
      %v5426 = vpop.f32.mrf.mxu0
      %v5427 = vadd.f32 %v4175, %v5426
      %5428 = vmatmul.bf16.gmra.mxu0 %v4760
      %v5429 = vpop.f32.mrf.mxu0
      %v5430 = vadd.f32 %v4175, %v5429
      %v5431 = vpop.f32.mrf.mxu0
      %v5432 = vadd.f32 %v4175, %v5431
      %5433 = vdwg.mxu0
      %5434 = vmatpush.bf16.msra.mxu0 %v5216
      %5435 = vmatpush.bf16.msra.mxu0 %v5215
      %5436 = vmatpush.bf16.msra.mxu0 %v5214
      %5437 = vmatpush.bf16.msra.mxu0 %v5213
      %5438 = vmatpush.bf16.msra.mxu0 %v5212
      %5439 = vmatpush.bf16.msra.mxu0 %v5211
      %5440 = vmatpush.bf16.msra.mxu0 %v5210
      %5441 = vmatpush.bf16.msra.mxu0 %v5209
      %5442 = vmatmul.bf16.gmra.mxu0 %v4626
      %v5443 = vpop.f32.mrf.mxu0
      %v5444 = vadd.f32 %v5355, %v5443
      %v5445 = vpop.f32.mrf.mxu0
      %v5446 = vadd.f32 %v5357, %v5445
      %5447 = vmatmul.bf16.gmra.mxu0 %v4635
      %v5448 = vpop.f32.mrf.mxu0
      %v5449 = vadd.f32 %v5360, %v5448
      %v5450 = vpop.f32.mrf.mxu0
      %v5451 = vadd.f32 %v5362, %v5450
      %5452 = vmatmul.bf16.gmra.mxu0 %v4644
      %v5453 = vpop.f32.mrf.mxu0
      %v5454 = vadd.f32 %v5365, %v5453
      %v5455 = vpop.f32.mrf.mxu0
      %v5456 = vadd.f32 %v5367, %v5455
      %5457 = vmatmul.bf16.gmra.mxu0 %v4653
      %v5458 = vpop.f32.mrf.mxu0
      %v5459 = vadd.f32 %v5370, %v5458
      %v5460 = vpop.f32.mrf.mxu0
      %v5461 = vadd.f32 %v5372, %v5460
      %5462 = vmatmul.bf16.gmra.mxu0 %v4662
      %v5463 = vpop.f32.mrf.mxu0
      %v5464 = vadd.f32 %v5375, %v5463
      %v5465 = vpop.f32.mrf.mxu0
      %v5466 = vadd.f32 %v5377, %v5465
      %5467 = vmatmul.bf16.gmra.mxu0 %v4671
      %v5468 = vpop.f32.mrf.mxu0
      %v5469 = vadd.f32 %v5380, %v5468
      %v5470 = vpop.f32.mrf.mxu0
      %v5471 = vadd.f32 %v5382, %v5470
      %5472 = vmatmul.bf16.gmra.mxu0 %v4680
      %v5473 = vpop.f32.mrf.mxu0
      %v5474 = vadd.f32 %v5385, %v5473
      %v5475 = vpop.f32.mrf.mxu0
      %v5476 = vadd.f32 %v5387, %v5475
      %5477 = vmatmul.bf16.gmra.mxu0 %v4689
      %v5478 = vpop.f32.mrf.mxu0
      %v5479 = vadd.f32 %v5390, %v5478
      %v5480 = vpop.f32.mrf.mxu0
      %v5481 = vadd.f32 %v5392, %v5480
      %5482 = vmatmul.bf16.gmra.mxu0 %v4698
      %v5483 = vpop.f32.mrf.mxu0
      %v5484 = vadd.f32 %v5395, %v5483
      %v5485 = vpop.f32.mrf.mxu0
      %v5486 = vadd.f32 %v5397, %v5485
      %5487 = vmatmul.bf16.gmra.mxu0 %v4707
      %v5488 = vpop.f32.mrf.mxu0
      %v5489 = vadd.f32 %v5400, %v5488
      %v5490 = vpop.f32.mrf.mxu0
      %v5491 = vadd.f32 %v5402, %v5490
      %5492 = vmatmul.bf16.gmra.mxu0 %v4716
      %v5493 = vpop.f32.mrf.mxu0
      %v5494 = vadd.f32 %v5405, %v5493
      %v5495 = vpop.f32.mrf.mxu0
      %v5496 = vadd.f32 %v5407, %v5495
      %5497 = vmatmul.bf16.gmra.mxu0 %v4725
      %v5498 = vpop.f32.mrf.mxu0
      %v5499 = vadd.f32 %v5410, %v5498
      %v5500 = vpop.f32.mrf.mxu0
      %v5501 = vadd.f32 %v5412, %v5500
      %5502 = vmatmul.bf16.gmra.mxu0 %v4734
      %v5503 = vpop.f32.mrf.mxu0
      %v5504 = vadd.f32 %v5415, %v5503
      %v5505 = vpop.f32.mrf.mxu0
      %v5506 = vadd.f32 %v5417, %v5505
      %5507 = vmatmul.bf16.gmra.mxu0 %v4743
      %v5508 = vpop.f32.mrf.mxu0
      %v5509 = vadd.f32 %v5420, %v5508
      %v5510 = vpop.f32.mrf.mxu0
      %v5511 = vadd.f32 %v5422, %v5510
      %5512 = vmatmul.bf16.gmra.mxu0 %v4752
      %v5513 = vpop.f32.mrf.mxu0
      %v5514 = vadd.f32 %v5425, %v5513
      %v5515 = vpop.f32.mrf.mxu0
      %v5516 = vadd.f32 %v5427, %v5515
      %5517 = vmatmul.bf16.gmra.mxu0 %v4761
      %v5518 = vpop.f32.mrf.mxu0
      %v5519 = vadd.f32 %v5430, %v5518
      %v5520 = vpop.f32.mrf.mxu0
      %v5521 = vadd.f32 %v5432, %v5520
      %5522 = vdwg.mxu0
      %5523 = vmatpush.bf16.msra.mxu0 %v5224
      %5524 = vmatpush.bf16.msra.mxu0 %v5223
      %5525 = vmatpush.bf16.msra.mxu0 %v5222
      %5526 = vmatpush.bf16.msra.mxu0 %v5221
      %5527 = vmatpush.bf16.msra.mxu0 %v5220
      %5528 = vmatpush.bf16.msra.mxu0 %v5219
      %5529 = vmatpush.bf16.msra.mxu0 %v5218
      %5530 = vmatpush.bf16.msra.mxu0 %v5217
      %5531 = vmatmul.bf16.gmra.mxu0 %v4627
      %v5532 = vpop.f32.mrf.mxu0
      %v5533 = vadd.f32 %v5444, %v5532
      %v5534 = vpop.f32.mrf.mxu0
      %v5535 = vadd.f32 %v5446, %v5534
      %5536 = vmatmul.bf16.gmra.mxu0 %v4636
      %v5537 = vpop.f32.mrf.mxu0
      %v5538 = vadd.f32 %v5449, %v5537
      %v5539 = vpop.f32.mrf.mxu0
      %v5540 = vadd.f32 %v5451, %v5539
      %5541 = vmatmul.bf16.gmra.mxu0 %v4645
      %v5542 = vpop.f32.mrf.mxu0
      %v5543 = vadd.f32 %v5454, %v5542
      %v5544 = vpop.f32.mrf.mxu0
      %v5545 = vadd.f32 %v5456, %v5544
      %5546 = vmatmul.bf16.gmra.mxu0 %v4654
      %v5547 = vpop.f32.mrf.mxu0
      %v5548 = vadd.f32 %v5459, %v5547
      %v5549 = vpop.f32.mrf.mxu0
      %v5550 = vadd.f32 %v5461, %v5549
      %5551 = vmatmul.bf16.gmra.mxu0 %v4663
      %v5552 = vpop.f32.mrf.mxu0
      %v5553 = vadd.f32 %v5464, %v5552
      %v5554 = vpop.f32.mrf.mxu0
      %v5555 = vadd.f32 %v5466, %v5554
      %5556 = vmatmul.bf16.gmra.mxu0 %v4672
      %v5557 = vpop.f32.mrf.mxu0
      %v5558 = vadd.f32 %v5469, %v5557
      %v5559 = vpop.f32.mrf.mxu0
      %v5560 = vadd.f32 %v5471, %v5559
      %5561 = vmatmul.bf16.gmra.mxu0 %v4681
      %v5562 = vpop.f32.mrf.mxu0
      %v5563 = vadd.f32 %v5474, %v5562
      %v5564 = vpop.f32.mrf.mxu0
      %v5565 = vadd.f32 %v5476, %v5564
      %5566 = vmatmul.bf16.gmra.mxu0 %v4690
      %v5567 = vpop.f32.mrf.mxu0
      %v5568 = vadd.f32 %v5479, %v5567
      %v5569 = vpop.f32.mrf.mxu0
      %v5570 = vadd.f32 %v5481, %v5569
      %5571 = vmatmul.bf16.gmra.mxu0 %v4699
      %v5572 = vpop.f32.mrf.mxu0
      %v5573 = vadd.f32 %v5484, %v5572
      %v5574 = vpop.f32.mrf.mxu0
      %v5575 = vadd.f32 %v5486, %v5574
      %5576 = vmatmul.bf16.gmra.mxu0 %v4708
      %v5577 = vpop.f32.mrf.mxu0
      %v5578 = vadd.f32 %v5489, %v5577
      %v5579 = vpop.f32.mrf.mxu0
      %v5580 = vadd.f32 %v5491, %v5579
      %5581 = vmatmul.bf16.gmra.mxu0 %v4717
      %v5582 = vpop.f32.mrf.mxu0
      %v5583 = vadd.f32 %v5494, %v5582
      %v5584 = vpop.f32.mrf.mxu0
      %v5585 = vadd.f32 %v5496, %v5584
      %5586 = vmatmul.bf16.gmra.mxu0 %v4726
      %v5587 = vpop.f32.mrf.mxu0
      %v5588 = vadd.f32 %v5499, %v5587
      %v5589 = vpop.f32.mrf.mxu0
      %v5590 = vadd.f32 %v5501, %v5589
      %5591 = vmatmul.bf16.gmra.mxu0 %v4735
      %v5592 = vpop.f32.mrf.mxu0
      %v5593 = vadd.f32 %v5504, %v5592
      %v5594 = vpop.f32.mrf.mxu0
      %v5595 = vadd.f32 %v5506, %v5594
      %5596 = vmatmul.bf16.gmra.mxu0 %v4744
      %v5597 = vpop.f32.mrf.mxu0
      %v5598 = vadd.f32 %v5509, %v5597
      %v5599 = vpop.f32.mrf.mxu0
      %v5600 = vadd.f32 %v5511, %v5599
      %5601 = vmatmul.bf16.gmra.mxu0 %v4753
      %v5602 = vpop.f32.mrf.mxu0
      %v5603 = vadd.f32 %v5514, %v5602
      %v5604 = vpop.f32.mrf.mxu0
      %v5605 = vadd.f32 %v5516, %v5604
      %5606 = vmatmul.bf16.gmra.mxu0 %v4762
      %v5607 = vpop.f32.mrf.mxu0
      %v5608 = vadd.f32 %v5519, %v5607
      %v5609 = vpop.f32.mrf.mxu0
      %v5610 = vadd.f32 %v5521, %v5609
      %5611 = vdwg.mxu0
      %5612 = vmatpush.bf16.msra.mxu0 %v5232
      %5613 = vmatpush.bf16.msra.mxu0 %v5231
      %5614 = vmatpush.bf16.msra.mxu0 %v5230
      %5615 = vmatpush.bf16.msra.mxu0 %v5229
      %5616 = vmatpush.bf16.msra.mxu0 %v5228
      %5617 = vmatpush.bf16.msra.mxu0 %v5227
      %5618 = vmatpush.bf16.msra.mxu0 %v5226
      %5619 = vmatpush.bf16.msra.mxu0 %v5225
      %5620 = vmatmul.bf16.gmra.mxu0 %v4628
      %v5621 = vpop.f32.mrf.mxu0
      %v5622 = vadd.f32 %v5533, %v5621
      %v5623 = vpop.f32.mrf.mxu0
      %v5624 = vadd.f32 %v5535, %v5623
      %5625 = vmatmul.bf16.gmra.mxu0 %v4637
      %v5626 = vpop.f32.mrf.mxu0
      %v5627 = vadd.f32 %v5538, %v5626
      %v5628 = vpop.f32.mrf.mxu0
      %v5629 = vadd.f32 %v5540, %v5628
      %5630 = vmatmul.bf16.gmra.mxu0 %v4646
      %v5631 = vpop.f32.mrf.mxu0
      %v5632 = vadd.f32 %v5543, %v5631
      %v5633 = vpop.f32.mrf.mxu0
      %v5634 = vadd.f32 %v5545, %v5633
      %5635 = vmatmul.bf16.gmra.mxu0 %v4655
      %v5636 = vpop.f32.mrf.mxu0
      %v5637 = vadd.f32 %v5548, %v5636
      %v5638 = vpop.f32.mrf.mxu0
      %v5639 = vadd.f32 %v5550, %v5638
      %5640 = vmatmul.bf16.gmra.mxu0 %v4664
      %v5641 = vpop.f32.mrf.mxu0
      %v5642 = vadd.f32 %v5553, %v5641
      %v5643 = vpop.f32.mrf.mxu0
      %v5644 = vadd.f32 %v5555, %v5643
      %5645 = vmatmul.bf16.gmra.mxu0 %v4673
      %v5646 = vpop.f32.mrf.mxu0
      %v5647 = vadd.f32 %v5558, %v5646
      %v5648 = vpop.f32.mrf.mxu0
      %v5649 = vadd.f32 %v5560, %v5648
      %5650 = vmatmul.bf16.gmra.mxu0 %v4682
      %v5651 = vpop.f32.mrf.mxu0
      %v5652 = vadd.f32 %v5563, %v5651
      %v5653 = vpop.f32.mrf.mxu0
      %v5654 = vadd.f32 %v5565, %v5653
      %5655 = vmatmul.bf16.gmra.mxu0 %v4691
      %v5656 = vpop.f32.mrf.mxu0
      %v5657 = vadd.f32 %v5568, %v5656
      %v5658 = vpop.f32.mrf.mxu0
      %v5659 = vadd.f32 %v5570, %v5658
      %5660 = vmatmul.bf16.gmra.mxu0 %v4700
      %v5661 = vpop.f32.mrf.mxu0
      %v5662 = vadd.f32 %v5573, %v5661
      %v5663 = vpop.f32.mrf.mxu0
      %v5664 = vadd.f32 %v5575, %v5663
      %5665 = vmatmul.bf16.gmra.mxu0 %v4709
      %v5666 = vpop.f32.mrf.mxu0
      %v5667 = vadd.f32 %v5578, %v5666
      %v5668 = vpop.f32.mrf.mxu0
      %v5669 = vadd.f32 %v5580, %v5668
      %5670 = vmatmul.bf16.gmra.mxu0 %v4718
      %v5671 = vpop.f32.mrf.mxu0
      %v5672 = vadd.f32 %v5583, %v5671
      %v5673 = vpop.f32.mrf.mxu0
      %v5674 = vadd.f32 %v5585, %v5673
      %5675 = vmatmul.bf16.gmra.mxu0 %v4727
      %v5676 = vpop.f32.mrf.mxu0
      %v5677 = vadd.f32 %v5588, %v5676
      %v5678 = vpop.f32.mrf.mxu0
      %v5679 = vadd.f32 %v5590, %v5678
      %5680 = vmatmul.bf16.gmra.mxu0 %v4736
      %v5681 = vpop.f32.mrf.mxu0
      %v5682 = vadd.f32 %v5593, %v5681
      %v5683 = vpop.f32.mrf.mxu0
      %v5684 = vadd.f32 %v5595, %v5683
      %5685 = vmatmul.bf16.gmra.mxu0 %v4745
      %v5686 = vpop.f32.mrf.mxu0
      %v5687 = vadd.f32 %v5598, %v5686
      %v5688 = vpop.f32.mrf.mxu0
      %v5689 = vadd.f32 %v5600, %v5688
      %5690 = vmatmul.bf16.gmra.mxu0 %v4754
      %v5691 = vpop.f32.mrf.mxu0
      %v5692 = vadd.f32 %v5603, %v5691
      %v5693 = vpop.f32.mrf.mxu0
      %v5694 = vadd.f32 %v5605, %v5693
      %5695 = vmatmul.bf16.gmra.mxu0 %v4763
      %v5696 = vpop.f32.mrf.mxu0
      %v5697 = vadd.f32 %v5608, %v5696
      %v5698 = vpop.f32.mrf.mxu0
      %v5699 = vadd.f32 %v5610, %v5698
      %5700 = vdwg.mxu0
      %5701 = vmatpush.bf16.msra.mxu0 %v5240
      %5702 = vmatpush.bf16.msra.mxu0 %v5239
      %5703 = vmatpush.bf16.msra.mxu0 %v5238
      %5704 = vmatpush.bf16.msra.mxu0 %v5237
      %5705 = vmatpush.bf16.msra.mxu0 %v5236
      %5706 = vmatpush.bf16.msra.mxu0 %v5235
      %5707 = vmatpush.bf16.msra.mxu0 %v5234
      %5708 = vmatpush.bf16.msra.mxu0 %v5233
      %5709 = vmatmul.bf16.gmra.mxu0 %v4629
      %v5710 = vpop.f32.mrf.mxu0
      %v5711 = vadd.f32 %v5622, %v5710
      %v5712 = vpop.f32.mrf.mxu0
      %v5713 = vadd.f32 %v5624, %v5712
      %5714 = vmatmul.bf16.gmra.mxu0 %v4638
      %v5715 = vpop.f32.mrf.mxu0
      %v5716 = vadd.f32 %v5627, %v5715
      %v5717 = vpop.f32.mrf.mxu0
      %v5718 = vadd.f32 %v5629, %v5717
      %5719 = vmatmul.bf16.gmra.mxu0 %v4647
      %v5720 = vpop.f32.mrf.mxu0
      %v5721 = vadd.f32 %v5632, %v5720
      %v5722 = vpop.f32.mrf.mxu0
      %v5723 = vadd.f32 %v5634, %v5722
      %5724 = vmatmul.bf16.gmra.mxu0 %v4656
      %v5725 = vpop.f32.mrf.mxu0
      %v5726 = vadd.f32 %v5637, %v5725
      %v5727 = vpop.f32.mrf.mxu0
      %v5728 = vadd.f32 %v5639, %v5727
      %5729 = vmatmul.bf16.gmra.mxu0 %v4665
      %v5730 = vpop.f32.mrf.mxu0
      %v5731 = vadd.f32 %v5642, %v5730
      %v5732 = vpop.f32.mrf.mxu0
      %v5733 = vadd.f32 %v5644, %v5732
      %5734 = vmatmul.bf16.gmra.mxu0 %v4674
      %v5735 = vpop.f32.mrf.mxu0
      %v5736 = vadd.f32 %v5647, %v5735
      %v5737 = vpop.f32.mrf.mxu0
      %v5738 = vadd.f32 %v5649, %v5737
      %5739 = vmatmul.bf16.gmra.mxu0 %v4683
      %v5740 = vpop.f32.mrf.mxu0
      %v5741 = vadd.f32 %v5652, %v5740
      %v5742 = vpop.f32.mrf.mxu0
      %v5743 = vadd.f32 %v5654, %v5742
      %5744 = vmatmul.bf16.gmra.mxu0 %v4692
      %v5745 = vpop.f32.mrf.mxu0
      %v5746 = vadd.f32 %v5657, %v5745
      %v5747 = vpop.f32.mrf.mxu0
      %v5748 = vadd.f32 %v5659, %v5747
      %5749 = vmatmul.bf16.gmra.mxu0 %v4701
      %v5750 = vpop.f32.mrf.mxu0
      %v5751 = vadd.f32 %v5662, %v5750
      %v5752 = vpop.f32.mrf.mxu0
      %v5753 = vadd.f32 %v5664, %v5752
      %5754 = vmatmul.bf16.gmra.mxu0 %v4710
      %v5755 = vpop.f32.mrf.mxu0
      %v5756 = vadd.f32 %v5667, %v5755
      %v5757 = vpop.f32.mrf.mxu0
      %v5758 = vadd.f32 %v5669, %v5757
      %5759 = vmatmul.bf16.gmra.mxu0 %v4719
      %v5760 = vpop.f32.mrf.mxu0
      %v5761 = vadd.f32 %v5672, %v5760
      %v5762 = vpop.f32.mrf.mxu0
      %v5763 = vadd.f32 %v5674, %v5762
      %5764 = vmatmul.bf16.gmra.mxu0 %v4728
      %v5765 = vpop.f32.mrf.mxu0
      %v5766 = vadd.f32 %v5677, %v5765
      %v5767 = vpop.f32.mrf.mxu0
      %v5768 = vadd.f32 %v5679, %v5767
      %5769 = vmatmul.bf16.gmra.mxu0 %v4737
      %v5770 = vpop.f32.mrf.mxu0
      %v5771 = vadd.f32 %v5682, %v5770
      %v5772 = vpop.f32.mrf.mxu0
      %v5773 = vadd.f32 %v5684, %v5772
      %5774 = vmatmul.bf16.gmra.mxu0 %v4746
      %v5775 = vpop.f32.mrf.mxu0
      %v5776 = vadd.f32 %v5687, %v5775
      %v5777 = vpop.f32.mrf.mxu0
      %v5778 = vadd.f32 %v5689, %v5777
      %5779 = vmatmul.bf16.gmra.mxu0 %v4755
      %v5780 = vpop.f32.mrf.mxu0
      %v5781 = vadd.f32 %v5692, %v5780
      %v5782 = vpop.f32.mrf.mxu0
      %v5783 = vadd.f32 %v5694, %v5782
      %5784 = vmatmul.bf16.gmra.mxu0 %v4764
      %v5785 = vpop.f32.mrf.mxu0
      %v5786 = vadd.f32 %v5697, %v5785
      %v5787 = vpop.f32.mrf.mxu0
      %v5788 = vadd.f32 %v5699, %v5787
      %5789 = vdwg.mxu0
      %5790 = vmatpush.bf16.msra.mxu0 %v5248
      %5791 = vmatpush.bf16.msra.mxu0 %v5247
      %5792 = vmatpush.bf16.msra.mxu0 %v5246
      %5793 = vmatpush.bf16.msra.mxu0 %v5245
      %5794 = vmatpush.bf16.msra.mxu0 %v5244
      %5795 = vmatpush.bf16.msra.mxu0 %v5243
      %5796 = vmatpush.bf16.msra.mxu0 %v5242
      %5797 = vmatpush.bf16.msra.mxu0 %v5241
      %5798 = vmatmul.bf16.gmra.mxu0 %v4630
      %v5799 = vpop.f32.mrf.mxu0
      %v5800 = vadd.f32 %v5711, %v5799
      %v5801 = vpop.f32.mrf.mxu0
      %v5802 = vadd.f32 %v5713, %v5801
      %5803 = vmatmul.bf16.gmra.mxu0 %v4639
      %v5804 = vpop.f32.mrf.mxu0
      %v5805 = vadd.f32 %v5716, %v5804
      %v5806 = vpop.f32.mrf.mxu0
      %v5807 = vadd.f32 %v5718, %v5806
      %5808 = vmatmul.bf16.gmra.mxu0 %v4648
      %v5809 = vpop.f32.mrf.mxu0
      %v5810 = vadd.f32 %v5721, %v5809
      %v5811 = vpop.f32.mrf.mxu0
      %v5812 = vadd.f32 %v5723, %v5811
      %5813 = vmatmul.bf16.gmra.mxu0 %v4657
      %v5814 = vpop.f32.mrf.mxu0
      %v5815 = vadd.f32 %v5726, %v5814
      %v5816 = vpop.f32.mrf.mxu0
      %v5817 = vadd.f32 %v5728, %v5816
      %5818 = vmatmul.bf16.gmra.mxu0 %v4666
      %v5819 = vpop.f32.mrf.mxu0
      %v5820 = vadd.f32 %v5731, %v5819
      %v5821 = vpop.f32.mrf.mxu0
      %v5822 = vadd.f32 %v5733, %v5821
      %5823 = vmatmul.bf16.gmra.mxu0 %v4675
      %v5824 = vpop.f32.mrf.mxu0
      %v5825 = vadd.f32 %v5736, %v5824
      %v5826 = vpop.f32.mrf.mxu0
      %v5827 = vadd.f32 %v5738, %v5826
      %5828 = vmatmul.bf16.gmra.mxu0 %v4684
      %v5829 = vpop.f32.mrf.mxu0
      %v5830 = vadd.f32 %v5741, %v5829
      %v5831 = vpop.f32.mrf.mxu0
      %v5832 = vadd.f32 %v5743, %v5831
      %5833 = vmatmul.bf16.gmra.mxu0 %v4693
      %v5834 = vpop.f32.mrf.mxu0
      %v5835 = vadd.f32 %v5746, %v5834
      %v5836 = vpop.f32.mrf.mxu0
      %v5837 = vadd.f32 %v5748, %v5836
      %5838 = vmatmul.bf16.gmra.mxu0 %v4702
      %v5839 = vpop.f32.mrf.mxu0
      %v5840 = vadd.f32 %v5751, %v5839
      %v5841 = vpop.f32.mrf.mxu0
      %v5842 = vadd.f32 %v5753, %v5841
      %5843 = vmatmul.bf16.gmra.mxu0 %v4711
      %v5844 = vpop.f32.mrf.mxu0
      %v5845 = vadd.f32 %v5756, %v5844
      %v5846 = vpop.f32.mrf.mxu0
      %v5847 = vadd.f32 %v5758, %v5846
      %5848 = vmatmul.bf16.gmra.mxu0 %v4720
      %v5849 = vpop.f32.mrf.mxu0
      %v5850 = vadd.f32 %v5761, %v5849
      %v5851 = vpop.f32.mrf.mxu0
      %v5852 = vadd.f32 %v5763, %v5851
      %5853 = vmatmul.bf16.gmra.mxu0 %v4729
      %v5854 = vpop.f32.mrf.mxu0
      %v5855 = vadd.f32 %v5766, %v5854
      %v5856 = vpop.f32.mrf.mxu0
      %v5857 = vadd.f32 %v5768, %v5856
      %5858 = vmatmul.bf16.gmra.mxu0 %v4738
      %v5859 = vpop.f32.mrf.mxu0
      %v5860 = vadd.f32 %v5771, %v5859
      %v5861 = vpop.f32.mrf.mxu0
      %v5862 = vadd.f32 %v5773, %v5861
      %5863 = vmatmul.bf16.gmra.mxu0 %v4747
      %v5864 = vpop.f32.mrf.mxu0
      %v5865 = vadd.f32 %v5776, %v5864
      %v5866 = vpop.f32.mrf.mxu0
      %v5867 = vadd.f32 %v5778, %v5866
      %5868 = vmatmul.bf16.gmra.mxu0 %v4756
      %v5869 = vpop.f32.mrf.mxu0
      %v5870 = vadd.f32 %v5781, %v5869
      %v5871 = vpop.f32.mrf.mxu0
      %v5872 = vadd.f32 %v5783, %v5871
      %5873 = vmatmul.bf16.gmra.mxu0 %v4765
      %v5874 = vpop.f32.mrf.mxu0
      %v5875 = vadd.f32 %v5786, %v5874
      %v5876 = vpop.f32.mrf.mxu0
      %v5877 = vadd.f32 %v5788, %v5876
      %5878 = vdwg.mxu0
      %5879 = vmatpush.bf16.msra.mxu0 %v5256
      %5880 = vmatpush.bf16.msra.mxu0 %v5255
      %5881 = vmatpush.bf16.msra.mxu0 %v5254
      %5882 = vmatpush.bf16.msra.mxu0 %v5253
      %5883 = vmatpush.bf16.msra.mxu0 %v5252
      %5884 = vmatpush.bf16.msra.mxu0 %v5251
      %5885 = vmatpush.bf16.msra.mxu0 %v5250
      %5886 = vmatpush.bf16.msra.mxu0 %v5249
      %5887 = vmatmul.bf16.gmra.mxu0 %v4631
      %v5888 = vpop.f32.mrf.mxu0
      %v5889 = vadd.f32 %v5800, %v5888
      %v5890 = vpop.f32.mrf.mxu0
      %v5891 = vadd.f32 %v5802, %v5890
      %5892 = vmatmul.bf16.gmra.mxu0 %v4640
      %v5893 = vpop.f32.mrf.mxu0
      %v5894 = vadd.f32 %v5805, %v5893
      %v5895 = vpop.f32.mrf.mxu0
      %v5896 = vadd.f32 %v5807, %v5895
      %5897 = vmatmul.bf16.gmra.mxu0 %v4649
      %v5898 = vpop.f32.mrf.mxu0
      %v5899 = vadd.f32 %v5810, %v5898
      %v5900 = vpop.f32.mrf.mxu0
      %v5901 = vadd.f32 %v5812, %v5900
      %5902 = vmatmul.bf16.gmra.mxu0 %v4658
      %v5903 = vpop.f32.mrf.mxu0
      %v5904 = vadd.f32 %v5815, %v5903
      %v5905 = vpop.f32.mrf.mxu0
      %v5906 = vadd.f32 %v5817, %v5905
      %5907 = vmatmul.bf16.gmra.mxu0 %v4667
      %v5908 = vpop.f32.mrf.mxu0
      %v5909 = vadd.f32 %v5820, %v5908
      %v5910 = vpop.f32.mrf.mxu0
      %v5911 = vadd.f32 %v5822, %v5910
      %5912 = vmatmul.bf16.gmra.mxu0 %v4676
      %v5913 = vpop.f32.mrf.mxu0
      %v5914 = vadd.f32 %v5825, %v5913
      %v5915 = vpop.f32.mrf.mxu0
      %v5916 = vadd.f32 %v5827, %v5915
      %5917 = vmatmul.bf16.gmra.mxu0 %v4685
      %v5918 = vpop.f32.mrf.mxu0
      %v5919 = vadd.f32 %v5830, %v5918
      %v5920 = vpop.f32.mrf.mxu0
      %v5921 = vadd.f32 %v5832, %v5920
      %5922 = vmatmul.bf16.gmra.mxu0 %v4694
      %v5923 = vpop.f32.mrf.mxu0
      %v5924 = vadd.f32 %v5835, %v5923
      %v5925 = vpop.f32.mrf.mxu0
      %v5926 = vadd.f32 %v5837, %v5925
      %5927 = vmatmul.bf16.gmra.mxu0 %v4703
      %v5928 = vpop.f32.mrf.mxu0
      %v5929 = vadd.f32 %v5840, %v5928
      %v5930 = vpop.f32.mrf.mxu0
      %v5931 = vadd.f32 %v5842, %v5930
      %5932 = vmatmul.bf16.gmra.mxu0 %v4712
      %v5933 = vpop.f32.mrf.mxu0
      %v5934 = vadd.f32 %v5845, %v5933
      %v5935 = vpop.f32.mrf.mxu0
      %v5936 = vadd.f32 %v5847, %v5935
      %5937 = vmatmul.bf16.gmra.mxu0 %v4721
      %v5938 = vpop.f32.mrf.mxu0
      %v5939 = vadd.f32 %v5850, %v5938
      %v5940 = vpop.f32.mrf.mxu0
      %v5941 = vadd.f32 %v5852, %v5940
      %5942 = vmatmul.bf16.gmra.mxu0 %v4730
      %v5943 = vpop.f32.mrf.mxu0
      %v5944 = vadd.f32 %v5855, %v5943
      %v5945 = vpop.f32.mrf.mxu0
      %v5946 = vadd.f32 %v5857, %v5945
      %5947 = vmatmul.bf16.gmra.mxu0 %v4739
      %v5948 = vpop.f32.mrf.mxu0
      %v5949 = vadd.f32 %v5860, %v5948
      %v5950 = vpop.f32.mrf.mxu0
      %v5951 = vadd.f32 %v5862, %v5950
      %5952 = vmatmul.bf16.gmra.mxu0 %v4748
      %v5953 = vpop.f32.mrf.mxu0
      %v5954 = vadd.f32 %v5865, %v5953
      %v5955 = vpop.f32.mrf.mxu0
      %v5956 = vadd.f32 %v5867, %v5955
      %5957 = vmatmul.bf16.gmra.mxu0 %v4757
      %v5958 = vpop.f32.mrf.mxu0
      %v5959 = vadd.f32 %v5870, %v5958
      %v5960 = vpop.f32.mrf.mxu0
      %v5961 = vadd.f32 %v5872, %v5960
      %5962 = vmatmul.bf16.gmra.mxu0 %v4766
      %v5963 = vpop.f32.mrf.mxu0
      %v5964 = vadd.f32 %v5875, %v5963
      %v5965 = vpop.f32.mrf.mxu0
      %v5966 = vadd.f32 %v5877, %v5965
      %5967 = vdwg.mxu0
      %5968 = vmatpush.bf16.msra.mxu0 %v5264
      %5969 = vmatpush.bf16.msra.mxu0 %v5263
      %5970 = vmatpush.bf16.msra.mxu0 %v5262
      %5971 = vmatpush.bf16.msra.mxu0 %v5261
      %5972 = vmatpush.bf16.msra.mxu0 %v5260
      %5973 = vmatpush.bf16.msra.mxu0 %v5259
      %5974 = vmatpush.bf16.msra.mxu0 %v5258
      %5975 = vmatpush.bf16.msra.mxu0 %v5257
      %5976 = vmatmul.bf16.gmra.mxu0 %v4632
      %v5977 = vpop.f32.mrf.mxu0
      %v5978 = vadd.f32 %v5889, %v5977
      %v5979 = vpop.f32.mrf.mxu0
      %v5980 = vadd.f32 %v5891, %v5979
      %5981 = vmatmul.bf16.gmra.mxu0 %v4641
      %v5982 = vpop.f32.mrf.mxu0
      %v5983 = vadd.f32 %v5894, %v5982
      %v5984 = vpop.f32.mrf.mxu0
      %v5985 = vadd.f32 %v5896, %v5984
      %5986 = vmatmul.bf16.gmra.mxu0 %v4650
      %v5987 = vpop.f32.mrf.mxu0
      %v5988 = vadd.f32 %v5899, %v5987
      %v5989 = vpop.f32.mrf.mxu0
      %v5990 = vadd.f32 %v5901, %v5989
      %5991 = vmatmul.bf16.gmra.mxu0 %v4659
      %v5992 = vpop.f32.mrf.mxu0
      %v5993 = vadd.f32 %v5904, %v5992
      %v5994 = vpop.f32.mrf.mxu0
      %v5995 = vadd.f32 %v5906, %v5994
      %5996 = vmatmul.bf16.gmra.mxu0 %v4668
      %v5997 = vpop.f32.mrf.mxu0
      %v5998 = vadd.f32 %v5909, %v5997
      %v5999 = vpop.f32.mrf.mxu0
      %v6000 = vadd.f32 %v5911, %v5999
      %6001 = vmatmul.bf16.gmra.mxu0 %v4677
      %v6002 = vpop.f32.mrf.mxu0
      %v6003 = vadd.f32 %v5914, %v6002
      %v6004 = vpop.f32.mrf.mxu0
      %v6005 = vadd.f32 %v5916, %v6004
      %6006 = vmatmul.bf16.gmra.mxu0 %v4686
      %v6007 = vpop.f32.mrf.mxu0
      %v6008 = vadd.f32 %v5919, %v6007
      %v6009 = vpop.f32.mrf.mxu0
      %v6010 = vadd.f32 %v5921, %v6009
      %6011 = vmatmul.bf16.gmra.mxu0 %v4695
      %v6012 = vpop.f32.mrf.mxu0
      %v6013 = vadd.f32 %v5924, %v6012
      %v6014 = vpop.f32.mrf.mxu0
      %v6015 = vadd.f32 %v5926, %v6014
      %6016 = vmatmul.bf16.gmra.mxu0 %v4704
      %v6017 = vpop.f32.mrf.mxu0
      %v6018 = vadd.f32 %v5929, %v6017
      %v6019 = vpop.f32.mrf.mxu0
      %v6020 = vadd.f32 %v5931, %v6019
      %6021 = vmatmul.bf16.gmra.mxu0 %v4713
      %v6022 = vpop.f32.mrf.mxu0
      %v6023 = vadd.f32 %v5934, %v6022
      %v6024 = vpop.f32.mrf.mxu0
      %v6025 = vadd.f32 %v5936, %v6024
      %6026 = vmatmul.bf16.gmra.mxu0 %v4722
      %v6027 = vpop.f32.mrf.mxu0
      %v6028 = vadd.f32 %v5939, %v6027
      %v6029 = vpop.f32.mrf.mxu0
      %v6030 = vadd.f32 %v5941, %v6029
      %6031 = vmatmul.bf16.gmra.mxu0 %v4731
      %v6032 = vpop.f32.mrf.mxu0
      %v6033 = vadd.f32 %v5944, %v6032
      %v6034 = vpop.f32.mrf.mxu0
      %v6035 = vadd.f32 %v5946, %v6034
      %6036 = vmatmul.bf16.gmra.mxu0 %v4740
      %v6037 = vpop.f32.mrf.mxu0
      %v6038 = vadd.f32 %v5949, %v6037
      %v6039 = vpop.f32.mrf.mxu0
      %v6040 = vadd.f32 %v5951, %v6039
      %6041 = vmatmul.bf16.gmra.mxu0 %v4749
      %v6042 = vpop.f32.mrf.mxu0
      %v6043 = vadd.f32 %v5954, %v6042
      %v6044 = vpop.f32.mrf.mxu0
      %v6045 = vadd.f32 %v5956, %v6044
      %6046 = vmatmul.bf16.gmra.mxu0 %v4758
      %v6047 = vpop.f32.mrf.mxu0
      %v6048 = vadd.f32 %v5959, %v6047
      %v6049 = vpop.f32.mrf.mxu0
      %v6050 = vadd.f32 %v5961, %v6049
      %6051 = vmatmul.bf16.gmra.mxu0 %v4767
      %v6052 = vpop.f32.mrf.mxu0
      %v6053 = vadd.f32 %v5964, %v6052
      %v6054 = vpop.f32.mrf.mxu0
      %v6055 = vadd.f32 %v5966, %v6054
      %6056 = vdwg.mxu0
      %6057 = vmatpush.bf16.msra.mxu0 %v5272
      %6058 = vmatpush.bf16.msra.mxu0 %v5271
      %6059 = vmatpush.bf16.msra.mxu0 %v5270
      %6060 = vmatpush.bf16.msra.mxu0 %v5269
      %6061 = vmatpush.bf16.msra.mxu0 %v5268
      %6062 = vmatpush.bf16.msra.mxu0 %v5267
      %6063 = vmatpush.bf16.msra.mxu0 %v5266
      %6064 = vmatpush.bf16.msra.mxu0 %v5265
      %6065 = vmatmul.bf16.gmra.mxu0 %v4633
      %v6066 = vpop.f32.mrf.mxu0
      %v6067 = vadd.f32 %v5978, %v6066
      %v6068 = vpop.f32.mrf.mxu0
      %v6069 = vadd.f32 %v5980, %v6068
      %6070 = vmatmul.bf16.gmra.mxu0 %v4642
      %v6071 = vpop.f32.mrf.mxu0
      %v6072 = vadd.f32 %v5983, %v6071
      %v6073 = vpop.f32.mrf.mxu0
      %v6074 = vadd.f32 %v5985, %v6073
      %6075 = vmatmul.bf16.gmra.mxu0 %v4651
      %v6076 = vpop.f32.mrf.mxu0
      %v6077 = vadd.f32 %v5988, %v6076
      %v6078 = vpop.f32.mrf.mxu0
      %v6079 = vadd.f32 %v5990, %v6078
      %6080 = vmatmul.bf16.gmra.mxu0 %v4660
      %v6081 = vpop.f32.mrf.mxu0
      %v6082 = vadd.f32 %v5993, %v6081
      %v6083 = vpop.f32.mrf.mxu0
      %v6084 = vadd.f32 %v5995, %v6083
      %6085 = vmatmul.bf16.gmra.mxu0 %v4669
      %v6086 = vpop.f32.mrf.mxu0
      %v6087 = vadd.f32 %v5998, %v6086
      %v6088 = vpop.f32.mrf.mxu0
      %v6089 = vadd.f32 %v6000, %v6088
      %6090 = vmatmul.bf16.gmra.mxu0 %v4678
      %v6091 = vpop.f32.mrf.mxu0
      %v6092 = vadd.f32 %v6003, %v6091
      %v6093 = vpop.f32.mrf.mxu0
      %v6094 = vadd.f32 %v6005, %v6093
      %6095 = vmatmul.bf16.gmra.mxu0 %v4687
      %v6096 = vpop.f32.mrf.mxu0
      %v6097 = vadd.f32 %v6008, %v6096
      %v6098 = vpop.f32.mrf.mxu0
      %v6099 = vadd.f32 %v6010, %v6098
      %6100 = vmatmul.bf16.gmra.mxu0 %v4696
      %v6101 = vpop.f32.mrf.mxu0
      %v6102 = vadd.f32 %v6013, %v6101
      %v6103 = vpop.f32.mrf.mxu0
      %v6104 = vadd.f32 %v6015, %v6103
      %6105 = vmatmul.bf16.gmra.mxu0 %v4705
      %v6106 = vpop.f32.mrf.mxu0
      %v6107 = vadd.f32 %v6018, %v6106
      %v6108 = vpop.f32.mrf.mxu0
      %v6109 = vadd.f32 %v6020, %v6108
      %6110 = vmatmul.bf16.gmra.mxu0 %v4714
      %v6111 = vpop.f32.mrf.mxu0
      %v6112 = vadd.f32 %v6023, %v6111
      %v6113 = vpop.f32.mrf.mxu0
      %v6114 = vadd.f32 %v6025, %v6113
      %6115 = vmatmul.bf16.gmra.mxu0 %v4723
      %v6116 = vpop.f32.mrf.mxu0
      %v6117 = vadd.f32 %v6028, %v6116
      %v6118 = vpop.f32.mrf.mxu0
      %v6119 = vadd.f32 %v6030, %v6118
      %6120 = vmatmul.bf16.gmra.mxu0 %v4732
      %v6121 = vpop.f32.mrf.mxu0
      %v6122 = vadd.f32 %v6033, %v6121
      %v6123 = vpop.f32.mrf.mxu0
      %v6124 = vadd.f32 %v6035, %v6123
      %6125 = vmatmul.bf16.gmra.mxu0 %v4741
      %v6126 = vpop.f32.mrf.mxu0
      %v6127 = vadd.f32 %v6038, %v6126
      %v6128 = vpop.f32.mrf.mxu0
      %v6129 = vadd.f32 %v6040, %v6128
      %6130 = vmatmul.bf16.gmra.mxu0 %v4750
      %v6131 = vpop.f32.mrf.mxu0
      %v6132 = vadd.f32 %v6043, %v6131
      %v6133 = vpop.f32.mrf.mxu0
      %v6134 = vadd.f32 %v6045, %v6133
      %6135 = vmatmul.bf16.gmra.mxu0 %v4759
      %v6136 = vpop.f32.mrf.mxu0
      %v6137 = vadd.f32 %v6048, %v6136
      %v6138 = vpop.f32.mrf.mxu0
      %v6139 = vadd.f32 %v6050, %v6138
      %6140 = vmatmul.bf16.gmra.mxu0 %v4768
      %v6141 = vpop.f32.mrf.mxu0
      %v6142 = vadd.f32 %v6053, %v6141
      %v6143 = vpop.f32.mrf.mxu0
      %v6144 = vadd.f32 %v6055, %v6143
      %6145 = vdwg.mxu0
      %vm6146 = vcmp.ge.f32.partialorder %v6067, 0.0
      %vm6147 = vcmp.ge.f32.partialorder %v6069, 0.0
      %vm6148 = vcmp.ge.f32.partialorder %v6072, 0.0
      %vm6149 = vcmp.ge.f32.partialorder %v6074, 0.0
      %vm6150 = vcmp.ge.f32.partialorder %v6077, 0.0
      %vm6151 = vcmp.ge.f32.partialorder %v6079, 0.0
      %vm6152 = vcmp.ge.f32.partialorder %v6082, 0.0
      %vm6153 = vcmp.ge.f32.partialorder %v6084, 0.0
      %vm6154 = vcmp.ge.f32.partialorder %v6087, 0.0
      %vm6155 = vcmp.ge.f32.partialorder %v6089, 0.0
      %vm6156 = vcmp.ge.f32.partialorder %v6092, 0.0
      %vm6157 = vcmp.ge.f32.partialorder %v6094, 0.0
      %vm6158 = vcmp.ge.f32.partialorder %v6097, 0.0
      %vm6159 = vcmp.ge.f32.partialorder %v6099, 0.0
      %vm6160 = vcmp.ge.f32.partialorder %v6102, 0.0
      %vm6161 = vcmp.ge.f32.partialorder %v6104, 0.0
      %vm6162 = vcmp.ge.f32.partialorder %v6107, 0.0
      %vm6163 = vcmp.ge.f32.partialorder %v6109, 0.0
      %vm6164 = vcmp.ge.f32.partialorder %v6112, 0.0
      %vm6165 = vcmp.ge.f32.partialorder %v6114, 0.0
      %vm6166 = vcmp.ge.f32.partialorder %v6117, 0.0
      %vm6167 = vcmp.ge.f32.partialorder %v6119, 0.0
      %vm6168 = vcmp.ge.f32.partialorder %v6122, 0.0
      %vm6169 = vcmp.ge.f32.partialorder %v6124, 0.0
      %vm6170 = vcmp.ge.f32.partialorder %v6127, 0.0
      %vm6171 = vcmp.ge.f32.partialorder %v6129, 0.0
      %vm6172 = vcmp.ge.f32.partialorder %v6132, 0.0
      %vm6173 = vcmp.ge.f32.partialorder %v6134, 0.0
      %vm6174 = vcmp.ge.f32.partialorder %v6137, 0.0
      %vm6175 = vcmp.ge.f32.partialorder %v6139, 0.0
      %vm6176 = vcmp.ge.f32.partialorder %v6142, 0.0
      %vm6177 = vcmp.ge.f32.partialorder %v6144, 0.0
      %v6178 = vmul.f32 %v6067, 0.01
      %v6179 = vmul.f32 %v6069, 0.01
      %v6180 = vmul.f32 %v6072, 0.01
      %v6181 = vmul.f32 %v6074, 0.01
      %v6182 = vmul.f32 %v6077, 0.01
      %v6183 = vmul.f32 %v6079, 0.01
      %v6184 = vmul.f32 %v6082, 0.01
      %v6185 = vmul.f32 %v6084, 0.01
      %v6186 = vmul.f32 %v6087, 0.01
      %v6187 = vmul.f32 %v6089, 0.01
      %v6188 = vmul.f32 %v6092, 0.01
      %v6189 = vmul.f32 %v6094, 0.01
      %v6190 = vmul.f32 %v6097, 0.01
      %v6191 = vmul.f32 %v6099, 0.01
      %v6192 = vmul.f32 %v6102, 0.01
      %v6193 = vmul.f32 %v6104, 0.01
      %v6194 = vmul.f32 %v6107, 0.01
      %v6195 = vmul.f32 %v6109, 0.01
      %v6196 = vmul.f32 %v6112, 0.01
      %v6197 = vmul.f32 %v6114, 0.01
      %v6198 = vmul.f32 %v6117, 0.01
      %v6199 = vmul.f32 %v6119, 0.01
      %v6200 = vmul.f32 %v6122, 0.01
      %v6201 = vmul.f32 %v6124, 0.01
      %v6202 = vmul.f32 %v6127, 0.01
      %v6203 = vmul.f32 %v6129, 0.01
      %v6204 = vmul.f32 %v6132, 0.01
      %v6205 = vmul.f32 %v6134, 0.01
      %v6206 = vmul.f32 %v6137, 0.01
      %v6207 = vmul.f32 %v6139, 0.01
      %v6208 = vmul.f32 %v6142, 0.01
      %v6209 = vmul.f32 %v6144, 0.01
      %v6210 = vsel %vm6146, %v6067, %v6178
      %v6211 = vsel %vm6147, %v6069, %v6179
      %v6212 = vsel %vm6148, %v6072, %v6180
      %v6213 = vsel %vm6149, %v6074, %v6181
      %v6214 = vsel %vm6150, %v6077, %v6182
      %v6215 = vsel %vm6151, %v6079, %v6183
      %v6216 = vsel %vm6152, %v6082, %v6184
      %v6217 = vsel %vm6153, %v6084, %v6185
      %v6218 = vsel %vm6154, %v6087, %v6186
      %v6219 = vsel %vm6155, %v6089, %v6187
      %v6220 = vsel %vm6156, %v6092, %v6188
      %v6221 = vsel %vm6157, %v6094, %v6189
      %v6222 = vsel %vm6158, %v6097, %v6190
      %v6223 = vsel %vm6159, %v6099, %v6191
      %v6224 = vsel %vm6160, %v6102, %v6192
      %v6225 = vsel %vm6161, %v6104, %v6193
      %v6226 = vsel %vm6162, %v6107, %v6194
      %v6227 = vsel %vm6163, %v6109, %v6195
      %v6228 = vsel %vm6164, %v6112, %v6196
      %v6229 = vsel %vm6165, %v6114, %v6197
      %v6230 = vsel %vm6166, %v6117, %v6198
      %v6231 = vsel %vm6167, %v6119, %v6199
      %v6232 = vsel %vm6168, %v6122, %v6200
      %v6233 = vsel %vm6169, %v6124, %v6201
      %v6234 = vsel %vm6170, %v6127, %v6202
      %v6235 = vsel %vm6171, %v6129, %v6203
      %v6236 = vsel %vm6172, %v6132, %v6204
      %v6237 = vsel %vm6173, %v6134, %v6205
      %v6238 = vsel %vm6174, %v6137, %v6206
      %v6239 = vsel %vm6175, %v6139, %v6207
      %v6240 = vsel %vm6176, %v6142, %v6208
      %v6241 = vsel %vm6177, %v6144, %v6209
      %v6242 = vld [vmem:[#allocation4 + $0x10] sm:$0xf]
      %v6243 = vld [vmem:[#allocation4 + $0x34] sm:$0xf]
      %v6244 = vld [vmem:[#allocation4 + $0x58] sm:$0xf]
      %v6245 = vld [vmem:[#allocation4 + $0x7c] sm:$0xf]
      %v6246 = vld [vmem:[#allocation4 + $0xa0] sm:$0xf]
      %v6247 = vld [vmem:[#allocation4 + $0xc4] sm:$0xf]
      %v6248 = vld [vmem:[#allocation4 + $0xe8] sm:$0xf]
      %v6249 = vld [vmem:[#allocation4 + $0x10c] sm:$0xf]
      %v6250 = vld [vmem:[#allocation4 + $0x130] sm:$0xf]
      %v6251 = vld [vmem:[#allocation4 + $0x154] sm:$0xf]
      %v6252 = vld [vmem:[#allocation4 + $0x178] sm:$0xf]
      %v6253 = vld [vmem:[#allocation4 + $0x19c] sm:$0xf]
      %v6254 = vld [vmem:[#allocation4 + $0x1c0] sm:$0xf]
      %v6255 = vld [vmem:[#allocation4 + $0x1e4] sm:$0xf]
      %v6256 = vld [vmem:[#allocation4 + $0x208] sm:$0xf]
      %v6257 = vld [vmem:[#allocation4 + $0x22c] sm:$0xf]
      %v6258 = vld [vmem:[#allocation4 + $0x250] sm:$0xf]
      %v6259 = vld [vmem:[#allocation4 + $0x274] sm:$0xf]
      %v6260 = vld [vmem:[#allocation4 + $0x298] sm:$0xf]
      %v6261 = vld [vmem:[#allocation4 + $0x2bc] sm:$0xf]
      %v6262 = vld [vmem:[#allocation4 + $0x2e0] sm:$0xf]
      %v6263 = vld [vmem:[#allocation4 + $0x304] sm:$0xf]
      %v6264 = vld [vmem:[#allocation4 + $0x328] sm:$0xf]
      %v6265 = vld [vmem:[#allocation4 + $0x34c] sm:$0xf]
      %v6266 = vld [vmem:[#allocation4 + $0x370] sm:$0xf]
      %v6267 = vld [vmem:[#allocation4 + $0x394] sm:$0xf]
      %v6268 = vld [vmem:[#allocation4 + $0x3b8] sm:$0xf]
      %v6269 = vld [vmem:[#allocation4 + $0x3dc] sm:$0xf]
      %v6270 = vld [vmem:[#allocation4 + $0x400] sm:$0xf]
      %v6271 = vld [vmem:[#allocation4 + $0x424] sm:$0xf]
      %v6272 = vld [vmem:[#allocation4 + $0x448] sm:$0xf]
      %v6273 = vld [vmem:[#allocation4 + $0x46c] sm:$0xf]
      %v6274 = vunpack.c.l.bf16 %v6242
      %v6275 = vunpack.c.l.bf16 %v6243
      %v6276 = vunpack.c.l.bf16 %v6244
      %v6277 = vunpack.c.l.bf16 %v6245
      %v6278 = vunpack.c.l.bf16 %v6246
      %v6279 = vunpack.c.l.bf16 %v6247
      %v6280 = vunpack.c.l.bf16 %v6248
      %v6281 = vunpack.c.l.bf16 %v6249
      %v6282 = vunpack.c.l.bf16 %v6250
      %v6283 = vunpack.c.l.bf16 %v6251
      %v6284 = vunpack.c.l.bf16 %v6252
      %v6285 = vunpack.c.l.bf16 %v6253
      %v6286 = vunpack.c.l.bf16 %v6254
      %v6287 = vunpack.c.l.bf16 %v6255
      %v6288 = vunpack.c.l.bf16 %v6256
      %v6289 = vunpack.c.l.bf16 %v6257
      %v6290 = vunpack.c.l.bf16 %v6258
      %v6291 = vunpack.c.l.bf16 %v6259
      %v6292 = vunpack.c.l.bf16 %v6260
      %v6293 = vunpack.c.l.bf16 %v6261
      %v6294 = vunpack.c.l.bf16 %v6262
      %v6295 = vunpack.c.l.bf16 %v6263
      %v6296 = vunpack.c.l.bf16 %v6264
      %v6297 = vunpack.c.l.bf16 %v6265
      %v6298 = vunpack.c.l.bf16 %v6266
      %v6299 = vunpack.c.l.bf16 %v6267
      %v6300 = vunpack.c.l.bf16 %v6268
      %v6301 = vunpack.c.l.bf16 %v6269
      %v6302 = vunpack.c.l.bf16 %v6270
      %v6303 = vunpack.c.l.bf16 %v6271
      %v6304 = vunpack.c.l.bf16 %v6272
      %v6305 = vunpack.c.l.bf16 %v6273
      %v6306 = vadd.f32 %v6210, %v6274
      %v6307 = vadd.f32 %v6211, %v6275
      %v6308 = vadd.f32 %v6212, %v6276
      %v6309 = vadd.f32 %v6213, %v6277
      %v6310 = vadd.f32 %v6214, %v6278
      %v6311 = vadd.f32 %v6215, %v6279
      %v6312 = vadd.f32 %v6216, %v6280
      %v6313 = vadd.f32 %v6217, %v6281
      %v6314 = vadd.f32 %v6218, %v6282
      %v6315 = vadd.f32 %v6219, %v6283
      %v6316 = vadd.f32 %v6220, %v6284
      %v6317 = vadd.f32 %v6221, %v6285
      %v6318 = vadd.f32 %v6222, %v6286
      %v6319 = vadd.f32 %v6223, %v6287
      %v6320 = vadd.f32 %v6224, %v6288
      %v6321 = vadd.f32 %v6225, %v6289
      %v6322 = vadd.f32 %v6226, %v6290
      %v6323 = vadd.f32 %v6227, %v6291
      %v6324 = vadd.f32 %v6228, %v6292
      %v6325 = vadd.f32 %v6229, %v6293
      %v6326 = vadd.f32 %v6230, %v6294
      %v6327 = vadd.f32 %v6231, %v6295
      %v6328 = vadd.f32 %v6232, %v6296
      %v6329 = vadd.f32 %v6233, %v6297
      %v6330 = vadd.f32 %v6234, %v6298
      %v6331 = vadd.f32 %v6235, %v6299
      %v6332 = vadd.f32 %v6236, %v6300
      %v6333 = vadd.f32 %v6237, %v6301
      %v6334 = vadd.f32 %v6238, %v6302
      %v6335 = vadd.f32 %v6239, %v6303
      %v6336 = vadd.f32 %v6240, %v6304
      %v6337 = vadd.f32 %v6241, %v6305
      %v6338 = vpack.c.bf16 %v6306, %v6306
      %v6339 = vpack.c.bf16 %v6307, %v6307
      %v6340 = vpack.c.bf16 %v6308, %v6308
      %v6341 = vpack.c.bf16 %v6309, %v6309
      %v6342 = vpack.c.bf16 %v6310, %v6310
      %v6343 = vpack.c.bf16 %v6311, %v6311
      %v6344 = vpack.c.bf16 %v6312, %v6312
      %v6345 = vpack.c.bf16 %v6313, %v6313
      %v6346 = vpack.c.bf16 %v6314, %v6314
      %v6347 = vpack.c.bf16 %v6315, %v6315
      %v6348 = vpack.c.bf16 %v6316, %v6316
      %v6349 = vpack.c.bf16 %v6317, %v6317
      %v6350 = vpack.c.bf16 %v6318, %v6318
      %v6351 = vpack.c.bf16 %v6319, %v6319
      %v6352 = vpack.c.bf16 %v6320, %v6320
      %v6353 = vpack.c.bf16 %v6321, %v6321
      %v6354 = vpack.c.bf16 %v6322, %v6322
      %v6355 = vpack.c.bf16 %v6323, %v6323
      %v6356 = vpack.c.bf16 %v6324, %v6324
      %v6357 = vpack.c.bf16 %v6325, %v6325
      %v6358 = vpack.c.bf16 %v6326, %v6326
      %v6359 = vpack.c.bf16 %v6327, %v6327
      %v6360 = vpack.c.bf16 %v6328, %v6328
      %v6361 = vpack.c.bf16 %v6329, %v6329
      %v6362 = vpack.c.bf16 %v6330, %v6330
      %v6363 = vpack.c.bf16 %v6331, %v6331
      %v6364 = vpack.c.bf16 %v6332, %v6332
      %v6365 = vpack.c.bf16 %v6333, %v6333
      %v6366 = vpack.c.bf16 %v6334, %v6334
      %v6367 = vpack.c.bf16 %v6335, %v6335
      %v6368 = vpack.c.bf16 %v6336, %v6336
      %v6369 = vpack.c.bf16 %v6337, %v6337
      %v6371 = vshrl.u32 %v6338, 16
      %v6373 = vrot.slane %v6371, 7
      %v6374 = vshll.u32 %v6338, 16
      %v6376 = vor.u32 %v6373, %v6374
      %v6377 = vrot.slane %v6373, 4
      %v6379 = vshrl.u32 %v6339, 16
      %v6381 = vrot.slane %v6379, 7
      %v6382 = vshll.u32 %v6339, 16
      %v6384 = vor.u32 %v6381, %v6382
      %v6385 = vsel %vm930, %v6377, %v6384
      %v6386 = vrot.slane %v6381, 4
      %v6388 = vshrl.u32 %v6340, 16
      %v6390 = vrot.slane %v6388, 7
      %v6391 = vshll.u32 %v6340, 16
      %v6393 = vor.u32 %v6390, %v6391
      %v6394 = vrot.slane %v6390, 4
      %v6396 = vshrl.u32 %v6341, 16
      %v6398 = vrot.slane %v6396, 7
      %v6399 = vshll.u32 %v6341, 16
      %v6401 = vor.u32 %v6398, %v6399
      %v6402 = vsel %vm930, %v6394, %v6401
      %v6403 = vrot.slane %v6398, 4
      %v6405 = vshrl.u32 %v6342, 16
      %v6407 = vrot.slane %v6405, 7
      %v6408 = vshll.u32 %v6342, 16
      %v6410 = vor.u32 %v6407, %v6408
      %v6411 = vrot.slane %v6407, 4
      %v6413 = vshrl.u32 %v6343, 16
      %v6415 = vrot.slane %v6413, 7
      %v6416 = vshll.u32 %v6343, 16
      %v6418 = vor.u32 %v6415, %v6416
      %v6419 = vsel %vm930, %v6411, %v6418
      %v6420 = vrot.slane %v6415, 4
      %v6422 = vshrl.u32 %v6344, 16
      %v6424 = vrot.slane %v6422, 7
      %v6425 = vshll.u32 %v6344, 16
      %v6427 = vor.u32 %v6424, %v6425
      %v6428 = vrot.slane %v6424, 4
      %v6430 = vshrl.u32 %v6345, 16
      %v6432 = vrot.slane %v6430, 7
      %v6433 = vshll.u32 %v6345, 16
      %v6435 = vor.u32 %v6432, %v6433
      %v6436 = vsel %vm930, %v6428, %v6435
      %v6437 = vrot.slane %v6432, 4
      %v6439 = vshrl.u32 %v6346, 16
      %v6441 = vrot.slane %v6439, 7
      %v6442 = vshll.u32 %v6346, 16
      %v6444 = vor.u32 %v6441, %v6442
      %v6445 = vrot.slane %v6441, 4
      %v6447 = vshrl.u32 %v6347, 16
      %v6449 = vrot.slane %v6447, 7
      %v6450 = vshll.u32 %v6347, 16
      %v6452 = vor.u32 %v6449, %v6450
      %v6453 = vsel %vm930, %v6445, %v6452
      %v6454 = vrot.slane %v6449, 4
      %v6456 = vshrl.u32 %v6348, 16
      %v6458 = vrot.slane %v6456, 7
      %v6459 = vshll.u32 %v6348, 16
      %v6461 = vor.u32 %v6458, %v6459
      %v6462 = vrot.slane %v6458, 4
      %v6464 = vshrl.u32 %v6349, 16
      %v6466 = vrot.slane %v6464, 7
      %v6467 = vshll.u32 %v6349, 16
      %v6469 = vor.u32 %v6466, %v6467
      %v6470 = vsel %vm930, %v6462, %v6469
      %v6471 = vrot.slane %v6466, 4
      %v6473 = vshrl.u32 %v6350, 16
      %v6475 = vrot.slane %v6473, 7
      %v6476 = vshll.u32 %v6350, 16
      %v6478 = vor.u32 %v6475, %v6476
      %v6479 = vrot.slane %v6475, 4
      %v6481 = vshrl.u32 %v6351, 16
      %v6483 = vrot.slane %v6481, 7
      %v6484 = vshll.u32 %v6351, 16
      %v6486 = vor.u32 %v6483, %v6484
      %v6487 = vsel %vm930, %v6479, %v6486
      %v6488 = vrot.slane %v6483, 4
      %v6490 = vshrl.u32 %v6352, 16
      %v6492 = vrot.slane %v6490, 7
      %v6493 = vshll.u32 %v6352, 16
      %v6495 = vor.u32 %v6492, %v6493
      %v6496 = vrot.slane %v6492, 4
      %v6498 = vshrl.u32 %v6353, 16
      %v6500 = vrot.slane %v6498, 7
      %v6501 = vshll.u32 %v6353, 16
      %v6503 = vor.u32 %v6500, %v6501
      %v6504 = vsel %vm930, %v6496, %v6503
      %v6505 = vrot.slane %v6500, 4
      %v6507 = vshrl.u32 %v6354, 16
      %v6509 = vrot.slane %v6507, 7
      %v6510 = vshll.u32 %v6354, 16
      %v6512 = vor.u32 %v6509, %v6510
      %v6513 = vrot.slane %v6509, 4
      %v6515 = vshrl.u32 %v6355, 16
      %v6517 = vrot.slane %v6515, 7
      %v6518 = vshll.u32 %v6355, 16
      %v6520 = vor.u32 %v6517, %v6518
      %v6521 = vsel %vm930, %v6513, %v6520
      %v6522 = vrot.slane %v6517, 4
      %v6524 = vshrl.u32 %v6356, 16
      %v6526 = vrot.slane %v6524, 7
      %v6527 = vshll.u32 %v6356, 16
      %v6529 = vor.u32 %v6526, %v6527
      %v6530 = vrot.slane %v6526, 4
      %v6532 = vshrl.u32 %v6357, 16
      %v6534 = vrot.slane %v6532, 7
      %v6535 = vshll.u32 %v6357, 16
      %v6537 = vor.u32 %v6534, %v6535
      %v6538 = vsel %vm930, %v6530, %v6537
      %v6539 = vrot.slane %v6534, 4
      %v6541 = vshrl.u32 %v6358, 16
      %v6543 = vrot.slane %v6541, 7
      %v6544 = vshll.u32 %v6358, 16
      %v6546 = vor.u32 %v6543, %v6544
      %v6547 = vrot.slane %v6543, 4
      %v6549 = vshrl.u32 %v6359, 16
      %v6551 = vrot.slane %v6549, 7
      %v6552 = vshll.u32 %v6359, 16
      %v6554 = vor.u32 %v6551, %v6552
      %v6555 = vsel %vm930, %v6547, %v6554
      %v6556 = vrot.slane %v6551, 4
      %v6558 = vshrl.u32 %v6360, 16
      %v6560 = vrot.slane %v6558, 7
      %v6561 = vshll.u32 %v6360, 16
      %v6563 = vor.u32 %v6560, %v6561
      %v6564 = vrot.slane %v6560, 4
      %v6566 = vshrl.u32 %v6361, 16
      %v6568 = vrot.slane %v6566, 7
      %v6569 = vshll.u32 %v6361, 16
      %v6571 = vor.u32 %v6568, %v6569
      %v6572 = vsel %vm930, %v6564, %v6571
      %v6573 = vrot.slane %v6568, 4
      %v6575 = vshrl.u32 %v6362, 16
      %v6577 = vrot.slane %v6575, 7
      %v6578 = vshll.u32 %v6362, 16
      %v6580 = vor.u32 %v6577, %v6578
      %v6581 = vrot.slane %v6577, 4
      %v6583 = vshrl.u32 %v6363, 16
      %v6585 = vrot.slane %v6583, 7
      %v6586 = vshll.u32 %v6363, 16
      %v6588 = vor.u32 %v6585, %v6586
      %v6589 = vsel %vm930, %v6581, %v6588
      %v6590 = vrot.slane %v6585, 4
      %v6592 = vshrl.u32 %v6364, 16
      %v6594 = vrot.slane %v6592, 7
      %v6595 = vshll.u32 %v6364, 16
      %v6597 = vor.u32 %v6594, %v6595
      %v6598 = vrot.slane %v6594, 4
      %v6600 = vshrl.u32 %v6365, 16
      %v6602 = vrot.slane %v6600, 7
      %v6603 = vshll.u32 %v6365, 16
      %v6605 = vor.u32 %v6602, %v6603
      %v6606 = vsel %vm930, %v6598, %v6605
      %v6607 = vrot.slane %v6602, 4
      %v6609 = vshrl.u32 %v6366, 16
      %v6611 = vrot.slane %v6609, 7
      %v6612 = vshll.u32 %v6366, 16
      %v6614 = vor.u32 %v6611, %v6612
      %v6615 = vrot.slane %v6611, 4
      %v6617 = vshrl.u32 %v6367, 16
      %v6619 = vrot.slane %v6617, 7
      %v6620 = vshll.u32 %v6367, 16
      %v6622 = vor.u32 %v6619, %v6620
      %v6623 = vsel %vm930, %v6615, %v6622
      %v6624 = vrot.slane %v6619, 4
      %v6626 = vshrl.u32 %v6368, 16
      %v6628 = vrot.slane %v6626, 7
      %v6629 = vshll.u32 %v6368, 16
      %v6631 = vor.u32 %v6628, %v6629
      %v6632 = vrot.slane %v6628, 4
      %v6634 = vshrl.u32 %v6369, 16
      %v6636 = vrot.slane %v6634, 7
      %v6637 = vshll.u32 %v6369, 16
      %v6639 = vor.u32 %v6636, %v6637
      %v6640 = vsel %vm930, %v6632, %v6639
      %v6641 = vrot.slane %v6636, 4
      %s6690 = scalar_lea.vmem [#allocation3], 12
      %v6691 = vld [vmem:[%s6690] sm:$0xf]
      %v6692 = vsel %vm1253, %v6376, %v6691
      %6693 = vst [vmem:[%s6690] sm:$0xf] %v6692
      %6694 = vst [vmem:[%s6690 + $0x4] sm:$0xf] %v6385
      %v6695 = vld [vmem:[%s6690 + $0x8] sm:$0x1]
      %v6696 = vsel %vm289, %v6386, %v6695
      %6697 = vst [vmem:[%s6690 + $0x8] sm:$0x1] %v6696
      %v6698 = vld [vmem:[%s6690 + $0xc] sm:$0xf]
      %v6699 = vsel %vm1253, %v6393, %v6698
      %6700 = vst [vmem:[%s6690 + $0xc] sm:$0xf] %v6699
      %6701 = vst [vmem:[%s6690 + $0x10] sm:$0xf] %v6402
      %v6702 = vld [vmem:[%s6690 + $0x14] sm:$0x1]
      %v6703 = vsel %vm289, %v6403, %v6702
      %6704 = vst [vmem:[%s6690 + $0x14] sm:$0x1] %v6703
      %v6705 = vld [vmem:[%s6690 + $0x18] sm:$0xf]
      %v6706 = vsel %vm1253, %v6410, %v6705
      %6707 = vst [vmem:[%s6690 + $0x18] sm:$0xf] %v6706
      %6708 = vst [vmem:[%s6690 + $0x1c] sm:$0xf] %v6419
      %v6709 = vld [vmem:[%s6690 + $0x20] sm:$0x1]
      %v6710 = vsel %vm289, %v6420, %v6709
      %6711 = vst [vmem:[%s6690 + $0x20] sm:$0x1] %v6710
      %v6712 = vld [vmem:[%s6690 + $0x24] sm:$0xf]
      %v6713 = vsel %vm1253, %v6427, %v6712
      %6714 = vst [vmem:[%s6690 + $0x24] sm:$0xf] %v6713
      %6715 = vst [vmem:[%s6690 + $0x28] sm:$0xf] %v6436
      %v6716 = vld [vmem:[%s6690 + $0x2c] sm:$0x1]
      %v6717 = vsel %vm289, %v6437, %v6716
      %6718 = vst [vmem:[%s6690 + $0x2c] sm:$0x1] %v6717
      %v6719 = vld [vmem:[%s6690 + $0x30] sm:$0xf]
      %v6720 = vsel %vm1253, %v6444, %v6719
      %6721 = vst [vmem:[%s6690 + $0x30] sm:$0xf] %v6720
      %6722 = vst [vmem:[%s6690 + $0x34] sm:$0xf] %v6453
      %v6723 = vld [vmem:[%s6690 + $0x38] sm:$0x1]
      %v6724 = vsel %vm289, %v6454, %v6723
      %6725 = vst [vmem:[%s6690 + $0x38] sm:$0x1] %v6724
      %v6726 = vld [vmem:[%s6690 + $0x3c] sm:$0xf]
      %v6727 = vsel %vm1253, %v6461, %v6726
      %6728 = vst [vmem:[%s6690 + $0x3c] sm:$0xf] %v6727
      %6729 = vst [vmem:[%s6690 + $0x40] sm:$0xf] %v6470
      %v6730 = vld [vmem:[%s6690 + $0x44] sm:$0x1]
      %v6731 = vsel %vm289, %v6471, %v6730
      %6732 = vst [vmem:[%s6690 + $0x44] sm:$0x1] %v6731
      %v6733 = vld [vmem:[%s6690 + $0x48] sm:$0xf]
      %v6734 = vsel %vm1253, %v6478, %v6733
      %6735 = vst [vmem:[%s6690 + $0x48] sm:$0xf] %v6734
      %6736 = vst [vmem:[%s6690 + $0x4c] sm:$0xf] %v6487
      %v6737 = vld [vmem:[%s6690 + $0x50] sm:$0x1]
      %v6738 = vsel %vm289, %v6488, %v6737
      %6739 = vst [vmem:[%s6690 + $0x50] sm:$0x1] %v6738
      %v6740 = vld [vmem:[%s6690 + $0x54] sm:$0xf]
      %v6741 = vsel %vm1253, %v6495, %v6740
      %6742 = vst [vmem:[%s6690 + $0x54] sm:$0xf] %v6741
      %6743 = vst [vmem:[%s6690 + $0x58] sm:$0xf] %v6504
      %v6744 = vld [vmem:[%s6690 + $0x5c] sm:$0x1]
      %v6745 = vsel %vm289, %v6505, %v6744
      %6746 = vst [vmem:[%s6690 + $0x5c] sm:$0x1] %v6745
      %v6747 = vld [vmem:[%s6690 + $0x60] sm:$0xf]
      %v6748 = vsel %vm1253, %v6512, %v6747
      %6749 = vst [vmem:[%s6690 + $0x60] sm:$0xf] %v6748
      %6750 = vst [vmem:[%s6690 + $0x64] sm:$0xf] %v6521
      %v6751 = vld [vmem:[%s6690 + $0x68] sm:$0x1]
      %v6752 = vsel %vm289, %v6522, %v6751
      %6753 = vst [vmem:[%s6690 + $0x68] sm:$0x1] %v6752
      %v6754 = vld [vmem:[%s6690 + $0x6c] sm:$0xf]
      %v6755 = vsel %vm1253, %v6529, %v6754
      %6756 = vst [vmem:[%s6690 + $0x6c] sm:$0xf] %v6755
      %6757 = vst [vmem:[%s6690 + $0x70] sm:$0xf] %v6538
      %v6758 = vld [vmem:[%s6690 + $0x74] sm:$0x1]
      %v6759 = vsel %vm289, %v6539, %v6758
      %6760 = vst [vmem:[%s6690 + $0x74] sm:$0x1] %v6759
      %v6761 = vld [vmem:[%s6690 + $0x78] sm:$0xf]
      %v6762 = vsel %vm1253, %v6546, %v6761
      %6763 = vst [vmem:[%s6690 + $0x78] sm:$0xf] %v6762
      %6764 = vst [vmem:[%s6690 + $0x7c] sm:$0xf] %v6555
      %v6765 = vld [vmem:[%s6690 + $0x80] sm:$0x1]
      %v6766 = vsel %vm289, %v6556, %v6765
      %6767 = vst [vmem:[%s6690 + $0x80] sm:$0x1] %v6766
      %v6768 = vld [vmem:[%s6690 + $0x84] sm:$0xf]
      %v6769 = vsel %vm1253, %v6563, %v6768
      %6770 = vst [vmem:[%s6690 + $0x84] sm:$0xf] %v6769
      %6771 = vst [vmem:[%s6690 + $0x88] sm:$0xf] %v6572
      %v6772 = vld [vmem:[%s6690 + $0x8c] sm:$0x1]
      %v6773 = vsel %vm289, %v6573, %v6772
      %6774 = vst [vmem:[%s6690 + $0x8c] sm:$0x1] %v6773
      %v6775 = vld [vmem:[%s6690 + $0x90] sm:$0xf]
      %v6776 = vsel %vm1253, %v6580, %v6775
      %6777 = vst [vmem:[%s6690 + $0x90] sm:$0xf] %v6776
      %6778 = vst [vmem:[%s6690 + $0x94] sm:$0xf] %v6589
      %v6779 = vld [vmem:[%s6690 + $0x98] sm:$0x1]
      %v6780 = vsel %vm289, %v6590, %v6779
      %6781 = vst [vmem:[%s6690 + $0x98] sm:$0x1] %v6780
      %v6782 = vld [vmem:[%s6690 + $0x9c] sm:$0xf]
      %v6783 = vsel %vm1253, %v6597, %v6782
      %6784 = vst [vmem:[%s6690 + $0x9c] sm:$0xf] %v6783
      %6785 = vst [vmem:[%s6690 + $0xa0] sm:$0xf] %v6606
      %v6786 = vld [vmem:[%s6690 + $0xa4] sm:$0x1]
      %v6787 = vsel %vm289, %v6607, %v6786
      %6788 = vst [vmem:[%s6690 + $0xa4] sm:$0x1] %v6787
      %v6789 = vld [vmem:[%s6690 + $0xa8] sm:$0xf]
      %v6790 = vsel %vm1253, %v6614, %v6789
      %6791 = vst [vmem:[%s6690 + $0xa8] sm:$0xf] %v6790
      %6792 = vst [vmem:[%s6690 + $0xac] sm:$0xf] %v6623
      %v6793 = vld [vmem:[%s6690 + $0xb0] sm:$0x1]
      %v6794 = vsel %vm289, %v6624, %v6793
      %6795 = vst [vmem:[%s6690 + $0xb0] sm:$0x1] %v6794
      %v6796 = vld [vmem:[%s6690 + $0xb4] sm:$0xf]
      %v6797 = vsel %vm1253, %v6631, %v6796
      %6798 = vst [vmem:[%s6690 + $0xb4] sm:$0xf] %v6797
      %6799 = vst [vmem:[%s6690 + $0xb8] sm:$0xf] %v6640
      %v6800 = vld [vmem:[%s6690 + $0xbc] sm:$0x1]
      %v6801 = vsel %vm289, %v6641, %v6800
      %6802 = vst [vmem:[%s6690 + $0xbc] sm:$0x1] %v6801
      %v6803 = vld [vmem:[#allocation3] sm:$0xf]
      %v6804 = vld [vmem:[#allocation3 + $0x4] sm:$0xf]
      %v6805 = vld [vmem:[#allocation3 + $0xc] sm:$0xf]
      %v6806 = vld [vmem:[#allocation3 + $0x10] sm:$0xf]
      %v6807 = vld [vmem:[#allocation3 + $0x18] sm:$0xf]
      %v6808 = vld [vmem:[#allocation3 + $0x1c] sm:$0xf]
      %v6809 = vld [vmem:[#allocation3 + $0x24] sm:$0xf]
      %v6810 = vld [vmem:[#allocation3 + $0x28] sm:$0xf]
      %v6811 = vld [vmem:[#allocation3 + $0x30] sm:$0xf]
      %v6812 = vld [vmem:[#allocation3 + $0x34] sm:$0xf]
      %v6813 = vld [vmem:[#allocation3 + $0x3c] sm:$0xf]
      %v6814 = vld [vmem:[#allocation3 + $0x40] sm:$0xf]
      %v6815 = vld [vmem:[#allocation3 + $0x48] sm:$0xf]
      %v6816 = vld [vmem:[#allocation3 + $0x4c] sm:$0xf]
      %v6817 = vld [vmem:[#allocation3 + $0x54] sm:$0xf]
      %v6818 = vld [vmem:[#allocation3 + $0x58] sm:$0xf]
      %v6819 = vld [vmem:[#allocation3 + $0x60] sm:$0xf]
      %v6820 = vld [vmem:[#allocation3 + $0x64] sm:$0xf]
      %v6821 = vld [vmem:[#allocation3 + $0x6c] sm:$0xf]
      %v6822 = vld [vmem:[#allocation3 + $0x70] sm:$0xf]
      %v6823 = vld [vmem:[#allocation3 + $0x78] sm:$0xf]
      %v6824 = vld [vmem:[#allocation3 + $0x7c] sm:$0xf]
      %v6825 = vld [vmem:[#allocation3 + $0x84] sm:$0xf]
      %v6826 = vld [vmem:[#allocation3 + $0x88] sm:$0xf]
      %v6827 = vld [vmem:[#allocation3 + $0x90] sm:$0xf]
      %v6828 = vld [vmem:[#allocation3 + $0x94] sm:$0xf]
      %v6829 = vld [vmem:[#allocation3 + $0x9c] sm:$0xf]
      %v6830 = vld [vmem:[#allocation3 + $0xa0] sm:$0xf]
      %v6831 = vld [vmem:[#allocation3 + $0xa8] sm:$0xf]
      %v6832 = vld [vmem:[#allocation3 + $0xac] sm:$0xf]
      %v6833 = vld [vmem:[#allocation3 + $0xb4] sm:$0xf]
      %v6834 = vld [vmem:[#allocation3 + $0xb8] sm:$0xf]
      %6835 = vst [vmem:[#allocation4] sm:$0xf] %v6803
      %6836 = vst [vmem:[#allocation4 + $0x24] sm:$0xf] %v6804
      %6837 = vst [vmem:[#allocation4 + $0x48] sm:$0xf] %v6805
      %6838 = vst [vmem:[#allocation4 + $0x6c] sm:$0xf] %v6806
      %6839 = vst [vmem:[#allocation4 + $0x90] sm:$0xf] %v6807
      %6840 = vst [vmem:[#allocation4 + $0xb4] sm:$0xf] %v6808
      %6841 = vst [vmem:[#allocation4 + $0xd8] sm:$0xf] %v6809
      %6842 = vst [vmem:[#allocation4 + $0xfc] sm:$0xf] %v6810
      %6843 = vst [vmem:[#allocation4 + $0x120] sm:$0xf] %v6811
      %6844 = vst [vmem:[#allocation4 + $0x144] sm:$0xf] %v6812
      %6845 = vst [vmem:[#allocation4 + $0x168] sm:$0xf] %v6813
      %6846 = vst [vmem:[#allocation4 + $0x18c] sm:$0xf] %v6814
      %6847 = vst [vmem:[#allocation4 + $0x1b0] sm:$0xf] %v6815
      %6848 = vst [vmem:[#allocation4 + $0x1d4] sm:$0xf] %v6816
      %6849 = vst [vmem:[#allocation4 + $0x1f8] sm:$0xf] %v6817
      %6850 = vst [vmem:[#allocation4 + $0x21c] sm:$0xf] %v6818
      %6851 = vst [vmem:[#allocation4 + $0x240] sm:$0xf] %v6819
      %6852 = vst [vmem:[#allocation4 + $0x264] sm:$0xf] %v6820
      %6853 = vst [vmem:[#allocation4 + $0x288] sm:$0xf] %v6821
      %6854 = vst [vmem:[#allocation4 + $0x2ac] sm:$0xf] %v6822
      %6855 = vst [vmem:[#allocation4 + $0x2d0] sm:$0xf] %v6823
      %6856 = vst [vmem:[#allocation4 + $0x2f4] sm:$0xf] %v6824
      %6857 = vst [vmem:[#allocation4 + $0x318] sm:$0xf] %v6825
      %6858 = vst [vmem:[#allocation4 + $0x33c] sm:$0xf] %v6826
      %6859 = vst [vmem:[#allocation4 + $0x360] sm:$0xf] %v6827
      %6860 = vst [vmem:[#allocation4 + $0x384] sm:$0xf] %v6828
      %6861 = vst [vmem:[#allocation4 + $0x3a8] sm:$0xf] %v6829
      %6862 = vst [vmem:[#allocation4 + $0x3cc] sm:$0xf] %v6830
      %6863 = vst [vmem:[#allocation4 + $0x3f0] sm:$0xf] %v6831
      %6864 = vst [vmem:[#allocation4 + $0x414] sm:$0xf] %v6832
      %6865 = vst [vmem:[#allocation4 + $0x438] sm:$0xf] %v6833
      %6866 = vst [vmem:[#allocation4 + $0x45c] sm:$0xf] %v6834
      %v6867 = vld [vmem:[#allocation3] sm:$0xf]
      %v6868 = vld [vmem:[#allocation3 + $0x4] sm:$0xf]
      %v6869 = vld [vmem:[#allocation3 + $0x8] sm:$0x1]
      %v6870 = vld [vmem:[#allocation3 + $0xc] sm:$0xf]
      %v6871 = vld [vmem:[#allocation3 + $0x10] sm:$0xf]
      %v6872 = vld [vmem:[#allocation3 + $0x14] sm:$0x1]
      %v6873 = vld [vmem:[#allocation3 + $0x18] sm:$0xf]
      %v6874 = vld [vmem:[#allocation3 + $0x1c] sm:$0xf]
      %v6875 = vld [vmem:[#allocation3 + $0x20] sm:$0x1]
      %v6876 = vld [vmem:[#allocation3 + $0x24] sm:$0xf]
      %v6877 = vld [vmem:[#allocation3 + $0x28] sm:$0xf]
      %v6878 = vld [vmem:[#allocation3 + $0x2c] sm:$0x1]
      %v6879 = vld [vmem:[#allocation3 + $0x30] sm:$0xf]
      %v6880 = vld [vmem:[#allocation3 + $0x34] sm:$0xf]
      %v6881 = vld [vmem:[#allocation3 + $0x38] sm:$0x1]
      %v6882 = vld [vmem:[#allocation3 + $0x3c] sm:$0xf]
      %v6883 = vld [vmem:[#allocation3 + $0x40] sm:$0xf]
      %v6884 = vld [vmem:[#allocation3 + $0x44] sm:$0x1]
      %v6885 = vld [vmem:[#allocation3 + $0x48] sm:$0xf]
      %v6886 = vld [vmem:[#allocation3 + $0x4c] sm:$0xf]
      %v6887 = vld [vmem:[#allocation3 + $0x50] sm:$0x1]
      %v6888 = vld [vmem:[#allocation3 + $0x54] sm:$0xf]
      %v6889 = vld [vmem:[#allocation3 + $0x58] sm:$0xf]
      %v6890 = vld [vmem:[#allocation3 + $0x5c] sm:$0x1]
      %v6891 = vld [vmem:[#allocation3 + $0x60] sm:$0xf]
      %v6892 = vld [vmem:[#allocation3 + $0x64] sm:$0xf]
      %v6893 = vld [vmem:[#allocation3 + $0x68] sm:$0x1]
      %v6894 = vld [vmem:[#allocation3 + $0x6c] sm:$0xf]
      %v6895 = vld [vmem:[#allocation3 + $0x70] sm:$0xf]
      %v6896 = vld [vmem:[#allocation3 + $0x74] sm:$0x1]
      %v6897 = vld [vmem:[#allocation3 + $0x78] sm:$0xf]
      %v6898 = vld [vmem:[#allocation3 + $0x7c] sm:$0xf]
      %v6899 = vld [vmem:[#allocation3 + $0x80] sm:$0x1]
      %v6900 = vld [vmem:[#allocation3 + $0x84] sm:$0xf]
      %v6901 = vld [vmem:[#allocation3 + $0x88] sm:$0xf]
      %v6902 = vld [vmem:[#allocation3 + $0x8c] sm:$0x1]
      %v6903 = vld [vmem:[#allocation3 + $0x90] sm:$0xf]
      %v6904 = vld [vmem:[#allocation3 + $0x94] sm:$0xf]
      %v6905 = vld [vmem:[#allocation3 + $0x98] sm:$0x1]
      %v6906 = vld [vmem:[#allocation3 + $0x9c] sm:$0xf]
      %v6907 = vld [vmem:[#allocation3 + $0xa0] sm:$0xf]
      %v6908 = vld [vmem:[#allocation3 + $0xa4] sm:$0x1]
      %v6909 = vld [vmem:[#allocation3 + $0xa8] sm:$0xf]
      %v6910 = vld [vmem:[#allocation3 + $0xac] sm:$0xf]
      %v6911 = vld [vmem:[#allocation3 + $0xb0] sm:$0x1]
      %v6912 = vld [vmem:[#allocation3 + $0xb4] sm:$0xf]
      %v6913 = vld [vmem:[#allocation3 + $0xb8] sm:$0xf]
      %v6914 = vld [vmem:[#allocation3 + $0xbc] sm:$0x1]
      %v6916 = vshrl.u32 %v6867, 16
      %v6918 = vrot.slane %v6916, 4
      %v6919 = vshll.u32 %v6867, 16
      %v6921 = vrot.slane %v6919, 5
      %v6922 = vor.u32 %v6918, %v6921
      %v6923 = vrot.slane %v6922, 4
      %v6925 = vshll.u32 %v6868, 16
      %v6927 = vrot.slane %v6925, 5
      %v6928 = vsel %vm1480, %v6923, %v6927
      %v6929 = vshrl.u32 %v6868, 16
      %v6931 = vrot.slane %v6929, 4
      %v6932 = vor.u32 %v6931, %v6927
      %v6933 = vrot.slane %v6932, 4
      %v6935 = vshll.u32 %v6869, 16
      %v6937 = vrot.slane %v6935, 5
      %v6938 = vsel %vm1480, %v6933, %v6937
      %v6940 = vshrl.u32 %v6870, 16
      %v6942 = vrot.slane %v6940, 4
      %v6943 = vshll.u32 %v6870, 16
      %v6945 = vrot.slane %v6943, 5
      %v6946 = vor.u32 %v6942, %v6945
      %v6947 = vrot.slane %v6946, 4
      %v6949 = vshll.u32 %v6871, 16
      %v6951 = vrot.slane %v6949, 5
      %v6952 = vsel %vm1480, %v6947, %v6951
      %v6953 = vshrl.u32 %v6871, 16
      %v6955 = vrot.slane %v6953, 4
      %v6956 = vor.u32 %v6955, %v6951
      %v6957 = vrot.slane %v6956, 4
      %v6959 = vshll.u32 %v6872, 16
      %v6961 = vrot.slane %v6959, 5
      %v6962 = vsel %vm1480, %v6957, %v6961
      %v6964 = vshrl.u32 %v6873, 16
      %v6966 = vrot.slane %v6964, 4
      %v6967 = vshll.u32 %v6873, 16
      %v6969 = vrot.slane %v6967, 5
      %v6970 = vor.u32 %v6966, %v6969
      %v6971 = vrot.slane %v6970, 4
      %v6973 = vshll.u32 %v6874, 16
      %v6975 = vrot.slane %v6973, 5
      %v6976 = vsel %vm1480, %v6971, %v6975
      %v6977 = vshrl.u32 %v6874, 16
      %v6979 = vrot.slane %v6977, 4
      %v6980 = vor.u32 %v6979, %v6975
      %v6981 = vrot.slane %v6980, 4
      %v6983 = vshll.u32 %v6875, 16
      %v6985 = vrot.slane %v6983, 5
      %v6986 = vsel %vm1480, %v6981, %v6985
      %v6988 = vshrl.u32 %v6876, 16
      %v6990 = vrot.slane %v6988, 4
      %v6991 = vshll.u32 %v6876, 16
      %v6993 = vrot.slane %v6991, 5
      %v6994 = vor.u32 %v6990, %v6993
      %v6995 = vrot.slane %v6994, 4
      %v6997 = vshll.u32 %v6877, 16
      %v6999 = vrot.slane %v6997, 5
      %v7000 = vsel %vm1480, %v6995, %v6999
      %v7001 = vshrl.u32 %v6877, 16
      %v7003 = vrot.slane %v7001, 4
      %v7004 = vor.u32 %v7003, %v6999
      %v7005 = vrot.slane %v7004, 4
      %v7007 = vshll.u32 %v6878, 16
      %v7009 = vrot.slane %v7007, 5
      %v7010 = vsel %vm1480, %v7005, %v7009
      %v7012 = vshrl.u32 %v6879, 16
      %v7014 = vrot.slane %v7012, 4
      %v7015 = vshll.u32 %v6879, 16
      %v7017 = vrot.slane %v7015, 5
      %v7018 = vor.u32 %v7014, %v7017
      %v7019 = vrot.slane %v7018, 4
      %v7021 = vshll.u32 %v6880, 16
      %v7023 = vrot.slane %v7021, 5
      %v7024 = vsel %vm1480, %v7019, %v7023
      %v7025 = vshrl.u32 %v6880, 16
      %v7027 = vrot.slane %v7025, 4
      %v7028 = vor.u32 %v7027, %v7023
      %v7029 = vrot.slane %v7028, 4
      %v7031 = vshll.u32 %v6881, 16
      %v7033 = vrot.slane %v7031, 5
      %v7034 = vsel %vm1480, %v7029, %v7033
      %v7036 = vshrl.u32 %v6882, 16
      %v7038 = vrot.slane %v7036, 4
      %v7039 = vshll.u32 %v6882, 16
      %v7041 = vrot.slane %v7039, 5
      %v7042 = vor.u32 %v7038, %v7041
      %v7043 = vrot.slane %v7042, 4
      %v7045 = vshll.u32 %v6883, 16
      %v7047 = vrot.slane %v7045, 5
      %v7048 = vsel %vm1480, %v7043, %v7047
      %v7049 = vshrl.u32 %v6883, 16
      %v7051 = vrot.slane %v7049, 4
      %v7052 = vor.u32 %v7051, %v7047
      %v7053 = vrot.slane %v7052, 4
      %v7055 = vshll.u32 %v6884, 16
      %v7057 = vrot.slane %v7055, 5
      %v7058 = vsel %vm1480, %v7053, %v7057
      %v7060 = vshrl.u32 %v6885, 16
      %v7062 = vrot.slane %v7060, 4
      %v7063 = vshll.u32 %v6885, 16
      %v7065 = vrot.slane %v7063, 5
      %v7066 = vor.u32 %v7062, %v7065
      %v7067 = vrot.slane %v7066, 4
      %v7069 = vshll.u32 %v6886, 16
      %v7071 = vrot.slane %v7069, 5
      %v7072 = vsel %vm1480, %v7067, %v7071
      %v7073 = vshrl.u32 %v6886, 16
      %v7075 = vrot.slane %v7073, 4
      %v7076 = vor.u32 %v7075, %v7071
      %v7077 = vrot.slane %v7076, 4
      %v7079 = vshll.u32 %v6887, 16
      %v7081 = vrot.slane %v7079, 5
      %v7082 = vsel %vm1480, %v7077, %v7081
      %v7084 = vshrl.u32 %v6888, 16
      %v7086 = vrot.slane %v7084, 4
      %v7087 = vshll.u32 %v6888, 16
      %v7089 = vrot.slane %v7087, 5
      %v7090 = vor.u32 %v7086, %v7089
      %v7091 = vrot.slane %v7090, 4
      %v7093 = vshll.u32 %v6889, 16
      %v7095 = vrot.slane %v7093, 5
      %v7096 = vsel %vm1480, %v7091, %v7095
      %v7097 = vshrl.u32 %v6889, 16
      %v7099 = vrot.slane %v7097, 4
      %v7100 = vor.u32 %v7099, %v7095
      %v7101 = vrot.slane %v7100, 4
      %v7103 = vshll.u32 %v6890, 16
      %v7105 = vrot.slane %v7103, 5
      %v7106 = vsel %vm1480, %v7101, %v7105
      %v7108 = vshrl.u32 %v6891, 16
      %v7110 = vrot.slane %v7108, 4
      %v7111 = vshll.u32 %v6891, 16
      %v7113 = vrot.slane %v7111, 5
      %v7114 = vor.u32 %v7110, %v7113
      %v7115 = vrot.slane %v7114, 4
      %v7117 = vshll.u32 %v6892, 16
      %v7119 = vrot.slane %v7117, 5
      %v7120 = vsel %vm1480, %v7115, %v7119
      %v7121 = vshrl.u32 %v6892, 16
      %v7123 = vrot.slane %v7121, 4
      %v7124 = vor.u32 %v7123, %v7119
      %v7125 = vrot.slane %v7124, 4
      %v7127 = vshll.u32 %v6893, 16
      %v7129 = vrot.slane %v7127, 5
      %v7130 = vsel %vm1480, %v7125, %v7129
      %v7132 = vshrl.u32 %v6894, 16
      %v7134 = vrot.slane %v7132, 4
      %v7135 = vshll.u32 %v6894, 16
      %v7137 = vrot.slane %v7135, 5
      %v7138 = vor.u32 %v7134, %v7137
      %v7139 = vrot.slane %v7138, 4
      %v7141 = vshll.u32 %v6895, 16
      %v7143 = vrot.slane %v7141, 5
      %v7144 = vsel %vm1480, %v7139, %v7143
      %v7145 = vshrl.u32 %v6895, 16
      %v7147 = vrot.slane %v7145, 4
      %v7148 = vor.u32 %v7147, %v7143
      %v7149 = vrot.slane %v7148, 4
      %v7151 = vshll.u32 %v6896, 16
      %v7153 = vrot.slane %v7151, 5
      %v7154 = vsel %vm1480, %v7149, %v7153
      %v7156 = vshrl.u32 %v6897, 16
      %v7158 = vrot.slane %v7156, 4
      %v7159 = vshll.u32 %v6897, 16
      %v7161 = vrot.slane %v7159, 5
      %v7162 = vor.u32 %v7158, %v7161
      %v7163 = vrot.slane %v7162, 4
      %v7165 = vshll.u32 %v6898, 16
      %v7167 = vrot.slane %v7165, 5
      %v7168 = vsel %vm1480, %v7163, %v7167
      %v7169 = vshrl.u32 %v6898, 16
      %v7171 = vrot.slane %v7169, 4
      %v7172 = vor.u32 %v7171, %v7167
      %v7173 = vrot.slane %v7172, 4
      %v7175 = vshll.u32 %v6899, 16
      %v7177 = vrot.slane %v7175, 5
      %v7178 = vsel %vm1480, %v7173, %v7177
      %v7180 = vshrl.u32 %v6900, 16
      %v7182 = vrot.slane %v7180, 4
      %v7183 = vshll.u32 %v6900, 16
      %v7185 = vrot.slane %v7183, 5
      %v7186 = vor.u32 %v7182, %v7185
      %v7187 = vrot.slane %v7186, 4
      %v7189 = vshll.u32 %v6901, 16
      %v7191 = vrot.slane %v7189, 5
      %v7192 = vsel %vm1480, %v7187, %v7191
      %v7193 = vshrl.u32 %v6901, 16
      %v7195 = vrot.slane %v7193, 4
      %v7196 = vor.u32 %v7195, %v7191
      %v7197 = vrot.slane %v7196, 4
      %v7199 = vshll.u32 %v6902, 16
      %v7201 = vrot.slane %v7199, 5
      %v7202 = vsel %vm1480, %v7197, %v7201
      %v7204 = vshrl.u32 %v6903, 16
      %v7206 = vrot.slane %v7204, 4
      %v7207 = vshll.u32 %v6903, 16
      %v7209 = vrot.slane %v7207, 5
      %v7210 = vor.u32 %v7206, %v7209
      %v7211 = vrot.slane %v7210, 4
      %v7213 = vshll.u32 %v6904, 16
      %v7215 = vrot.slane %v7213, 5
      %v7216 = vsel %vm1480, %v7211, %v7215
      %v7217 = vshrl.u32 %v6904, 16
      %v7219 = vrot.slane %v7217, 4
      %v7220 = vor.u32 %v7219, %v7215
      %v7221 = vrot.slane %v7220, 4
      %v7223 = vshll.u32 %v6905, 16
      %v7225 = vrot.slane %v7223, 5
      %v7226 = vsel %vm1480, %v7221, %v7225
      %v7228 = vshrl.u32 %v6906, 16
      %v7230 = vrot.slane %v7228, 4
      %v7231 = vshll.u32 %v6906, 16
      %v7233 = vrot.slane %v7231, 5
      %v7234 = vor.u32 %v7230, %v7233
      %v7235 = vrot.slane %v7234, 4
      %v7237 = vshll.u32 %v6907, 16
      %v7239 = vrot.slane %v7237, 5
      %v7240 = vsel %vm1480, %v7235, %v7239
      %v7241 = vshrl.u32 %v6907, 16
      %v7243 = vrot.slane %v7241, 4
      %v7244 = vor.u32 %v7243, %v7239
      %v7245 = vrot.slane %v7244, 4
      %v7247 = vshll.u32 %v6908, 16
      %v7249 = vrot.slane %v7247, 5
      %v7250 = vsel %vm1480, %v7245, %v7249
      %v7252 = vshrl.u32 %v6909, 16
      %v7254 = vrot.slane %v7252, 4
      %v7255 = vshll.u32 %v6909, 16
      %v7257 = vrot.slane %v7255, 5
      %v7258 = vor.u32 %v7254, %v7257
      %v7259 = vrot.slane %v7258, 4
      %v7261 = vshll.u32 %v6910, 16
      %v7263 = vrot.slane %v7261, 5
      %v7264 = vsel %vm1480, %v7259, %v7263
      %v7265 = vshrl.u32 %v6910, 16
      %v7267 = vrot.slane %v7265, 4
      %v7268 = vor.u32 %v7267, %v7263
      %v7269 = vrot.slane %v7268, 4
      %v7271 = vshll.u32 %v6911, 16
      %v7273 = vrot.slane %v7271, 5
      %v7274 = vsel %vm1480, %v7269, %v7273
      %v7276 = vshrl.u32 %v6912, 16
      %v7278 = vrot.slane %v7276, 4
      %v7279 = vshll.u32 %v6912, 16
      %v7281 = vrot.slane %v7279, 5
      %v7282 = vor.u32 %v7278, %v7281
      %v7283 = vrot.slane %v7282, 4
      %v7285 = vshll.u32 %v6913, 16
      %v7287 = vrot.slane %v7285, 5
      %v7288 = vsel %vm1480, %v7283, %v7287
      %v7289 = vshrl.u32 %v6913, 16
      %v7291 = vrot.slane %v7289, 4
      %v7292 = vor.u32 %v7291, %v7287
      %v7293 = vrot.slane %v7292, 4
      %v7295 = vshll.u32 %v6914, 16
      %v7297 = vrot.slane %v7295, 5
      %v7298 = vsel %vm1480, %v7293, %v7297
      %7331 = vst [vmem:[#allocation4 + $0x4] sm:$0xf] %v6928
      %7332 = vst [vmem:[#allocation4 + $0x28] sm:$0xf] %v6938
      %7333 = vst [vmem:[#allocation4 + $0x4c] sm:$0xf] %v6952
      %7334 = vst [vmem:[#allocation4 + $0x70] sm:$0xf] %v6962
      %7335 = vst [vmem:[#allocation4 + $0x94] sm:$0xf] %v6976
      %7336 = vst [vmem:[#allocation4 + $0xb8] sm:$0xf] %v6986
      %7337 = vst [vmem:[#allocation4 + $0xdc] sm:$0xf] %v7000
      %7338 = vst [vmem:[#allocation4 + $0x100] sm:$0xf] %v7010
      %7339 = vst [vmem:[#allocation4 + $0x124] sm:$0xf] %v7024
      %7340 = vst [vmem:[#allocation4 + $0x148] sm:$0xf] %v7034
      %7341 = vst [vmem:[#allocation4 + $0x16c] sm:$0xf] %v7048
      %7342 = vst [vmem:[#allocation4 + $0x190] sm:$0xf] %v7058
      %7343 = vst [vmem:[#allocation4 + $0x1b4] sm:$0xf] %v7072
      %7344 = vst [vmem:[#allocation4 + $0x1d8] sm:$0xf] %v7082
      %7345 = vst [vmem:[#allocation4 + $0x1fc] sm:$0xf] %v7096
      %7346 = vst [vmem:[#allocation4 + $0x220] sm:$0xf] %v7106
      %7347 = vst [vmem:[#allocation4 + $0x244] sm:$0xf] %v7120
      %7348 = vst [vmem:[#allocation4 + $0x268] sm:$0xf] %v7130
      %7349 = vst [vmem:[#allocation4 + $0x28c] sm:$0xf] %v7144
      %7350 = vst [vmem:[#allocation4 + $0x2b0] sm:$0xf] %v7154
      %7351 = vst [vmem:[#allocation4 + $0x2d4] sm:$0xf] %v7168
      %7352 = vst [vmem:[#allocation4 + $0x2f8] sm:$0xf] %v7178
      %7353 = vst [vmem:[#allocation4 + $0x31c] sm:$0xf] %v7192
      %7354 = vst [vmem:[#allocation4 + $0x340] sm:$0xf] %v7202
      %7355 = vst [vmem:[#allocation4 + $0x364] sm:$0xf] %v7216
      %7356 = vst [vmem:[#allocation4 + $0x388] sm:$0xf] %v7226
      %7357 = vst [vmem:[#allocation4 + $0x3ac] sm:$0xf] %v7240
      %7358 = vst [vmem:[#allocation4 + $0x3d0] sm:$0xf] %v7250
      %7359 = vst [vmem:[#allocation4 + $0x3f4] sm:$0xf] %v7264
      %7360 = vst [vmem:[#allocation4 + $0x418] sm:$0xf] %v7274
      %7361 = vst [vmem:[#allocation4 + $0x43c] sm:$0xf] %v7288
      %7362 = vst [vmem:[#allocation4 + $0x460] sm:$0xf] %v7298
      %v7363 = vld [vmem:[#allocation3] sm:$0xe]
      %v7364 = vld [vmem:[#allocation3 + $0x4] sm:$0xf]
      %v7365 = vld [vmem:[#allocation3 + $0x8] sm:$0x1]
      %v7366 = vld [vmem:[#allocation3 + $0xc] sm:$0xe]
      %v7367 = vld [vmem:[#allocation3 + $0x10] sm:$0xf]
      %v7368 = vld [vmem:[#allocation3 + $0x14] sm:$0x1]
      %v7369 = vld [vmem:[#allocation3 + $0x18] sm:$0xe]
      %v7370 = vld [vmem:[#allocation3 + $0x1c] sm:$0xf]
      %v7371 = vld [vmem:[#allocation3 + $0x20] sm:$0x1]
      %v7372 = vld [vmem:[#allocation3 + $0x24] sm:$0xe]
      %v7373 = vld [vmem:[#allocation3 + $0x28] sm:$0xf]
      %v7374 = vld [vmem:[#allocation3 + $0x2c] sm:$0x1]
      %v7375 = vld [vmem:[#allocation3 + $0x30] sm:$0xe]
      %v7376 = vld [vmem:[#allocation3 + $0x34] sm:$0xf]
      %v7377 = vld [vmem:[#allocation3 + $0x38] sm:$0x1]
      %v7378 = vld [vmem:[#allocation3 + $0x3c] sm:$0xe]
      %v7379 = vld [vmem:[#allocation3 + $0x40] sm:$0xf]
      %v7380 = vld [vmem:[#allocation3 + $0x44] sm:$0x1]
      %v7381 = vld [vmem:[#allocation3 + $0x48] sm:$0xe]
      %v7382 = vld [vmem:[#allocation3 + $0x4c] sm:$0xf]
      %v7383 = vld [vmem:[#allocation3 + $0x50] sm:$0x1]
      %v7384 = vld [vmem:[#allocation3 + $0x54] sm:$0xe]
      %v7385 = vld [vmem:[#allocation3 + $0x58] sm:$0xf]
      %v7386 = vld [vmem:[#allocation3 + $0x5c] sm:$0x1]
      %v7387 = vld [vmem:[#allocation3 + $0x60] sm:$0xe]
      %v7388 = vld [vmem:[#allocation3 + $0x64] sm:$0xf]
      %v7389 = vld [vmem:[#allocation3 + $0x68] sm:$0x1]
      %v7390 = vld [vmem:[#allocation3 + $0x6c] sm:$0xe]
      %v7391 = vld [vmem:[#allocation3 + $0x70] sm:$0xf]
      %v7392 = vld [vmem:[#allocation3 + $0x74] sm:$0x1]
      %v7393 = vld [vmem:[#allocation3 + $0x78] sm:$0xe]
      %v7394 = vld [vmem:[#allocation3 + $0x7c] sm:$0xf]
      %v7395 = vld [vmem:[#allocation3 + $0x80] sm:$0x1]
      %v7396 = vld [vmem:[#allocation3 + $0x84] sm:$0xe]
      %v7397 = vld [vmem:[#allocation3 + $0x88] sm:$0xf]
      %v7398 = vld [vmem:[#allocation3 + $0x8c] sm:$0x1]
      %v7399 = vld [vmem:[#allocation3 + $0x90] sm:$0xe]
      %v7400 = vld [vmem:[#allocation3 + $0x94] sm:$0xf]
      %v7401 = vld [vmem:[#allocation3 + $0x98] sm:$0x1]
      %v7402 = vld [vmem:[#allocation3 + $0x9c] sm:$0xe]
      %v7403 = vld [vmem:[#allocation3 + $0xa0] sm:$0xf]
      %v7404 = vld [vmem:[#allocation3 + $0xa4] sm:$0x1]
      %v7405 = vld [vmem:[#allocation3 + $0xa8] sm:$0xe]
      %v7406 = vld [vmem:[#allocation3 + $0xac] sm:$0xf]
      %v7407 = vld [vmem:[#allocation3 + $0xb0] sm:$0x1]
      %v7408 = vld [vmem:[#allocation3 + $0xb4] sm:$0xe]
      %v7409 = vld [vmem:[#allocation3 + $0xb8] sm:$0xf]
      %v7410 = vld [vmem:[#allocation3 + $0xbc] sm:$0x1]
      %v7459 = vrot.slane %v7363, 5
      %v7460 = vrot.slane %v7459, 4
      %v7461 = vrot.slane %v7364, 5
      %v7462 = vsel %vm2027, %v7460, %v7461
      %v7463 = vrot.slane %v7461, 4
      %v7464 = vrot.slane %v7365, 5
      %v7465 = vsel %vm2027, %v7463, %v7464
      %v7466 = vrot.slane %v7366, 5
      %v7467 = vrot.slane %v7466, 4
      %v7468 = vrot.slane %v7367, 5
      %v7469 = vsel %vm2027, %v7467, %v7468
      %v7470 = vrot.slane %v7468, 4
      %v7471 = vrot.slane %v7368, 5
      %v7472 = vsel %vm2027, %v7470, %v7471
      %v7473 = vrot.slane %v7369, 5
      %v7474 = vrot.slane %v7473, 4
      %v7475 = vrot.slane %v7370, 5
      %v7476 = vsel %vm2027, %v7474, %v7475
      %v7477 = vrot.slane %v7475, 4
      %v7478 = vrot.slane %v7371, 5
      %v7479 = vsel %vm2027, %v7477, %v7478
      %v7480 = vrot.slane %v7372, 5
      %v7481 = vrot.slane %v7480, 4
      %v7482 = vrot.slane %v7373, 5
      %v7483 = vsel %vm2027, %v7481, %v7482
      %v7484 = vrot.slane %v7482, 4
      %v7485 = vrot.slane %v7374, 5
      %v7486 = vsel %vm2027, %v7484, %v7485
      %v7487 = vrot.slane %v7375, 5
      %v7488 = vrot.slane %v7487, 4
      %v7489 = vrot.slane %v7376, 5
      %v7490 = vsel %vm2027, %v7488, %v7489
      %v7491 = vrot.slane %v7489, 4
      %v7492 = vrot.slane %v7377, 5
      %v7493 = vsel %vm2027, %v7491, %v7492
      %v7494 = vrot.slane %v7378, 5
      %v7495 = vrot.slane %v7494, 4
      %v7496 = vrot.slane %v7379, 5
      %v7497 = vsel %vm2027, %v7495, %v7496
      %v7498 = vrot.slane %v7496, 4
      %v7499 = vrot.slane %v7380, 5
      %v7500 = vsel %vm2027, %v7498, %v7499
      %v7501 = vrot.slane %v7381, 5
      %v7502 = vrot.slane %v7501, 4
      %v7503 = vrot.slane %v7382, 5
      %v7504 = vsel %vm2027, %v7502, %v7503
      %v7505 = vrot.slane %v7503, 4
      %v7506 = vrot.slane %v7383, 5
      %v7507 = vsel %vm2027, %v7505, %v7506
      %v7508 = vrot.slane %v7384, 5
      %v7509 = vrot.slane %v7508, 4
      %v7510 = vrot.slane %v7385, 5
      %v7511 = vsel %vm2027, %v7509, %v7510
      %v7512 = vrot.slane %v7510, 4
      %v7513 = vrot.slane %v7386, 5
      %v7514 = vsel %vm2027, %v7512, %v7513
      %v7515 = vrot.slane %v7387, 5
      %v7516 = vrot.slane %v7515, 4
      %v7517 = vrot.slane %v7388, 5
      %v7518 = vsel %vm2027, %v7516, %v7517
      %v7519 = vrot.slane %v7517, 4
      %v7520 = vrot.slane %v7389, 5
      %v7521 = vsel %vm2027, %v7519, %v7520
      %v7522 = vrot.slane %v7390, 5
      %v7523 = vrot.slane %v7522, 4
      %v7524 = vrot.slane %v7391, 5
      %v7525 = vsel %vm2027, %v7523, %v7524
      %v7526 = vrot.slane %v7524, 4
      %v7527 = vrot.slane %v7392, 5
      %v7528 = vsel %vm2027, %v7526, %v7527
      %v7529 = vrot.slane %v7393, 5
      %v7530 = vrot.slane %v7529, 4
      %v7531 = vrot.slane %v7394, 5
      %v7532 = vsel %vm2027, %v7530, %v7531
      %v7533 = vrot.slane %v7531, 4
      %v7534 = vrot.slane %v7395, 5
      %v7535 = vsel %vm2027, %v7533, %v7534
      %v7536 = vrot.slane %v7396, 5
      %v7537 = vrot.slane %v7536, 4
      %v7538 = vrot.slane %v7397, 5
      %v7539 = vsel %vm2027, %v7537, %v7538
      %v7540 = vrot.slane %v7538, 4
      %v7541 = vrot.slane %v7398, 5
      %v7542 = vsel %vm2027, %v7540, %v7541
      %v7543 = vrot.slane %v7399, 5
      %v7544 = vrot.slane %v7543, 4
      %v7545 = vrot.slane %v7400, 5
      %v7546 = vsel %vm2027, %v7544, %v7545
      %v7547 = vrot.slane %v7545, 4
      %v7548 = vrot.slane %v7401, 5
      %v7549 = vsel %vm2027, %v7547, %v7548
      %v7550 = vrot.slane %v7402, 5
      %v7551 = vrot.slane %v7550, 4
      %v7552 = vrot.slane %v7403, 5
      %v7553 = vsel %vm2027, %v7551, %v7552
      %v7554 = vrot.slane %v7552, 4
      %v7555 = vrot.slane %v7404, 5
      %v7556 = vsel %vm2027, %v7554, %v7555
      %v7557 = vrot.slane %v7405, 5
      %v7558 = vrot.slane %v7557, 4
      %v7559 = vrot.slane %v7406, 5
      %v7560 = vsel %vm2027, %v7558, %v7559
      %v7561 = vrot.slane %v7559, 4
      %v7562 = vrot.slane %v7407, 5
      %v7563 = vsel %vm2027, %v7561, %v7562
      %v7564 = vrot.slane %v7408, 5
      %v7565 = vrot.slane %v7564, 4
      %v7566 = vrot.slane %v7409, 5
      %v7567 = vsel %vm2027, %v7565, %v7566
      %v7568 = vrot.slane %v7566, 4
      %v7569 = vrot.slane %v7410, 5
      %v7570 = vsel %vm2027, %v7568, %v7569
      %7603 = vst [vmem:[#allocation4 + $0x8] sm:$0xf] %v7462
      %7604 = vst [vmem:[#allocation4 + $0x2c] sm:$0xf] %v7465
      %7605 = vst [vmem:[#allocation4 + $0x50] sm:$0xf] %v7469
      %7606 = vst [vmem:[#allocation4 + $0x74] sm:$0xf] %v7472
      %7607 = vst [vmem:[#allocation4 + $0x98] sm:$0xf] %v7476
      %7608 = vst [vmem:[#allocation4 + $0xbc] sm:$0xf] %v7479
      %7609 = vst [vmem:[#allocation4 + $0xe0] sm:$0xf] %v7483
      %7610 = vst [vmem:[#allocation4 + $0x104] sm:$0xf] %v7486
      %7611 = vst [vmem:[#allocation4 + $0x128] sm:$0xf] %v7490
      %7612 = vst [vmem:[#allocation4 + $0x14c] sm:$0xf] %v7493
      %7613 = vst [vmem:[#allocation4 + $0x170] sm:$0xf] %v7497
      %7614 = vst [vmem:[#allocation4 + $0x194] sm:$0xf] %v7500
      %7615 = vst [vmem:[#allocation4 + $0x1b8] sm:$0xf] %v7504
      %7616 = vst [vmem:[#allocation4 + $0x1dc] sm:$0xf] %v7507
      %7617 = vst [vmem:[#allocation4 + $0x200] sm:$0xf] %v7511
      %7618 = vst [vmem:[#allocation4 + $0x224] sm:$0xf] %v7514
      %7619 = vst [vmem:[#allocation4 + $0x248] sm:$0xf] %v7518
      %7620 = vst [vmem:[#allocation4 + $0x26c] sm:$0xf] %v7521
      %7621 = vst [vmem:[#allocation4 + $0x290] sm:$0xf] %v7525
      %7622 = vst [vmem:[#allocation4 + $0x2b4] sm:$0xf] %v7528
      %7623 = vst [vmem:[#allocation4 + $0x2d8] sm:$0xf] %v7532
      %7624 = vst [vmem:[#allocation4 + $0x2fc] sm:$0xf] %v7535
      %7625 = vst [vmem:[#allocation4 + $0x320] sm:$0xf] %v7539
      %7626 = vst [vmem:[#allocation4 + $0x344] sm:$0xf] %v7542
      %7627 = vst [vmem:[#allocation4 + $0x368] sm:$0xf] %v7546
      %7628 = vst [vmem:[#allocation4 + $0x38c] sm:$0xf] %v7549
      %7629 = vst [vmem:[#allocation4 + $0x3b0] sm:$0xf] %v7553
      %7630 = vst [vmem:[#allocation4 + $0x3d4] sm:$0xf] %v7556
      %7631 = vst [vmem:[#allocation4 + $0x3f8] sm:$0xf] %v7560
      %7632 = vst [vmem:[#allocation4 + $0x41c] sm:$0xf] %v7563
      %7633 = vst [vmem:[#allocation4 + $0x440] sm:$0xf] %v7567
      %7634 = vst [vmem:[#allocation4 + $0x464] sm:$0xf] %v7570
      %v7635 = vld [vmem:[%s6690] sm:$0xf]
      %v7636 = vld [vmem:[%s6690 + $0x4] sm:$0xf]
      %v7637 = vld [vmem:[%s6690 + $0xc] sm:$0xf]
      %v7638 = vld [vmem:[%s6690 + $0x10] sm:$0xf]
      %v7639 = vld [vmem:[%s6690 + $0x18] sm:$0xf]
      %v7640 = vld [vmem:[%s6690 + $0x1c] sm:$0xf]
      %v7641 = vld [vmem:[%s6690 + $0x24] sm:$0xf]
      %v7642 = vld [vmem:[%s6690 + $0x28] sm:$0xf]
      %v7643 = vld [vmem:[%s6690 + $0x30] sm:$0xf]
      %v7644 = vld [vmem:[%s6690 + $0x34] sm:$0xf]
      %v7645 = vld [vmem:[%s6690 + $0x3c] sm:$0xf]
      %v7646 = vld [vmem:[%s6690 + $0x40] sm:$0xf]
      %v7647 = vld [vmem:[%s6690 + $0x48] sm:$0xf]
      %v7648 = vld [vmem:[%s6690 + $0x4c] sm:$0xf]
      %v7649 = vld [vmem:[%s6690 + $0x54] sm:$0xf]
      %v7650 = vld [vmem:[%s6690 + $0x58] sm:$0xf]
      %v7651 = vld [vmem:[%s6690 + $0x60] sm:$0xf]
      %v7652 = vld [vmem:[%s6690 + $0x64] sm:$0xf]
      %v7653 = vld [vmem:[%s6690 + $0x6c] sm:$0xf]
      %v7654 = vld [vmem:[%s6690 + $0x70] sm:$0xf]
      %v7655 = vld [vmem:[%s6690 + $0x78] sm:$0xf]
      %v7656 = vld [vmem:[%s6690 + $0x7c] sm:$0xf]
      %v7657 = vld [vmem:[%s6690 + $0x84] sm:$0xf]
      %v7658 = vld [vmem:[%s6690 + $0x88] sm:$0xf]
      %v7659 = vld [vmem:[%s6690 + $0x90] sm:$0xf]
      %v7660 = vld [vmem:[%s6690 + $0x94] sm:$0xf]
      %v7661 = vld [vmem:[%s6690 + $0x9c] sm:$0xf]
      %v7662 = vld [vmem:[%s6690 + $0xa0] sm:$0xf]
      %v7663 = vld [vmem:[%s6690 + $0xa8] sm:$0xf]
      %v7664 = vld [vmem:[%s6690 + $0xac] sm:$0xf]
      %v7665 = vld [vmem:[%s6690 + $0xb4] sm:$0xf]
      %v7666 = vld [vmem:[%s6690 + $0xb8] sm:$0xf]
      %7667 = vst [vmem:[#allocation4 + $0xc] sm:$0xf] %v7635
      %7668 = vst [vmem:[#allocation4 + $0x30] sm:$0xf] %v7636
      %7669 = vst [vmem:[#allocation4 + $0x54] sm:$0xf] %v7637
      %7670 = vst [vmem:[#allocation4 + $0x78] sm:$0xf] %v7638
      %7671 = vst [vmem:[#allocation4 + $0x9c] sm:$0xf] %v7639
      %7672 = vst [vmem:[#allocation4 + $0xc0] sm:$0xf] %v7640
      %7673 = vst [vmem:[#allocation4 + $0xe4] sm:$0xf] %v7641
      %7674 = vst [vmem:[#allocation4 + $0x108] sm:$0xf] %v7642
      %7675 = vst [vmem:[#allocation4 + $0x12c] sm:$0xf] %v7643
      %7676 = vst [vmem:[#allocation4 + $0x150] sm:$0xf] %v7644
      %7677 = vst [vmem:[#allocation4 + $0x174] sm:$0xf] %v7645
      %7678 = vst [vmem:[#allocation4 + $0x198] sm:$0xf] %v7646
      %7679 = vst [vmem:[#allocation4 + $0x1bc] sm:$0xf] %v7647
      %7680 = vst [vmem:[#allocation4 + $0x1e0] sm:$0xf] %v7648
      %7681 = vst [vmem:[#allocation4 + $0x204] sm:$0xf] %v7649
      %7682 = vst [vmem:[#allocation4 + $0x228] sm:$0xf] %v7650
      %7683 = vst [vmem:[#allocation4 + $0x24c] sm:$0xf] %v7651
      %7684 = vst [vmem:[#allocation4 + $0x270] sm:$0xf] %v7652
      %7685 = vst [vmem:[#allocation4 + $0x294] sm:$0xf] %v7653
      %7686 = vst [vmem:[#allocation4 + $0x2b8] sm:$0xf] %v7654
      %7687 = vst [vmem:[#allocation4 + $0x2dc] sm:$0xf] %v7655
      %7688 = vst [vmem:[#allocation4 + $0x300] sm:$0xf] %v7656
      %7689 = vst [vmem:[#allocation4 + $0x324] sm:$0xf] %v7657
      %7690 = vst [vmem:[#allocation4 + $0x348] sm:$0xf] %v7658
      %7691 = vst [vmem:[#allocation4 + $0x36c] sm:$0xf] %v7659
      %7692 = vst [vmem:[#allocation4 + $0x390] sm:$0xf] %v7660
      %7693 = vst [vmem:[#allocation4 + $0x3b4] sm:$0xf] %v7661
      %7694 = vst [vmem:[#allocation4 + $0x3d8] sm:$0xf] %v7662
      %7695 = vst [vmem:[#allocation4 + $0x3fc] sm:$0xf] %v7663
      %7696 = vst [vmem:[#allocation4 + $0x420] sm:$0xf] %v7664
      %7697 = vst [vmem:[#allocation4 + $0x444] sm:$0xf] %v7665
      %7698 = vst [vmem:[#allocation4 + $0x468] sm:$0xf] %v7666
      %v7699 = vld [vmem:[%s6690] sm:$0xf]
      %v7700 = vld [vmem:[%s6690 + $0x4] sm:$0xf]
      %v7701 = vld [vmem:[%s6690 + $0x8] sm:$0x1]
      %v7702 = vld [vmem:[%s6690 + $0xc] sm:$0xf]
      %v7703 = vld [vmem:[%s6690 + $0x10] sm:$0xf]
      %v7704 = vld [vmem:[%s6690 + $0x14] sm:$0x1]
      %v7705 = vld [vmem:[%s6690 + $0x18] sm:$0xf]
      %v7706 = vld [vmem:[%s6690 + $0x1c] sm:$0xf]
      %v7707 = vld [vmem:[%s6690 + $0x20] sm:$0x1]
      %v7708 = vld [vmem:[%s6690 + $0x24] sm:$0xf]
      %v7709 = vld [vmem:[%s6690 + $0x28] sm:$0xf]
      %v7710 = vld [vmem:[%s6690 + $0x2c] sm:$0x1]
      %v7711 = vld [vmem:[%s6690 + $0x30] sm:$0xf]
      %v7712 = vld [vmem:[%s6690 + $0x34] sm:$0xf]
      %v7713 = vld [vmem:[%s6690 + $0x38] sm:$0x1]
      %v7714 = vld [vmem:[%s6690 + $0x3c] sm:$0xf]
      %v7715 = vld [vmem:[%s6690 + $0x40] sm:$0xf]
      %v7716 = vld [vmem:[%s6690 + $0x44] sm:$0x1]
      %v7717 = vld [vmem:[%s6690 + $0x48] sm:$0xf]
      %v7718 = vld [vmem:[%s6690 + $0x4c] sm:$0xf]
      %v7719 = vld [vmem:[%s6690 + $0x50] sm:$0x1]
      %v7720 = vld [vmem:[%s6690 + $0x54] sm:$0xf]
      %v7721 = vld [vmem:[%s6690 + $0x58] sm:$0xf]
      %v7722 = vld [vmem:[%s6690 + $0x5c] sm:$0x1]
      %v7723 = vld [vmem:[%s6690 + $0x60] sm:$0xf]
      %v7724 = vld [vmem:[%s6690 + $0x64] sm:$0xf]
      %v7725 = vld [vmem:[%s6690 + $0x68] sm:$0x1]
      %v7726 = vld [vmem:[%s6690 + $0x6c] sm:$0xf]
      %v7727 = vld [vmem:[%s6690 + $0x70] sm:$0xf]
      %v7728 = vld [vmem:[%s6690 + $0x74] sm:$0x1]
      %v7729 = vld [vmem:[%s6690 + $0x78] sm:$0xf]
      %v7730 = vld [vmem:[%s6690 + $0x7c] sm:$0xf]
      %v7731 = vld [vmem:[%s6690 + $0x80] sm:$0x1]
      %v7732 = vld [vmem:[%s6690 + $0x84] sm:$0xf]
      %v7733 = vld [vmem:[%s6690 + $0x88] sm:$0xf]
      %v7734 = vld [vmem:[%s6690 + $0x8c] sm:$0x1]
      %v7735 = vld [vmem:[%s6690 + $0x90] sm:$0xf]
      %v7736 = vld [vmem:[%s6690 + $0x94] sm:$0xf]
      %v7737 = vld [vmem:[%s6690 + $0x98] sm:$0x1]
      %v7738 = vld [vmem:[%s6690 + $0x9c] sm:$0xf]
      %v7739 = vld [vmem:[%s6690 + $0xa0] sm:$0xf]
      %v7740 = vld [vmem:[%s6690 + $0xa4] sm:$0x1]
      %v7741 = vld [vmem:[%s6690 + $0xa8] sm:$0xf]
      %v7742 = vld [vmem:[%s6690 + $0xac] sm:$0xf]
      %v7743 = vld [vmem:[%s6690 + $0xb0] sm:$0x1]
      %v7744 = vld [vmem:[%s6690 + $0xb4] sm:$0xf]
      %v7745 = vld [vmem:[%s6690 + $0xb8] sm:$0xf]
      %v7746 = vld [vmem:[%s6690 + $0xbc] sm:$0x1]
      %v7748 = vshrl.u32 %v7699, 16
      %v7750 = vrot.slane %v7748, 4
      %v7751 = vshll.u32 %v7699, 16
      %v7753 = vrot.slane %v7751, 5
      %v7754 = vor.u32 %v7750, %v7753
      %v7755 = vrot.slane %v7754, 4
      %v7757 = vshll.u32 %v7700, 16
      %v7759 = vrot.slane %v7757, 5
      %v7760 = vsel %vm1480, %v7755, %v7759
      %v7761 = vshrl.u32 %v7700, 16
      %v7763 = vrot.slane %v7761, 4
      %v7764 = vor.u32 %v7763, %v7759
      %v7765 = vrot.slane %v7764, 4
      %v7767 = vshll.u32 %v7701, 16
      %v7769 = vrot.slane %v7767, 5
      %v7770 = vsel %vm1480, %v7765, %v7769
      %v7772 = vshrl.u32 %v7702, 16
      %v7774 = vrot.slane %v7772, 4
      %v7775 = vshll.u32 %v7702, 16
      %v7777 = vrot.slane %v7775, 5
      %v7778 = vor.u32 %v7774, %v7777
      %v7779 = vrot.slane %v7778, 4
      %v7781 = vshll.u32 %v7703, 16
      %v7783 = vrot.slane %v7781, 5
      %v7784 = vsel %vm1480, %v7779, %v7783
      %v7785 = vshrl.u32 %v7703, 16
      %v7787 = vrot.slane %v7785, 4
      %v7788 = vor.u32 %v7787, %v7783
      %v7789 = vrot.slane %v7788, 4
      %v7791 = vshll.u32 %v7704, 16
      %v7793 = vrot.slane %v7791, 5
      %v7794 = vsel %vm1480, %v7789, %v7793
      %v7796 = vshrl.u32 %v7705, 16
      %v7798 = vrot.slane %v7796, 4
      %v7799 = vshll.u32 %v7705, 16
      %v7801 = vrot.slane %v7799, 5
      %v7802 = vor.u32 %v7798, %v7801
      %v7803 = vrot.slane %v7802, 4
      %v7805 = vshll.u32 %v7706, 16
      %v7807 = vrot.slane %v7805, 5
      %v7808 = vsel %vm1480, %v7803, %v7807
      %v7809 = vshrl.u32 %v7706, 16
      %v7811 = vrot.slane %v7809, 4
      %v7812 = vor.u32 %v7811, %v7807
      %v7813 = vrot.slane %v7812, 4
      %v7815 = vshll.u32 %v7707, 16
      %v7817 = vrot.slane %v7815, 5
      %v7818 = vsel %vm1480, %v7813, %v7817
      %v7820 = vshrl.u32 %v7708, 16
      %v7822 = vrot.slane %v7820, 4
      %v7823 = vshll.u32 %v7708, 16
      %v7825 = vrot.slane %v7823, 5
      %v7826 = vor.u32 %v7822, %v7825
      %v7827 = vrot.slane %v7826, 4
      %v7829 = vshll.u32 %v7709, 16
      %v7831 = vrot.slane %v7829, 5
      %v7832 = vsel %vm1480, %v7827, %v7831
      %v7833 = vshrl.u32 %v7709, 16
      %v7835 = vrot.slane %v7833, 4
      %v7836 = vor.u32 %v7835, %v7831
      %v7837 = vrot.slane %v7836, 4
      %v7839 = vshll.u32 %v7710, 16
      %v7841 = vrot.slane %v7839, 5
      %v7842 = vsel %vm1480, %v7837, %v7841
      %v7844 = vshrl.u32 %v7711, 16
      %v7846 = vrot.slane %v7844, 4
      %v7847 = vshll.u32 %v7711, 16
      %v7849 = vrot.slane %v7847, 5
      %v7850 = vor.u32 %v7846, %v7849
      %v7851 = vrot.slane %v7850, 4
      %v7853 = vshll.u32 %v7712, 16
      %v7855 = vrot.slane %v7853, 5
      %v7856 = vsel %vm1480, %v7851, %v7855
      %v7857 = vshrl.u32 %v7712, 16
      %v7859 = vrot.slane %v7857, 4
      %v7860 = vor.u32 %v7859, %v7855
      %v7861 = vrot.slane %v7860, 4
      %v7863 = vshll.u32 %v7713, 16
      %v7865 = vrot.slane %v7863, 5
      %v7866 = vsel %vm1480, %v7861, %v7865
      %v7868 = vshrl.u32 %v7714, 16
      %v7870 = vrot.slane %v7868, 4
      %v7871 = vshll.u32 %v7714, 16
      %v7873 = vrot.slane %v7871, 5
      %v7874 = vor.u32 %v7870, %v7873
      %v7875 = vrot.slane %v7874, 4
      %v7877 = vshll.u32 %v7715, 16
      %v7879 = vrot.slane %v7877, 5
      %v7880 = vsel %vm1480, %v7875, %v7879
      %v7881 = vshrl.u32 %v7715, 16
      %v7883 = vrot.slane %v7881, 4
      %v7884 = vor.u32 %v7883, %v7879
      %v7885 = vrot.slane %v7884, 4
      %v7887 = vshll.u32 %v7716, 16
      %v7889 = vrot.slane %v7887, 5
      %v7890 = vsel %vm1480, %v7885, %v7889
      %v7892 = vshrl.u32 %v7717, 16
      %v7894 = vrot.slane %v7892, 4
      %v7895 = vshll.u32 %v7717, 16
      %v7897 = vrot.slane %v7895, 5
      %v7898 = vor.u32 %v7894, %v7897
      %v7899 = vrot.slane %v7898, 4
      %v7901 = vshll.u32 %v7718, 16
      %v7903 = vrot.slane %v7901, 5
      %v7904 = vsel %vm1480, %v7899, %v7903
      %v7905 = vshrl.u32 %v7718, 16
      %v7907 = vrot.slane %v7905, 4
      %v7908 = vor.u32 %v7907, %v7903
      %v7909 = vrot.slane %v7908, 4
      %v7911 = vshll.u32 %v7719, 16
      %v7913 = vrot.slane %v7911, 5
      %v7914 = vsel %vm1480, %v7909, %v7913
      %v7916 = vshrl.u32 %v7720, 16
      %v7918 = vrot.slane %v7916, 4
      %v7919 = vshll.u32 %v7720, 16
      %v7921 = vrot.slane %v7919, 5
      %v7922 = vor.u32 %v7918, %v7921
      %v7923 = vrot.slane %v7922, 4
      %v7925 = vshll.u32 %v7721, 16
      %v7927 = vrot.slane %v7925, 5
      %v7928 = vsel %vm1480, %v7923, %v7927
      %v7929 = vshrl.u32 %v7721, 16
      %v7931 = vrot.slane %v7929, 4
      %v7932 = vor.u32 %v7931, %v7927
      %v7933 = vrot.slane %v7932, 4
      %v7935 = vshll.u32 %v7722, 16
      %v7937 = vrot.slane %v7935, 5
      %v7938 = vsel %vm1480, %v7933, %v7937
      %v7940 = vshrl.u32 %v7723, 16
      %v7942 = vrot.slane %v7940, 4
      %v7943 = vshll.u32 %v7723, 16
      %v7945 = vrot.slane %v7943, 5
      %v7946 = vor.u32 %v7942, %v7945
      %v7947 = vrot.slane %v7946, 4
      %v7949 = vshll.u32 %v7724, 16
      %v7951 = vrot.slane %v7949, 5
      %v7952 = vsel %vm1480, %v7947, %v7951
      %v7953 = vshrl.u32 %v7724, 16
      %v7955 = vrot.slane %v7953, 4
      %v7956 = vor.u32 %v7955, %v7951
      %v7957 = vrot.slane %v7956, 4
      %v7959 = vshll.u32 %v7725, 16
      %v7961 = vrot.slane %v7959, 5
      %v7962 = vsel %vm1480, %v7957, %v7961
      %v7964 = vshrl.u32 %v7726, 16
      %v7966 = vrot.slane %v7964, 4
      %v7967 = vshll.u32 %v7726, 16
      %v7969 = vrot.slane %v7967, 5
      %v7970 = vor.u32 %v7966, %v7969
      %v7971 = vrot.slane %v7970, 4
      %v7973 = vshll.u32 %v7727, 16
      %v7975 = vrot.slane %v7973, 5
      %v7976 = vsel %vm1480, %v7971, %v7975
      %v7977 = vshrl.u32 %v7727, 16
      %v7979 = vrot.slane %v7977, 4
      %v7980 = vor.u32 %v7979, %v7975
      %v7981 = vrot.slane %v7980, 4
      %v7983 = vshll.u32 %v7728, 16
      %v7985 = vrot.slane %v7983, 5
      %v7986 = vsel %vm1480, %v7981, %v7985
      %v7988 = vshrl.u32 %v7729, 16
      %v7990 = vrot.slane %v7988, 4
      %v7991 = vshll.u32 %v7729, 16
      %v7993 = vrot.slane %v7991, 5
      %v7994 = vor.u32 %v7990, %v7993
      %v7995 = vrot.slane %v7994, 4
      %v7997 = vshll.u32 %v7730, 16
      %v7999 = vrot.slane %v7997, 5
      %v8000 = vsel %vm1480, %v7995, %v7999
      %v8001 = vshrl.u32 %v7730, 16
      %v8003 = vrot.slane %v8001, 4
      %v8004 = vor.u32 %v8003, %v7999
      %v8005 = vrot.slane %v8004, 4
      %v8007 = vshll.u32 %v7731, 16
      %v8009 = vrot.slane %v8007, 5
      %v8010 = vsel %vm1480, %v8005, %v8009
      %v8012 = vshrl.u32 %v7732, 16
      %v8014 = vrot.slane %v8012, 4
      %v8015 = vshll.u32 %v7732, 16
      %v8017 = vrot.slane %v8015, 5
      %v8018 = vor.u32 %v8014, %v8017
      %v8019 = vrot.slane %v8018, 4
      %v8021 = vshll.u32 %v7733, 16
      %v8023 = vrot.slane %v8021, 5
      %v8024 = vsel %vm1480, %v8019, %v8023
      %v8025 = vshrl.u32 %v7733, 16
      %v8027 = vrot.slane %v8025, 4
      %v8028 = vor.u32 %v8027, %v8023
      %v8029 = vrot.slane %v8028, 4
      %v8031 = vshll.u32 %v7734, 16
      %v8033 = vrot.slane %v8031, 5
      %v8034 = vsel %vm1480, %v8029, %v8033
      %v8036 = vshrl.u32 %v7735, 16
      %v8038 = vrot.slane %v8036, 4
      %v8039 = vshll.u32 %v7735, 16
      %v8041 = vrot.slane %v8039, 5
      %v8042 = vor.u32 %v8038, %v8041
      %v8043 = vrot.slane %v8042, 4
      %v8045 = vshll.u32 %v7736, 16
      %v8047 = vrot.slane %v8045, 5
      %v8048 = vsel %vm1480, %v8043, %v8047
      %v8049 = vshrl.u32 %v7736, 16
      %v8051 = vrot.slane %v8049, 4
      %v8052 = vor.u32 %v8051, %v8047
      %v8053 = vrot.slane %v8052, 4
      %v8055 = vshll.u32 %v7737, 16
      %v8057 = vrot.slane %v8055, 5
      %v8058 = vsel %vm1480, %v8053, %v8057
      %v8060 = vshrl.u32 %v7738, 16
      %v8062 = vrot.slane %v8060, 4
      %v8063 = vshll.u32 %v7738, 16
      %v8065 = vrot.slane %v8063, 5
      %v8066 = vor.u32 %v8062, %v8065
      %v8067 = vrot.slane %v8066, 4
      %v8069 = vshll.u32 %v7739, 16
      %v8071 = vrot.slane %v8069, 5
      %v8072 = vsel %vm1480, %v8067, %v8071
      %v8073 = vshrl.u32 %v7739, 16
      %v8075 = vrot.slane %v8073, 4
      %v8076 = vor.u32 %v8075, %v8071
      %v8077 = vrot.slane %v8076, 4
      %v8079 = vshll.u32 %v7740, 16
      %v8081 = vrot.slane %v8079, 5
      %v8082 = vsel %vm1480, %v8077, %v8081
      %v8084 = vshrl.u32 %v7741, 16
      %v8086 = vrot.slane %v8084, 4
      %v8087 = vshll.u32 %v7741, 16
      %v8089 = vrot.slane %v8087, 5
      %v8090 = vor.u32 %v8086, %v8089
      %v8091 = vrot.slane %v8090, 4
      %v8093 = vshll.u32 %v7742, 16
      %v8095 = vrot.slane %v8093, 5
      %v8096 = vsel %vm1480, %v8091, %v8095
      %v8097 = vshrl.u32 %v7742, 16
      %v8099 = vrot.slane %v8097, 4
      %v8100 = vor.u32 %v8099, %v8095
      %v8101 = vrot.slane %v8100, 4
      %v8103 = vshll.u32 %v7743, 16
      %v8105 = vrot.slane %v8103, 5
      %v8106 = vsel %vm1480, %v8101, %v8105
      %v8108 = vshrl.u32 %v7744, 16
      %v8110 = vrot.slane %v8108, 4
      %v8111 = vshll.u32 %v7744, 16
      %v8113 = vrot.slane %v8111, 5
      %v8114 = vor.u32 %v8110, %v8113
      %v8115 = vrot.slane %v8114, 4
      %v8117 = vshll.u32 %v7745, 16
      %v8119 = vrot.slane %v8117, 5
      %v8120 = vsel %vm1480, %v8115, %v8119
      %v8121 = vshrl.u32 %v7745, 16
      %v8123 = vrot.slane %v8121, 4
      %v8124 = vor.u32 %v8123, %v8119
      %v8125 = vrot.slane %v8124, 4
      %v8127 = vshll.u32 %v7746, 16
      %v8129 = vrot.slane %v8127, 5
      %v8130 = vsel %vm1480, %v8125, %v8129
      %8163 = vst [vmem:[#allocation4 + $0x10] sm:$0xf] %v7760
      %8164 = vst [vmem:[#allocation4 + $0x34] sm:$0xf] %v7770
      %8165 = vst [vmem:[#allocation4 + $0x58] sm:$0xf] %v7784
      %8166 = vst [vmem:[#allocation4 + $0x7c] sm:$0xf] %v7794
      %8167 = vst [vmem:[#allocation4 + $0xa0] sm:$0xf] %v7808
      %8168 = vst [vmem:[#allocation4 + $0xc4] sm:$0xf] %v7818
      %8169 = vst [vmem:[#allocation4 + $0xe8] sm:$0xf] %v7832
      %8170 = vst [vmem:[#allocation4 + $0x10c] sm:$0xf] %v7842
      %8171 = vst [vmem:[#allocation4 + $0x130] sm:$0xf] %v7856
      %8172 = vst [vmem:[#allocation4 + $0x154] sm:$0xf] %v7866
      %8173 = vst [vmem:[#allocation4 + $0x178] sm:$0xf] %v7880
      %8174 = vst [vmem:[#allocation4 + $0x19c] sm:$0xf] %v7890
      %8175 = vst [vmem:[#allocation4 + $0x1c0] sm:$0xf] %v7904
      %8176 = vst [vmem:[#allocation4 + $0x1e4] sm:$0xf] %v7914
      %8177 = vst [vmem:[#allocation4 + $0x208] sm:$0xf] %v7928
      %8178 = vst [vmem:[#allocation4 + $0x22c] sm:$0xf] %v7938
      %8179 = vst [vmem:[#allocation4 + $0x250] sm:$0xf] %v7952
      %8180 = vst [vmem:[#allocation4 + $0x274] sm:$0xf] %v7962
      %8181 = vst [vmem:[#allocation4 + $0x298] sm:$0xf] %v7976
      %8182 = vst [vmem:[#allocation4 + $0x2bc] sm:$0xf] %v7986
      %8183 = vst [vmem:[#allocation4 + $0x2e0] sm:$0xf] %v8000
      %8184 = vst [vmem:[#allocation4 + $0x304] sm:$0xf] %v8010
      %8185 = vst [vmem:[#allocation4 + $0x328] sm:$0xf] %v8024
      %8186 = vst [vmem:[#allocation4 + $0x34c] sm:$0xf] %v8034
      %8187 = vst [vmem:[#allocation4 + $0x370] sm:$0xf] %v8048
      %8188 = vst [vmem:[#allocation4 + $0x394] sm:$0xf] %v8058
      %8189 = vst [vmem:[#allocation4 + $0x3b8] sm:$0xf] %v8072
      %8190 = vst [vmem:[#allocation4 + $0x3dc] sm:$0xf] %v8082
      %8191 = vst [vmem:[#allocation4 + $0x400] sm:$0xf] %v8096
      %8192 = vst [vmem:[#allocation4 + $0x424] sm:$0xf] %v8106
      %8193 = vst [vmem:[#allocation4 + $0x448] sm:$0xf] %v8120
      %8194 = vst [vmem:[#allocation4 + $0x46c] sm:$0xf] %v8130
      %v8195 = vld [vmem:[%s6690] sm:$0xe]
      %v8196 = vld [vmem:[%s6690 + $0x4] sm:$0xf]
      %v8197 = vld [vmem:[%s6690 + $0x8] sm:$0x1]
      %v8198 = vld [vmem:[%s6690 + $0xc] sm:$0xe]
      %v8199 = vld [vmem:[%s6690 + $0x10] sm:$0xf]
      %v8200 = vld [vmem:[%s6690 + $0x14] sm:$0x1]
      %v8201 = vld [vmem:[%s6690 + $0x18] sm:$0xe]
      %v8202 = vld [vmem:[%s6690 + $0x1c] sm:$0xf]
      %v8203 = vld [vmem:[%s6690 + $0x20] sm:$0x1]
      %v8204 = vld [vmem:[%s6690 + $0x24] sm:$0xe]
      %v8205 = vld [vmem:[%s6690 + $0x28] sm:$0xf]
      %v8206 = vld [vmem:[%s6690 + $0x2c] sm:$0x1]
      %v8207 = vld [vmem:[%s6690 + $0x30] sm:$0xe]
      %v8208 = vld [vmem:[%s6690 + $0x34] sm:$0xf]
      %v8209 = vld [vmem:[%s6690 + $0x38] sm:$0x1]
      %v8210 = vld [vmem:[%s6690 + $0x3c] sm:$0xe]
      %v8211 = vld [vmem:[%s6690 + $0x40] sm:$0xf]
      %v8212 = vld [vmem:[%s6690 + $0x44] sm:$0x1]
      %v8213 = vld [vmem:[%s6690 + $0x48] sm:$0xe]
      %v8214 = vld [vmem:[%s6690 + $0x4c] sm:$0xf]
      %v8215 = vld [vmem:[%s6690 + $0x50] sm:$0x1]
      %v8216 = vld [vmem:[%s6690 + $0x54] sm:$0xe]
      %v8217 = vld [vmem:[%s6690 + $0x58] sm:$0xf]
      %v8218 = vld [vmem:[%s6690 + $0x5c] sm:$0x1]
      %v8219 = vld [vmem:[%s6690 + $0x60] sm:$0xe]
      %v8220 = vld [vmem:[%s6690 + $0x64] sm:$0xf]
      %v8221 = vld [vmem:[%s6690 + $0x68] sm:$0x1]
      %v8222 = vld [vmem:[%s6690 + $0x6c] sm:$0xe]
      %v8223 = vld [vmem:[%s6690 + $0x70] sm:$0xf]
      %v8224 = vld [vmem:[%s6690 + $0x74] sm:$0x1]
      %v8225 = vld [vmem:[%s6690 + $0x78] sm:$0xe]
      %v8226 = vld [vmem:[%s6690 + $0x7c] sm:$0xf]
      %v8227 = vld [vmem:[%s6690 + $0x80] sm:$0x1]
      %v8228 = vld [vmem:[%s6690 + $0x84] sm:$0xe]
      %v8229 = vld [vmem:[%s6690 + $0x88] sm:$0xf]
      %v8230 = vld [vmem:[%s6690 + $0x8c] sm:$0x1]
      %v8231 = vld [vmem:[%s6690 + $0x90] sm:$0xe]
      %v8232 = vld [vmem:[%s6690 + $0x94] sm:$0xf]
      %v8233 = vld [vmem:[%s6690 + $0x98] sm:$0x1]
      %v8234 = vld [vmem:[%s6690 + $0x9c] sm:$0xe]
      %v8235 = vld [vmem:[%s6690 + $0xa0] sm:$0xf]
      %v8236 = vld [vmem:[%s6690 + $0xa4] sm:$0x1]
      %v8237 = vld [vmem:[%s6690 + $0xa8] sm:$0xe]
      %v8238 = vld [vmem:[%s6690 + $0xac] sm:$0xf]
      %v8239 = vld [vmem:[%s6690 + $0xb0] sm:$0x1]
      %v8240 = vld [vmem:[%s6690 + $0xb4] sm:$0xe]
      %v8241 = vld [vmem:[%s6690 + $0xb8] sm:$0xf]
      %v8242 = vld [vmem:[%s6690 + $0xbc] sm:$0x1]
      %v8291 = vrot.slane %v8195, 5
      %v8292 = vrot.slane %v8291, 4
      %v8293 = vrot.slane %v8196, 5
      %v8294 = vsel %vm2027, %v8292, %v8293
      %v8295 = vrot.slane %v8293, 4
      %v8296 = vrot.slane %v8197, 5
      %v8297 = vsel %vm2027, %v8295, %v8296
      %v8298 = vrot.slane %v8198, 5
      %v8299 = vrot.slane %v8298, 4
      %v8300 = vrot.slane %v8199, 5
      %v8301 = vsel %vm2027, %v8299, %v8300
      %v8302 = vrot.slane %v8300, 4
      %v8303 = vrot.slane %v8200, 5
      %v8304 = vsel %vm2027, %v8302, %v8303
      %v8305 = vrot.slane %v8201, 5
      %v8306 = vrot.slane %v8305, 4
      %v8307 = vrot.slane %v8202, 5
      %v8308 = vsel %vm2027, %v8306, %v8307
      %v8309 = vrot.slane %v8307, 4
      %v8310 = vrot.slane %v8203, 5
      %v8311 = vsel %vm2027, %v8309, %v8310
      %v8312 = vrot.slane %v8204, 5
      %v8313 = vrot.slane %v8312, 4
      %v8314 = vrot.slane %v8205, 5
      %v8315 = vsel %vm2027, %v8313, %v8314
      %v8316 = vrot.slane %v8314, 4
      %v8317 = vrot.slane %v8206, 5
      %v8318 = vsel %vm2027, %v8316, %v8317
      %v8319 = vrot.slane %v8207, 5
      %v8320 = vrot.slane %v8319, 4
      %v8321 = vrot.slane %v8208, 5
      %v8322 = vsel %vm2027, %v8320, %v8321
      %v8323 = vrot.slane %v8321, 4
      %v8324 = vrot.slane %v8209, 5
      %v8325 = vsel %vm2027, %v8323, %v8324
      %v8326 = vrot.slane %v8210, 5
      %v8327 = vrot.slane %v8326, 4
      %v8328 = vrot.slane %v8211, 5
      %v8329 = vsel %vm2027, %v8327, %v8328
      %v8330 = vrot.slane %v8328, 4
      %v8331 = vrot.slane %v8212, 5
      %v8332 = vsel %vm2027, %v8330, %v8331
      %v8333 = vrot.slane %v8213, 5
      %v8334 = vrot.slane %v8333, 4
      %v8335 = vrot.slane %v8214, 5
      %v8336 = vsel %vm2027, %v8334, %v8335
      %v8337 = vrot.slane %v8335, 4
      %v8338 = vrot.slane %v8215, 5
      %v8339 = vsel %vm2027, %v8337, %v8338
      %v8340 = vrot.slane %v8216, 5
      %v8341 = vrot.slane %v8340, 4
      %v8342 = vrot.slane %v8217, 5
      %v8343 = vsel %vm2027, %v8341, %v8342
      %v8344 = vrot.slane %v8342, 4
      %v8345 = vrot.slane %v8218, 5
      %v8346 = vsel %vm2027, %v8344, %v8345
      %v8347 = vrot.slane %v8219, 5
      %v8348 = vrot.slane %v8347, 4
      %v8349 = vrot.slane %v8220, 5
      %v8350 = vsel %vm2027, %v8348, %v8349
      %v8351 = vrot.slane %v8349, 4
      %v8352 = vrot.slane %v8221, 5
      %v8353 = vsel %vm2027, %v8351, %v8352
      %v8354 = vrot.slane %v8222, 5
      %v8355 = vrot.slane %v8354, 4
      %v8356 = vrot.slane %v8223, 5
      %v8357 = vsel %vm2027, %v8355, %v8356
      %v8358 = vrot.slane %v8356, 4
      %v8359 = vrot.slane %v8224, 5
      %v8360 = vsel %vm2027, %v8358, %v8359
      %v8361 = vrot.slane %v8225, 5
      %v8362 = vrot.slane %v8361, 4
      %v8363 = vrot.slane %v8226, 5
      %v8364 = vsel %vm2027, %v8362, %v8363
      %v8365 = vrot.slane %v8363, 4
      %v8366 = vrot.slane %v8227, 5
      %v8367 = vsel %vm2027, %v8365, %v8366
      %v8368 = vrot.slane %v8228, 5
      %v8369 = vrot.slane %v8368, 4
      %v8370 = vrot.slane %v8229, 5
      %v8371 = vsel %vm2027, %v8369, %v8370
      %v8372 = vrot.slane %v8370, 4
      %v8373 = vrot.slane %v8230, 5
      %v8374 = vsel %vm2027, %v8372, %v8373
      %v8375 = vrot.slane %v8231, 5
      %v8376 = vrot.slane %v8375, 4
      %v8377 = vrot.slane %v8232, 5
      %v8378 = vsel %vm2027, %v8376, %v8377
      %v8379 = vrot.slane %v8377, 4
      %v8380 = vrot.slane %v8233, 5
      %v8381 = vsel %vm2027, %v8379, %v8380
      %v8382 = vrot.slane %v8234, 5
      %v8383 = vrot.slane %v8382, 4
      %v8384 = vrot.slane %v8235, 5
      %v8385 = vsel %vm2027, %v8383, %v8384
      %v8386 = vrot.slane %v8384, 4
      %v8387 = vrot.slane %v8236, 5
      %v8388 = vsel %vm2027, %v8386, %v8387
      %v8389 = vrot.slane %v8237, 5
      %v8390 = vrot.slane %v8389, 4
      %v8391 = vrot.slane %v8238, 5
      %v8392 = vsel %vm2027, %v8390, %v8391
      %v8393 = vrot.slane %v8391, 4
      %v8394 = vrot.slane %v8239, 5
      %v8395 = vsel %vm2027, %v8393, %v8394
      %v8396 = vrot.slane %v8240, 5
      %v8397 = vrot.slane %v8396, 4
      %v8398 = vrot.slane %v8241, 5
      %v8399 = vsel %vm2027, %v8397, %v8398
      %v8400 = vrot.slane %v8398, 4
      %v8401 = vrot.slane %v8242, 5
      %v8402 = vsel %vm2027, %v8400, %v8401
      %8435 = vst [vmem:[#allocation4 + $0x14] sm:$0xf] %v8294
      %8436 = vst [vmem:[#allocation4 + $0x38] sm:$0xf] %v8297
      %8437 = vst [vmem:[#allocation4 + $0x5c] sm:$0xf] %v8301
      %8438 = vst [vmem:[#allocation4 + $0x80] sm:$0xf] %v8304
      %8439 = vst [vmem:[#allocation4 + $0xa4] sm:$0xf] %v8308
      %8440 = vst [vmem:[#allocation4 + $0xc8] sm:$0xf] %v8311
      %8441 = vst [vmem:[#allocation4 + $0xec] sm:$0xf] %v8315
      %8442 = vst [vmem:[#allocation4 + $0x110] sm:$0xf] %v8318
      %8443 = vst [vmem:[#allocation4 + $0x134] sm:$0xf] %v8322
      %8444 = vst [vmem:[#allocation4 + $0x158] sm:$0xf] %v8325
      %8445 = vst [vmem:[#allocation4 + $0x17c] sm:$0xf] %v8329
      %8446 = vst [vmem:[#allocation4 + $0x1a0] sm:$0xf] %v8332
      %8447 = vst [vmem:[#allocation4 + $0x1c4] sm:$0xf] %v8336
      %8448 = vst [vmem:[#allocation4 + $0x1e8] sm:$0xf] %v8339
      %8449 = vst [vmem:[#allocation4 + $0x20c] sm:$0xf] %v8343
      %8450 = vst [vmem:[#allocation4 + $0x230] sm:$0xf] %v8346
      %8451 = vst [vmem:[#allocation4 + $0x254] sm:$0xf] %v8350
      %8452 = vst [vmem:[#allocation4 + $0x278] sm:$0xf] %v8353
      %8453 = vst [vmem:[#allocation4 + $0x29c] sm:$0xf] %v8357
      %8454 = vst [vmem:[#allocation4 + $0x2c0] sm:$0xf] %v8360
      %8455 = vst [vmem:[#allocation4 + $0x2e4] sm:$0xf] %v8364
      %8456 = vst [vmem:[#allocation4 + $0x308] sm:$0xf] %v8367
      %8457 = vst [vmem:[#allocation4 + $0x32c] sm:$0xf] %v8371
      %8458 = vst [vmem:[#allocation4 + $0x350] sm:$0xf] %v8374
      %8459 = vst [vmem:[#allocation4 + $0x374] sm:$0xf] %v8378
      %8460 = vst [vmem:[#allocation4 + $0x398] sm:$0xf] %v8381
      %8461 = vst [vmem:[#allocation4 + $0x3bc] sm:$0xf] %v8385
      %8462 = vst [vmem:[#allocation4 + $0x3e0] sm:$0xf] %v8388
      %8463 = vst [vmem:[#allocation4 + $0x404] sm:$0xf] %v8392
      %8464 = vst [vmem:[#allocation4 + $0x428] sm:$0xf] %v8395
      %8465 = vst [vmem:[#allocation4 + $0x44c] sm:$0xf] %v8399
      %8466 = vst [vmem:[#allocation4 + $0x470] sm:$0xf] %v8402
      %s8467 = scalar_lea.vmem [#allocation3], 24
      %v8468 = vld [vmem:[%s8467] sm:$0xf]
      %v8469 = vld [vmem:[%s8467 + $0x4] sm:$0xf]
      %v8470 = vld [vmem:[%s8467 + $0xc] sm:$0xf]
      %v8471 = vld [vmem:[%s8467 + $0x10] sm:$0xf]
      %v8472 = vld [vmem:[%s8467 + $0x18] sm:$0xf]
      %v8473 = vld [vmem:[%s8467 + $0x1c] sm:$0xf]
      %v8474 = vld [vmem:[%s8467 + $0x24] sm:$0xf]
      %v8475 = vld [vmem:[%s8467 + $0x28] sm:$0xf]
      %v8476 = vld [vmem:[%s8467 + $0x30] sm:$0xf]
      %v8477 = vld [vmem:[%s8467 + $0x34] sm:$0xf]
      %v8478 = vld [vmem:[%s8467 + $0x3c] sm:$0xf]
      %v8479 = vld [vmem:[%s8467 + $0x40] sm:$0xf]
      %v8480 = vld [vmem:[%s8467 + $0x48] sm:$0xf]
      %v8481 = vld [vmem:[%s8467 + $0x4c] sm:$0xf]
      %v8482 = vld [vmem:[%s8467 + $0x54] sm:$0xf]
      %v8483 = vld [vmem:[%s8467 + $0x58] sm:$0xf]
      %v8484 = vld [vmem:[%s8467 + $0x60] sm:$0xf]
      %v8485 = vld [vmem:[%s8467 + $0x64] sm:$0xf]
      %v8486 = vld [vmem:[%s8467 + $0x6c] sm:$0xf]
      %v8487 = vld [vmem:[%s8467 + $0x70] sm:$0xf]
      %v8488 = vld [vmem:[%s8467 + $0x78] sm:$0xf]
      %v8489 = vld [vmem:[%s8467 + $0x7c] sm:$0xf]
      %v8490 = vld [vmem:[%s8467 + $0x84] sm:$0xf]
      %v8491 = vld [vmem:[%s8467 + $0x88] sm:$0xf]
      %v8492 = vld [vmem:[%s8467 + $0x90] sm:$0xf]
      %v8493 = vld [vmem:[%s8467 + $0x94] sm:$0xf]
      %v8494 = vld [vmem:[%s8467 + $0x9c] sm:$0xf]
      %v8495 = vld [vmem:[%s8467 + $0xa0] sm:$0xf]
      %v8496 = vld [vmem:[%s8467 + $0xa8] sm:$0xf]
      %v8497 = vld [vmem:[%s8467 + $0xac] sm:$0xf]
      %v8498 = vld [vmem:[%s8467 + $0xb4] sm:$0xf]
      %v8499 = vld [vmem:[%s8467 + $0xb8] sm:$0xf]
      %8500 = vst [vmem:[#allocation4 + $0x18] sm:$0xf] %v8468
      %8501 = vst [vmem:[#allocation4 + $0x3c] sm:$0xf] %v8469
      %8502 = vst [vmem:[#allocation4 + $0x60] sm:$0xf] %v8470
      %8503 = vst [vmem:[#allocation4 + $0x84] sm:$0xf] %v8471
      %8504 = vst [vmem:[#allocation4 + $0xa8] sm:$0xf] %v8472
      %8505 = vst [vmem:[#allocation4 + $0xcc] sm:$0xf] %v8473
      %8506 = vst [vmem:[#allocation4 + $0xf0] sm:$0xf] %v8474
      %8507 = vst [vmem:[#allocation4 + $0x114] sm:$0xf] %v8475
      %8508 = vst [vmem:[#allocation4 + $0x138] sm:$0xf] %v8476
      %8509 = vst [vmem:[#allocation4 + $0x15c] sm:$0xf] %v8477
      %8510 = vst [vmem:[#allocation4 + $0x180] sm:$0xf] %v8478
      %8511 = vst [vmem:[#allocation4 + $0x1a4] sm:$0xf] %v8479
      %8512 = vst [vmem:[#allocation4 + $0x1c8] sm:$0xf] %v8480
      %8513 = vst [vmem:[#allocation4 + $0x1ec] sm:$0xf] %v8481
      %8514 = vst [vmem:[#allocation4 + $0x210] sm:$0xf] %v8482
      %8515 = vst [vmem:[#allocation4 + $0x234] sm:$0xf] %v8483
      %8516 = vst [vmem:[#allocation4 + $0x258] sm:$0xf] %v8484
      %8517 = vst [vmem:[#allocation4 + $0x27c] sm:$0xf] %v8485
      %8518 = vst [vmem:[#allocation4 + $0x2a0] sm:$0xf] %v8486
      %8519 = vst [vmem:[#allocation4 + $0x2c4] sm:$0xf] %v8487
      %8520 = vst [vmem:[#allocation4 + $0x2e8] sm:$0xf] %v8488
      %8521 = vst [vmem:[#allocation4 + $0x30c] sm:$0xf] %v8489
      %8522 = vst [vmem:[#allocation4 + $0x330] sm:$0xf] %v8490
      %8523 = vst [vmem:[#allocation4 + $0x354] sm:$0xf] %v8491
      %8524 = vst [vmem:[#allocation4 + $0x378] sm:$0xf] %v8492
      %8525 = vst [vmem:[#allocation4 + $0x39c] sm:$0xf] %v8493
      %8526 = vst [vmem:[#allocation4 + $0x3c0] sm:$0xf] %v8494
      %8527 = vst [vmem:[#allocation4 + $0x3e4] sm:$0xf] %v8495
      %8528 = vst [vmem:[#allocation4 + $0x408] sm:$0xf] %v8496
      %8529 = vst [vmem:[#allocation4 + $0x42c] sm:$0xf] %v8497
      %8530 = vst [vmem:[#allocation4 + $0x450] sm:$0xf] %v8498
      %8531 = vst [vmem:[#allocation4 + $0x474] sm:$0xf] %v8499
      %v8532 = vld [vmem:[%s8467] sm:$0xf]
      %v8533 = vld [vmem:[%s8467 + $0x4] sm:$0xf]
      %v8534 = vld [vmem:[%s8467 + $0x8] sm:$0x1]
      %v8535 = vld [vmem:[%s8467 + $0xc] sm:$0xf]
      %v8536 = vld [vmem:[%s8467 + $0x10] sm:$0xf]
      %v8537 = vld [vmem:[%s8467 + $0x14] sm:$0x1]
      %v8538 = vld [vmem:[%s8467 + $0x18] sm:$0xf]
      %v8539 = vld [vmem:[%s8467 + $0x1c] sm:$0xf]
      %v8540 = vld [vmem:[%s8467 + $0x20] sm:$0x1]
      %v8541 = vld [vmem:[%s8467 + $0x24] sm:$0xf]
      %v8542 = vld [vmem:[%s8467 + $0x28] sm:$0xf]
      %v8543 = vld [vmem:[%s8467 + $0x2c] sm:$0x1]
      %v8544 = vld [vmem:[%s8467 + $0x30] sm:$0xf]
      %v8545 = vld [vmem:[%s8467 + $0x34] sm:$0xf]
      %v8546 = vld [vmem:[%s8467 + $0x38] sm:$0x1]
      %v8547 = vld [vmem:[%s8467 + $0x3c] sm:$0xf]
      %v8548 = vld [vmem:[%s8467 + $0x40] sm:$0xf]
      %v8549 = vld [vmem:[%s8467 + $0x44] sm:$0x1]
      %v8550 = vld [vmem:[%s8467 + $0x48] sm:$0xf]
      %v8551 = vld [vmem:[%s8467 + $0x4c] sm:$0xf]
      %v8552 = vld [vmem:[%s8467 + $0x50] sm:$0x1]
      %v8553 = vld [vmem:[%s8467 + $0x54] sm:$0xf]
      %v8554 = vld [vmem:[%s8467 + $0x58] sm:$0xf]
      %v8555 = vld [vmem:[%s8467 + $0x5c] sm:$0x1]
      %v8556 = vld [vmem:[%s8467 + $0x60] sm:$0xf]
      %v8557 = vld [vmem:[%s8467 + $0x64] sm:$0xf]
      %v8558 = vld [vmem:[%s8467 + $0x68] sm:$0x1]
      %v8559 = vld [vmem:[%s8467 + $0x6c] sm:$0xf]
      %v8560 = vld [vmem:[%s8467 + $0x70] sm:$0xf]
      %v8561 = vld [vmem:[%s8467 + $0x74] sm:$0x1]
      %v8562 = vld [vmem:[%s8467 + $0x78] sm:$0xf]
      %v8563 = vld [vmem:[%s8467 + $0x7c] sm:$0xf]
      %v8564 = vld [vmem:[%s8467 + $0x80] sm:$0x1]
      %v8565 = vld [vmem:[%s8467 + $0x84] sm:$0xf]
      %v8566 = vld [vmem:[%s8467 + $0x88] sm:$0xf]
      %v8567 = vld [vmem:[%s8467 + $0x8c] sm:$0x1]
      %v8568 = vld [vmem:[%s8467 + $0x90] sm:$0xf]
      %v8569 = vld [vmem:[%s8467 + $0x94] sm:$0xf]
      %v8570 = vld [vmem:[%s8467 + $0x98] sm:$0x1]
      %v8571 = vld [vmem:[%s8467 + $0x9c] sm:$0xf]
      %v8572 = vld [vmem:[%s8467 + $0xa0] sm:$0xf]
      %v8573 = vld [vmem:[%s8467 + $0xa4] sm:$0x1]
      %v8574 = vld [vmem:[%s8467 + $0xa8] sm:$0xf]
      %v8575 = vld [vmem:[%s8467 + $0xac] sm:$0xf]
      %v8576 = vld [vmem:[%s8467 + $0xb0] sm:$0x1]
      %v8577 = vld [vmem:[%s8467 + $0xb4] sm:$0xf]
      %v8578 = vld [vmem:[%s8467 + $0xb8] sm:$0xf]
      %v8579 = vld [vmem:[%s8467 + $0xbc] sm:$0x1]
      %v8581 = vshrl.u32 %v8532, 16
      %v8583 = vrot.slane %v8581, 4
      %v8584 = vshll.u32 %v8532, 16
      %v8586 = vrot.slane %v8584, 5
      %v8587 = vor.u32 %v8583, %v8586
      %v8588 = vrot.slane %v8587, 4
      %v8590 = vshll.u32 %v8533, 16
      %v8592 = vrot.slane %v8590, 5
      %v8593 = vsel %vm1480, %v8588, %v8592
      %v8594 = vshrl.u32 %v8533, 16
      %v8596 = vrot.slane %v8594, 4
      %v8597 = vor.u32 %v8596, %v8592
      %v8598 = vrot.slane %v8597, 4
      %v8600 = vshll.u32 %v8534, 16
      %v8602 = vrot.slane %v8600, 5
      %v8603 = vsel %vm1480, %v8598, %v8602
      %v8605 = vshrl.u32 %v8535, 16
      %v8607 = vrot.slane %v8605, 4
      %v8608 = vshll.u32 %v8535, 16
      %v8610 = vrot.slane %v8608, 5
      %v8611 = vor.u32 %v8607, %v8610
      %v8612 = vrot.slane %v8611, 4
      %v8614 = vshll.u32 %v8536, 16
      %v8616 = vrot.slane %v8614, 5
      %v8617 = vsel %vm1480, %v8612, %v8616
      %v8618 = vshrl.u32 %v8536, 16
      %v8620 = vrot.slane %v8618, 4
      %v8621 = vor.u32 %v8620, %v8616
      %v8622 = vrot.slane %v8621, 4
      %v8624 = vshll.u32 %v8537, 16
      %v8626 = vrot.slane %v8624, 5
      %v8627 = vsel %vm1480, %v8622, %v8626
      %v8629 = vshrl.u32 %v8538, 16
      %v8631 = vrot.slane %v8629, 4
      %v8632 = vshll.u32 %v8538, 16
      %v8634 = vrot.slane %v8632, 5
      %v8635 = vor.u32 %v8631, %v8634
      %v8636 = vrot.slane %v8635, 4
      %v8638 = vshll.u32 %v8539, 16
      %v8640 = vrot.slane %v8638, 5
      %v8641 = vsel %vm1480, %v8636, %v8640
      %v8642 = vshrl.u32 %v8539, 16
      %v8644 = vrot.slane %v8642, 4
      %v8645 = vor.u32 %v8644, %v8640
      %v8646 = vrot.slane %v8645, 4
      %v8648 = vshll.u32 %v8540, 16
      %v8650 = vrot.slane %v8648, 5
      %v8651 = vsel %vm1480, %v8646, %v8650
      %v8653 = vshrl.u32 %v8541, 16
      %v8655 = vrot.slane %v8653, 4
      %v8656 = vshll.u32 %v8541, 16
      %v8658 = vrot.slane %v8656, 5
      %v8659 = vor.u32 %v8655, %v8658
      %v8660 = vrot.slane %v8659, 4
      %v8662 = vshll.u32 %v8542, 16
      %v8664 = vrot.slane %v8662, 5
      %v8665 = vsel %vm1480, %v8660, %v8664
      %v8666 = vshrl.u32 %v8542, 16
      %v8668 = vrot.slane %v8666, 4
      %v8669 = vor.u32 %v8668, %v8664
      %v8670 = vrot.slane %v8669, 4
      %v8672 = vshll.u32 %v8543, 16
      %v8674 = vrot.slane %v8672, 5
      %v8675 = vsel %vm1480, %v8670, %v8674
      %v8677 = vshrl.u32 %v8544, 16
      %v8679 = vrot.slane %v8677, 4
      %v8680 = vshll.u32 %v8544, 16
      %v8682 = vrot.slane %v8680, 5
      %v8683 = vor.u32 %v8679, %v8682
      %v8684 = vrot.slane %v8683, 4
      %v8686 = vshll.u32 %v8545, 16
      %v8688 = vrot.slane %v8686, 5
      %v8689 = vsel %vm1480, %v8684, %v8688
      %v8690 = vshrl.u32 %v8545, 16
      %v8692 = vrot.slane %v8690, 4
      %v8693 = vor.u32 %v8692, %v8688
      %v8694 = vrot.slane %v8693, 4
      %v8696 = vshll.u32 %v8546, 16
      %v8698 = vrot.slane %v8696, 5
      %v8699 = vsel %vm1480, %v8694, %v8698
      %v8701 = vshrl.u32 %v8547, 16
      %v8703 = vrot.slane %v8701, 4
      %v8704 = vshll.u32 %v8547, 16
      %v8706 = vrot.slane %v8704, 5
      %v8707 = vor.u32 %v8703, %v8706
      %v8708 = vrot.slane %v8707, 4
      %v8710 = vshll.u32 %v8548, 16
      %v8712 = vrot.slane %v8710, 5
      %v8713 = vsel %vm1480, %v8708, %v8712
      %v8714 = vshrl.u32 %v8548, 16
      %v8716 = vrot.slane %v8714, 4
      %v8717 = vor.u32 %v8716, %v8712
      %v8718 = vrot.slane %v8717, 4
      %v8720 = vshll.u32 %v8549, 16
      %v8722 = vrot.slane %v8720, 5
      %v8723 = vsel %vm1480, %v8718, %v8722
      %v8725 = vshrl.u32 %v8550, 16
      %v8727 = vrot.slane %v8725, 4
      %v8728 = vshll.u32 %v8550, 16
      %v8730 = vrot.slane %v8728, 5
      %v8731 = vor.u32 %v8727, %v8730
      %v8732 = vrot.slane %v8731, 4
      %v8734 = vshll.u32 %v8551, 16
      %v8736 = vrot.slane %v8734, 5
      %v8737 = vsel %vm1480, %v8732, %v8736
      %v8738 = vshrl.u32 %v8551, 16
      %v8740 = vrot.slane %v8738, 4
      %v8741 = vor.u32 %v8740, %v8736
      %v8742 = vrot.slane %v8741, 4
      %v8744 = vshll.u32 %v8552, 16
      %v8746 = vrot.slane %v8744, 5
      %v8747 = vsel %vm1480, %v8742, %v8746
      %v8749 = vshrl.u32 %v8553, 16
      %v8751 = vrot.slane %v8749, 4
      %v8752 = vshll.u32 %v8553, 16
      %v8754 = vrot.slane %v8752, 5
      %v8755 = vor.u32 %v8751, %v8754
      %v8756 = vrot.slane %v8755, 4
      %v8758 = vshll.u32 %v8554, 16
      %v8760 = vrot.slane %v8758, 5
      %v8761 = vsel %vm1480, %v8756, %v8760
      %v8762 = vshrl.u32 %v8554, 16
      %v8764 = vrot.slane %v8762, 4
      %v8765 = vor.u32 %v8764, %v8760
      %v8766 = vrot.slane %v8765, 4
      %v8768 = vshll.u32 %v8555, 16
      %v8770 = vrot.slane %v8768, 5
      %v8771 = vsel %vm1480, %v8766, %v8770
      %v8773 = vshrl.u32 %v8556, 16
      %v8775 = vrot.slane %v8773, 4
      %v8776 = vshll.u32 %v8556, 16
      %v8778 = vrot.slane %v8776, 5
      %v8779 = vor.u32 %v8775, %v8778
      %v8780 = vrot.slane %v8779, 4
      %v8782 = vshll.u32 %v8557, 16
      %v8784 = vrot.slane %v8782, 5
      %v8785 = vsel %vm1480, %v8780, %v8784
      %v8786 = vshrl.u32 %v8557, 16
      %v8788 = vrot.slane %v8786, 4
      %v8789 = vor.u32 %v8788, %v8784
      %v8790 = vrot.slane %v8789, 4
      %v8792 = vshll.u32 %v8558, 16
      %v8794 = vrot.slane %v8792, 5
      %v8795 = vsel %vm1480, %v8790, %v8794
      %v8797 = vshrl.u32 %v8559, 16
      %v8799 = vrot.slane %v8797, 4
      %v8800 = vshll.u32 %v8559, 16
      %v8802 = vrot.slane %v8800, 5
      %v8803 = vor.u32 %v8799, %v8802
      %v8804 = vrot.slane %v8803, 4
      %v8806 = vshll.u32 %v8560, 16
      %v8808 = vrot.slane %v8806, 5
      %v8809 = vsel %vm1480, %v8804, %v8808
      %v8810 = vshrl.u32 %v8560, 16
      %v8812 = vrot.slane %v8810, 4
      %v8813 = vor.u32 %v8812, %v8808
      %v8814 = vrot.slane %v8813, 4
      %v8816 = vshll.u32 %v8561, 16
      %v8818 = vrot.slane %v8816, 5
      %v8819 = vsel %vm1480, %v8814, %v8818
      %v8821 = vshrl.u32 %v8562, 16
      %v8823 = vrot.slane %v8821, 4
      %v8824 = vshll.u32 %v8562, 16
      %v8826 = vrot.slane %v8824, 5
      %v8827 = vor.u32 %v8823, %v8826
      %v8828 = vrot.slane %v8827, 4
      %v8830 = vshll.u32 %v8563, 16
      %v8832 = vrot.slane %v8830, 5
      %v8833 = vsel %vm1480, %v8828, %v8832
      %v8834 = vshrl.u32 %v8563, 16
      %v8836 = vrot.slane %v8834, 4
      %v8837 = vor.u32 %v8836, %v8832
      %v8838 = vrot.slane %v8837, 4
      %v8840 = vshll.u32 %v8564, 16
      %v8842 = vrot.slane %v8840, 5
      %v8843 = vsel %vm1480, %v8838, %v8842
      %v8845 = vshrl.u32 %v8565, 16
      %v8847 = vrot.slane %v8845, 4
      %v8848 = vshll.u32 %v8565, 16
      %v8850 = vrot.slane %v8848, 5
      %v8851 = vor.u32 %v8847, %v8850
      %v8852 = vrot.slane %v8851, 4
      %v8854 = vshll.u32 %v8566, 16
      %v8856 = vrot.slane %v8854, 5
      %v8857 = vsel %vm1480, %v8852, %v8856
      %v8858 = vshrl.u32 %v8566, 16
      %v8860 = vrot.slane %v8858, 4
      %v8861 = vor.u32 %v8860, %v8856
      %v8862 = vrot.slane %v8861, 4
      %v8864 = vshll.u32 %v8567, 16
      %v8866 = vrot.slane %v8864, 5
      %v8867 = vsel %vm1480, %v8862, %v8866
      %v8869 = vshrl.u32 %v8568, 16
      %v8871 = vrot.slane %v8869, 4
      %v8872 = vshll.u32 %v8568, 16
      %v8874 = vrot.slane %v8872, 5
      %v8875 = vor.u32 %v8871, %v8874
      %v8876 = vrot.slane %v8875, 4
      %v8878 = vshll.u32 %v8569, 16
      %v8880 = vrot.slane %v8878, 5
      %v8881 = vsel %vm1480, %v8876, %v8880
      %v8882 = vshrl.u32 %v8569, 16
      %v8884 = vrot.slane %v8882, 4
      %v8885 = vor.u32 %v8884, %v8880
      %v8886 = vrot.slane %v8885, 4
      %v8888 = vshll.u32 %v8570, 16
      %v8890 = vrot.slane %v8888, 5
      %v8891 = vsel %vm1480, %v8886, %v8890
      %v8893 = vshrl.u32 %v8571, 16
      %v8895 = vrot.slane %v8893, 4
      %v8896 = vshll.u32 %v8571, 16
      %v8898 = vrot.slane %v8896, 5
      %v8899 = vor.u32 %v8895, %v8898
      %v8900 = vrot.slane %v8899, 4
      %v8902 = vshll.u32 %v8572, 16
      %v8904 = vrot.slane %v8902, 5
      %v8905 = vsel %vm1480, %v8900, %v8904
      %v8906 = vshrl.u32 %v8572, 16
      %v8908 = vrot.slane %v8906, 4
      %v8909 = vor.u32 %v8908, %v8904
      %v8910 = vrot.slane %v8909, 4
      %v8912 = vshll.u32 %v8573, 16
      %v8914 = vrot.slane %v8912, 5
      %v8915 = vsel %vm1480, %v8910, %v8914
      %v8917 = vshrl.u32 %v8574, 16
      %v8919 = vrot.slane %v8917, 4
      %v8920 = vshll.u32 %v8574, 16
      %v8922 = vrot.slane %v8920, 5
      %v8923 = vor.u32 %v8919, %v8922
      %v8924 = vrot.slane %v8923, 4
      %v8926 = vshll.u32 %v8575, 16
      %v8928 = vrot.slane %v8926, 5
      %v8929 = vsel %vm1480, %v8924, %v8928
      %v8930 = vshrl.u32 %v8575, 16
      %v8932 = vrot.slane %v8930, 4
      %v8933 = vor.u32 %v8932, %v8928
      %v8934 = vrot.slane %v8933, 4
      %v8936 = vshll.u32 %v8576, 16
      %v8938 = vrot.slane %v8936, 5
      %v8939 = vsel %vm1480, %v8934, %v8938
      %v8941 = vshrl.u32 %v8577, 16
      %v8943 = vrot.slane %v8941, 4
      %v8944 = vshll.u32 %v8577, 16
      %v8946 = vrot.slane %v8944, 5
      %v8947 = vor.u32 %v8943, %v8946
      %v8948 = vrot.slane %v8947, 4
      %v8950 = vshll.u32 %v8578, 16
      %v8952 = vrot.slane %v8950, 5
      %v8953 = vsel %vm1480, %v8948, %v8952
      %v8954 = vshrl.u32 %v8578, 16
      %v8956 = vrot.slane %v8954, 4
      %v8957 = vor.u32 %v8956, %v8952
      %v8958 = vrot.slane %v8957, 4
      %v8960 = vshll.u32 %v8579, 16
      %v8962 = vrot.slane %v8960, 5
      %v8963 = vsel %vm1480, %v8958, %v8962
      %8996 = vst [vmem:[#allocation4 + $0x1c] sm:$0xf] %v8593
      %8997 = vst [vmem:[#allocation4 + $0x40] sm:$0xf] %v8603
      %8998 = vst [vmem:[#allocation4 + $0x64] sm:$0xf] %v8617
      %8999 = vst [vmem:[#allocation4 + $0x88] sm:$0xf] %v8627
      %9000 = vst [vmem:[#allocation4 + $0xac] sm:$0xf] %v8641
      %9001 = vst [vmem:[#allocation4 + $0xd0] sm:$0xf] %v8651
      %9002 = vst [vmem:[#allocation4 + $0xf4] sm:$0xf] %v8665
      %9003 = vst [vmem:[#allocation4 + $0x118] sm:$0xf] %v8675
      %9004 = vst [vmem:[#allocation4 + $0x13c] sm:$0xf] %v8689
      %9005 = vst [vmem:[#allocation4 + $0x160] sm:$0xf] %v8699
      %9006 = vst [vmem:[#allocation4 + $0x184] sm:$0xf] %v8713
      %9007 = vst [vmem:[#allocation4 + $0x1a8] sm:$0xf] %v8723
      %9008 = vst [vmem:[#allocation4 + $0x1cc] sm:$0xf] %v8737
      %9009 = vst [vmem:[#allocation4 + $0x1f0] sm:$0xf] %v8747
      %9010 = vst [vmem:[#allocation4 + $0x214] sm:$0xf] %v8761
      %9011 = vst [vmem:[#allocation4 + $0x238] sm:$0xf] %v8771
      %9012 = vst [vmem:[#allocation4 + $0x25c] sm:$0xf] %v8785
      %9013 = vst [vmem:[#allocation4 + $0x280] sm:$0xf] %v8795
      %9014 = vst [vmem:[#allocation4 + $0x2a4] sm:$0xf] %v8809
      %9015 = vst [vmem:[#allocation4 + $0x2c8] sm:$0xf] %v8819
      %9016 = vst [vmem:[#allocation4 + $0x2ec] sm:$0xf] %v8833
      %9017 = vst [vmem:[#allocation4 + $0x310] sm:$0xf] %v8843
      %9018 = vst [vmem:[#allocation4 + $0x334] sm:$0xf] %v8857
      %9019 = vst [vmem:[#allocation4 + $0x358] sm:$0xf] %v8867
      %9020 = vst [vmem:[#allocation4 + $0x37c] sm:$0xf] %v8881
      %9021 = vst [vmem:[#allocation4 + $0x3a0] sm:$0xf] %v8891
      %9022 = vst [vmem:[#allocation4 + $0x3c4] sm:$0xf] %v8905
      %9023 = vst [vmem:[#allocation4 + $0x3e8] sm:$0xf] %v8915
      %9024 = vst [vmem:[#allocation4 + $0x40c] sm:$0xf] %v8929
      %9025 = vst [vmem:[#allocation4 + $0x430] sm:$0xf] %v8939
      %9026 = vst [vmem:[#allocation4 + $0x454] sm:$0xf] %v8953
      %9027 = vst [vmem:[#allocation4 + $0x478] sm:$0xf] %v8963
      %v9028 = vld [vmem:[%s8467] sm:$0xe]
      %v9029 = vld [vmem:[%s8467 + $0x4] sm:$0xf]
      %v9030 = vld [vmem:[%s8467 + $0x8] sm:$0x1]
      %v9031 = vld [vmem:[%s8467 + $0xc] sm:$0xe]
      %v9032 = vld [vmem:[%s8467 + $0x10] sm:$0xf]
      %v9033 = vld [vmem:[%s8467 + $0x14] sm:$0x1]
      %v9034 = vld [vmem:[%s8467 + $0x18] sm:$0xe]
      %v9035 = vld [vmem:[%s8467 + $0x1c] sm:$0xf]
      %v9036 = vld [vmem:[%s8467 + $0x20] sm:$0x1]
      %v9037 = vld [vmem:[%s8467 + $0x24] sm:$0xe]
      %v9038 = vld [vmem:[%s8467 + $0x28] sm:$0xf]
      %v9039 = vld [vmem:[%s8467 + $0x2c] sm:$0x1]
      %v9040 = vld [vmem:[%s8467 + $0x30] sm:$0xe]
      %v9041 = vld [vmem:[%s8467 + $0x34] sm:$0xf]
      %v9042 = vld [vmem:[%s8467 + $0x38] sm:$0x1]
      %v9043 = vld [vmem:[%s8467 + $0x3c] sm:$0xe]
      %v9044 = vld [vmem:[%s8467 + $0x40] sm:$0xf]
      %v9045 = vld [vmem:[%s8467 + $0x44] sm:$0x1]
      %v9046 = vld [vmem:[%s8467 + $0x48] sm:$0xe]
      %v9047 = vld [vmem:[%s8467 + $0x4c] sm:$0xf]
      %v9048 = vld [vmem:[%s8467 + $0x50] sm:$0x1]
      %v9049 = vld [vmem:[%s8467 + $0x54] sm:$0xe]
      %v9050 = vld [vmem:[%s8467 + $0x58] sm:$0xf]
      %v9051 = vld [vmem:[%s8467 + $0x5c] sm:$0x1]
      %v9052 = vld [vmem:[%s8467 + $0x60] sm:$0xe]
      %v9053 = vld [vmem:[%s8467 + $0x64] sm:$0xf]
      %v9054 = vld [vmem:[%s8467 + $0x68] sm:$0x1]
      %v9055 = vld [vmem:[%s8467 + $0x6c] sm:$0xe]
      %v9056 = vld [vmem:[%s8467 + $0x70] sm:$0xf]
      %v9057 = vld [vmem:[%s8467 + $0x74] sm:$0x1]
      %v9058 = vld [vmem:[%s8467 + $0x78] sm:$0xe]
      %v9059 = vld [vmem:[%s8467 + $0x7c] sm:$0xf]
      %v9060 = vld [vmem:[%s8467 + $0x80] sm:$0x1]
      %v9061 = vld [vmem:[%s8467 + $0x84] sm:$0xe]
      %v9062 = vld [vmem:[%s8467 + $0x88] sm:$0xf]
      %v9063 = vld [vmem:[%s8467 + $0x8c] sm:$0x1]
      %v9064 = vld [vmem:[%s8467 + $0x90] sm:$0xe]
      %v9065 = vld [vmem:[%s8467 + $0x94] sm:$0xf]
      %v9066 = vld [vmem:[%s8467 + $0x98] sm:$0x1]
      %v9067 = vld [vmem:[%s8467 + $0x9c] sm:$0xe]
      %v9068 = vld [vmem:[%s8467 + $0xa0] sm:$0xf]
      %v9069 = vld [vmem:[%s8467 + $0xa4] sm:$0x1]
      %v9070 = vld [vmem:[%s8467 + $0xa8] sm:$0xe]
      %v9071 = vld [vmem:[%s8467 + $0xac] sm:$0xf]
      %v9072 = vld [vmem:[%s8467 + $0xb0] sm:$0x1]
      %v9073 = vld [vmem:[%s8467 + $0xb4] sm:$0xe]
      %v9074 = vld [vmem:[%s8467 + $0xb8] sm:$0xf]
      %v9075 = vld [vmem:[%s8467 + $0xbc] sm:$0x1]
      %v9124 = vrot.slane %v9028, 5
      %v9125 = vrot.slane %v9124, 4
      %v9126 = vrot.slane %v9029, 5
      %v9127 = vsel %vm2027, %v9125, %v9126
      %v9128 = vrot.slane %v9126, 4
      %v9129 = vrot.slane %v9030, 5
      %v9130 = vsel %vm2027, %v9128, %v9129
      %v9131 = vrot.slane %v9031, 5
      %v9132 = vrot.slane %v9131, 4
      %v9133 = vrot.slane %v9032, 5
      %v9134 = vsel %vm2027, %v9132, %v9133
      %v9135 = vrot.slane %v9133, 4
      %v9136 = vrot.slane %v9033, 5
      %v9137 = vsel %vm2027, %v9135, %v9136
      %v9138 = vrot.slane %v9034, 5
      %v9139 = vrot.slane %v9138, 4
      %v9140 = vrot.slane %v9035, 5
      %v9141 = vsel %vm2027, %v9139, %v9140
      %v9142 = vrot.slane %v9140, 4
      %v9143 = vrot.slane %v9036, 5
      %v9144 = vsel %vm2027, %v9142, %v9143
      %v9145 = vrot.slane %v9037, 5
      %v9146 = vrot.slane %v9145, 4
      %v9147 = vrot.slane %v9038, 5
      %v9148 = vsel %vm2027, %v9146, %v9147
      %v9149 = vrot.slane %v9147, 4
      %v9150 = vrot.slane %v9039, 5
      %v9151 = vsel %vm2027, %v9149, %v9150
      %v9152 = vrot.slane %v9040, 5
      %v9153 = vrot.slane %v9152, 4
      %v9154 = vrot.slane %v9041, 5
      %v9155 = vsel %vm2027, %v9153, %v9154
      %v9156 = vrot.slane %v9154, 4
      %v9157 = vrot.slane %v9042, 5
      %v9158 = vsel %vm2027, %v9156, %v9157
      %v9159 = vrot.slane %v9043, 5
      %v9160 = vrot.slane %v9159, 4
      %v9161 = vrot.slane %v9044, 5
      %v9162 = vsel %vm2027, %v9160, %v9161
      %v9163 = vrot.slane %v9161, 4
      %v9164 = vrot.slane %v9045, 5
      %v9165 = vsel %vm2027, %v9163, %v9164
      %v9166 = vrot.slane %v9046, 5
      %v9167 = vrot.slane %v9166, 4
      %v9168 = vrot.slane %v9047, 5
      %v9169 = vsel %vm2027, %v9167, %v9168
      %v9170 = vrot.slane %v9168, 4
      %v9171 = vrot.slane %v9048, 5
      %v9172 = vsel %vm2027, %v9170, %v9171
      %v9173 = vrot.slane %v9049, 5
      %v9174 = vrot.slane %v9173, 4
      %v9175 = vrot.slane %v9050, 5
      %v9176 = vsel %vm2027, %v9174, %v9175
      %v9177 = vrot.slane %v9175, 4
      %v9178 = vrot.slane %v9051, 5
      %v9179 = vsel %vm2027, %v9177, %v9178
      %v9180 = vrot.slane %v9052, 5
      %v9181 = vrot.slane %v9180, 4
      %v9182 = vrot.slane %v9053, 5
      %v9183 = vsel %vm2027, %v9181, %v9182
      %v9184 = vrot.slane %v9182, 4
      %v9185 = vrot.slane %v9054, 5
      %v9186 = vsel %vm2027, %v9184, %v9185
      %v9187 = vrot.slane %v9055, 5
      %v9188 = vrot.slane %v9187, 4
      %v9189 = vrot.slane %v9056, 5
      %v9190 = vsel %vm2027, %v9188, %v9189
      %v9191 = vrot.slane %v9189, 4
      %v9192 = vrot.slane %v9057, 5
      %v9193 = vsel %vm2027, %v9191, %v9192
      %v9194 = vrot.slane %v9058, 5
      %v9195 = vrot.slane %v9194, 4
      %v9196 = vrot.slane %v9059, 5
      %v9197 = vsel %vm2027, %v9195, %v9196
      %v9198 = vrot.slane %v9196, 4
      %v9199 = vrot.slane %v9060, 5
      %v9200 = vsel %vm2027, %v9198, %v9199
      %v9201 = vrot.slane %v9061, 5
      %v9202 = vrot.slane %v9201, 4
      %v9203 = vrot.slane %v9062, 5
      %v9204 = vsel %vm2027, %v9202, %v9203
      %v9205 = vrot.slane %v9203, 4
      %v9206 = vrot.slane %v9063, 5
      %v9207 = vsel %vm2027, %v9205, %v9206
      %v9208 = vrot.slane %v9064, 5
      %v9209 = vrot.slane %v9208, 4
      %v9210 = vrot.slane %v9065, 5
      %v9211 = vsel %vm2027, %v9209, %v9210
      %v9212 = vrot.slane %v9210, 4
      %v9213 = vrot.slane %v9066, 5
      %v9214 = vsel %vm2027, %v9212, %v9213
      %v9215 = vrot.slane %v9067, 5
      %v9216 = vrot.slane %v9215, 4
      %v9217 = vrot.slane %v9068, 5
      %v9218 = vsel %vm2027, %v9216, %v9217
      %v9219 = vrot.slane %v9217, 4
      %v9220 = vrot.slane %v9069, 5
      %v9221 = vsel %vm2027, %v9219, %v9220
      %v9222 = vrot.slane %v9070, 5
      %v9223 = vrot.slane %v9222, 4
      %v9224 = vrot.slane %v9071, 5
      %v9225 = vsel %vm2027, %v9223, %v9224
      %v9226 = vrot.slane %v9224, 4
      %v9227 = vrot.slane %v9072, 5
      %v9228 = vsel %vm2027, %v9226, %v9227
      %v9229 = vrot.slane %v9073, 5
      %v9230 = vrot.slane %v9229, 4
      %v9231 = vrot.slane %v9074, 5
      %v9232 = vsel %vm2027, %v9230, %v9231
      %v9233 = vrot.slane %v9231, 4
      %v9234 = vrot.slane %v9075, 5
      %v9235 = vsel %vm2027, %v9233, %v9234
      %9268 = vst [vmem:[#allocation4 + $0x20] sm:$0xf] %v9127
      %9269 = vst [vmem:[#allocation4 + $0x44] sm:$0xf] %v9130
      %9270 = vst [vmem:[#allocation4 + $0x68] sm:$0xf] %v9134
      %9271 = vst [vmem:[#allocation4 + $0x8c] sm:$0xf] %v9137
      %9272 = vst [vmem:[#allocation4 + $0xb0] sm:$0xf] %v9141
      %9273 = vst [vmem:[#allocation4 + $0xd4] sm:$0xf] %v9144
      %9274 = vst [vmem:[#allocation4 + $0xf8] sm:$0xf] %v9148
      %9275 = vst [vmem:[#allocation4 + $0x11c] sm:$0xf] %v9151
      %9276 = vst [vmem:[#allocation4 + $0x140] sm:$0xf] %v9155
      %9277 = vst [vmem:[#allocation4 + $0x164] sm:$0xf] %v9158
      %9278 = vst [vmem:[#allocation4 + $0x188] sm:$0xf] %v9162
      %9279 = vst [vmem:[#allocation4 + $0x1ac] sm:$0xf] %v9165
      %9280 = vst [vmem:[#allocation4 + $0x1d0] sm:$0xf] %v9169
      %9281 = vst [vmem:[#allocation4 + $0x1f4] sm:$0xf] %v9172
      %9282 = vst [vmem:[#allocation4 + $0x218] sm:$0xf] %v9176
      %9283 = vst [vmem:[#allocation4 + $0x23c] sm:$0xf] %v9179
      %9284 = vst [vmem:[#allocation4 + $0x260] sm:$0xf] %v9183
      %9285 = vst [vmem:[#allocation4 + $0x284] sm:$0xf] %v9186
      %9286 = vst [vmem:[#allocation4 + $0x2a8] sm:$0xf] %v9190
      %9287 = vst [vmem:[#allocation4 + $0x2cc] sm:$0xf] %v9193
      %9288 = vst [vmem:[#allocation4 + $0x2f0] sm:$0xf] %v9197
      %9289 = vst [vmem:[#allocation4 + $0x314] sm:$0xf] %v9200
      %9290 = vst [vmem:[#allocation4 + $0x338] sm:$0xf] %v9204
      %9291 = vst [vmem:[#allocation4 + $0x35c] sm:$0xf] %v9207
      %9292 = vst [vmem:[#allocation4 + $0x380] sm:$0xf] %v9211
      %9293 = vst [vmem:[#allocation4 + $0x3a4] sm:$0xf] %v9214
      %9294 = vst [vmem:[#allocation4 + $0x3c8] sm:$0xf] %v9218
      %9295 = vst [vmem:[#allocation4 + $0x3ec] sm:$0xf] %v9221
      %9296 = vst [vmem:[#allocation4 + $0x410] sm:$0xf] %v9225
      %9297 = vst [vmem:[#allocation4 + $0x434] sm:$0xf] %v9228
      %9298 = vst [vmem:[#allocation4 + $0x458] sm:$0xf] %v9232
      %9299 = vst [vmem:[#allocation4 + $0x47c] sm:$0xf] %v9235
      %v9300 = vld [vmem:[#allocation4] sm:$0xff]
      %v9301 = vld [vmem:[#allocation4 + $0x8] sm:$0xff]
      %v9302 = vld [vmem:[#allocation4 + $0x10] sm:$0xff]
      %v9303 = vld [vmem:[#allocation4 + $0x18] sm:$0xff]
      %v9304 = vld [vmem:[#allocation4 + $0x20] sm:$0xf]
      %v9305 = vld [vmem:[#allocation4 + $0x24] sm:$0xff]
      %v9306 = vld [vmem:[#allocation4 + $0x2c] sm:$0xff]
      %v9307 = vld [vmem:[#allocation4 + $0x34] sm:$0xff]
      %v9308 = vld [vmem:[#allocation4 + $0x3c] sm:$0xff]
      %v9309 = vld [vmem:[#allocation4 + $0x44] sm:$0xf]
      %v9310 = vld [vmem:[#allocation4 + $0x48] sm:$0xff]
      %v9311 = vld [vmem:[#allocation4 + $0x50] sm:$0xff]
      %v9312 = vld [vmem:[#allocation4 + $0x58] sm:$0xff]
      %v9313 = vld [vmem:[#allocation4 + $0x60] sm:$0xff]
      %v9314 = vld [vmem:[#allocation4 + $0x68] sm:$0xf]
      %v9315 = vld [vmem:[#allocation4 + $0x6c] sm:$0xff]
      %v9316 = vld [vmem:[#allocation4 + $0x74] sm:$0xff]
      %v9317 = vld [vmem:[#allocation4 + $0x7c] sm:$0xff]
      %v9318 = vld [vmem:[#allocation4 + $0x84] sm:$0xff]
      %v9319 = vld [vmem:[#allocation4 + $0x8c] sm:$0xf]
      %v9320 = vld [vmem:[#allocation4 + $0x90] sm:$0xff]
      %v9321 = vld [vmem:[#allocation4 + $0x98] sm:$0xff]
      %v9322 = vld [vmem:[#allocation4 + $0xa0] sm:$0xff]
      %v9323 = vld [vmem:[#allocation4 + $0xa8] sm:$0xff]
      %v9324 = vld [vmem:[#allocation4 + $0xb0] sm:$0xf]
      %v9325 = vld [vmem:[#allocation4 + $0xb4] sm:$0xff]
      %v9326 = vld [vmem:[#allocation4 + $0xbc] sm:$0xff]
      %v9327 = vld [vmem:[#allocation4 + $0xc4] sm:$0xff]
      %v9328 = vld [vmem:[#allocation4 + $0xcc] sm:$0xff]
      %v9329 = vld [vmem:[#allocation4 + $0xd4] sm:$0xf]
      %v9330 = vld [vmem:[#allocation4 + $0xd8] sm:$0xff]
      %v9331 = vld [vmem:[#allocation4 + $0xe0] sm:$0xff]
      %v9332 = vld [vmem:[#allocation4 + $0xe8] sm:$0xff]
      %v9333 = vld [vmem:[#allocation4 + $0xf0] sm:$0xff]
      %v9334 = vld [vmem:[#allocation4 + $0xf8] sm:$0xf]
      %v9335 = vld [vmem:[#allocation4 + $0xfc] sm:$0xff]
      %v9336 = vld [vmem:[#allocation4 + $0x104] sm:$0xff]
      %v9337 = vld [vmem:[#allocation4 + $0x10c] sm:$0xff]
      %v9338 = vld [vmem:[#allocation4 + $0x114] sm:$0xff]
      %v9339 = vld [vmem:[#allocation4 + $0x11c] sm:$0xf]
      %v9340 = vld [vmem:[#allocation4 + $0x120] sm:$0xff]
      %v9341 = vld [vmem:[#allocation4 + $0x128] sm:$0xff]
      %v9342 = vld [vmem:[#allocation4 + $0x130] sm:$0xff]
      %v9343 = vld [vmem:[#allocation4 + $0x138] sm:$0xff]
      %v9344 = vld [vmem:[#allocation4 + $0x140] sm:$0xf]
      %v9345 = vld [vmem:[#allocation4 + $0x144] sm:$0xff]
      %v9346 = vld [vmem:[#allocation4 + $0x14c] sm:$0xff]
      %v9347 = vld [vmem:[#allocation4 + $0x154] sm:$0xff]
      %v9348 = vld [vmem:[#allocation4 + $0x15c] sm:$0xff]
      %v9349 = vld [vmem:[#allocation4 + $0x164] sm:$0xf]
      %v9350 = vld [vmem:[#allocation4 + $0x168] sm:$0xff]
      %v9351 = vld [vmem:[#allocation4 + $0x170] sm:$0xff]
      %v9352 = vld [vmem:[#allocation4 + $0x178] sm:$0xff]
      %v9353 = vld [vmem:[#allocation4 + $0x180] sm:$0xff]
      %v9354 = vld [vmem:[#allocation4 + $0x188] sm:$0xf]
      %v9355 = vld [vmem:[#allocation4 + $0x18c] sm:$0xff]
      %v9356 = vld [vmem:[#allocation4 + $0x194] sm:$0xff]
      %v9357 = vld [vmem:[#allocation4 + $0x19c] sm:$0xff]
      %v9358 = vld [vmem:[#allocation4 + $0x1a4] sm:$0xff]
      %v9359 = vld [vmem:[#allocation4 + $0x1ac] sm:$0xf]
      %v9360 = vld [vmem:[#allocation4 + $0x1b0] sm:$0xff]
      %v9361 = vld [vmem:[#allocation4 + $0x1b8] sm:$0xff]
      %v9362 = vld [vmem:[#allocation4 + $0x1c0] sm:$0xff]
      %v9363 = vld [vmem:[#allocation4 + $0x1c8] sm:$0xff]
      %v9364 = vld [vmem:[#allocation4 + $0x1d0] sm:$0xf]
      %v9365 = vld [vmem:[#allocation4 + $0x1d4] sm:$0xff]
      %v9366 = vld [vmem:[#allocation4 + $0x1dc] sm:$0xff]
      %v9367 = vld [vmem:[#allocation4 + $0x1e4] sm:$0xff]
      %v9368 = vld [vmem:[#allocation4 + $0x1ec] sm:$0xff]
      %v9369 = vld [vmem:[#allocation4 + $0x1f4] sm:$0xf]
      %v9370 = vld [vmem:[#allocation4 + $0x1f8] sm:$0xff]
      %v9371 = vld [vmem:[#allocation4 + $0x200] sm:$0xff]
      %v9372 = vld [vmem:[#allocation4 + $0x208] sm:$0xff]
      %v9373 = vld [vmem:[#allocation4 + $0x210] sm:$0xff]
      %v9374 = vld [vmem:[#allocation4 + $0x218] sm:$0xf]
      %v9375 = vld [vmem:[#allocation4 + $0x21c] sm:$0xff]
      %v9376 = vld [vmem:[#allocation4 + $0x224] sm:$0xff]
      %v9377 = vld [vmem:[#allocation4 + $0x22c] sm:$0xff]
      %v9378 = vld [vmem:[#allocation4 + $0x234] sm:$0xff]
      %v9379 = vld [vmem:[#allocation4 + $0x23c] sm:$0xf]
      %v9380 = vld [vmem:[#allocation4 + $0x240] sm:$0xff]
      %v9381 = vld [vmem:[#allocation4 + $0x248] sm:$0xff]
      %v9382 = vld [vmem:[#allocation4 + $0x250] sm:$0xff]
      %v9383 = vld [vmem:[#allocation4 + $0x258] sm:$0xff]
      %v9384 = vld [vmem:[#allocation4 + $0x260] sm:$0xf]
      %v9385 = vld [vmem:[#allocation4 + $0x264] sm:$0xff]
      %v9386 = vld [vmem:[#allocation4 + $0x26c] sm:$0xff]
      %v9387 = vld [vmem:[#allocation4 + $0x274] sm:$0xff]
      %v9388 = vld [vmem:[#allocation4 + $0x27c] sm:$0xff]
      %v9389 = vld [vmem:[#allocation4 + $0x284] sm:$0xf]
      %v9390 = vld [vmem:[#allocation4 + $0x288] sm:$0xff]
      %v9391 = vld [vmem:[#allocation4 + $0x290] sm:$0xff]
      %v9392 = vld [vmem:[#allocation4 + $0x298] sm:$0xff]
      %v9393 = vld [vmem:[#allocation4 + $0x2a0] sm:$0xff]
      %v9394 = vld [vmem:[#allocation4 + $0x2a8] sm:$0xf]
      %v9395 = vld [vmem:[#allocation4 + $0x2ac] sm:$0xff]
      %v9396 = vld [vmem:[#allocation4 + $0x2b4] sm:$0xff]
      %v9397 = vld [vmem:[#allocation4 + $0x2bc] sm:$0xff]
      %v9398 = vld [vmem:[#allocation4 + $0x2c4] sm:$0xff]
      %v9399 = vld [vmem:[#allocation4 + $0x2cc] sm:$0xf]
      %v9400 = vld [vmem:[#allocation4 + $0x2d0] sm:$0xff]
      %v9401 = vld [vmem:[#allocation4 + $0x2d8] sm:$0xff]
      %v9402 = vld [vmem:[#allocation4 + $0x2e0] sm:$0xff]
      %v9403 = vld [vmem:[#allocation4 + $0x2e8] sm:$0xff]
      %v9404 = vld [vmem:[#allocation4 + $0x2f0] sm:$0xf]
      %v9405 = vld [vmem:[#allocation4 + $0x2f4] sm:$0xff]
      %v9406 = vld [vmem:[#allocation4 + $0x2fc] sm:$0xff]
      %v9407 = vld [vmem:[#allocation4 + $0x304] sm:$0xff]
      %v9408 = vld [vmem:[#allocation4 + $0x30c] sm:$0xff]
      %v9409 = vld [vmem:[#allocation4 + $0x314] sm:$0xf]
      %v9410 = vld [vmem:[#allocation4 + $0x318] sm:$0xff]
      %v9411 = vld [vmem:[#allocation4 + $0x320] sm:$0xff]
      %v9412 = vld [vmem:[#allocation4 + $0x328] sm:$0xff]
      %v9413 = vld [vmem:[#allocation4 + $0x330] sm:$0xff]
      %v9414 = vld [vmem:[#allocation4 + $0x338] sm:$0xf]
      %v9415 = vld [vmem:[#allocation4 + $0x33c] sm:$0xff]
      %v9416 = vld [vmem:[#allocation4 + $0x344] sm:$0xff]
      %v9417 = vld [vmem:[#allocation4 + $0x34c] sm:$0xff]
      %v9418 = vld [vmem:[#allocation4 + $0x354] sm:$0xff]
      %v9419 = vld [vmem:[#allocation4 + $0x35c] sm:$0xf]
      %v9420 = vld [vmem:[#allocation4 + $0x360] sm:$0xff]
      %v9421 = vld [vmem:[#allocation4 + $0x368] sm:$0xff]
      %v9422 = vld [vmem:[#allocation4 + $0x370] sm:$0xff]
      %v9423 = vld [vmem:[#allocation4 + $0x378] sm:$0xff]
      %v9424 = vld [vmem:[#allocation4 + $0x380] sm:$0xf]
      %v9425 = vld [vmem:[#allocation4 + $0x384] sm:$0xff]
      %v9426 = vld [vmem:[#allocation4 + $0x38c] sm:$0xff]
      %v9427 = vld [vmem:[#allocation4 + $0x394] sm:$0xff]
      %v9428 = vld [vmem:[#allocation4 + $0x39c] sm:$0xff]
      %v9429 = vld [vmem:[#allocation4 + $0x3a4] sm:$0xf]
      %v9430 = vld [vmem:[#allocation4 + $0x3a8] sm:$0xff]
      %v9431 = vld [vmem:[#allocation4 + $0x3b0] sm:$0xff]
      %v9432 = vld [vmem:[#allocation4 + $0x3b8] sm:$0xff]
      %v9433 = vld [vmem:[#allocation4 + $0x3c0] sm:$0xff]
      %v9434 = vld [vmem:[#allocation4 + $0x3c8] sm:$0xf]
      %v9435 = vld [vmem:[#allocation4 + $0x3cc] sm:$0xff]
      %v9436 = vld [vmem:[#allocation4 + $0x3d4] sm:$0xff]
      %v9437 = vld [vmem:[#allocation4 + $0x3dc] sm:$0xff]
      %v9438 = vld [vmem:[#allocation4 + $0x3e4] sm:$0xff]
      %v9439 = vld [vmem:[#allocation4 + $0x3ec] sm:$0xf]
      %v9440 = vld [vmem:[#allocation4 + $0x3f0] sm:$0xff]
      %v9441 = vld [vmem:[#allocation4 + $0x3f8] sm:$0xff]
      %v9442 = vld [vmem:[#allocation4 + $0x400] sm:$0xff]
      %v9443 = vld [vmem:[#allocation4 + $0x408] sm:$0xff]
      %v9444 = vld [vmem:[#allocation4 + $0x410] sm:$0xf]
      %v9445 = vld [vmem:[#allocation4 + $0x414] sm:$0xff]
      %v9446 = vld [vmem:[#allocation4 + $0x41c] sm:$0xff]
      %v9447 = vld [vmem:[#allocation4 + $0x424] sm:$0xff]
      %v9448 = vld [vmem:[#allocation4 + $0x42c] sm:$0xff]
      %v9449 = vld [vmem:[#allocation4 + $0x434] sm:$0xf]
      %v9450 = vld [vmem:[#allocation4 + $0x438] sm:$0xff]
      %v9451 = vld [vmem:[#allocation4 + $0x440] sm:$0xff]
      %v9452 = vld [vmem:[#allocation4 + $0x448] sm:$0xff]
      %v9453 = vld [vmem:[#allocation4 + $0x450] sm:$0xff]
      %v9454 = vld [vmem:[#allocation4 + $0x458] sm:$0xf]
      %v9455 = vld [vmem:[#allocation4 + $0x45c] sm:$0xff]
      %v9456 = vld [vmem:[#allocation4 + $0x464] sm:$0xff]
      %v9457 = vld [vmem:[#allocation4 + $0x46c] sm:$0xff]
      %v9458 = vld [vmem:[#allocation4 + $0x474] sm:$0xff]
      %v9459 = vld [vmem:[#allocation4 + $0x47c] sm:$0xf]
      %v9460 = vld [vmem:[%s5] sm:$0xf]
      %v9461 = vld [vmem:[%s5 + $0x4] sm:$0xf]
      %v9462 = vld [vmem:[%s5 + $0x8] sm:$0xf]
      %v9463 = vld [vmem:[%s5 + $0xc] sm:$0xf]
      %v9464 = vld [vmem:[%s5 + $0x10] sm:$0xf]
      %v9465 = vld [vmem:[%s5 + $0x14] sm:$0xf]
      %v9466 = vld [vmem:[%s5 + $0x18] sm:$0xf]
      %v9467 = vld [vmem:[%s5 + $0x1c] sm:$0xf]
      %v9468 = vld [vmem:[%s5 + $0x20] sm:$0xf]
      %v9469 = vld [vmem:[%s5 + $0x24] sm:$0xf]
      %v9470 = vld [vmem:[%s5 + $0x28] sm:$0xf]
      %v9471 = vld [vmem:[%s5 + $0x2c] sm:$0xf]
      %v9472 = vld [vmem:[%s5 + $0x30] sm:$0xf]
      %v9473 = vld [vmem:[%s5 + $0x34] sm:$0xf]
      %v9474 = vld [vmem:[%s5 + $0x38] sm:$0xf]
      %v9475 = vld [vmem:[%s5 + $0x3c] sm:$0xf]
      %v9476 = vld [vmem:[%s5 + $0x40] sm:$0xf]
      %v9477 = vld [vmem:[%s5 + $0x44] sm:$0xf]
      %v9478 = vld [vmem:[%s5 + $0x48] sm:$0xf]
      %v9479 = vld [vmem:[%s5 + $0x4c] sm:$0xf]
      %v9480 = vld [vmem:[%s5 + $0x50] sm:$0xf]
      %v9481 = vld [vmem:[%s5 + $0x54] sm:$0xf]
      %v9482 = vld [vmem:[%s5 + $0x58] sm:$0xf]
      %v9483 = vld [vmem:[%s5 + $0x5c] sm:$0xf]
      %v9484 = vld [vmem:[%s5 + $0x60] sm:$0xf]
      %v9485 = vld [vmem:[%s5 + $0x64] sm:$0xf]
      %v9486 = vld [vmem:[%s5 + $0x68] sm:$0xf]
      %v9487 = vld [vmem:[%s5 + $0x6c] sm:$0xf]
      %v9488 = vld [vmem:[%s5 + $0x70] sm:$0xf]
      %v9489 = vld [vmem:[%s5 + $0x74] sm:$0xf]
      %v9490 = vld [vmem:[%s5 + $0x78] sm:$0xf]
      %v9491 = vld [vmem:[%s5 + $0x7c] sm:$0xf]
      %v9492 = vld [vmem:[%s5 + $0x80] sm:$0xf]
      %v9493 = vld [vmem:[%s5 + $0x84] sm:$0xf]
      %v9494 = vld [vmem:[%s5 + $0x88] sm:$0xf]
      %v9495 = vld [vmem:[%s5 + $0x8c] sm:$0xf]
      %v9496 = vld [vmem:[%s5 + $0x90] sm:$0xf]
      %v9497 = vld [vmem:[%s5 + $0x94] sm:$0xf]
      %v9498 = vld [vmem:[%s5 + $0x98] sm:$0xf]
      %v9499 = vld [vmem:[%s5 + $0x9c] sm:$0xf]
      %v9500 = vld [vmem:[%s5 + $0xa0] sm:$0xf]
      %v9501 = vld [vmem:[%s5 + $0xa4] sm:$0xf]
      %v9502 = vld [vmem:[%s5 + $0xa8] sm:$0xf]
      %v9503 = vld [vmem:[%s5 + $0xac] sm:$0xf]
      %v9504 = vld [vmem:[%s5 + $0xb0] sm:$0xf]
      %v9505 = vld [vmem:[%s5 + $0xb4] sm:$0xf]
      %v9506 = vld [vmem:[%s5 + $0xb8] sm:$0xf]
      %v9507 = vld [vmem:[%s5 + $0xbc] sm:$0xf]
      %v9508 = vld [vmem:[%s5 + $0xc0] sm:$0xf]
      %v9509 = vld [vmem:[%s5 + $0xc4] sm:$0xf]
      %v9510 = vld [vmem:[%s5 + $0xc8] sm:$0xf]
      %v9511 = vld [vmem:[%s5 + $0xcc] sm:$0xf]
      %v9512 = vld [vmem:[%s5 + $0xd0] sm:$0xf]
      %v9513 = vld [vmem:[%s5 + $0xd4] sm:$0xf]
      %v9514 = vld [vmem:[%s5 + $0xd8] sm:$0xf]
      %v9515 = vld [vmem:[%s5 + $0xdc] sm:$0xf]
      %v9516 = vld [vmem:[%s5 + $0xe0] sm:$0xf]
      %v9517 = vld [vmem:[%s5 + $0xe4] sm:$0xf]
      %v9518 = vld [vmem:[%s5 + $0xe8] sm:$0xf]
      %v9519 = vld [vmem:[%s5 + $0xec] sm:$0xf]
      %v9520 = vld [vmem:[%s5 + $0xf0] sm:$0xf]
      %v9521 = vld [vmem:[%s5 + $0xf4] sm:$0xf]
      %v9522 = vld [vmem:[%s5 + $0xf8] sm:$0xf]
      %v9523 = vld [vmem:[%s5 + $0xfc] sm:$0xf]
      %v9524 = vld [vmem:[%s5 + $0x100] sm:$0xf]
      %v9525 = vld [vmem:[%s5 + $0x104] sm:$0xf]
      %v9526 = vld [vmem:[%s5 + $0x108] sm:$0xf]
      %v9527 = vld [vmem:[%s5 + $0x10c] sm:$0xf]
      %v9528 = vld [vmem:[%s5 + $0x110] sm:$0xf]
      %v9529 = vld [vmem:[%s5 + $0x114] sm:$0xf]
      %v9530 = vld [vmem:[%s5 + $0x118] sm:$0xf]
      %v9531 = vld [vmem:[%s5 + $0x11c] sm:$0xf]
      %v9532 = vld [vmem:[%s5 + $0x120] sm:$0xf]
      %v9533 = vld [vmem:[%s5 + $0x124] sm:$0xf]
      %v9534 = vld [vmem:[%s5 + $0x128] sm:$0xf]
      %v9535 = vld [vmem:[%s5 + $0x12c] sm:$0xf]
      %v9536 = vld [vmem:[%s5 + $0x130] sm:$0xf]
      %v9537 = vld [vmem:[%s5 + $0x134] sm:$0xf]
      %v9538 = vld [vmem:[%s5 + $0x138] sm:$0xf]
      %v9539 = vld [vmem:[%s5 + $0x13c] sm:$0xf]
      %v9540 = vld [vmem:[%s5 + $0x140] sm:$0xf]
      %v9541 = vld [vmem:[%s5 + $0x144] sm:$0xf]
      %v9542 = vld [vmem:[%s5 + $0x148] sm:$0xf]
      %v9543 = vld [vmem:[%s5 + $0x14c] sm:$0xf]
      %v9544 = vld [vmem:[%s5 + $0x150] sm:$0xf]
      %v9545 = vld [vmem:[%s5 + $0x154] sm:$0xf]
      %v9546 = vld [vmem:[%s5 + $0x158] sm:$0xf]
      %v9547 = vld [vmem:[%s5 + $0x15c] sm:$0xf]
      %v9548 = vld [vmem:[%s5 + $0x160] sm:$0xf]
      %v9549 = vld [vmem:[%s5 + $0x164] sm:$0xf]
      %v9550 = vld [vmem:[%s5 + $0x168] sm:$0xf]
      %v9551 = vld [vmem:[%s5 + $0x16c] sm:$0xf]
      %v9552 = vld [vmem:[%s5 + $0x170] sm:$0xf]
      %v9553 = vld [vmem:[%s5 + $0x174] sm:$0xf]
      %v9554 = vld [vmem:[%s5 + $0x178] sm:$0xf]
      %v9555 = vld [vmem:[%s5 + $0x17c] sm:$0xf]
      %v9556 = vld [vmem:[%s5 + $0x180] sm:$0xf]
      %v9557 = vld [vmem:[%s5 + $0x184] sm:$0xf]
      %v9558 = vld [vmem:[%s5 + $0x188] sm:$0xf]
      %v9559 = vld [vmem:[%s5 + $0x18c] sm:$0xf]
      %v9560 = vld [vmem:[%s5 + $0x190] sm:$0xf]
      %v9561 = vld [vmem:[%s5 + $0x194] sm:$0xf]
      %v9562 = vld [vmem:[%s5 + $0x198] sm:$0xf]
      %v9563 = vld [vmem:[%s5 + $0x19c] sm:$0xf]
      %v9564 = vld [vmem:[%s5 + $0x1a0] sm:$0xf]
      %v9565 = vld [vmem:[%s5 + $0x1a4] sm:$0xf]
      %v9566 = vld [vmem:[%s5 + $0x1a8] sm:$0xf]
      %v9567 = vld [vmem:[%s5 + $0x1ac] sm:$0xf]
      %v9568 = vld [vmem:[%s5 + $0x1b0] sm:$0xf]
      %v9569 = vld [vmem:[%s5 + $0x1b4] sm:$0xf]
      %v9570 = vld [vmem:[%s5 + $0x1b8] sm:$0xf]
      %v9571 = vld [vmem:[%s5 + $0x1bc] sm:$0xf]
      %v9572 = vld [vmem:[%s5 + $0x1c0] sm:$0xf]
      %v9573 = vld [vmem:[%s5 + $0x1c4] sm:$0xf]
      %v9574 = vld [vmem:[%s5 + $0x1c8] sm:$0xf]
      %v9575 = vld [vmem:[%s5 + $0x1cc] sm:$0xf]
      %v9576 = vld [vmem:[%s5 + $0x1d0] sm:$0xf]
      %v9577 = vld [vmem:[%s5 + $0x1d4] sm:$0xf]
      %v9578 = vld [vmem:[%s5 + $0x1d8] sm:$0xf]
      %v9579 = vld [vmem:[%s5 + $0x1dc] sm:$0xf]
      %v9580 = vld [vmem:[%s5 + $0x1e0] sm:$0xf]
      %v9581 = vld [vmem:[%s5 + $0x1e4] sm:$0xf]
      %v9582 = vld [vmem:[%s5 + $0x1e8] sm:$0xf]
      %v9583 = vld [vmem:[%s5 + $0x1ec] sm:$0xf]
      %v9584 = vld [vmem:[%s5 + $0x1f0] sm:$0xf]
      %v9585 = vld [vmem:[%s5 + $0x1f4] sm:$0xf]
      %v9586 = vld [vmem:[%s5 + $0x1f8] sm:$0xf]
      %v9587 = vld [vmem:[%s5 + $0x1fc] sm:$0xf]
      %v9588 = vld [vmem:[%s5 + $0x200] sm:$0xf]
      %v9589 = vld [vmem:[%s5 + $0x204] sm:$0xf]
      %v9590 = vld [vmem:[%s5 + $0x208] sm:$0xf]
      %v9591 = vld [vmem:[%s5 + $0x20c] sm:$0xf]
      %v9592 = vld [vmem:[%s5 + $0x210] sm:$0xf]
      %v9593 = vld [vmem:[%s5 + $0x214] sm:$0xf]
      %v9594 = vld [vmem:[%s5 + $0x218] sm:$0xf]
      %v9595 = vld [vmem:[%s5 + $0x21c] sm:$0xf]
      %v9596 = vld [vmem:[%s5 + $0x220] sm:$0xf]
      %v9597 = vld [vmem:[%s5 + $0x224] sm:$0xf]
      %v9598 = vld [vmem:[%s5 + $0x228] sm:$0xf]
      %v9599 = vld [vmem:[%s5 + $0x22c] sm:$0xf]
      %v9600 = vld [vmem:[%s5 + $0x230] sm:$0xf]
      %v9601 = vld [vmem:[%s5 + $0x234] sm:$0xf]
      %v9602 = vld [vmem:[%s5 + $0x238] sm:$0xf]
      %v9603 = vld [vmem:[%s5 + $0x23c] sm:$0xf]
      %v9604 = vld [vmem:[%s6] sm:$0x1]
      %v9606 = vperm.slane %v9604, 0
      %v9768 = vunpack.c.l.b16 %v9300
      %v9769 = vunpack.c.h.b16 %v9300
      %v9770 = vunpack.c.l.b16 %v9301
      %v9771 = vunpack.c.h.b16 %v9301
      %v9772 = vunpack.c.l.b16 %v9302
      %v9773 = vunpack.c.h.b16 %v9302
      %v9774 = vunpack.c.l.b16 %v9303
      %v9775 = vunpack.c.h.b16 %v9303
      %v9776 = vunpack.c.l.b16 %v9304
      %v9777 = vunpack.c.l.b16 %v9305
      %v9778 = vunpack.c.h.b16 %v9305
      %v9779 = vunpack.c.l.b16 %v9306
      %v9780 = vunpack.c.h.b16 %v9306
      %v9781 = vunpack.c.l.b16 %v9307
      %v9782 = vunpack.c.h.b16 %v9307
      %v9783 = vunpack.c.l.b16 %v9308
      %v9784 = vunpack.c.h.b16 %v9308
      %v9785 = vunpack.c.l.b16 %v9309
      %v9786 = vunpack.c.l.b16 %v9310
      %v9787 = vunpack.c.h.b16 %v9310
      %v9788 = vunpack.c.l.b16 %v9311
      %v9789 = vunpack.c.h.b16 %v9311
      %v9790 = vunpack.c.l.b16 %v9312
      %v9791 = vunpack.c.h.b16 %v9312
      %v9792 = vunpack.c.l.b16 %v9313
      %v9793 = vunpack.c.h.b16 %v9313
      %v9794 = vunpack.c.l.b16 %v9314
      %v9795 = vunpack.c.l.b16 %v9315
      %v9796 = vunpack.c.h.b16 %v9315
      %v9797 = vunpack.c.l.b16 %v9316
      %v9798 = vunpack.c.h.b16 %v9316
      %v9799 = vunpack.c.l.b16 %v9317
      %v9800 = vunpack.c.h.b16 %v9317
      %v9801 = vunpack.c.l.b16 %v9318
      %v9802 = vunpack.c.h.b16 %v9318
      %v9803 = vunpack.c.l.b16 %v9319
      %v9804 = vunpack.c.l.b16 %v9320
      %v9805 = vunpack.c.h.b16 %v9320
      %v9806 = vunpack.c.l.b16 %v9321
      %v9807 = vunpack.c.h.b16 %v9321
      %v9808 = vunpack.c.l.b16 %v9322
      %v9809 = vunpack.c.h.b16 %v9322
      %v9810 = vunpack.c.l.b16 %v9323
      %v9811 = vunpack.c.h.b16 %v9323
      %v9812 = vunpack.c.l.b16 %v9324
      %v9813 = vunpack.c.l.b16 %v9325
      %v9814 = vunpack.c.h.b16 %v9325
      %v9815 = vunpack.c.l.b16 %v9326
      %v9816 = vunpack.c.h.b16 %v9326
      %v9817 = vunpack.c.l.b16 %v9327
      %v9818 = vunpack.c.h.b16 %v9327
      %v9819 = vunpack.c.l.b16 %v9328
      %v9820 = vunpack.c.h.b16 %v9328
      %v9821 = vunpack.c.l.b16 %v9329
      %v9822 = vunpack.c.l.b16 %v9330
      %v9823 = vunpack.c.h.b16 %v9330
      %v9824 = vunpack.c.l.b16 %v9331
      %v9825 = vunpack.c.h.b16 %v9331
      %v9826 = vunpack.c.l.b16 %v9332
      %v9827 = vunpack.c.h.b16 %v9332
      %v9828 = vunpack.c.l.b16 %v9333
      %v9829 = vunpack.c.h.b16 %v9333
      %v9830 = vunpack.c.l.b16 %v9334
      %v9831 = vunpack.c.l.b16 %v9335
      %v9832 = vunpack.c.h.b16 %v9335
      %v9833 = vunpack.c.l.b16 %v9336
      %v9834 = vunpack.c.h.b16 %v9336
      %v9835 = vunpack.c.l.b16 %v9337
      %v9836 = vunpack.c.h.b16 %v9337
      %v9837 = vunpack.c.l.b16 %v9338
      %v9838 = vunpack.c.h.b16 %v9338
      %v9839 = vunpack.c.l.b16 %v9339
      %v9840 = vunpack.c.l.b16 %v9340
      %v9841 = vunpack.c.h.b16 %v9340
      %v9842 = vunpack.c.l.b16 %v9341
      %v9843 = vunpack.c.h.b16 %v9341
      %v9844 = vunpack.c.l.b16 %v9342
      %v9845 = vunpack.c.h.b16 %v9342
      %v9846 = vunpack.c.l.b16 %v9343
      %v9847 = vunpack.c.h.b16 %v9343
      %v9848 = vunpack.c.l.b16 %v9344
      %v9849 = vunpack.c.l.b16 %v9345
      %v9850 = vunpack.c.h.b16 %v9345
      %v9851 = vunpack.c.l.b16 %v9346
      %v9852 = vunpack.c.h.b16 %v9346
      %v9853 = vunpack.c.l.b16 %v9347
      %v9854 = vunpack.c.h.b16 %v9347
      %v9855 = vunpack.c.l.b16 %v9348
      %v9856 = vunpack.c.h.b16 %v9348
      %v9857 = vunpack.c.l.b16 %v9349
      %v9858 = vunpack.c.l.b16 %v9350
      %v9859 = vunpack.c.h.b16 %v9350
      %v9860 = vunpack.c.l.b16 %v9351
      %v9861 = vunpack.c.h.b16 %v9351
      %v9862 = vunpack.c.l.b16 %v9352
      %v9863 = vunpack.c.h.b16 %v9352
      %v9864 = vunpack.c.l.b16 %v9353
      %v9865 = vunpack.c.h.b16 %v9353
      %v9866 = vunpack.c.l.b16 %v9354
      %v9867 = vunpack.c.l.b16 %v9355
      %v9868 = vunpack.c.h.b16 %v9355
      %v9869 = vunpack.c.l.b16 %v9356
      %v9870 = vunpack.c.h.b16 %v9356
      %v9871 = vunpack.c.l.b16 %v9357
      %v9872 = vunpack.c.h.b16 %v9357
      %v9873 = vunpack.c.l.b16 %v9358
      %v9874 = vunpack.c.h.b16 %v9358
      %v9875 = vunpack.c.l.b16 %v9359
      %v9876 = vunpack.c.l.b16 %v9360
      %v9877 = vunpack.c.h.b16 %v9360
      %v9878 = vunpack.c.l.b16 %v9361
      %v9879 = vunpack.c.h.b16 %v9361
      %v9880 = vunpack.c.l.b16 %v9362
      %v9881 = vunpack.c.h.b16 %v9362
      %v9882 = vunpack.c.l.b16 %v9363
      %v9883 = vunpack.c.h.b16 %v9363
      %v9884 = vunpack.c.l.b16 %v9364
      %v9885 = vunpack.c.l.b16 %v9365
      %v9886 = vunpack.c.h.b16 %v9365
      %v9887 = vunpack.c.l.b16 %v9366
      %v9888 = vunpack.c.h.b16 %v9366
      %v9889 = vunpack.c.l.b16 %v9367
      %v9890 = vunpack.c.h.b16 %v9367
      %v9891 = vunpack.c.l.b16 %v9368
      %v9892 = vunpack.c.h.b16 %v9368
      %v9893 = vunpack.c.l.b16 %v9369
      %v9894 = vunpack.c.l.b16 %v9370
      %v9895 = vunpack.c.h.b16 %v9370
      %v9896 = vunpack.c.l.b16 %v9371
      %v9897 = vunpack.c.h.b16 %v9371
      %v9898 = vunpack.c.l.b16 %v9372
      %v9899 = vunpack.c.h.b16 %v9372
      %v9900 = vunpack.c.l.b16 %v9373
      %v9901 = vunpack.c.h.b16 %v9373
      %v9902 = vunpack.c.l.b16 %v9374
      %v9903 = vunpack.c.l.b16 %v9375
      %v9904 = vunpack.c.h.b16 %v9375
      %v9905 = vunpack.c.l.b16 %v9376
      %v9906 = vunpack.c.h.b16 %v9376
      %v9907 = vunpack.c.l.b16 %v9377
      %v9908 = vunpack.c.h.b16 %v9377
      %v9909 = vunpack.c.l.b16 %v9378
      %v9910 = vunpack.c.h.b16 %v9378
      %v9911 = vunpack.c.l.b16 %v9379
      %v9912 = vunpack.c.l.b16 %v9380
      %v9913 = vunpack.c.h.b16 %v9380
      %v9914 = vunpack.c.l.b16 %v9381
      %v9915 = vunpack.c.h.b16 %v9381
      %v9916 = vunpack.c.l.b16 %v9382
      %v9917 = vunpack.c.h.b16 %v9382
      %v9918 = vunpack.c.l.b16 %v9383
      %v9919 = vunpack.c.h.b16 %v9383
      %v9920 = vunpack.c.l.b16 %v9384
      %v9921 = vunpack.c.l.b16 %v9385
      %v9922 = vunpack.c.h.b16 %v9385
      %v9923 = vunpack.c.l.b16 %v9386
      %v9924 = vunpack.c.h.b16 %v9386
      %v9925 = vunpack.c.l.b16 %v9387
      %v9926 = vunpack.c.h.b16 %v9387
      %v9927 = vunpack.c.l.b16 %v9388
      %v9928 = vunpack.c.h.b16 %v9388
      %v9929 = vunpack.c.l.b16 %v9389
      %v9930 = vunpack.c.l.b16 %v9390
      %v9931 = vunpack.c.h.b16 %v9390
      %v9932 = vunpack.c.l.b16 %v9391
      %v9933 = vunpack.c.h.b16 %v9391
      %v9934 = vunpack.c.l.b16 %v9392
      %v9935 = vunpack.c.h.b16 %v9392
      %v9936 = vunpack.c.l.b16 %v9393
      %v9937 = vunpack.c.h.b16 %v9393
      %v9938 = vunpack.c.l.b16 %v9394
      %v9939 = vunpack.c.l.b16 %v9395
      %v9940 = vunpack.c.h.b16 %v9395
      %v9941 = vunpack.c.l.b16 %v9396
      %v9942 = vunpack.c.h.b16 %v9396
      %v9943 = vunpack.c.l.b16 %v9397
      %v9944 = vunpack.c.h.b16 %v9397
      %v9945 = vunpack.c.l.b16 %v9398
      %v9946 = vunpack.c.h.b16 %v9398
      %v9947 = vunpack.c.l.b16 %v9399
      %v9948 = vunpack.c.l.b16 %v9400
      %v9949 = vunpack.c.h.b16 %v9400
      %v9950 = vunpack.c.l.b16 %v9401
      %v9951 = vunpack.c.h.b16 %v9401
      %v9952 = vunpack.c.l.b16 %v9402
      %v9953 = vunpack.c.h.b16 %v9402
      %v9954 = vunpack.c.l.b16 %v9403
      %v9955 = vunpack.c.h.b16 %v9403
      %v9956 = vunpack.c.l.b16 %v9404
      %v9957 = vunpack.c.l.b16 %v9405
      %v9958 = vunpack.c.h.b16 %v9405
      %v9959 = vunpack.c.l.b16 %v9406
      %v9960 = vunpack.c.h.b16 %v9406
      %v9961 = vunpack.c.l.b16 %v9407
      %v9962 = vunpack.c.h.b16 %v9407
      %v9963 = vunpack.c.l.b16 %v9408
      %v9964 = vunpack.c.h.b16 %v9408
      %v9965 = vunpack.c.l.b16 %v9409
      %v9966 = vunpack.c.l.b16 %v9410
      %v9967 = vunpack.c.h.b16 %v9410
      %v9968 = vunpack.c.l.b16 %v9411
      %v9969 = vunpack.c.h.b16 %v9411
      %v9970 = vunpack.c.l.b16 %v9412
      %v9971 = vunpack.c.h.b16 %v9412
      %v9972 = vunpack.c.l.b16 %v9413
      %v9973 = vunpack.c.h.b16 %v9413
      %v9974 = vunpack.c.l.b16 %v9414
      %v9975 = vunpack.c.l.b16 %v9415
      %v9976 = vunpack.c.h.b16 %v9415
      %v9977 = vunpack.c.l.b16 %v9416
      %v9978 = vunpack.c.h.b16 %v9416
      %v9979 = vunpack.c.l.b16 %v9417
      %v9980 = vunpack.c.h.b16 %v9417
      %v9981 = vunpack.c.l.b16 %v9418
      %v9982 = vunpack.c.h.b16 %v9418
      %v9983 = vunpack.c.l.b16 %v9419
      %v9984 = vunpack.c.l.b16 %v9420
      %v9985 = vunpack.c.h.b16 %v9420
      %v9986 = vunpack.c.l.b16 %v9421
      %v9987 = vunpack.c.h.b16 %v9421
      %v9988 = vunpack.c.l.b16 %v9422
      %v9989 = vunpack.c.h.b16 %v9422
      %v9990 = vunpack.c.l.b16 %v9423
      %v9991 = vunpack.c.h.b16 %v9423
      %v9992 = vunpack.c.l.b16 %v9424
      %v9993 = vunpack.c.l.b16 %v9425
      %v9994 = vunpack.c.h.b16 %v9425
      %v9995 = vunpack.c.l.b16 %v9426
      %v9996 = vunpack.c.h.b16 %v9426
      %v9997 = vunpack.c.l.b16 %v9427
      %v9998 = vunpack.c.h.b16 %v9427
      %v9999 = vunpack.c.l.b16 %v9428
      %v10000 = vunpack.c.h.b16 %v9428
      %v10001 = vunpack.c.l.b16 %v9429
      %v10002 = vunpack.c.l.b16 %v9430
      %v10003 = vunpack.c.h.b16 %v9430
      %v10004 = vunpack.c.l.b16 %v9431
      %v10005 = vunpack.c.h.b16 %v9431
      %v10006 = vunpack.c.l.b16 %v9432
      %v10007 = vunpack.c.h.b16 %v9432
      %v10008 = vunpack.c.l.b16 %v9433
      %v10009 = vunpack.c.h.b16 %v9433
      %v10010 = vunpack.c.l.b16 %v9434
      %v10011 = vunpack.c.l.b16 %v9435
      %v10012 = vunpack.c.h.b16 %v9435
      %v10013 = vunpack.c.l.b16 %v9436
      %v10014 = vunpack.c.h.b16 %v9436
      %v10015 = vunpack.c.l.b16 %v9437
      %v10016 = vunpack.c.h.b16 %v9437
      %v10017 = vunpack.c.l.b16 %v9438
      %v10018 = vunpack.c.h.b16 %v9438
      %v10019 = vunpack.c.l.b16 %v9439
      %v10020 = vunpack.c.l.b16 %v9440
      %v10021 = vunpack.c.h.b16 %v9440
      %v10022 = vunpack.c.l.b16 %v9441
      %v10023 = vunpack.c.h.b16 %v9441
      %v10024 = vunpack.c.l.b16 %v9442
      %v10025 = vunpack.c.h.b16 %v9442
      %v10026 = vunpack.c.l.b16 %v9443
      %v10027 = vunpack.c.h.b16 %v9443
      %v10028 = vunpack.c.l.b16 %v9444
      %v10029 = vunpack.c.l.b16 %v9445
      %v10030 = vunpack.c.h.b16 %v9445
      %v10031 = vunpack.c.l.b16 %v9446
      %v10032 = vunpack.c.h.b16 %v9446
      %v10033 = vunpack.c.l.b16 %v9447
      %v10034 = vunpack.c.h.b16 %v9447
      %v10035 = vunpack.c.l.b16 %v9448
      %v10036 = vunpack.c.h.b16 %v9448
      %v10037 = vunpack.c.l.b16 %v9449
      %v10038 = vunpack.c.l.b16 %v9450
      %v10039 = vunpack.c.h.b16 %v9450
      %v10040 = vunpack.c.l.b16 %v9451
      %v10041 = vunpack.c.h.b16 %v9451
      %v10042 = vunpack.c.l.b16 %v9452
      %v10043 = vunpack.c.h.b16 %v9452
      %v10044 = vunpack.c.l.b16 %v9453
      %v10045 = vunpack.c.h.b16 %v9453
      %v10046 = vunpack.c.l.b16 %v9454
      %v10047 = vunpack.c.l.b16 %v9455
      %v10048 = vunpack.c.h.b16 %v9455
      %v10049 = vunpack.c.l.b16 %v9456
      %v10050 = vunpack.c.h.b16 %v9456
      %v10051 = vunpack.c.l.b16 %v9457
      %v10052 = vunpack.c.h.b16 %v9457
      %v10053 = vunpack.c.l.b16 %v9458
      %v10054 = vunpack.c.h.b16 %v9458
      %v10055 = vunpack.c.l.b16 %v9459
      %v10056 = vpack.c.b16 %v9777, %v9768
      %v10057 = vpack.c.b16 %v9778, %v9769
      %v10058 = vpack.c.b16 %v9779, %v9770
      %v10059 = vpack.c.b16 %v9780, %v9771
      %v10060 = vpack.c.b16 %v9781, %v9772
      %v10061 = vpack.c.b16 %v9782, %v9773
      %v10062 = vpack.c.b16 %v9783, %v9774
      %v10063 = vpack.c.b16 %v9784, %v9775
      %v10064 = vpack.c.b16 %v9785, %v9776
      %v10065 = vpack.c.b16 %v9795, %v9786
      %v10066 = vpack.c.b16 %v9796, %v9787
      %v10067 = vpack.c.b16 %v9797, %v9788
      %v10068 = vpack.c.b16 %v9798, %v9789
      %v10069 = vpack.c.b16 %v9799, %v9790
      %v10070 = vpack.c.b16 %v9800, %v9791
      %v10071 = vpack.c.b16 %v9801, %v9792
      %v10072 = vpack.c.b16 %v9802, %v9793
      %v10073 = vpack.c.b16 %v9803, %v9794
      %v10074 = vpack.c.b16 %v9813, %v9804
      %v10075 = vpack.c.b16 %v9814, %v9805
      %v10076 = vpack.c.b16 %v9815, %v9806
      %v10077 = vpack.c.b16 %v9816, %v9807
      %v10078 = vpack.c.b16 %v9817, %v9808
      %v10079 = vpack.c.b16 %v9818, %v9809
      %v10080 = vpack.c.b16 %v9819, %v9810
      %v10081 = vpack.c.b16 %v9820, %v9811
      %v10082 = vpack.c.b16 %v9821, %v9812
      %v10083 = vpack.c.b16 %v9831, %v9822
      %v10084 = vpack.c.b16 %v9832, %v9823
      %v10085 = vpack.c.b16 %v9833, %v9824
      %v10086 = vpack.c.b16 %v9834, %v9825
      %v10087 = vpack.c.b16 %v9835, %v9826
      %v10088 = vpack.c.b16 %v9836, %v9827
      %v10089 = vpack.c.b16 %v9837, %v9828
      %v10090 = vpack.c.b16 %v9838, %v9829
      %v10091 = vpack.c.b16 %v9839, %v9830
      %v10092 = vpack.c.b16 %v9849, %v9840
      %v10093 = vpack.c.b16 %v9850, %v9841
      %v10094 = vpack.c.b16 %v9851, %v9842
      %v10095 = vpack.c.b16 %v9852, %v9843
      %v10096 = vpack.c.b16 %v9853, %v9844
      %v10097 = vpack.c.b16 %v9854, %v9845
      %v10098 = vpack.c.b16 %v9855, %v9846
      %v10099 = vpack.c.b16 %v9856, %v9847
      %v10100 = vpack.c.b16 %v9857, %v9848
      %v10101 = vpack.c.b16 %v9867, %v9858
      %v10102 = vpack.c.b16 %v9868, %v9859
      %v10103 = vpack.c.b16 %v9869, %v9860
      %v10104 = vpack.c.b16 %v9870, %v9861
      %v10105 = vpack.c.b16 %v9871, %v9862
      %v10106 = vpack.c.b16 %v9872, %v9863
      %v10107 = vpack.c.b16 %v9873, %v9864
      %v10108 = vpack.c.b16 %v9874, %v9865
      %v10109 = vpack.c.b16 %v9875, %v9866
      %v10110 = vpack.c.b16 %v9885, %v9876
      %v10111 = vpack.c.b16 %v9886, %v9877
      %v10112 = vpack.c.b16 %v9887, %v9878
      %v10113 = vpack.c.b16 %v9888, %v9879
      %v10114 = vpack.c.b16 %v9889, %v9880
      %v10115 = vpack.c.b16 %v9890, %v9881
      %v10116 = vpack.c.b16 %v9891, %v9882
      %v10117 = vpack.c.b16 %v9892, %v9883
      %v10118 = vpack.c.b16 %v9893, %v9884
      %v10119 = vpack.c.b16 %v9903, %v9894
      %v10120 = vpack.c.b16 %v9904, %v9895
      %v10121 = vpack.c.b16 %v9905, %v9896
      %v10122 = vpack.c.b16 %v9906, %v9897
      %v10123 = vpack.c.b16 %v9907, %v9898
      %v10124 = vpack.c.b16 %v9908, %v9899
      %v10125 = vpack.c.b16 %v9909, %v9900
      %v10126 = vpack.c.b16 %v9910, %v9901
      %v10127 = vpack.c.b16 %v9911, %v9902
      %v10128 = vpack.c.b16 %v9921, %v9912
      %v10129 = vpack.c.b16 %v9922, %v9913
      %v10130 = vpack.c.b16 %v9923, %v9914
      %v10131 = vpack.c.b16 %v9924, %v9915
      %v10132 = vpack.c.b16 %v9925, %v9916
      %v10133 = vpack.c.b16 %v9926, %v9917
      %v10134 = vpack.c.b16 %v9927, %v9918
      %v10135 = vpack.c.b16 %v9928, %v9919
      %v10136 = vpack.c.b16 %v9929, %v9920
      %v10137 = vpack.c.b16 %v9939, %v9930
      %v10138 = vpack.c.b16 %v9940, %v9931
      %v10139 = vpack.c.b16 %v9941, %v9932
      %v10140 = vpack.c.b16 %v9942, %v9933
      %v10141 = vpack.c.b16 %v9943, %v9934
      %v10142 = vpack.c.b16 %v9944, %v9935
      %v10143 = vpack.c.b16 %v9945, %v9936
      %v10144 = vpack.c.b16 %v9946, %v9937
      %v10145 = vpack.c.b16 %v9947, %v9938
      %v10146 = vpack.c.b16 %v9957, %v9948
      %v10147 = vpack.c.b16 %v9958, %v9949
      %v10148 = vpack.c.b16 %v9959, %v9950
      %v10149 = vpack.c.b16 %v9960, %v9951
      %v10150 = vpack.c.b16 %v9961, %v9952
      %v10151 = vpack.c.b16 %v9962, %v9953
      %v10152 = vpack.c.b16 %v9963, %v9954
      %v10153 = vpack.c.b16 %v9964, %v9955
      %v10154 = vpack.c.b16 %v9965, %v9956
      %v10155 = vpack.c.b16 %v9975, %v9966
      %v10156 = vpack.c.b16 %v9976, %v9967
      %v10157 = vpack.c.b16 %v9977, %v9968
      %v10158 = vpack.c.b16 %v9978, %v9969
      %v10159 = vpack.c.b16 %v9979, %v9970
      %v10160 = vpack.c.b16 %v9980, %v9971
      %v10161 = vpack.c.b16 %v9981, %v9972
      %v10162 = vpack.c.b16 %v9982, %v9973
      %v10163 = vpack.c.b16 %v9983, %v9974
      %v10164 = vpack.c.b16 %v9993, %v9984
      %v10165 = vpack.c.b16 %v9994, %v9985
      %v10166 = vpack.c.b16 %v9995, %v9986
      %v10167 = vpack.c.b16 %v9996, %v9987
      %v10168 = vpack.c.b16 %v9997, %v9988
      %v10169 = vpack.c.b16 %v9998, %v9989
      %v10170 = vpack.c.b16 %v9999, %v9990
      %v10171 = vpack.c.b16 %v10000, %v9991
      %v10172 = vpack.c.b16 %v10001, %v9992
      %v10173 = vpack.c.b16 %v10011, %v10002
      %v10174 = vpack.c.b16 %v10012, %v10003
      %v10175 = vpack.c.b16 %v10013, %v10004
      %v10176 = vpack.c.b16 %v10014, %v10005
      %v10177 = vpack.c.b16 %v10015, %v10006
      %v10178 = vpack.c.b16 %v10016, %v10007
      %v10179 = vpack.c.b16 %v10017, %v10008
      %v10180 = vpack.c.b16 %v10018, %v10009
      %v10181 = vpack.c.b16 %v10019, %v10010
      %v10182 = vpack.c.b16 %v10029, %v10020
      %v10183 = vpack.c.b16 %v10030, %v10021
      %v10184 = vpack.c.b16 %v10031, %v10022
      %v10185 = vpack.c.b16 %v10032, %v10023
      %v10186 = vpack.c.b16 %v10033, %v10024
      %v10187 = vpack.c.b16 %v10034, %v10025
      %v10188 = vpack.c.b16 %v10035, %v10026
      %v10189 = vpack.c.b16 %v10036, %v10027
      %v10190 = vpack.c.b16 %v10037, %v10028
      %v10191 = vpack.c.b16 %v10047, %v10038
      %v10192 = vpack.c.b16 %v10048, %v10039
      %v10193 = vpack.c.b16 %v10049, %v10040
      %v10194 = vpack.c.b16 %v10050, %v10041
      %v10195 = vpack.c.b16 %v10051, %v10042
      %v10196 = vpack.c.b16 %v10052, %v10043
      %v10197 = vpack.c.b16 %v10053, %v10044
      %v10198 = vpack.c.b16 %v10054, %v10045
      %v10199 = vpack.c.b16 %v10055, %v10046
      %v10488 = vunpack.c.l.b16 %v9460
      %v10489 = vunpack.c.l.b16 %v9461
      %v10490 = vunpack.c.l.b16 %v9462
      %v10491 = vunpack.c.l.b16 %v9463
      %v10492 = vunpack.c.l.b16 %v9464
      %v10493 = vunpack.c.l.b16 %v9465
      %v10494 = vunpack.c.l.b16 %v9466
      %v10495 = vunpack.c.l.b16 %v9467
      %v10496 = vunpack.c.l.b16 %v9468
      %v10497 = vunpack.c.l.b16 %v9469
      %v10498 = vunpack.c.l.b16 %v9470
      %v10499 = vunpack.c.l.b16 %v9471
      %v10500 = vunpack.c.l.b16 %v9472
      %v10501 = vunpack.c.l.b16 %v9473
      %v10502 = vunpack.c.l.b16 %v9474
      %v10503 = vunpack.c.l.b16 %v9475
      %v10504 = vunpack.c.l.b16 %v9476
      %v10505 = vunpack.c.l.b16 %v9477
      %v10506 = vunpack.c.l.b16 %v9478
      %v10507 = vunpack.c.l.b16 %v9479
      %v10508 = vunpack.c.l.b16 %v9480
      %v10509 = vunpack.c.l.b16 %v9481
      %v10510 = vunpack.c.l.b16 %v9482
      %v10511 = vunpack.c.l.b16 %v9483
      %v10512 = vunpack.c.l.b16 %v9484
      %v10513 = vunpack.c.l.b16 %v9485
      %v10514 = vunpack.c.l.b16 %v9486
      %v10515 = vunpack.c.l.b16 %v9487
      %v10516 = vunpack.c.l.b16 %v9488
      %v10517 = vunpack.c.l.b16 %v9489
      %v10518 = vunpack.c.l.b16 %v9490
      %v10519 = vunpack.c.l.b16 %v9491
      %v10520 = vunpack.c.l.b16 %v9492
      %v10521 = vunpack.c.l.b16 %v9493
      %v10522 = vunpack.c.l.b16 %v9494
      %v10523 = vunpack.c.l.b16 %v9495
      %v10524 = vunpack.c.l.b16 %v9496
      %v10525 = vunpack.c.l.b16 %v9497
      %v10526 = vunpack.c.l.b16 %v9498
      %v10527 = vunpack.c.l.b16 %v9499
      %v10528 = vunpack.c.l.b16 %v9500
      %v10529 = vunpack.c.l.b16 %v9501
      %v10530 = vunpack.c.l.b16 %v9502
      %v10531 = vunpack.c.l.b16 %v9503
      %v10532 = vunpack.c.l.b16 %v9504
      %v10533 = vunpack.c.l.b16 %v9505
      %v10534 = vunpack.c.l.b16 %v9506
      %v10535 = vunpack.c.l.b16 %v9507
      %v10536 = vunpack.c.l.b16 %v9508
      %v10537 = vunpack.c.l.b16 %v9509
      %v10538 = vunpack.c.l.b16 %v9510
      %v10539 = vunpack.c.l.b16 %v9511
      %v10540 = vunpack.c.l.b16 %v9512
      %v10541 = vunpack.c.l.b16 %v9513
      %v10542 = vunpack.c.l.b16 %v9514
      %v10543 = vunpack.c.l.b16 %v9515
      %v10544 = vunpack.c.l.b16 %v9516
      %v10545 = vunpack.c.l.b16 %v9517
      %v10546 = vunpack.c.l.b16 %v9518
      %v10547 = vunpack.c.l.b16 %v9519
      %v10548 = vunpack.c.l.b16 %v9520
      %v10549 = vunpack.c.l.b16 %v9521
      %v10550 = vunpack.c.l.b16 %v9522
      %v10551 = vunpack.c.l.b16 %v9523
      %v10552 = vunpack.c.l.b16 %v9524
      %v10553 = vunpack.c.l.b16 %v9525
      %v10554 = vunpack.c.l.b16 %v9526
      %v10555 = vunpack.c.l.b16 %v9527
      %v10556 = vunpack.c.l.b16 %v9528
      %v10557 = vunpack.c.l.b16 %v9529
      %v10558 = vunpack.c.l.b16 %v9530
      %v10559 = vunpack.c.l.b16 %v9531
      %v10560 = vunpack.c.l.b16 %v9532
      %v10561 = vunpack.c.l.b16 %v9533
      %v10562 = vunpack.c.l.b16 %v9534
      %v10563 = vunpack.c.l.b16 %v9535
      %v10564 = vunpack.c.l.b16 %v9536
      %v10565 = vunpack.c.l.b16 %v9537
      %v10566 = vunpack.c.l.b16 %v9538
      %v10567 = vunpack.c.l.b16 %v9539
      %v10568 = vunpack.c.l.b16 %v9540
      %v10569 = vunpack.c.l.b16 %v9541
      %v10570 = vunpack.c.l.b16 %v9542
      %v10571 = vunpack.c.l.b16 %v9543
      %v10572 = vunpack.c.l.b16 %v9544
      %v10573 = vunpack.c.l.b16 %v9545
      %v10574 = vunpack.c.l.b16 %v9546
      %v10575 = vunpack.c.l.b16 %v9547
      %v10576 = vunpack.c.l.b16 %v9548
      %v10577 = vunpack.c.l.b16 %v9549
      %v10578 = vunpack.c.l.b16 %v9550
      %v10579 = vunpack.c.l.b16 %v9551
      %v10580 = vunpack.c.l.b16 %v9552
      %v10581 = vunpack.c.l.b16 %v9553
      %v10582 = vunpack.c.l.b16 %v9554
      %v10583 = vunpack.c.l.b16 %v9555
      %v10584 = vunpack.c.l.b16 %v9556
      %v10585 = vunpack.c.l.b16 %v9557
      %v10586 = vunpack.c.l.b16 %v9558
      %v10587 = vunpack.c.l.b16 %v9559
      %v10588 = vunpack.c.l.b16 %v9560
      %v10589 = vunpack.c.l.b16 %v9561
      %v10590 = vunpack.c.l.b16 %v9562
      %v10591 = vunpack.c.l.b16 %v9563
      %v10592 = vunpack.c.l.b16 %v9564
      %v10593 = vunpack.c.l.b16 %v9565
      %v10594 = vunpack.c.l.b16 %v9566
      %v10595 = vunpack.c.l.b16 %v9567
      %v10596 = vunpack.c.l.b16 %v9568
      %v10597 = vunpack.c.l.b16 %v9569
      %v10598 = vunpack.c.l.b16 %v9570
      %v10599 = vunpack.c.l.b16 %v9571
      %v10600 = vunpack.c.l.b16 %v9572
      %v10601 = vunpack.c.l.b16 %v9573
      %v10602 = vunpack.c.l.b16 %v9574
      %v10603 = vunpack.c.l.b16 %v9575
      %v10604 = vunpack.c.l.b16 %v9576
      %v10605 = vunpack.c.l.b16 %v9577
      %v10606 = vunpack.c.l.b16 %v9578
      %v10607 = vunpack.c.l.b16 %v9579
      %v10608 = vunpack.c.l.b16 %v9580
      %v10609 = vunpack.c.l.b16 %v9581
      %v10610 = vunpack.c.l.b16 %v9582
      %v10611 = vunpack.c.l.b16 %v9583
      %v10612 = vunpack.c.l.b16 %v9584
      %v10613 = vunpack.c.l.b16 %v9585
      %v10614 = vunpack.c.l.b16 %v9586
      %v10615 = vunpack.c.l.b16 %v9587
      %v10616 = vunpack.c.l.b16 %v9588
      %v10617 = vunpack.c.l.b16 %v9589
      %v10618 = vunpack.c.l.b16 %v9590
      %v10619 = vunpack.c.l.b16 %v9591
      %v10620 = vunpack.c.l.b16 %v9592
      %v10621 = vunpack.c.l.b16 %v9593
      %v10622 = vunpack.c.l.b16 %v9594
      %v10623 = vunpack.c.l.b16 %v9595
      %v10624 = vunpack.c.l.b16 %v9596
      %v10625 = vunpack.c.l.b16 %v9597
      %v10626 = vunpack.c.l.b16 %v9598
      %v10627 = vunpack.c.l.b16 %v9599
      %v10628 = vunpack.c.l.b16 %v9600
      %v10629 = vunpack.c.l.b16 %v9601
      %v10630 = vunpack.c.l.b16 %v9602
      %v10631 = vunpack.c.l.b16 %v9603
      %v10632 = vpack.c.b16 %v10489, %v10488
      %v10633 = vpack.c.b16 %v10491, %v10490
      %v10634 = vpack.c.b16 %v10493, %v10492
      %v10635 = vpack.c.b16 %v10495, %v10494
      %v10636 = vpack.c.b16 %v10497, %v10496
      %v10637 = vpack.c.b16 %v10499, %v10498
      %v10638 = vpack.c.b16 %v10501, %v10500
      %v10639 = vpack.c.b16 %v10503, %v10502
      %v10640 = vpack.c.b16 %v10505, %v10504
      %v10641 = vpack.c.b16 %v10507, %v10506
      %v10642 = vpack.c.b16 %v10509, %v10508
      %v10643 = vpack.c.b16 %v10511, %v10510
      %v10644 = vpack.c.b16 %v10513, %v10512
      %v10645 = vpack.c.b16 %v10515, %v10514
      %v10646 = vpack.c.b16 %v10517, %v10516
      %v10647 = vpack.c.b16 %v10519, %v10518
      %v10648 = vpack.c.b16 %v10521, %v10520
      %v10649 = vpack.c.b16 %v10523, %v10522
      %v10650 = vpack.c.b16 %v10525, %v10524
      %v10651 = vpack.c.b16 %v10527, %v10526
      %v10652 = vpack.c.b16 %v10529, %v10528
      %v10653 = vpack.c.b16 %v10531, %v10530
      %v10654 = vpack.c.b16 %v10533, %v10532
      %v10655 = vpack.c.b16 %v10535, %v10534
      %v10656 = vpack.c.b16 %v10537, %v10536
      %v10657 = vpack.c.b16 %v10539, %v10538
      %v10658 = vpack.c.b16 %v10541, %v10540
      %v10659 = vpack.c.b16 %v10543, %v10542
      %v10660 = vpack.c.b16 %v10545, %v10544
      %v10661 = vpack.c.b16 %v10547, %v10546
      %v10662 = vpack.c.b16 %v10549, %v10548
      %v10663 = vpack.c.b16 %v10551, %v10550
      %v10664 = vpack.c.b16 %v10553, %v10552
      %v10665 = vpack.c.b16 %v10555, %v10554
      %v10666 = vpack.c.b16 %v10557, %v10556
      %v10667 = vpack.c.b16 %v10559, %v10558
      %v10668 = vpack.c.b16 %v10561, %v10560
      %v10669 = vpack.c.b16 %v10563, %v10562
      %v10670 = vpack.c.b16 %v10565, %v10564
      %v10671 = vpack.c.b16 %v10567, %v10566
      %v10672 = vpack.c.b16 %v10569, %v10568
      %v10673 = vpack.c.b16 %v10571, %v10570
      %v10674 = vpack.c.b16 %v10573, %v10572
      %v10675 = vpack.c.b16 %v10575, %v10574
      %v10676 = vpack.c.b16 %v10577, %v10576
      %v10677 = vpack.c.b16 %v10579, %v10578
      %v10678 = vpack.c.b16 %v10581, %v10580
      %v10679 = vpack.c.b16 %v10583, %v10582
      %v10680 = vpack.c.b16 %v10585, %v10584
      %v10681 = vpack.c.b16 %v10587, %v10586
      %v10682 = vpack.c.b16 %v10589, %v10588
      %v10683 = vpack.c.b16 %v10591, %v10590
      %v10684 = vpack.c.b16 %v10593, %v10592
      %v10685 = vpack.c.b16 %v10595, %v10594
      %v10686 = vpack.c.b16 %v10597, %v10596
      %v10687 = vpack.c.b16 %v10599, %v10598
      %v10688 = vpack.c.b16 %v10601, %v10600
      %v10689 = vpack.c.b16 %v10603, %v10602
      %v10690 = vpack.c.b16 %v10605, %v10604
      %v10691 = vpack.c.b16 %v10607, %v10606
      %v10692 = vpack.c.b16 %v10609, %v10608
      %v10693 = vpack.c.b16 %v10611, %v10610
      %v10694 = vpack.c.b16 %v10613, %v10612
      %v10695 = vpack.c.b16 %v10615, %v10614
      %v10696 = vpack.c.b16 %v10617, %v10616
      %v10697 = vpack.c.b16 %v10619, %v10618
      %v10698 = vpack.c.b16 %v10621, %v10620
      %v10699 = vpack.c.b16 %v10623, %v10622
      %v10700 = vpack.c.b16 %v10625, %v10624
      %v10701 = vpack.c.b16 %v10627, %v10626
      %v10702 = vpack.c.b16 %v10629, %v10628
      %v10703 = vpack.c.b16 %v10631, %v10630
      %10776 = vmatpush.bf16.msra.mxu0 %v10639
      %10777 = vmatpush.bf16.msra.mxu0 %v10638
      %10778 = vmatpush.bf16.msra.mxu0 %v10637
      %10779 = vmatpush.bf16.msra.mxu0 %v10636
      %10780 = vmatpush.bf16.msra.mxu0 %v10635
      %10781 = vmatpush.bf16.msra.mxu0 %v10634
      %10782 = vmatpush.bf16.msra.mxu0 %v10633
      %10783 = vmatpush.bf16.msra.mxu0 %v10632
      %10784 = vmatmul.bf16.gmra.mxu0 %v10056
      %v10785 = vpop.f32.mrf.mxu0
      %v10786 = vadd.f32 %v9606, %v10785
      %v10787 = vpop.f32.mrf.mxu0
      %v10788 = vadd.f32 %v9606, %v10787
      %10789 = vmatmul.bf16.gmra.mxu0 %v10065
      %v10790 = vpop.f32.mrf.mxu0
      %v10791 = vadd.f32 %v9606, %v10790
      %v10792 = vpop.f32.mrf.mxu0
      %v10793 = vadd.f32 %v9606, %v10792
      %10794 = vmatmul.bf16.gmra.mxu0 %v10074
      %v10795 = vpop.f32.mrf.mxu0
      %v10796 = vadd.f32 %v9606, %v10795
      %v10797 = vpop.f32.mrf.mxu0
      %v10798 = vadd.f32 %v9606, %v10797
      %10799 = vmatmul.bf16.gmra.mxu0 %v10083
      %v10800 = vpop.f32.mrf.mxu0
      %v10801 = vadd.f32 %v9606, %v10800
      %v10802 = vpop.f32.mrf.mxu0
      %v10803 = vadd.f32 %v9606, %v10802
      %10804 = vmatmul.bf16.gmra.mxu0 %v10092
      %v10805 = vpop.f32.mrf.mxu0
      %v10806 = vadd.f32 %v9606, %v10805
      %v10807 = vpop.f32.mrf.mxu0
      %v10808 = vadd.f32 %v9606, %v10807
      %10809 = vmatmul.bf16.gmra.mxu0 %v10101
      %v10810 = vpop.f32.mrf.mxu0
      %v10811 = vadd.f32 %v9606, %v10810
      %v10812 = vpop.f32.mrf.mxu0
      %v10813 = vadd.f32 %v9606, %v10812
      %10814 = vmatmul.bf16.gmra.mxu0 %v10110
      %v10815 = vpop.f32.mrf.mxu0
      %v10816 = vadd.f32 %v9606, %v10815
      %v10817 = vpop.f32.mrf.mxu0
      %v10818 = vadd.f32 %v9606, %v10817
      %10819 = vmatmul.bf16.gmra.mxu0 %v10119
      %v10820 = vpop.f32.mrf.mxu0
      %v10821 = vadd.f32 %v9606, %v10820
      %v10822 = vpop.f32.mrf.mxu0
      %v10823 = vadd.f32 %v9606, %v10822
      %10824 = vmatmul.bf16.gmra.mxu0 %v10128
      %v10825 = vpop.f32.mrf.mxu0
      %v10826 = vadd.f32 %v9606, %v10825
      %v10827 = vpop.f32.mrf.mxu0
      %v10828 = vadd.f32 %v9606, %v10827
      %10829 = vmatmul.bf16.gmra.mxu0 %v10137
      %v10830 = vpop.f32.mrf.mxu0
      %v10831 = vadd.f32 %v9606, %v10830
      %v10832 = vpop.f32.mrf.mxu0
      %v10833 = vadd.f32 %v9606, %v10832
      %10834 = vmatmul.bf16.gmra.mxu0 %v10146
      %v10835 = vpop.f32.mrf.mxu0
      %v10836 = vadd.f32 %v9606, %v10835
      %v10837 = vpop.f32.mrf.mxu0
      %v10838 = vadd.f32 %v9606, %v10837
      %10839 = vmatmul.bf16.gmra.mxu0 %v10155
      %v10840 = vpop.f32.mrf.mxu0
      %v10841 = vadd.f32 %v9606, %v10840
      %v10842 = vpop.f32.mrf.mxu0
      %v10843 = vadd.f32 %v9606, %v10842
      %10844 = vmatmul.bf16.gmra.mxu0 %v10164
      %v10845 = vpop.f32.mrf.mxu0
      %v10846 = vadd.f32 %v9606, %v10845
      %v10847 = vpop.f32.mrf.mxu0
      %v10848 = vadd.f32 %v9606, %v10847
      %10849 = vmatmul.bf16.gmra.mxu0 %v10173
      %v10850 = vpop.f32.mrf.mxu0
      %v10851 = vadd.f32 %v9606, %v10850
      %v10852 = vpop.f32.mrf.mxu0
      %v10853 = vadd.f32 %v9606, %v10852
      %10854 = vmatmul.bf16.gmra.mxu0 %v10182
      %v10855 = vpop.f32.mrf.mxu0
      %v10856 = vadd.f32 %v9606, %v10855
      %v10857 = vpop.f32.mrf.mxu0
      %v10858 = vadd.f32 %v9606, %v10857
      %10859 = vmatmul.bf16.gmra.mxu0 %v10191
      %v10860 = vpop.f32.mrf.mxu0
      %v10861 = vadd.f32 %v9606, %v10860
      %v10862 = vpop.f32.mrf.mxu0
      %v10863 = vadd.f32 %v9606, %v10862
      %10864 = vdwg.mxu0
      %10865 = vmatpush.bf16.msra.mxu0 %v10647
      %10866 = vmatpush.bf16.msra.mxu0 %v10646
      %10867 = vmatpush.bf16.msra.mxu0 %v10645
      %10868 = vmatpush.bf16.msra.mxu0 %v10644
      %10869 = vmatpush.bf16.msra.mxu0 %v10643
      %10870 = vmatpush.bf16.msra.mxu0 %v10642
      %10871 = vmatpush.bf16.msra.mxu0 %v10641
      %10872 = vmatpush.bf16.msra.mxu0 %v10640
      %10873 = vmatmul.bf16.gmra.mxu0 %v10057
      %v10874 = vpop.f32.mrf.mxu0
      %v10875 = vadd.f32 %v10786, %v10874
      %v10876 = vpop.f32.mrf.mxu0
      %v10877 = vadd.f32 %v10788, %v10876
      %10878 = vmatmul.bf16.gmra.mxu0 %v10066
      %v10879 = vpop.f32.mrf.mxu0
      %v10880 = vadd.f32 %v10791, %v10879
      %v10881 = vpop.f32.mrf.mxu0
      %v10882 = vadd.f32 %v10793, %v10881
      %10883 = vmatmul.bf16.gmra.mxu0 %v10075
      %v10884 = vpop.f32.mrf.mxu0
      %v10885 = vadd.f32 %v10796, %v10884
      %v10886 = vpop.f32.mrf.mxu0
      %v10887 = vadd.f32 %v10798, %v10886
      %10888 = vmatmul.bf16.gmra.mxu0 %v10084
      %v10889 = vpop.f32.mrf.mxu0
      %v10890 = vadd.f32 %v10801, %v10889
      %v10891 = vpop.f32.mrf.mxu0
      %v10892 = vadd.f32 %v10803, %v10891
      %10893 = vmatmul.bf16.gmra.mxu0 %v10093
      %v10894 = vpop.f32.mrf.mxu0
      %v10895 = vadd.f32 %v10806, %v10894
      %v10896 = vpop.f32.mrf.mxu0
      %v10897 = vadd.f32 %v10808, %v10896
      %10898 = vmatmul.bf16.gmra.mxu0 %v10102
      %v10899 = vpop.f32.mrf.mxu0
      %v10900 = vadd.f32 %v10811, %v10899
      %v10901 = vpop.f32.mrf.mxu0
      %v10902 = vadd.f32 %v10813, %v10901
      %10903 = vmatmul.bf16.gmra.mxu0 %v10111
      %v10904 = vpop.f32.mrf.mxu0
      %v10905 = vadd.f32 %v10816, %v10904
      %v10906 = vpop.f32.mrf.mxu0
      %v10907 = vadd.f32 %v10818, %v10906
      %10908 = vmatmul.bf16.gmra.mxu0 %v10120
      %v10909 = vpop.f32.mrf.mxu0
      %v10910 = vadd.f32 %v10821, %v10909
      %v10911 = vpop.f32.mrf.mxu0
      %v10912 = vadd.f32 %v10823, %v10911
      %10913 = vmatmul.bf16.gmra.mxu0 %v10129
      %v10914 = vpop.f32.mrf.mxu0
      %v10915 = vadd.f32 %v10826, %v10914
      %v10916 = vpop.f32.mrf.mxu0
      %v10917 = vadd.f32 %v10828, %v10916
      %10918 = vmatmul.bf16.gmra.mxu0 %v10138
      %v10919 = vpop.f32.mrf.mxu0
      %v10920 = vadd.f32 %v10831, %v10919
      %v10921 = vpop.f32.mrf.mxu0
      %v10922 = vadd.f32 %v10833, %v10921
      %10923 = vmatmul.bf16.gmra.mxu0 %v10147
      %v10924 = vpop.f32.mrf.mxu0
      %v10925 = vadd.f32 %v10836, %v10924
      %v10926 = vpop.f32.mrf.mxu0
      %v10927 = vadd.f32 %v10838, %v10926
      %10928 = vmatmul.bf16.gmra.mxu0 %v10156
      %v10929 = vpop.f32.mrf.mxu0
      %v10930 = vadd.f32 %v10841, %v10929
      %v10931 = vpop.f32.mrf.mxu0
      %v10932 = vadd.f32 %v10843, %v10931
      %10933 = vmatmul.bf16.gmra.mxu0 %v10165
      %v10934 = vpop.f32.mrf.mxu0
      %v10935 = vadd.f32 %v10846, %v10934
      %v10936 = vpop.f32.mrf.mxu0
      %v10937 = vadd.f32 %v10848, %v10936
      %10938 = vmatmul.bf16.gmra.mxu0 %v10174
      %v10939 = vpop.f32.mrf.mxu0
      %v10940 = vadd.f32 %v10851, %v10939
      %v10941 = vpop.f32.mrf.mxu0
      %v10942 = vadd.f32 %v10853, %v10941
      %10943 = vmatmul.bf16.gmra.mxu0 %v10183
      %v10944 = vpop.f32.mrf.mxu0
      %v10945 = vadd.f32 %v10856, %v10944
      %v10946 = vpop.f32.mrf.mxu0
      %v10947 = vadd.f32 %v10858, %v10946
      %10948 = vmatmul.bf16.gmra.mxu0 %v10192
      %v10949 = vpop.f32.mrf.mxu0
      %v10950 = vadd.f32 %v10861, %v10949
      %v10951 = vpop.f32.mrf.mxu0
      %v10952 = vadd.f32 %v10863, %v10951
      %10953 = vdwg.mxu0
      %10954 = vmatpush.bf16.msra.mxu0 %v10655
      %10955 = vmatpush.bf16.msra.mxu0 %v10654
      %10956 = vmatpush.bf16.msra.mxu0 %v10653
      %10957 = vmatpush.bf16.msra.mxu0 %v10652
      %10958 = vmatpush.bf16.msra.mxu0 %v10651
      %10959 = vmatpush.bf16.msra.mxu0 %v10650
      %10960 = vmatpush.bf16.msra.mxu0 %v10649
      %10961 = vmatpush.bf16.msra.mxu0 %v10648
      %10962 = vmatmul.bf16.gmra.mxu0 %v10058
      %v10963 = vpop.f32.mrf.mxu0
      %v10964 = vadd.f32 %v10875, %v10963
      %v10965 = vpop.f32.mrf.mxu0
      %v10966 = vadd.f32 %v10877, %v10965
      %10967 = vmatmul.bf16.gmra.mxu0 %v10067
      %v10968 = vpop.f32.mrf.mxu0
      %v10969 = vadd.f32 %v10880, %v10968
      %v10970 = vpop.f32.mrf.mxu0
      %v10971 = vadd.f32 %v10882, %v10970
      %10972 = vmatmul.bf16.gmra.mxu0 %v10076
      %v10973 = vpop.f32.mrf.mxu0
      %v10974 = vadd.f32 %v10885, %v10973
      %v10975 = vpop.f32.mrf.mxu0
      %v10976 = vadd.f32 %v10887, %v10975
      %10977 = vmatmul.bf16.gmra.mxu0 %v10085
      %v10978 = vpop.f32.mrf.mxu0
      %v10979 = vadd.f32 %v10890, %v10978
      %v10980 = vpop.f32.mrf.mxu0
      %v10981 = vadd.f32 %v10892, %v10980
      %10982 = vmatmul.bf16.gmra.mxu0 %v10094
      %v10983 = vpop.f32.mrf.mxu0
      %v10984 = vadd.f32 %v10895, %v10983
      %v10985 = vpop.f32.mrf.mxu0
      %v10986 = vadd.f32 %v10897, %v10985
      %10987 = vmatmul.bf16.gmra.mxu0 %v10103
      %v10988 = vpop.f32.mrf.mxu0
      %v10989 = vadd.f32 %v10900, %v10988
      %v10990 = vpop.f32.mrf.mxu0
      %v10991 = vadd.f32 %v10902, %v10990
      %10992 = vmatmul.bf16.gmra.mxu0 %v10112
      %v10993 = vpop.f32.mrf.mxu0
      %v10994 = vadd.f32 %v10905, %v10993
      %v10995 = vpop.f32.mrf.mxu0
      %v10996 = vadd.f32 %v10907, %v10995
      %10997 = vmatmul.bf16.gmra.mxu0 %v10121
      %v10998 = vpop.f32.mrf.mxu0
      %v10999 = vadd.f32 %v10910, %v10998
      %v11000 = vpop.f32.mrf.mxu0
      %v11001 = vadd.f32 %v10912, %v11000
      %11002 = vmatmul.bf16.gmra.mxu0 %v10130
      %v11003 = vpop.f32.mrf.mxu0
      %v11004 = vadd.f32 %v10915, %v11003
      %v11005 = vpop.f32.mrf.mxu0
      %v11006 = vadd.f32 %v10917, %v11005
      %11007 = vmatmul.bf16.gmra.mxu0 %v10139
      %v11008 = vpop.f32.mrf.mxu0
      %v11009 = vadd.f32 %v10920, %v11008
      %v11010 = vpop.f32.mrf.mxu0
      %v11011 = vadd.f32 %v10922, %v11010
      %11012 = vmatmul.bf16.gmra.mxu0 %v10148
      %v11013 = vpop.f32.mrf.mxu0
      %v11014 = vadd.f32 %v10925, %v11013
      %v11015 = vpop.f32.mrf.mxu0
      %v11016 = vadd.f32 %v10927, %v11015
      %11017 = vmatmul.bf16.gmra.mxu0 %v10157
      %v11018 = vpop.f32.mrf.mxu0
      %v11019 = vadd.f32 %v10930, %v11018
      %v11020 = vpop.f32.mrf.mxu0
      %v11021 = vadd.f32 %v10932, %v11020
      %11022 = vmatmul.bf16.gmra.mxu0 %v10166
      %v11023 = vpop.f32.mrf.mxu0
      %v11024 = vadd.f32 %v10935, %v11023
      %v11025 = vpop.f32.mrf.mxu0
      %v11026 = vadd.f32 %v10937, %v11025
      %11027 = vmatmul.bf16.gmra.mxu0 %v10175
      %v11028 = vpop.f32.mrf.mxu0
      %v11029 = vadd.f32 %v10940, %v11028
      %v11030 = vpop.f32.mrf.mxu0
      %v11031 = vadd.f32 %v10942, %v11030
      %11032 = vmatmul.bf16.gmra.mxu0 %v10184
      %v11033 = vpop.f32.mrf.mxu0
      %v11034 = vadd.f32 %v10945, %v11033
      %v11035 = vpop.f32.mrf.mxu0
      %v11036 = vadd.f32 %v10947, %v11035
      %11037 = vmatmul.bf16.gmra.mxu0 %v10193
      %v11038 = vpop.f32.mrf.mxu0
      %v11039 = vadd.f32 %v10950, %v11038
      %v11040 = vpop.f32.mrf.mxu0
      %v11041 = vadd.f32 %v10952, %v11040
      %11042 = vdwg.mxu0
      %11043 = vmatpush.bf16.msra.mxu0 %v10663
      %11044 = vmatpush.bf16.msra.mxu0 %v10662
      %11045 = vmatpush.bf16.msra.mxu0 %v10661
      %11046 = vmatpush.bf16.msra.mxu0 %v10660
      %11047 = vmatpush.bf16.msra.mxu0 %v10659
      %11048 = vmatpush.bf16.msra.mxu0 %v10658
      %11049 = vmatpush.bf16.msra.mxu0 %v10657
      %11050 = vmatpush.bf16.msra.mxu0 %v10656
      %11051 = vmatmul.bf16.gmra.mxu0 %v10059
      %v11052 = vpop.f32.mrf.mxu0
      %v11053 = vadd.f32 %v10964, %v11052
      %v11054 = vpop.f32.mrf.mxu0
      %v11055 = vadd.f32 %v10966, %v11054
      %11056 = vmatmul.bf16.gmra.mxu0 %v10068
      %v11057 = vpop.f32.mrf.mxu0
      %v11058 = vadd.f32 %v10969, %v11057
      %v11059 = vpop.f32.mrf.mxu0
      %v11060 = vadd.f32 %v10971, %v11059
      %11061 = vmatmul.bf16.gmra.mxu0 %v10077
      %v11062 = vpop.f32.mrf.mxu0
      %v11063 = vadd.f32 %v10974, %v11062
      %v11064 = vpop.f32.mrf.mxu0
      %v11065 = vadd.f32 %v10976, %v11064
      %11066 = vmatmul.bf16.gmra.mxu0 %v10086
      %v11067 = vpop.f32.mrf.mxu0
      %v11068 = vadd.f32 %v10979, %v11067
      %v11069 = vpop.f32.mrf.mxu0
      %v11070 = vadd.f32 %v10981, %v11069
      %11071 = vmatmul.bf16.gmra.mxu0 %v10095
      %v11072 = vpop.f32.mrf.mxu0
      %v11073 = vadd.f32 %v10984, %v11072
      %v11074 = vpop.f32.mrf.mxu0
      %v11075 = vadd.f32 %v10986, %v11074
      %11076 = vmatmul.bf16.gmra.mxu0 %v10104
      %v11077 = vpop.f32.mrf.mxu0
      %v11078 = vadd.f32 %v10989, %v11077
      %v11079 = vpop.f32.mrf.mxu0
      %v11080 = vadd.f32 %v10991, %v11079
      %11081 = vmatmul.bf16.gmra.mxu0 %v10113
      %v11082 = vpop.f32.mrf.mxu0
      %v11083 = vadd.f32 %v10994, %v11082
      %v11084 = vpop.f32.mrf.mxu0
      %v11085 = vadd.f32 %v10996, %v11084
      %11086 = vmatmul.bf16.gmra.mxu0 %v10122
      %v11087 = vpop.f32.mrf.mxu0
      %v11088 = vadd.f32 %v10999, %v11087
      %v11089 = vpop.f32.mrf.mxu0
      %v11090 = vadd.f32 %v11001, %v11089
      %11091 = vmatmul.bf16.gmra.mxu0 %v10131
      %v11092 = vpop.f32.mrf.mxu0
      %v11093 = vadd.f32 %v11004, %v11092
      %v11094 = vpop.f32.mrf.mxu0
      %v11095 = vadd.f32 %v11006, %v11094
      %11096 = vmatmul.bf16.gmra.mxu0 %v10140
      %v11097 = vpop.f32.mrf.mxu0
      %v11098 = vadd.f32 %v11009, %v11097
      %v11099 = vpop.f32.mrf.mxu0
      %v11100 = vadd.f32 %v11011, %v11099
      %11101 = vmatmul.bf16.gmra.mxu0 %v10149
      %v11102 = vpop.f32.mrf.mxu0
      %v11103 = vadd.f32 %v11014, %v11102
      %v11104 = vpop.f32.mrf.mxu0
      %v11105 = vadd.f32 %v11016, %v11104
      %11106 = vmatmul.bf16.gmra.mxu0 %v10158
      %v11107 = vpop.f32.mrf.mxu0
      %v11108 = vadd.f32 %v11019, %v11107
      %v11109 = vpop.f32.mrf.mxu0
      %v11110 = vadd.f32 %v11021, %v11109
      %11111 = vmatmul.bf16.gmra.mxu0 %v10167
      %v11112 = vpop.f32.mrf.mxu0
      %v11113 = vadd.f32 %v11024, %v11112
      %v11114 = vpop.f32.mrf.mxu0
      %v11115 = vadd.f32 %v11026, %v11114
      %11116 = vmatmul.bf16.gmra.mxu0 %v10176
      %v11117 = vpop.f32.mrf.mxu0
      %v11118 = vadd.f32 %v11029, %v11117
      %v11119 = vpop.f32.mrf.mxu0
      %v11120 = vadd.f32 %v11031, %v11119
      %11121 = vmatmul.bf16.gmra.mxu0 %v10185
      %v11122 = vpop.f32.mrf.mxu0
      %v11123 = vadd.f32 %v11034, %v11122
      %v11124 = vpop.f32.mrf.mxu0
      %v11125 = vadd.f32 %v11036, %v11124
      %11126 = vmatmul.bf16.gmra.mxu0 %v10194
      %v11127 = vpop.f32.mrf.mxu0
      %v11128 = vadd.f32 %v11039, %v11127
      %v11129 = vpop.f32.mrf.mxu0
      %v11130 = vadd.f32 %v11041, %v11129
      %11131 = vdwg.mxu0
      %11132 = vmatpush.bf16.msra.mxu0 %v10671
      %11133 = vmatpush.bf16.msra.mxu0 %v10670
      %11134 = vmatpush.bf16.msra.mxu0 %v10669
      %11135 = vmatpush.bf16.msra.mxu0 %v10668
      %11136 = vmatpush.bf16.msra.mxu0 %v10667
      %11137 = vmatpush.bf16.msra.mxu0 %v10666
      %11138 = vmatpush.bf16.msra.mxu0 %v10665
      %11139 = vmatpush.bf16.msra.mxu0 %v10664
      %11140 = vmatmul.bf16.gmra.mxu0 %v10060
      %v11141 = vpop.f32.mrf.mxu0
      %v11142 = vadd.f32 %v11053, %v11141
      %v11143 = vpop.f32.mrf.mxu0
      %v11144 = vadd.f32 %v11055, %v11143
      %11145 = vmatmul.bf16.gmra.mxu0 %v10069
      %v11146 = vpop.f32.mrf.mxu0
      %v11147 = vadd.f32 %v11058, %v11146
      %v11148 = vpop.f32.mrf.mxu0
      %v11149 = vadd.f32 %v11060, %v11148
      %11150 = vmatmul.bf16.gmra.mxu0 %v10078
      %v11151 = vpop.f32.mrf.mxu0
      %v11152 = vadd.f32 %v11063, %v11151
      %v11153 = vpop.f32.mrf.mxu0
      %v11154 = vadd.f32 %v11065, %v11153
      %11155 = vmatmul.bf16.gmra.mxu0 %v10087
      %v11156 = vpop.f32.mrf.mxu0
      %v11157 = vadd.f32 %v11068, %v11156
      %v11158 = vpop.f32.mrf.mxu0
      %v11159 = vadd.f32 %v11070, %v11158
      %11160 = vmatmul.bf16.gmra.mxu0 %v10096
      %v11161 = vpop.f32.mrf.mxu0
      %v11162 = vadd.f32 %v11073, %v11161
      %v11163 = vpop.f32.mrf.mxu0
      %v11164 = vadd.f32 %v11075, %v11163
      %11165 = vmatmul.bf16.gmra.mxu0 %v10105
      %v11166 = vpop.f32.mrf.mxu0
      %v11167 = vadd.f32 %v11078, %v11166
      %v11168 = vpop.f32.mrf.mxu0
      %v11169 = vadd.f32 %v11080, %v11168
      %11170 = vmatmul.bf16.gmra.mxu0 %v10114
      %v11171 = vpop.f32.mrf.mxu0
      %v11172 = vadd.f32 %v11083, %v11171
      %v11173 = vpop.f32.mrf.mxu0
      %v11174 = vadd.f32 %v11085, %v11173
      %11175 = vmatmul.bf16.gmra.mxu0 %v10123
      %v11176 = vpop.f32.mrf.mxu0
      %v11177 = vadd.f32 %v11088, %v11176
      %v11178 = vpop.f32.mrf.mxu0
      %v11179 = vadd.f32 %v11090, %v11178
      %11180 = vmatmul.bf16.gmra.mxu0 %v10132
      %v11181 = vpop.f32.mrf.mxu0
      %v11182 = vadd.f32 %v11093, %v11181
      %v11183 = vpop.f32.mrf.mxu0
      %v11184 = vadd.f32 %v11095, %v11183
      %11185 = vmatmul.bf16.gmra.mxu0 %v10141
      %v11186 = vpop.f32.mrf.mxu0
      %v11187 = vadd.f32 %v11098, %v11186
      %v11188 = vpop.f32.mrf.mxu0
      %v11189 = vadd.f32 %v11100, %v11188
      %11190 = vmatmul.bf16.gmra.mxu0 %v10150
      %v11191 = vpop.f32.mrf.mxu0
      %v11192 = vadd.f32 %v11103, %v11191
      %v11193 = vpop.f32.mrf.mxu0
      %v11194 = vadd.f32 %v11105, %v11193
      %11195 = vmatmul.bf16.gmra.mxu0 %v10159
      %v11196 = vpop.f32.mrf.mxu0
      %v11197 = vadd.f32 %v11108, %v11196
      %v11198 = vpop.f32.mrf.mxu0
      %v11199 = vadd.f32 %v11110, %v11198
      %11200 = vmatmul.bf16.gmra.mxu0 %v10168
      %v11201 = vpop.f32.mrf.mxu0
      %v11202 = vadd.f32 %v11113, %v11201
      %v11203 = vpop.f32.mrf.mxu0
      %v11204 = vadd.f32 %v11115, %v11203
      %11205 = vmatmul.bf16.gmra.mxu0 %v10177
      %v11206 = vpop.f32.mrf.mxu0
      %v11207 = vadd.f32 %v11118, %v11206
      %v11208 = vpop.f32.mrf.mxu0
      %v11209 = vadd.f32 %v11120, %v11208
      %11210 = vmatmul.bf16.gmra.mxu0 %v10186
      %v11211 = vpop.f32.mrf.mxu0
      %v11212 = vadd.f32 %v11123, %v11211
      %v11213 = vpop.f32.mrf.mxu0
      %v11214 = vadd.f32 %v11125, %v11213
      %11215 = vmatmul.bf16.gmra.mxu0 %v10195
      %v11216 = vpop.f32.mrf.mxu0
      %v11217 = vadd.f32 %v11128, %v11216
      %v11218 = vpop.f32.mrf.mxu0
      %v11219 = vadd.f32 %v11130, %v11218
      %11220 = vdwg.mxu0
      %11221 = vmatpush.bf16.msra.mxu0 %v10679
      %11222 = vmatpush.bf16.msra.mxu0 %v10678
      %11223 = vmatpush.bf16.msra.mxu0 %v10677
      %11224 = vmatpush.bf16.msra.mxu0 %v10676
      %11225 = vmatpush.bf16.msra.mxu0 %v10675
      %11226 = vmatpush.bf16.msra.mxu0 %v10674
      %11227 = vmatpush.bf16.msra.mxu0 %v10673
      %11228 = vmatpush.bf16.msra.mxu0 %v10672
      %11229 = vmatmul.bf16.gmra.mxu0 %v10061
      %v11230 = vpop.f32.mrf.mxu0
      %v11231 = vadd.f32 %v11142, %v11230
      %v11232 = vpop.f32.mrf.mxu0
      %v11233 = vadd.f32 %v11144, %v11232
      %11234 = vmatmul.bf16.gmra.mxu0 %v10070
      %v11235 = vpop.f32.mrf.mxu0
      %v11236 = vadd.f32 %v11147, %v11235
      %v11237 = vpop.f32.mrf.mxu0
      %v11238 = vadd.f32 %v11149, %v11237
      %11239 = vmatmul.bf16.gmra.mxu0 %v10079
      %v11240 = vpop.f32.mrf.mxu0
      %v11241 = vadd.f32 %v11152, %v11240
      %v11242 = vpop.f32.mrf.mxu0
      %v11243 = vadd.f32 %v11154, %v11242
      %11244 = vmatmul.bf16.gmra.mxu0 %v10088
      %v11245 = vpop.f32.mrf.mxu0
      %v11246 = vadd.f32 %v11157, %v11245
      %v11247 = vpop.f32.mrf.mxu0
      %v11248 = vadd.f32 %v11159, %v11247
      %11249 = vmatmul.bf16.gmra.mxu0 %v10097
      %v11250 = vpop.f32.mrf.mxu0
      %v11251 = vadd.f32 %v11162, %v11250
      %v11252 = vpop.f32.mrf.mxu0
      %v11253 = vadd.f32 %v11164, %v11252
      %11254 = vmatmul.bf16.gmra.mxu0 %v10106
      %v11255 = vpop.f32.mrf.mxu0
      %v11256 = vadd.f32 %v11167, %v11255
      %v11257 = vpop.f32.mrf.mxu0
      %v11258 = vadd.f32 %v11169, %v11257
      %11259 = vmatmul.bf16.gmra.mxu0 %v10115
      %v11260 = vpop.f32.mrf.mxu0
      %v11261 = vadd.f32 %v11172, %v11260
      %v11262 = vpop.f32.mrf.mxu0
      %v11263 = vadd.f32 %v11174, %v11262
      %11264 = vmatmul.bf16.gmra.mxu0 %v10124
      %v11265 = vpop.f32.mrf.mxu0
      %v11266 = vadd.f32 %v11177, %v11265
      %v11267 = vpop.f32.mrf.mxu0
      %v11268 = vadd.f32 %v11179, %v11267
      %11269 = vmatmul.bf16.gmra.mxu0 %v10133
      %v11270 = vpop.f32.mrf.mxu0
      %v11271 = vadd.f32 %v11182, %v11270
      %v11272 = vpop.f32.mrf.mxu0
      %v11273 = vadd.f32 %v11184, %v11272
      %11274 = vmatmul.bf16.gmra.mxu0 %v10142
      %v11275 = vpop.f32.mrf.mxu0
      %v11276 = vadd.f32 %v11187, %v11275
      %v11277 = vpop.f32.mrf.mxu0
      %v11278 = vadd.f32 %v11189, %v11277
      %11279 = vmatmul.bf16.gmra.mxu0 %v10151
      %v11280 = vpop.f32.mrf.mxu0
      %v11281 = vadd.f32 %v11192, %v11280
      %v11282 = vpop.f32.mrf.mxu0
      %v11283 = vadd.f32 %v11194, %v11282
      %11284 = vmatmul.bf16.gmra.mxu0 %v10160
      %v11285 = vpop.f32.mrf.mxu0
      %v11286 = vadd.f32 %v11197, %v11285
      %v11287 = vpop.f32.mrf.mxu0
      %v11288 = vadd.f32 %v11199, %v11287
      %11289 = vmatmul.bf16.gmra.mxu0 %v10169
      %v11290 = vpop.f32.mrf.mxu0
      %v11291 = vadd.f32 %v11202, %v11290
      %v11292 = vpop.f32.mrf.mxu0
      %v11293 = vadd.f32 %v11204, %v11292
      %11294 = vmatmul.bf16.gmra.mxu0 %v10178
      %v11295 = vpop.f32.mrf.mxu0
      %v11296 = vadd.f32 %v11207, %v11295
      %v11297 = vpop.f32.mrf.mxu0
      %v11298 = vadd.f32 %v11209, %v11297
      %11299 = vmatmul.bf16.gmra.mxu0 %v10187
      %v11300 = vpop.f32.mrf.mxu0
      %v11301 = vadd.f32 %v11212, %v11300
      %v11302 = vpop.f32.mrf.mxu0
      %v11303 = vadd.f32 %v11214, %v11302
      %11304 = vmatmul.bf16.gmra.mxu0 %v10196
      %v11305 = vpop.f32.mrf.mxu0
      %v11306 = vadd.f32 %v11217, %v11305
      %v11307 = vpop.f32.mrf.mxu0
      %v11308 = vadd.f32 %v11219, %v11307
      %11309 = vdwg.mxu0
      %11310 = vmatpush.bf16.msra.mxu0 %v10687
      %11311 = vmatpush.bf16.msra.mxu0 %v10686
      %11312 = vmatpush.bf16.msra.mxu0 %v10685
      %11313 = vmatpush.bf16.msra.mxu0 %v10684
      %11314 = vmatpush.bf16.msra.mxu0 %v10683
      %11315 = vmatpush.bf16.msra.mxu0 %v10682
      %11316 = vmatpush.bf16.msra.mxu0 %v10681
      %11317 = vmatpush.bf16.msra.mxu0 %v10680
      %11318 = vmatmul.bf16.gmra.mxu0 %v10062
      %v11319 = vpop.f32.mrf.mxu0
      %v11320 = vadd.f32 %v11231, %v11319
      %v11321 = vpop.f32.mrf.mxu0
      %v11322 = vadd.f32 %v11233, %v11321
      %11323 = vmatmul.bf16.gmra.mxu0 %v10071
      %v11324 = vpop.f32.mrf.mxu0
      %v11325 = vadd.f32 %v11236, %v11324
      %v11326 = vpop.f32.mrf.mxu0
      %v11327 = vadd.f32 %v11238, %v11326
      %11328 = vmatmul.bf16.gmra.mxu0 %v10080
      %v11329 = vpop.f32.mrf.mxu0
      %v11330 = vadd.f32 %v11241, %v11329
      %v11331 = vpop.f32.mrf.mxu0
      %v11332 = vadd.f32 %v11243, %v11331
      %11333 = vmatmul.bf16.gmra.mxu0 %v10089
      %v11334 = vpop.f32.mrf.mxu0
      %v11335 = vadd.f32 %v11246, %v11334
      %v11336 = vpop.f32.mrf.mxu0
      %v11337 = vadd.f32 %v11248, %v11336
      %11338 = vmatmul.bf16.gmra.mxu0 %v10098
      %v11339 = vpop.f32.mrf.mxu0
      %v11340 = vadd.f32 %v11251, %v11339
      %v11341 = vpop.f32.mrf.mxu0
      %v11342 = vadd.f32 %v11253, %v11341
      %11343 = vmatmul.bf16.gmra.mxu0 %v10107
      %v11344 = vpop.f32.mrf.mxu0
      %v11345 = vadd.f32 %v11256, %v11344
      %v11346 = vpop.f32.mrf.mxu0
      %v11347 = vadd.f32 %v11258, %v11346
      %11348 = vmatmul.bf16.gmra.mxu0 %v10116
      %v11349 = vpop.f32.mrf.mxu0
      %v11350 = vadd.f32 %v11261, %v11349
      %v11351 = vpop.f32.mrf.mxu0
      %v11352 = vadd.f32 %v11263, %v11351
      %11353 = vmatmul.bf16.gmra.mxu0 %v10125
      %v11354 = vpop.f32.mrf.mxu0
      %v11355 = vadd.f32 %v11266, %v11354
      %v11356 = vpop.f32.mrf.mxu0
      %v11357 = vadd.f32 %v11268, %v11356
      %11358 = vmatmul.bf16.gmra.mxu0 %v10134
      %v11359 = vpop.f32.mrf.mxu0
      %v11360 = vadd.f32 %v11271, %v11359
      %v11361 = vpop.f32.mrf.mxu0
      %v11362 = vadd.f32 %v11273, %v11361
      %11363 = vmatmul.bf16.gmra.mxu0 %v10143
      %v11364 = vpop.f32.mrf.mxu0
      %v11365 = vadd.f32 %v11276, %v11364
      %v11366 = vpop.f32.mrf.mxu0
      %v11367 = vadd.f32 %v11278, %v11366
      %11368 = vmatmul.bf16.gmra.mxu0 %v10152
      %v11369 = vpop.f32.mrf.mxu0
      %v11370 = vadd.f32 %v11281, %v11369
      %v11371 = vpop.f32.mrf.mxu0
      %v11372 = vadd.f32 %v11283, %v11371
      %11373 = vmatmul.bf16.gmra.mxu0 %v10161
      %v11374 = vpop.f32.mrf.mxu0
      %v11375 = vadd.f32 %v11286, %v11374
      %v11376 = vpop.f32.mrf.mxu0
      %v11377 = vadd.f32 %v11288, %v11376
      %11378 = vmatmul.bf16.gmra.mxu0 %v10170
      %v11379 = vpop.f32.mrf.mxu0
      %v11380 = vadd.f32 %v11291, %v11379
      %v11381 = vpop.f32.mrf.mxu0
      %v11382 = vadd.f32 %v11293, %v11381
      %11383 = vmatmul.bf16.gmra.mxu0 %v10179
      %v11384 = vpop.f32.mrf.mxu0
      %v11385 = vadd.f32 %v11296, %v11384
      %v11386 = vpop.f32.mrf.mxu0
      %v11387 = vadd.f32 %v11298, %v11386
      %11388 = vmatmul.bf16.gmra.mxu0 %v10188
      %v11389 = vpop.f32.mrf.mxu0
      %v11390 = vadd.f32 %v11301, %v11389
      %v11391 = vpop.f32.mrf.mxu0
      %v11392 = vadd.f32 %v11303, %v11391
      %11393 = vmatmul.bf16.gmra.mxu0 %v10197
      %v11394 = vpop.f32.mrf.mxu0
      %v11395 = vadd.f32 %v11306, %v11394
      %v11396 = vpop.f32.mrf.mxu0
      %v11397 = vadd.f32 %v11308, %v11396
      %11398 = vdwg.mxu0
      %11399 = vmatpush.bf16.msra.mxu0 %v10695
      %11400 = vmatpush.bf16.msra.mxu0 %v10694
      %11401 = vmatpush.bf16.msra.mxu0 %v10693
      %11402 = vmatpush.bf16.msra.mxu0 %v10692
      %11403 = vmatpush.bf16.msra.mxu0 %v10691
      %11404 = vmatpush.bf16.msra.mxu0 %v10690
      %11405 = vmatpush.bf16.msra.mxu0 %v10689
      %11406 = vmatpush.bf16.msra.mxu0 %v10688
      %11407 = vmatmul.bf16.gmra.mxu0 %v10063
      %v11408 = vpop.f32.mrf.mxu0
      %v11409 = vadd.f32 %v11320, %v11408
      %v11410 = vpop.f32.mrf.mxu0
      %v11411 = vadd.f32 %v11322, %v11410
      %11412 = vmatmul.bf16.gmra.mxu0 %v10072
      %v11413 = vpop.f32.mrf.mxu0
      %v11414 = vadd.f32 %v11325, %v11413
      %v11415 = vpop.f32.mrf.mxu0
      %v11416 = vadd.f32 %v11327, %v11415
      %11417 = vmatmul.bf16.gmra.mxu0 %v10081
      %v11418 = vpop.f32.mrf.mxu0
      %v11419 = vadd.f32 %v11330, %v11418
      %v11420 = vpop.f32.mrf.mxu0
      %v11421 = vadd.f32 %v11332, %v11420
      %11422 = vmatmul.bf16.gmra.mxu0 %v10090
      %v11423 = vpop.f32.mrf.mxu0
      %v11424 = vadd.f32 %v11335, %v11423
      %v11425 = vpop.f32.mrf.mxu0
      %v11426 = vadd.f32 %v11337, %v11425
      %11427 = vmatmul.bf16.gmra.mxu0 %v10099
      %v11428 = vpop.f32.mrf.mxu0
      %v11429 = vadd.f32 %v11340, %v11428
      %v11430 = vpop.f32.mrf.mxu0
      %v11431 = vadd.f32 %v11342, %v11430
      %11432 = vmatmul.bf16.gmra.mxu0 %v10108
      %v11433 = vpop.f32.mrf.mxu0
      %v11434 = vadd.f32 %v11345, %v11433
      %v11435 = vpop.f32.mrf.mxu0
      %v11436 = vadd.f32 %v11347, %v11435
      %11437 = vmatmul.bf16.gmra.mxu0 %v10117
      %v11438 = vpop.f32.mrf.mxu0
      %v11439 = vadd.f32 %v11350, %v11438
      %v11440 = vpop.f32.mrf.mxu0
      %v11441 = vadd.f32 %v11352, %v11440
      %11442 = vmatmul.bf16.gmra.mxu0 %v10126
      %v11443 = vpop.f32.mrf.mxu0
      %v11444 = vadd.f32 %v11355, %v11443
      %v11445 = vpop.f32.mrf.mxu0
      %v11446 = vadd.f32 %v11357, %v11445
      %11447 = vmatmul.bf16.gmra.mxu0 %v10135
      %v11448 = vpop.f32.mrf.mxu0
      %v11449 = vadd.f32 %v11360, %v11448
      %v11450 = vpop.f32.mrf.mxu0
      %v11451 = vadd.f32 %v11362, %v11450
      %11452 = vmatmul.bf16.gmra.mxu0 %v10144
      %v11453 = vpop.f32.mrf.mxu0
      %v11454 = vadd.f32 %v11365, %v11453
      %v11455 = vpop.f32.mrf.mxu0
      %v11456 = vadd.f32 %v11367, %v11455
      %11457 = vmatmul.bf16.gmra.mxu0 %v10153
      %v11458 = vpop.f32.mrf.mxu0
      %v11459 = vadd.f32 %v11370, %v11458
      %v11460 = vpop.f32.mrf.mxu0
      %v11461 = vadd.f32 %v11372, %v11460
      %11462 = vmatmul.bf16.gmra.mxu0 %v10162
      %v11463 = vpop.f32.mrf.mxu0
      %v11464 = vadd.f32 %v11375, %v11463
      %v11465 = vpop.f32.mrf.mxu0
      %v11466 = vadd.f32 %v11377, %v11465
      %11467 = vmatmul.bf16.gmra.mxu0 %v10171
      %v11468 = vpop.f32.mrf.mxu0
      %v11469 = vadd.f32 %v11380, %v11468
      %v11470 = vpop.f32.mrf.mxu0
      %v11471 = vadd.f32 %v11382, %v11470
      %11472 = vmatmul.bf16.gmra.mxu0 %v10180
      %v11473 = vpop.f32.mrf.mxu0
      %v11474 = vadd.f32 %v11385, %v11473
      %v11475 = vpop.f32.mrf.mxu0
      %v11476 = vadd.f32 %v11387, %v11475
      %11477 = vmatmul.bf16.gmra.mxu0 %v10189
      %v11478 = vpop.f32.mrf.mxu0
      %v11479 = vadd.f32 %v11390, %v11478
      %v11480 = vpop.f32.mrf.mxu0
      %v11481 = vadd.f32 %v11392, %v11480
      %11482 = vmatmul.bf16.gmra.mxu0 %v10198
      %v11483 = vpop.f32.mrf.mxu0
      %v11484 = vadd.f32 %v11395, %v11483
      %v11485 = vpop.f32.mrf.mxu0
      %v11486 = vadd.f32 %v11397, %v11485
      %11487 = vdwg.mxu0
      %11488 = vmatpush.bf16.msra.mxu0 %v10703
      %11489 = vmatpush.bf16.msra.mxu0 %v10702
      %11490 = vmatpush.bf16.msra.mxu0 %v10701
      %11491 = vmatpush.bf16.msra.mxu0 %v10700
      %11492 = vmatpush.bf16.msra.mxu0 %v10699
      %11493 = vmatpush.bf16.msra.mxu0 %v10698
      %11494 = vmatpush.bf16.msra.mxu0 %v10697
      %11495 = vmatpush.bf16.msra.mxu0 %v10696
      %11496 = vmatmul.bf16.gmra.mxu0 %v10064
      %v11497 = vpop.f32.mrf.mxu0
      %v11498 = vadd.f32 %v11409, %v11497
      %v11499 = vpop.f32.mrf.mxu0
      %v11500 = vadd.f32 %v11411, %v11499
      %11501 = vmatmul.bf16.gmra.mxu0 %v10073
      %v11502 = vpop.f32.mrf.mxu0
      %v11503 = vadd.f32 %v11414, %v11502
      %v11504 = vpop.f32.mrf.mxu0
      %v11505 = vadd.f32 %v11416, %v11504
      %11506 = vmatmul.bf16.gmra.mxu0 %v10082
      %v11507 = vpop.f32.mrf.mxu0
      %v11508 = vadd.f32 %v11419, %v11507
      %v11509 = vpop.f32.mrf.mxu0
      %v11510 = vadd.f32 %v11421, %v11509
      %11511 = vmatmul.bf16.gmra.mxu0 %v10091
      %v11512 = vpop.f32.mrf.mxu0
      %v11513 = vadd.f32 %v11424, %v11512
      %v11514 = vpop.f32.mrf.mxu0
      %v11515 = vadd.f32 %v11426, %v11514
      %11516 = vmatmul.bf16.gmra.mxu0 %v10100
      %v11517 = vpop.f32.mrf.mxu0
      %v11518 = vadd.f32 %v11429, %v11517
      %v11519 = vpop.f32.mrf.mxu0
      %v11520 = vadd.f32 %v11431, %v11519
      %11521 = vmatmul.bf16.gmra.mxu0 %v10109
      %v11522 = vpop.f32.mrf.mxu0
      %v11523 = vadd.f32 %v11434, %v11522
      %v11524 = vpop.f32.mrf.mxu0
      %v11525 = vadd.f32 %v11436, %v11524
      %11526 = vmatmul.bf16.gmra.mxu0 %v10118
      %v11527 = vpop.f32.mrf.mxu0
      %v11528 = vadd.f32 %v11439, %v11527
      %v11529 = vpop.f32.mrf.mxu0
      %v11530 = vadd.f32 %v11441, %v11529
      %11531 = vmatmul.bf16.gmra.mxu0 %v10127
      %v11532 = vpop.f32.mrf.mxu0
      %v11533 = vadd.f32 %v11444, %v11532
      %v11534 = vpop.f32.mrf.mxu0
      %v11535 = vadd.f32 %v11446, %v11534
      %11536 = vmatmul.bf16.gmra.mxu0 %v10136
      %v11537 = vpop.f32.mrf.mxu0
      %v11538 = vadd.f32 %v11449, %v11537
      %v11539 = vpop.f32.mrf.mxu0
      %v11540 = vadd.f32 %v11451, %v11539
      %11541 = vmatmul.bf16.gmra.mxu0 %v10145
      %v11542 = vpop.f32.mrf.mxu0
      %v11543 = vadd.f32 %v11454, %v11542
      %v11544 = vpop.f32.mrf.mxu0
      %v11545 = vadd.f32 %v11456, %v11544
      %11546 = vmatmul.bf16.gmra.mxu0 %v10154
      %v11547 = vpop.f32.mrf.mxu0
      %v11548 = vadd.f32 %v11459, %v11547
      %v11549 = vpop.f32.mrf.mxu0
      %v11550 = vadd.f32 %v11461, %v11549
      %11551 = vmatmul.bf16.gmra.mxu0 %v10163
      %v11552 = vpop.f32.mrf.mxu0
      %v11553 = vadd.f32 %v11464, %v11552
      %v11554 = vpop.f32.mrf.mxu0
      %v11555 = vadd.f32 %v11466, %v11554
      %11556 = vmatmul.bf16.gmra.mxu0 %v10172
      %v11557 = vpop.f32.mrf.mxu0
      %v11558 = vadd.f32 %v11469, %v11557
      %v11559 = vpop.f32.mrf.mxu0
      %v11560 = vadd.f32 %v11471, %v11559
      %11561 = vmatmul.bf16.gmra.mxu0 %v10181
      %v11562 = vpop.f32.mrf.mxu0
      %v11563 = vadd.f32 %v11474, %v11562
      %v11564 = vpop.f32.mrf.mxu0
      %v11565 = vadd.f32 %v11476, %v11564
      %11566 = vmatmul.bf16.gmra.mxu0 %v10190
      %v11567 = vpop.f32.mrf.mxu0
      %v11568 = vadd.f32 %v11479, %v11567
      %v11569 = vpop.f32.mrf.mxu0
      %v11570 = vadd.f32 %v11481, %v11569
      %11571 = vmatmul.bf16.gmra.mxu0 %v10199
      %v11572 = vpop.f32.mrf.mxu0
      %v11573 = vadd.f32 %v11484, %v11572
      %v11574 = vpop.f32.mrf.mxu0
      %v11575 = vadd.f32 %v11486, %v11574
      %11576 = vdwg.mxu0
      %11577 = vxpose.xlu0.b32.start [1/16] %v11498, 128
      %11578 = vxpose.xlu0.b32.cont [2/16] %v11500, 128
      %11579 = vxpose.xlu0.b32.cont [3/16] %v11503, 128
      %11580 = vxpose.xlu0.b32.cont [4/16] %v11505, 128
      %11581 = vxpose.xlu0.b32.cont [5/16] %v11508, 128
      %11582 = vxpose.xlu0.b32.cont [6/16] %v11510, 128
      %11583 = vxpose.xlu0.b32.cont [7/16] %v11513, 128
      %11584 = vxpose.xlu0.b32.cont [8/16] %v11515, 128
      %11585 = vxpose.xlu0.b32.cont [9/16] %v11518, 128
      %11586 = vxpose.xlu0.b32.cont [10/16] %v11520, 128
      %11587 = vxpose.xlu0.b32.cont [11/16] %v11523, 128
      %11588 = vxpose.xlu0.b32.cont [12/16] %v11525, 128
      %11589 = vxpose.xlu0.b32.cont [13/16] %v11528, 128
      %11590 = vxpose.xlu0.b32.cont [14/16] %v11530, 128
      %11591 = vxpose.xlu0.b32.cont [15/16] %v11533, 128
      %11592 = vxpose.xlu0.b32.end [16/16] %v11535, 128
      %v11593 = vpop.trf.xlu0
      %v11594 = vpop.trf.xlu0
      %v11595 = vpop.trf.xlu0
      %v11596 = vpop.trf.xlu0
      %v11597 = vpop.trf.xlu0
      %v11598 = vpop.trf.xlu0
      %v11599 = vpop.trf.xlu0
      %v11600 = vpop.trf.xlu0
      %v11601 = vpop.trf.xlu0
      %v11602 = vpop.trf.xlu0
      %v11603 = vpop.trf.xlu0
      %v11604 = vpop.trf.xlu0
      %v11605 = vpop.trf.xlu0
      %v11606 = vpop.trf.xlu0
      %v11607 = vpop.trf.xlu0
      %v11608 = vpop.trf.xlu0
      %11609 = vxpose.xlu0.b32.start [1/16] %v11538, 128
      %11610 = vxpose.xlu0.b32.cont [2/16] %v11540, 128
      %11611 = vxpose.xlu0.b32.cont [3/16] %v11543, 128
      %11612 = vxpose.xlu0.b32.cont [4/16] %v11545, 128
      %11613 = vxpose.xlu0.b32.cont [5/16] %v11548, 128
      %11614 = vxpose.xlu0.b32.cont [6/16] %v11550, 128
      %11615 = vxpose.xlu0.b32.cont [7/16] %v11553, 128
      %11616 = vxpose.xlu0.b32.cont [8/16] %v11555, 128
      %11617 = vxpose.xlu0.b32.cont [9/16] %v11558, 128
      %11618 = vxpose.xlu0.b32.cont [10/16] %v11560, 128
      %11619 = vxpose.xlu0.b32.cont [11/16] %v11563, 128
      %11620 = vxpose.xlu0.b32.cont [12/16] %v11565, 128
      %11621 = vxpose.xlu0.b32.cont [13/16] %v11568, 128
      %11622 = vxpose.xlu0.b32.cont [14/16] %v11570, 128
      %11623 = vxpose.xlu0.b32.cont [15/16] %v11573, 128
      %11624 = vxpose.xlu0.b32.end [16/16] %v11575, 128
      %v11625 = vpop.trf.xlu0
      %v11626 = vpop.trf.xlu0
      %v11627 = vpop.trf.xlu0
      %v11628 = vpop.trf.xlu0
      %v11629 = vpop.trf.xlu0
      %v11630 = vpop.trf.xlu0
      %v11631 = vpop.trf.xlu0
      %v11632 = vpop.trf.xlu0
      %v11633 = vpop.trf.xlu0
      %v11634 = vpop.trf.xlu0
      %v11635 = vpop.trf.xlu0
      %v11636 = vpop.trf.xlu0
      %v11637 = vpop.trf.xlu0
      %v11638 = vpop.trf.xlu0
      %v11639 = vpop.trf.xlu0
      %v11640 = vpop.trf.xlu0
      %11641 = vst [vmem:[%s278] sm:$0xff] %v11593
      %11642 = vst [vmem:[%s278 + $0x8] sm:$0xff] %v11625
      %p11643 = scmp.lt.s32.totalorder %s18, 1
      %s11644 = scalar_select %p11643, %s18, 1
      %s11645 = smul.addr %s11644, 2
      %s11646 = smul.addr %s11645, 8
      %s11647 = scalar_lea.vmem %s7, %s11646
      // Predicated region
      $region49: #{primal_proximal_equivariant_forward.1} parent=47 // pred_check
        %p11648 = pneg %p188
      $region50: #{primal_proximal_equivariant_forward.1} parent=47 // pred_check_branch
        %11650 = sbr.rel (%p11648) target = $region52
      $region51: #{primal_proximal_equivariant_forward.1} parent=47 // pred_region
        _
      $region52: #{primal_proximal_equivariant_forward.1} parent=47 // pred_fallthru
        _
    $region48: #{primal_proximal_equivariant_forward.1} parent=5 // pred_fallthru
      _
    %p11651 = scmp.le.s32.totalorder 2, %s13
    // Predicated region
    $region53: #{primal_proximal_equivariant_forward.1} parent=5 // pred_check
      %p11652 = pneg %p11651
    $region54: #{primal_proximal_equivariant_forward.1} parent=5 // pred_check_branch
      %11654 = sbr.rel (%p11652) target = $region56
    $region55: #{primal_proximal_equivariant_forward.1} parent=5 // pred_region
      %s11655 = ssub.s32 %s13, 2
      // Predicated region
      $region57: #{primal_proximal_equivariant_forward.1} parent=55 // pred_check
        %p11656 = pneg %p194
      $region58: #{primal_proximal_equivariant_forward.1} parent=55 // pred_check_branch
        %11658 = sbr.rel (%p11656) target = $region60
      $region59: #{primal_proximal_equivariant_forward.1} parent=55 // pred_region
        %p11659 = scmp.lt.s32.totalorder %s19, 1
        %s11660 = scalar_select %p11659, %s19, 1
        %s11661 = smul.addr %s11660, 2
        %s11662 = smul.addr %s11661, 8
        %s11663 = scalar_lea.vmem %s7, %s11662
      $region60: #{primal_proximal_equivariant_forward.1} parent=55 // pred_fallthru
        _
    $region56: #{primal_proximal_equivariant_forward.1} parent=5 // pred_fallthru
      _
  $region6: #{primal_proximal_equivariant_forward.1} parent=0 // loop_footer
    %s17 = sadd.s32 1, %s13
  $region7: #{primal_proximal_equivariant_forward.1} parent=0 // loop_footer_branch
    %12 = sbr.rel target = $region3
  $region8: #{primal_proximal_equivariant_forward.1} parent=0 // loop_exit
    _

</llo_original>
